<compile_context>
chip_gen: v5e
topology: v5e:2x2
jax: 0.10.0
libtpu: 0.0.40
codegen_flags: <defaults>
</compile_context>

<pallas_src>
import functools
import math

import jax
import jax.numpy as jnp
from jax.experimental import pallas as pl
from jax.experimental.pallas import tpu as pltpu

D = 128       # model dim
M_IND = 16    # inducing points
H = 4         # heads
K_SEED = 4    # PMA seeds
LN_EPS = 1e-5
KV_CHUNK = 1024   # KV rows per grid step when the set is large
TN_MAX = 512      # query-row tile cap


@functools.lru_cache(maxsize=None)
def _vmem_limit_bytes():
    """Generation-aware VMEM limit (~85% of physical); safe fallback 48 MiB."""
    try:
        return int(pltpu.get_tpu_info().vmem_capacity_bytes * 0.85)
    except Exception:
        return 48 * 1024 * 1024


# ----------------------------------------------------------------------------
# Helpers used inside kernels
# ----------------------------------------------------------------------------
def _ln(x, g, b):
    """LayerNorm over the last dim (biased variance, eps=1e-5), f32."""
    mu = jnp.mean(x, axis=-1, keepdims=True)
    xc = x - mu
    var = jnp.mean(xc * xc, axis=-1, keepdims=True)
    return xc * jax.lax.rsqrt(var + LN_EPS) * g + b


# ----------------------------------------------------------------------------
# Fused MAB kernel: QKV proj + flash MHA + out-proj + LN1 + RFF(x3) + LN2
# Grid: (batch, query-row tiles, kv chunks["arbitrary"])
# ----------------------------------------------------------------------------
def _fused_mab_kernel(x_ref, y_ref,
                      wq_ref, bq_ref, wkv_ref, bkv_ref,
                      wo_ref, bo_ref,
                      ln1g_ref, ln1b_ref,
                      wr_ref, br_ref,
                      ln2g_ref, ln2b_ref,
                      o_ref,
                      q_sc, m_sc, l_sc, acc_sc,
                      *, heads):
    kv_i = pl.program_id(2)
    n_kv = pl.num_programs(2)

    x = x_ref[0]                      # [tn, d] f32 (query-side row tile)
    tn, d = x.shape
    p_h = d // heads
    scale = 1.0 / math.sqrt(p_h)

    # ---- first KV chunk: Q projection (scale folded in) + accumulator init --
    @pl.when(kv_i == 0)
    def _init():
        q = (jnp.dot(x.astype(jnp.bfloat16), wq_ref[...],
                     preferred_element_type=jnp.float32)
             + bq_ref[...]) * scale                               # [tn, d] f32
        q_sc[...] = q
        m_sc[...] = jnp.full_like(m_sc, -jnp.inf)
        l_sc[...] = jnp.zeros_like(l_sc)
        acc_sc[...] = jnp.zeros_like(acc_sc)

    # ---- accumulate this KV chunk (online softmax, per head) ----------------
    y = y_ref[0]                      # [tkv, d] f32
    kv = (jnp.dot(y.astype(jnp.bfloat16), wkv_ref[...],
                  preferred_element_type=jnp.float32)
          + bkv_ref[...])             # [tkv, 2d] f32
    k = kv[:, :d].astype(jnp.bfloat16)
    v = kv[:, d:].astype(jnp.bfloat16)
    q = q_sc[...]

    for hd in range(heads):
        sl = slice(hd * p_h, (hd + 1) * p_h)
        qh = q[:, sl].astype(jnp.bfloat16)                        # [tn, p]
        kh = k[:, sl]                                             # [tkv, p]
        vh = v[:, sl]                                             # [tkv, p]
        # NT matmul (contract last dims) -> no explicit kh.T relayout.
        s = jax.lax.dot_general(qh, kh, (((1,), (1,)), ((), ())),
                                preferred_element_type=jnp.float32)  # [tn, tkv]
        m_prev = m_sc[hd]                                         # [tn, 1]
        m_new = jnp.maximum(m_prev, jnp.max(s, axis=-1, keepdims=True))
        alpha = jnp.exp(m_prev - m_new)                           # [tn, 1]
        p = jnp.exp(s - m_new)                                    # [tn, tkv]
        l_sc[hd] = alpha * l_sc[hd] + jnp.sum(p, axis=-1, keepdims=True)
        oh = jnp.dot(p.astype(jnp.bfloat16), vh,
                     preferred_element_type=jnp.float32)          # [tn, p]
        acc_sc[:, sl] = alpha * acc_sc[:, sl] + oh                # lane-concat heads
        m_sc[hd] = m_new

    # ---- last KV chunk: single K=128 out-proj + LN1 + RFF + LN2 -------------
    @pl.when(kv_i == n_kv - 1)
    def _finalize():
        # Normalize each head's context; heads stay lane-concatenated so the
        # output projection is one [tn,128] @ [128,128] matmul.
        ctx = jnp.concatenate(
            [acc_sc[:, h_ * p_h:(h_ + 1) * p_h]
             * pl.reciprocal(l_sc[h_], approx=True)
             for h_ in range(heads)], axis=-1)                    # [tn, d] f32
        a = jnp.dot(ctx.astype(jnp.bfloat16), wo_ref[...],
                    preferred_element_type=jnp.float32) + bo_ref[...]

        # h = LN(x + MHA(x, y, y))
        h1 = _ln(x + a, ln1g_ref[...], ln1b_ref[...])

        # RFF: 3 x (Linear + ReLU), VMEM-resident bf16 weights
        f = h1
        for i in range(3):
            f = jnp.maximum(
                jnp.dot(f.astype(jnp.bfloat16), wr_ref[i],
                        preferred_element_type=jnp.float32) + br_ref[i], 0.0)

        # out = LN(h + RFF(h))
        out = _ln(h1 + f, ln2g_ref[...], ln2b_ref[...])
        o_ref[0] = out.astype(o_ref.dtype)


def mab(x, y, prm, *, x_batch_invariant=False, heads=H):
    """Fused MultiheadAttentionBlock.

    x: [bx, n, d] query-side set (bx == 1 when batch-invariant, e.g. inducing
       points / PMA seeds), y: [b, m, d] key/value-side set.  Returns [b, n, d].
    """
    b, m, d = y.shape
    n = x.shape[1]
    tn = min(n, TN_MAX)                 # query-row tile
    if m % KV_CHUNK == 0:
        tkv = min(m, KV_CHUNK)          # KV chunk (flash accumulation)
    else:
        # TODO(synk): masked tail handling for large sets not a multiple of
        # KV_CHUNK; fall back to a single full-set chunk for now.
        tkv = m
    grid = (b, pl.cdiv(n, tn), m // tkv)

    if x_batch_invariant:
        x_map = lambda i, t, kv: (0, t, 0)      # no HBM broadcast of seeds
    else:
        x_map = lambda i, t, kv: (i, t, 0)

    # NOTE: weight specs use constant index maps so they are never re-fetched.
    # (pipeline_mode=pl.Buffered(1) would save their second buffer; skipped to
    # stay compatible across jax versions.  Batch-blocking the tiny-row MABs
    # (PMA/SAB/mab1) is also left for very large batch sizes.)
    def wspec2(shape):
        return pl.BlockSpec(shape, lambda i, t, kv: (0, 0))

    def wspec3(shape):
        return pl.BlockSpec(shape, lambda i, t, kv: (0, 0, 0))

    bf16 = jnp.bfloat16
    return pl.pallas_call(
        functools.partial(_fused_mab_kernel, heads=heads),
        out_shape=jax.ShapeDtypeStruct((b, n, d), y.dtype),
        grid=grid,
        in_specs=[
            pl.BlockSpec((1, tn, d), x_map),
            pl.BlockSpec((1, tkv, d), lambda i, t, kv: (i, kv, 0)),
            wspec2((d, d)), wspec2((1, d)),            # wq (bf16), bq
            wspec2((d, 2 * d)), wspec2((1, 2 * d)),    # wkv (bf16), bkv
            wspec2((d, d)), wspec2((1, d)),            # wo (bf16), bo
            wspec2((1, d)), wspec2((1, d)),            # ln1 gamma/beta
            wspec3((3, d, d)), wspec3((3, 1, d)),      # rff weights (bf16)/biases
            wspec2((1, d)), wspec2((1, d)),            # ln2 gamma/beta
        ],
        out_specs=pl.BlockSpec((1, tn, d), lambda i, t, kv: (i, t, 0)),
        scratch_shapes=[
            pltpu.VMEM((tn, d), jnp.float32),          # q (scaled)
            pltpu.VMEM((heads, tn, 1), jnp.float32),   # running max
            pltpu.VMEM((heads, tn, 1), jnp.float32),   # running denom
            pltpu.VMEM((tn, d), jnp.float32),          # head-concat context acc
        ],
        compiler_params=pltpu.CompilerParams(
            dimension_semantics=("parallel", "parallel", "arbitrary"),
            vmem_limit_bytes=_vmem_limit_bytes()),
    )(x, y,
      prm["wq"].astype(bf16), prm["bq"],
      prm["wkv"].astype(bf16), prm["bkv"],
      prm["wo"].astype(bf16), prm["bo"],
      prm["ln1_g"], prm["ln1_b"],
      prm["wr"].astype(bf16), prm["br"],
      prm["ln2_g"], prm["ln2_b"])


# ----------------------------------------------------------------------------
# Standalone linear (embed / predictor), row-tiled + parallel grid
# ----------------------------------------------------------------------------
def _linear_kernel(x_ref, w_ref, b_ref, o_ref, *, relu, use_mxu):
    x = x_ref[...]
    w = w_ref[...]
    if use_mxu:
        y = jnp.dot(x.astype(jnp.bfloat16), w.astype(jnp.bfloat16),
                    preferred_element_type=jnp.float32)
    else:
        # Tiny-K contraction (e.g. in_dim=4): broadcast-MAC on the VPU; an MXU
        # dot would leave the array ~97% idle.
        kdim = x.shape[1]
        y = jnp.zeros((x.shape[0], w.shape[1]), jnp.float32)
        for kk in range(kdim):
            y = y + x[:, kk:kk + 1] * w[kk:kk + 1, :]
    y = y + b_ref[...]
    if relu:
        y = jnp.maximum(y, 0.0)
    o_ref[...] = y.astype(o_ref.dtype)


def linear(x2d, w, b2d, relu=False, tm_max=TN_MAX):
    """y = x @ w + b (optional ReLU). x2d: [M, K], w: [K, N], b2d: [1, N]."""
    M, K = x2d.shape
    _, N = w.shape
    tm = min(M, tm_max)
    use_mxu = K >= 16
    return pl.pallas_call(
        functools.partial(_linear_kernel, relu=relu, use_mxu=use_mxu),
        out_shape=jax.ShapeDtypeStruct((M, N), x2d.dtype),
        grid=(pl.cdiv(M, tm),),
        in_specs=[
            pl.BlockSpec((tm, K), lambda i: (i, 0)),
            pl.BlockSpec((K, N), lambda i: (0, 0)),
            pl.BlockSpec((1, N), lambda i: (0, 0)),
        ],
        out_specs=pl.BlockSpec((tm, N), lambda i: (i, 0)),
        compiler_params=pltpu.CompilerParams(
            dimension_semantics=("parallel",),
            vmem_limit_bytes=_vmem_limit_bytes()),
    )(x2d, w, b2d)


# ----------------------------------------------------------------------------
# Parameter initialization (deterministic, mirrors weights_init)
# ----------------------------------------------------------------------------
def kaiming_linear(key, fan_in, fan_out):
    std = math.sqrt(2.0 / fan_in)
    w = jax.random.normal(key, (fan_in, fan_out), jnp.float32) * std
    b = jnp.zeros((fan_out,), jnp.float32)
    return w, b


def init_mab(key, d=D):
    ks = jax.random.split(key, 5)
    wq, bq = kaiming_linear(ks[0], d, d)
    wk, bk = kaiming_linear(ks[1], d, d)
    wv, bv = kaiming_linear(ks[2], d, d)
    wo, bo = kaiming_linear(ks[3], d, d)
    rff = [kaiming_linear(k2, d, d) for k2 in jax.random.split(ks[4], 3)]
    return {
        "wq": wq, "bq": bq.reshape(1, d),
        "wkv": jnp.concatenate([wk, wv], axis=1),                # [d, 2d]
        "bkv": jnp.concatenate([bk, bv]).reshape(1, 2 * d),
        "wo": wo, "bo": bo.reshape(1, d),
        "ln1_g": jnp.ones((1, d), jnp.float32),
        "ln1_b": jnp.zeros((1, d), jnp.float32),
        "wr": jnp.stack([w for w, _ in rff]),                    # [3, d, d]
        "br": jnp.stack([b.reshape(1, d) for _, b in rff]),      # [3, 1, d]
        "ln2_g": jnp.ones((1, d), jnp.float32),
        "ln2_b": jnp.zeros((1, d), jnp.float32),
    }


def init_params(key, in_dim, out_dim):
    ks = jax.random.split(key, 12)
    ew, eb = kaiming_linear(ks[0], in_dim, D)
    pw, pb = kaiming_linear(ks[10], K_SEED * D, out_dim)
    # Pad predictor output to a multiple of 128 lanes (unmasked stores);
    # the wrapper slices back to out_dim.
    out_pad = pl.cdiv(out_dim, 128) * 128
    pw_pad = jnp.zeros((K_SEED * D, out_pad), jnp.float32).at[:, :out_dim].set(pw)
    pb_pad = jnp.zeros((1, out_pad), jnp.float32).at[0, :out_dim].set(pb)
    return {
        "embed_w": ew, "embed_b": eb.reshape(1, D),
        "isab1": {"ind": jax.random.normal(ks[1], (1, M_IND, D), jnp.float32),
                  "mab1": init_mab(ks[2]), "mab2": init_mab(ks[3])},
        "isab2": {"ind": jax.random.normal(ks[4], (1, M_IND, D), jnp.float32),
                  "mab1": init_mab(ks[5]), "mab2": init_mab(ks[6])},
        "pma": {"seed": jax.random.normal(ks[7], (1, K_SEED, D), jnp.float32),
                "mab": init_mab(ks[8])},
        "sab": init_mab(ks[9]),
        "pred_w": pw_pad, "pred_b": pb_pad,
    }


# ----------------------------------------------------------------------------
# Model forward (thin JAX glue around the fused Pallas kernels)
# ----------------------------------------------------------------------------
def isab_forward(x, p):
    h = mab(p["ind"], x, p["mab1"], x_batch_invariant=True)   # [b, m_ind, d]
    return mab(x, h, p["mab2"])                               # [b, n, d]


def pma_forward(z, p):
    return mab(p["seed"], z, p["mab"], x_batch_invariant=True)  # [b, k, d]


def set_transformer_forward(x, params, *, out_dim):
    b, n, in_dim = x.shape
    e = linear(x.reshape(b * n, in_dim), params["embed_w"], params["embed_b"],
               relu=True).reshape(b, n, D)
    e = isab_forward(e, params["isab1"])
    e = isab_forward(e, params["isab2"])
    z = pma_forward(e, params["pma"])
    z = mab(z, z, params["sab"])                              # SAB
    z = z.reshape(b, K_SEED * D)
    out = linear(z, params["pred_w"], params["pred_b"])       # [b, 128-padded]
    return out[:, :out_dim]


# ----------------------------------------------------------------------------
# Pure-JAX reference (f32) for a sanity comparison
# ----------------------------------------------------------------------------
def _mab_ref(x, y, prm, heads=H):
    b = y.shape[0]
    if x.shape[0] == 1 and b > 1:
        x = jnp.broadcast_to(x, (b,) + x.shape[1:])
    d = x.shape[-1]
    p_h = d // heads
    q = x @ prm["wq"] + prm["bq"]
    kv = y @ prm["wkv"] + prm["bkv"]
    k, v = kv[..., :d], kv[..., d:]
    outs = []
    for hd in range(heads):
        sl = slice(hd * p_h, (hd + 1) * p_h)
        s = jnp.einsum("bnd,bmd->bnm", q[..., sl], k[..., sl]) / math.sqrt(p_h)
        a = jax.nn.softmax(s, axis=-1)
        outs.append(jnp.einsum("bnm,bmd->bnd", a, v[..., sl]))
    o = jnp.concatenate(outs, axis=-1) @ prm["wo"] + prm["bo"]
    h1 = _ln(x + o, prm["ln1_g"], prm["ln1_b"])
    f = h1
    for i in range(3):
        f = jax.nn.relu(f @ prm["wr"][i] + prm["br"][i])
    return _ln(h1 + f, prm["ln2_g"], prm["ln2_b"])


def set_transformer_ref(x, params, *, out_dim):
    b = x.shape[0]
    e = jax.nn.relu(x @ params["embed_w"] + params["embed_b"])
    for name in ("isab1", "isab2"):
        p = params[name]
        h = _mab_ref(p["ind"], e, p["mab1"])
        e = _mab_ref(e, h, p["mab2"])
    z = _mab_ref(params["pma"]["seed"], e, params["pma"]["mab"])
    z = _mab_ref(z, z, params["sab"])
    z = z.reshape(b, K_SEED * D)
    out = z @ params["pred_w"] + params["pred_b"]
    return out[:, :out_dim]


# ----------------------------------------------------------------------------
if __name__ == "__main__":
    B, N, IN_DIM, OUT_DIM = 2, 8, 4, 8
    key = jax.random.PRNGKey(0)
    k_x, k_p = jax.random.split(key)
    x = jax.random.normal(k_x, (B, N, IN_DIM), jnp.float32)
    params = init_params(k_p, IN_DIM, OUT_DIM)

    fwd = jax.jit(functools.partial(set_transformer_forward, out_dim=OUT_DIM))
    out = jax.block_until_ready(fwd(x, params))

    assert out.shape == (B, OUT_DIM), out.shape
    assert jnp.all(jnp.isfinite(out))

    # Loose check vs f32 reference (bf16 MXU operands + approx reciprocal).
    ref = set_transformer_ref(x, params, out_dim=OUT_DIM)
    err = float(jnp.max(jnp.abs(out - ref)))
    assert err < 0.5, f"max abs diff vs reference: {err}"

    print("KERNEL_OK")
</pallas_src>

<mosaic_0001>
module attributes {stable_mosaic.version = 11 : i64} {
  func.func @_linear_kernel(%arg0: i32, %arg1: memref<16x4xf32, #tpu.memory_space<vmem>>, %arg2: memref<4x128xf32, #tpu.memory_space<vmem>>, %arg3: memref<1x128xf32, #tpu.memory_space<vmem>>, %arg4: memref<16x128xf32, #tpu.memory_space<vmem>>) attributes {dimension_semantics = [#tpu.dimension_semantics<parallel>], iteration_bounds = array<i64: 1>, scalar_prefetch = 0 : i64, scratch_operands = 0 : i64, tpu.core_type = #tpu.core_type<tc>, window_params = [{transform_indices = @transform_0, window_bounds = array<i64: 16, 4>}, {pipeline_mode = #tpu.pipeline_mode<synchronous>, transform_indices = @transform_1, window_bounds = array<i64: 4, 128>}, {pipeline_mode = #tpu.pipeline_mode<synchronous>, transform_indices = @transform_2, window_bounds = array<i64: 1, 128>}, {transform_indices = @transform_3, window_bounds = array<i64: 16, 128>}]} {
    %c0 = arith.constant 0 : index
    %c0_0 = arith.constant 0 : index
    %0 = vector.load %arg1[%c0, %c0_0] : memref<16x4xf32, #tpu.memory_space<vmem>>, vector<16x4xf32>
    %c0_1 = arith.constant 0 : index
    %c0_2 = arith.constant 0 : index
    %1 = vector.load %arg2[%c0_1, %c0_2] : memref<4x128xf32, #tpu.memory_space<vmem>>, vector<4x128xf32>
    %cst = arith.constant 0.000000e+00 : f32
    %2 = vector.broadcast %cst : f32 to vector<16x128xf32>
    %3 = vector.extract_strided_slice %0 {offsets = [0, 0], sizes = [16, 1], strides = [1, 1]} : vector<16x4xf32> to vector<16x1xf32>
    %4 = vector.extract_strided_slice %1 {offsets = [0, 0], sizes = [1, 128], strides = [1, 1]} : vector<4x128xf32> to vector<1x128xf32>
    %5 = vector.broadcast %3 : vector<16x1xf32> to vector<16x128xf32>
    %6 = vector.broadcast %4 : vector<1x128xf32> to vector<16x128xf32>
    %7 = arith.mulf %5, %6 : vector<16x128xf32>
    %8 = arith.addf %2, %7 : vector<16x128xf32>
    %9 = vector.extract_strided_slice %0 {offsets = [0, 1], sizes = [16, 1], strides = [1, 1]} : vector<16x4xf32> to vector<16x1xf32>
    %10 = vector.extract_strided_slice %1 {offsets = [1, 0], sizes = [1, 128], strides = [1, 1]} : vector<4x128xf32> to vector<1x128xf32>
    %11 = vector.broadcast %9 : vector<16x1xf32> to vector<16x128xf32>
    %12 = vector.broadcast %10 : vector<1x128xf32> to vector<16x128xf32>
    %13 = arith.mulf %11, %12 : vector<16x128xf32>
    %14 = arith.addf %8, %13 : vector<16x128xf32>
    %15 = vector.extract_strided_slice %0 {offsets = [0, 2], sizes = [16, 1], strides = [1, 1]} : vector<16x4xf32> to vector<16x1xf32>
    %16 = vector.extract_strided_slice %1 {offsets = [2, 0], sizes = [1, 128], strides = [1, 1]} : vector<4x128xf32> to vector<1x128xf32>
    %17 = vector.broadcast %15 : vector<16x1xf32> to vector<16x128xf32>
    %18 = vector.broadcast %16 : vector<1x128xf32> to vector<16x128xf32>
    %19 = arith.mulf %17, %18 : vector<16x128xf32>
    %20 = arith.addf %14, %19 : vector<16x128xf32>
    %21 = vector.extract_strided_slice %0 {offsets = [0, 3], sizes = [16, 1], strides = [1, 1]} : vector<16x4xf32> to vector<16x1xf32>
    %22 = vector.extract_strided_slice %1 {offsets = [3, 0], sizes = [1, 128], strides = [1, 1]} : vector<4x128xf32> to vector<1x128xf32>
    %23 = vector.broadcast %21 : vector<16x1xf32> to vector<16x128xf32>
    %24 = vector.broadcast %22 : vector<1x128xf32> to vector<16x128xf32>
    %25 = arith.mulf %23, %24 : vector<16x128xf32>
    %26 = arith.addf %20, %25 : vector<16x128xf32>
    %c0_3 = arith.constant 0 : index
    %c0_4 = arith.constant 0 : index
    %27 = vector.load %arg3[%c0_3, %c0_4] : memref<1x128xf32, #tpu.memory_space<vmem>>, vector<1x128xf32>
    %28 = vector.broadcast %27 : vector<1x128xf32> to vector<16x128xf32>
    %29 = arith.addf %26, %28 : vector<16x128xf32>
    %cst_5 = arith.constant 0.000000e+00 : f32
    %30 = vector.broadcast %cst_5 : f32 to vector<16x128xf32>
    %31 = arith.maximumf %29, %30 : vector<16x128xf32>
    %c0_6 = arith.constant 0 : index
    %c0_7 = arith.constant 0 : index
    %32 = vector.load %arg4[%c0_6, %c0_7] : memref<16x128xf32, #tpu.memory_space<vmem>>, vector<16x128xf32>
    tpu.vector_store %arg4[%c0_6, %c0_7], %31 {strides = array<i32>} : memref<16x128xf32, #tpu.memory_space<vmem>>, vector<16x128xf32>,
    return
  }
  func.func @transform_0(%arg0: i32) -> (i32, i32) {
    %c0_i32 = arith.constant 0 : i32
    %c0_i32_0 = arith.constant 0 : i32
    return %arg0, %c0_i32 : i32, i32
  }
  func.func @transform_1(%arg0: i32) -> (i32, i32) {
    %c0_i32 = arith.constant 0 : i32
    %c0_i32_0 = arith.constant 0 : i32
    %c0_i32_1 = arith.constant 0 : i32
    return %c0_i32, %c0_i32_0 : i32, i32
  }
  func.func @transform_2(%arg0: i32) -> (i32, i32) {
    %c0_i32 = arith.constant 0 : i32
    %c0_i32_0 = arith.constant 0 : i32
    %c0_i32_1 = arith.constant 0 : i32
    return %c0_i32, %c0_i32_0 : i32, i32
  }
  func.func @transform_3(%arg0: i32) -> (i32, i32) {
    %c0_i32 = arith.constant 0 : i32
    %c0_i32_0 = arith.constant 0 : i32
    return %arg0, %c0_i32 : i32, i32
  }
}

module attributes {stable_mosaic.version = 11 : i64} {
  func.func @_fused_mab_kernel(%arg0: i32, %arg1: i32, %arg2: i32, %arg3: memref<1x16x128xf32, #tpu.memory_space<vmem>>, %arg4: memref<1x8x128xf32, #tpu.memory_space<vmem>>, %arg5: memref<128x128xbf16, #tpu.memory_space<vmem>>, %arg6: memref<1x128xf32, #tpu.memory_space<vmem>>, %arg7: memref<128x256xbf16, #tpu.memory_space<vmem>>, %arg8: memref<1x256xf32, #tpu.memory_space<vmem>>, %arg9: memref<128x128xbf16, #tpu.memory_space<vmem>>, %arg10: memref<1x128xf32, #tpu.memory_space<vmem>>, %arg11: memref<1x128xf32, #tpu.memory_space<vmem>>, %arg12: memref<1x128xf32, #tpu.memory_space<vmem>>, %arg13: memref<3x128x128xbf16, #tpu.memory_space<vmem>>, %arg14: memref<3x1x128xf32, #tpu.memory_space<vmem>>, %arg15: memref<1x128xf32, #tpu.memory_space<vmem>>, %arg16: memref<1x128xf32, #tpu.memory_space<vmem>>, %arg17: memref<1x16x128xf32, #tpu.memory_space<vmem>>, %arg18: memref<16x128xf32, #tpu.memory_space<vmem>>, %arg19: memref<4x16x1xf32, #tpu.memory_space<vmem>>, %arg20: memref<4x16x1xf32, #tpu.memory_space<vmem>>, %arg21: memref<16x128xf32, #tpu.memory_space<vmem>>) attributes {dimension_semantics = [#tpu.dimension_semantics<parallel>, #tpu.dimension_semantics<parallel>, #tpu.dimension_semantics<arbitrary>], iteration_bounds = array<i64: 2, 1, 1>, scalar_prefetch = 0 : i64, scratch_operands = 4 : i64, tpu.core_type = #tpu.core_type<tc>, window_params = [{transform_indices = @transform_0, window_bounds = array<i64: 1, 16, 128>}, {transform_indices = @transform_1, window_bounds = array<i64: 1, 8, 128>}, {pipeline_mode = #tpu.pipeline_mode<synchronous>, transform_indices = @transform_2, window_bounds = array<i64: 128, 128>}, {pipeline_mode = #tpu.pipeline_mode<synchronous>, transform_indices = @transform_3, window_bounds = array<i64: 1, 128>}, {pipeline_mode = #tpu.pipeline_mode<synchronous>, transform_indices = @transform_4, window_bounds = array<i64: 128, 256>}, {pipeline_mode = #tpu.pipeline_mode<synchronous>, transform_indices = @transform_5, window_bounds = array<i64: 1, 256>}, {pipeline_mode = #tpu.pipeline_mode<synchronous>, transform_indices = @transform_6, window_bounds = array<i64: 128, 128>}, {pipeline_mode = #tpu.pipeline_mode<synchronous>, transform_indices = @transform_7, window_bounds = array<i64: 1, 128>}, {pipeline_mode = #tpu.pipeline_mode<synchronous>, transform_indices = @transform_8, window_bounds = array<i64: 1, 128>}, {pipeline_mode = #tpu.pipeline_mode<synchronous>, transform_indices = @transform_9, window_bounds = array<i64: 1, 128>}, {pipeline_mode = #tpu.pipeline_mode<synchronous>, transform_indices = @transform_10, window_bounds = array<i64: 3, 128, 128>}, {pipeline_mode = #tpu.pipeline_mode<synchronous>, transform_indices = @transform_11, window_bounds = array<i64: 3, 1, 128>}, {pipeline_mode = #tpu.pipeline_mode<synchronous>, transform_indices = @transform_12, window_bounds = array<i64: 1, 128>}, {pipeline_mode = #tpu.pipeline_mode<synchronous>, transform_indices = @transform_13, window_bounds = array<i64: 1, 128>}, {transform_indices = @transform_14, window_bounds = array<i64: 1, 16, 128>}]} {
    %c0 = arith.constant 0 : index
    %c0_0 = arith.constant 0 : index
    %c0_1 = arith.constant 0 : index
    %0 = vector.load %arg3[%c0, %c0_0, %c0_1] : memref<1x16x128xf32, #tpu.memory_space<vmem>>, vector<1x16x128xf32>
    %1 = vector.shape_cast %0 : vector<1x16x128xf32> to vector<16x128xf32>
    %c0_i32 = arith.constant 0 : i32
    %2 = arith.cmpi eq, %arg2, %c0_i32 : i32
    %3 = arith.extui %2 : i1 to i32
    %c0_i32_2 = arith.constant 0 : i32
    %4 = arith.cmpi ne, %3, %c0_i32_2 : i32
    scf.if %4 {
      %157 = arith.truncf %1 : vector<16x128xf32> to vector<16x128xbf16>
      %c0_88 = arith.constant 0 : index
      %c0_89 = arith.constant 0 : index
      %158 = vector.load %arg5[%c0_88, %c0_89] : memref<128x128xbf16, #tpu.memory_space<vmem>>, vector<128x128xbf16>
      %cst_90 = arith.constant dense<0.000000e+00> : vector<16x128xf32>
      %159 = tpu.matmul %157, %158, %cst_90 {dimension_numbers = #tpu.dot_dimension_numbers<[1], [0], [0], [1], [0, 0, 1, 1], [], []>} : vector<16x128xbf16>, vector<128x128xbf16>, vector<16x128xf32> -> vector<16x128xf32>
      %c0_91 = arith.constant 0 : index
      %c0_92 = arith.constant 0 : index
      %160 = vector.load %arg6[%c0_91, %c0_92] : memref<1x128xf32, #tpu.memory_space<vmem>>, vector<1x128xf32>
      %161 = vector.broadcast %160 : vector<1x128xf32> to vector<16x128xf32>
      %162 = arith.addf %159, %161 : vector<16x128xf32>
      %cst_93 = arith.constant 0.176776692 : f32
      %163 = vector.broadcast %cst_93 : f32 to vector<16x128xf32>
      %164 = arith.mulf %162, %163 : vector<16x128xf32>
      %c0_94 = arith.constant 0 : index
      %c0_95 = arith.constant 0 : index
      %165 = vector.load %arg18[%c0_94, %c0_95] : memref<16x128xf32, #tpu.memory_space<vmem>>, vector<16x128xf32>
      tpu.vector_store %arg18[%c0_94, %c0_95], %164 {strides = array<i32>} : memref<16x128xf32, #tpu.memory_space<vmem>>, vector<16x128xf32>,
      %cst_96 = arith.constant 0xFF800000 : f32
      %166 = vector.broadcast %cst_96 : f32 to vector<4x16x1xf32>
      %c0_97 = arith.constant 0 : index
      %c0_98 = arith.constant 0 : index
      %c0_99 = arith.constant 0 : index
      %167 = vector.load %arg19[%c0_97, %c0_98, %c0_99] : memref<4x16x1xf32, #tpu.memory_space<vmem>>, vector<4x16x1xf32>
      tpu.vector_store %arg19[%c0_97, %c0_98, %c0_99], %166 {strides = array<i32>} : memref<4x16x1xf32, #tpu.memory_space<vmem>>, vector<4x16x1xf32>,
      %cst_100 = arith.constant 0.000000e+00 : f32
      %168 = vector.broadcast %cst_100 : f32 to vector<4x16x1xf32>
      %c0_101 = arith.constant 0 : index
      %c0_102 = arith.constant 0 : index
      %c0_103 = arith.constant 0 : index
      %169 = vector.load %arg20[%c0_101, %c0_102, %c0_103] : memref<4x16x1xf32, #tpu.memory_space<vmem>>, vector<4x16x1xf32>
      tpu.vector_store %arg20[%c0_101, %c0_102, %c0_103], %168 {strides = array<i32>} : memref<4x16x1xf32, #tpu.memory_space<vmem>>, vector<4x16x1xf32>,
      %cst_104 = arith.constant 0.000000e+00 : f32
      %170 = vector.broadcast %cst_104 : f32 to vector<16x128xf32>
      %c0_105 = arith.constant 0 : index
      %c0_106 = arith.constant 0 : index
      %171 = vector.load %arg21[%c0_105, %c0_106] : memref<16x128xf32, #tpu.memory_space<vmem>>, vector<16x128xf32>
      tpu.vector_store %arg21[%c0_105, %c0_106], %170 {strides = array<i32>} : memref<16x128xf32, #tpu.memory_space<vmem>>, vector<16x128xf32>,
    } else {
    }
    %c0_3 = arith.constant 0 : index
    %c0_4 = arith.constant 0 : index
    %c0_5 = arith.constant 0 : index
    %5 = vector.load %arg4[%c0_3, %c0_4, %c0_5] : memref<1x8x128xf32, #tpu.memory_space<vmem>>, vector<1x8x128xf32>
    %6 = vector.shape_cast %5 : vector<1x8x128xf32> to vector<8x128xf32>
    %7 = arith.truncf %6 : vector<8x128xf32> to vector<8x128xbf16>
    %c0_6 = arith.constant 0 : index
    %c0_7 = arith.constant 0 : index
    %8 = vector.load %arg7[%c0_6, %c0_7] : memref<128x256xbf16, #tpu.memory_space<vmem>>, vector<128x256xbf16>
    %cst = arith.constant dense<0.000000e+00> : vector<8x256xf32>
    %9 = tpu.matmul %7, %8, %cst {dimension_numbers = #tpu.dot_dimension_numbers<[1], [0], [0], [1], [0, 0, 1, 1], [], []>} : vector<8x128xbf16>, vector<128x256xbf16>, vector<8x256xf32> -> vector<8x256xf32>
    %c0_8 = arith.constant 0 : index
    %c0_9 = arith.constant 0 : index
    %10 = vector.load %arg8[%c0_8, %c0_9] : memref<1x256xf32, #tpu.memory_space<vmem>>, vector<1x256xf32>
    %11 = vector.broadcast %10 : vector<1x256xf32> to vector<8x256xf32>
    %12 = arith.addf %9, %11 : vector<8x256xf32>
    %13 = vector.extract_strided_slice %12 {offsets = [0, 0], sizes = [8, 128], strides = [1, 1]} : vector<8x256xf32> to vector<8x128xf32>
    %14 = arith.truncf %13 : vector<8x128xf32> to vector<8x128xbf16>
    %15 = vector.extract_strided_slice %12 {offsets = [0, 128], sizes = [8, 128], strides = [1, 1]} : vector<8x256xf32> to vector<8x128xf32>
    %16 = arith.truncf %15 : vector<8x128xf32> to vector<8x128xbf16>
    %c0_10 = arith.constant 0 : index
    %c0_11 = arith.constant 0 : index
    %17 = vector.load %arg18[%c0_10, %c0_11] : memref<16x128xf32, #tpu.memory_space<vmem>>, vector<16x128xf32>
    %18 = vector.extract_strided_slice %17 {offsets = [0, 0], sizes = [16, 32], strides = [1, 1]} : vector<16x128xf32> to vector<16x32xf32>
    %19 = arith.truncf %18 : vector<16x32xf32> to vector<16x32xbf16>
    %20 = vector.extract_strided_slice %14 {offsets = [0, 0], sizes = [8, 32], strides = [1, 1]} : vector<8x128xbf16> to vector<8x32xbf16>
    %21 = vector.extract_strided_slice %16 {offsets = [0, 0], sizes = [8, 32], strides = [1, 1]} : vector<8x128xbf16> to vector<8x32xbf16>
    %cst_12 = arith.constant dense<0.000000e+00> : vector<16x8xf32>
    %22 = tpu.matmul %19, %20, %cst_12 {dimension_numbers = #tpu.dot_dimension_numbers<[1], [1], [0], [0], [0, 0, 1, 0], [], []>} : vector<16x32xbf16>, vector<8x32xbf16>, vector<16x8xf32> -> vector<16x8xf32>
    %c0_13 = arith.constant 0 : index
    %c0_14 = arith.constant 0 : index
    %c0_15 = arith.constant 0 : index
    %23 = vector.load %arg19[%c0_13, %c0_14, %c0_15] : memref<4x16x1xf32, #tpu.memory_space<vmem>>, vector<1x16x1xf32>
    %24 = vector.shape_cast %23 : vector<1x16x1xf32> to vector<16x1xf32>
    %cst_16 = arith.constant dense<0xFF800000> : vector<16xf32>
    %25 = vector.multi_reduction <maximumf>, %22, %cst_16 [1] : vector<16x8xf32> to vector<16xf32>
    %26 = vector.shape_cast %25 : vector<16xf32> to vector<16x1xf32>
    %27 = arith.maximumf %24, %26 : vector<16x1xf32>
    %28 = arith.subf %24, %27 : vector<16x1xf32>
    %29 = math.exp %28 : vector<16x1xf32>
    %30 = vector.broadcast %27 : vector<16x1xf32> to vector<16x8xf32>
    %31 = arith.subf %22, %30 : vector<16x8xf32>
    %32 = math.exp %31 : vector<16x8xf32>
    %c0_17 = arith.constant 0 : index
    %c0_18 = arith.constant 0 : index
    %c0_19 = arith.constant 0 : index
    %33 = vector.load %arg20[%c0_17, %c0_18, %c0_19] : memref<4x16x1xf32, #tpu.memory_space<vmem>>, vector<1x16x1xf32>
    %34 = vector.shape_cast %33 : vector<1x16x1xf32> to vector<16x1xf32>
    %35 = arith.mulf %29, %34 : vector<16x1xf32>
    %cst_20 = arith.constant dense<0.000000e+00> : vector<16xf32>
    %36 = vector.multi_reduction <add>, %32, %cst_20 [1] : vector<16x8xf32> to vector<16xf32>
    %37 = vector.shape_cast %36 : vector<16xf32> to vector<16x1xf32>
    %38 = arith.addf %35, %37 : vector<16x1xf32>
    %c0_21 = arith.constant 0 : index
    %c0_22 = arith.constant 0 : index
    %c0_23 = arith.constant 0 : index
    %39 = vector.load %arg20[%c0_21, %c0_22, %c0_23] : memref<4x16x1xf32, #tpu.memory_space<vmem>>, vector<1x16x1xf32>
    %40 = vector.shape_cast %39 : vector<1x16x1xf32> to vector<16x1xf32>
    %41 = vector.shape_cast %38 : vector<16x1xf32> to vector<1x16x1xf32>
    tpu.vector_store %arg20[%c0_21, %c0_22, %c0_23], %41 {strides = array<i32>} : memref<4x16x1xf32, #tpu.memory_space<vmem>>, vector<1x16x1xf32>,
    %42 = arith.truncf %32 : vector<16x8xf32> to vector<16x8xbf16>
    %cst_24 = arith.constant dense<0.000000e+00> : vector<16x32xf32>
    %43 = tpu.matmul %42, %21, %cst_24 {dimension_numbers = #tpu.dot_dimension_numbers<[1], [0], [0], [1], [0, 0, 1, 1], [], []>} : vector<16x8xbf16>, vector<8x32xbf16>, vector<16x32xf32> -> vector<16x32xf32>
    %c0_25 = arith.constant 0 : index
    %c0_26 = arith.constant 0 : index
    %44 = vector.load %arg21[%c0_25, %c0_26] : memref<16x128xf32, #tpu.memory_space<vmem>>, vector<16x32xf32>
    %45 = vector.broadcast %29 : vector<16x1xf32> to vector<16x32xf32>
    %46 = arith.mulf %45, %44 : vector<16x32xf32>
    %47 = arith.addf %46, %43 : vector<16x32xf32>
    %c0_27 = arith.constant 0 : index
    %c0_28 = arith.constant 0 : index
    %48 = vector.load %arg21[%c0_27, %c0_28] : memref<16x128xf32, #tpu.memory_space<vmem>>, vector<16x32xf32>
    tpu.vector_store %arg21[%c0_27, %c0_28], %47 {strides = array<i32>} : memref<16x128xf32, #tpu.memory_space<vmem>>, vector<16x32xf32>,
    %c0_29 = arith.constant 0 : index
    %c0_30 = arith.constant 0 : index
    %c0_31 = arith.constant 0 : index
    %49 = vector.load %arg19[%c0_29, %c0_30, %c0_31] : memref<4x16x1xf32, #tpu.memory_space<vmem>>, vector<1x16x1xf32>
    %50 = vector.shape_cast %49 : vector<1x16x1xf32> to vector<16x1xf32>
    %51 = vector.shape_cast %27 : vector<16x1xf32> to vector<1x16x1xf32>
    tpu.vector_store %arg19[%c0_29, %c0_30, %c0_31], %51 {strides = array<i32>} : memref<4x16x1xf32, #tpu.memory_space<vmem>>, vector<1x16x1xf32>,
    %52 = vector.extract_strided_slice %17 {offsets = [0, 32], sizes = [16, 32], strides = [1, 1]} : vector<16x128xf32> to vector<16x32xf32>
    %53 = arith.truncf %52 : vector<16x32xf32> to vector<16x32xbf16>
    %54 = vector.extract_strided_slice %14 {offsets = [0, 32], sizes = [8, 32], strides = [1, 1]} : vector<8x128xbf16> to vector<8x32xbf16>
    %55 = vector.extract_strided_slice %16 {offsets = [0, 32], sizes = [8, 32], strides = [1, 1]} : vector<8x128xbf16> to vector<8x32xbf16>
    %cst_32 = arith.constant dense<0.000000e+00> : vector<16x8xf32>
    %56 = tpu.matmul %53, %54, %cst_32 {dimension_numbers = #tpu.dot_dimension_numbers<[1], [1], [0], [0], [0, 0, 1, 0], [], []>} : vector<16x32xbf16>, vector<8x32xbf16>, vector<16x8xf32> -> vector<16x8xf32>
    %c1 = arith.constant 1 : index
    %c0_33 = arith.constant 0 : index
    %c0_34 = arith.constant 0 : index
    %57 = vector.load %arg19[%c1, %c0_33, %c0_34] : memref<4x16x1xf32, #tpu.memory_space<vmem>>, vector<1x16x1xf32>
    %58 = vector.shape_cast %57 : vector<1x16x1xf32> to vector<16x1xf32>
    %cst_35 = arith.constant dense<0xFF800000> : vector<16xf32>
    %59 = vector.multi_reduction <maximumf>, %56, %cst_35 [1] : vector<16x8xf32> to vector<16xf32>
    %60 = vector.shape_cast %59 : vector<16xf32> to vector<16x1xf32>
    %61 = arith.maximumf %58, %60 : vector<16x1xf32>
    %62 = arith.subf %58, %61 : vector<16x1xf32>
    %63 = math.exp %62 : vector<16x1xf32>
    %64 = vector.broadcast %61 : vector<16x1xf32> to vector<16x8xf32>
    %65 = arith.subf %56, %64 : vector<16x8xf32>
    %66 = math.exp %65 : vector<16x8xf32>
    %c1_36 = arith.constant 1 : index
    %c0_37 = arith.constant 0 : index
    %c0_38 = arith.constant 0 : index
    %67 = vector.load %arg20[%c1_36, %c0_37, %c0_38] : memref<4x16x1xf32, #tpu.memory_space<vmem>>, vector<1x16x1xf32>
    %68 = vector.shape_cast %67 : vector<1x16x1xf32> to vector<16x1xf32>
    %69 = arith.mulf %63, %68 : vector<16x1xf32>
    %cst_39 = arith.constant dense<0.000000e+00> : vector<16xf32>
    %70 = vector.multi_reduction <add>, %66, %cst_39 [1] : vector<16x8xf32> to vector<16xf32>
    %71 = vector.shape_cast %70 : vector<16xf32> to vector<16x1xf32>
    %72 = arith.addf %69, %71 : vector<16x1xf32>
    %c1_40 = arith.constant 1 : index
    %c0_41 = arith.constant 0 : index
    %c0_42 = arith.constant 0 : index
    %73 = vector.load %arg20[%c1_40, %c0_41, %c0_42] : memref<4x16x1xf32, #tpu.memory_space<vmem>>, vector<1x16x1xf32>
    %74 = vector.shape_cast %73 : vector<1x16x1xf32> to vector<16x1xf32>
    %75 = vector.shape_cast %72 : vector<16x1xf32> to vector<1x16x1xf32>
    tpu.vector_store %arg20[%c1_40, %c0_41, %c0_42], %75 {strides = array<i32>} : memref<4x16x1xf32, #tpu.memory_space<vmem>>, vector<1x16x1xf32>,
    %76 = arith.truncf %66 : vector<16x8xf32> to vector<16x8xbf16>
    %cst_43 = arith.constant dense<0.000000e+00> : vector<16x32xf32>
    %77 = tpu.matmul %76, %55, %cst_43 {dimension_numbers = #tpu.dot_dimension_numbers<[1], [0], [0], [1], [0, 0, 1, 1], [], []>} : vector<16x8xbf16>, vector<8x32xbf16>, vector<16x32xf32> -> vector<16x32xf32>
    %c0_44 = arith.constant 0 : index
    %c32 = arith.constant 32 : index
    %78 = vector.load %arg21[%c0_44, %c32] : memref<16x128xf32, #tpu.memory_space<vmem>>, vector<16x32xf32>
    %79 = vector.broadcast %63 : vector<16x1xf32> to vector<16x32xf32>
    %80 = arith.mulf %79, %78 : vector<16x32xf32>
    %81 = arith.addf %80, %77 : vector<16x32xf32>
    %c0_45 = arith.constant 0 : index
    %c32_46 = arith.constant 32 : index
    %82 = vector.load %arg21[%c0_45, %c32_46] : memref<16x128xf32, #tpu.memory_space<vmem>>, vector<16x32xf32>
    tpu.vector_store %arg21[%c0_45, %c32_46], %81 {strides = array<i32>} : memref<16x128xf32, #tpu.memory_space<vmem>>, vector<16x32xf32>,
    %c1_47 = arith.constant 1 : index
    %c0_48 = arith.constant 0 : index
    %c0_49 = arith.constant 0 : index
    %83 = vector.load %arg19[%c1_47, %c0_48, %c0_49] : memref<4x16x1xf32, #tpu.memory_space<vmem>>, vector<1x16x1xf32>
    %84 = vector.shape_cast %83 : vector<1x16x1xf32> to vector<16x1xf32>
    %85 = vector.shape_cast %61 : vector<16x1xf32> to vector<1x16x1xf32>
    tpu.vector_store %arg19[%c1_47, %c0_48, %c0_49], %85 {strides = array<i32>} : memref<4x16x1xf32, #tpu.memory_space<vmem>>, vector<1x16x1xf32>,
    %86 = vector.extract_strided_slice %17 {offsets = [0, 64], sizes = [16, 32], strides = [1, 1]} : vector<16x128xf32> to vector<16x32xf32>
    %87 = arith.truncf %86 : vector<16x32xf32> to vector<16x32xbf16>
    %88 = vector.extract_strided_slice %14 {offsets = [0, 64], sizes = [8, 32], strides = [1, 1]} : vector<8x128xbf16> to vector<8x32xbf16>
    %89 = vector.extract_strided_slice %16 {offsets = [0, 64], sizes = [8, 32], strides = [1, 1]} : vector<8x128xbf16> to vector<8x32xbf16>
    %cst_50 = arith.constant dense<0.000000e+00> : vector<16x8xf32>
    %90 = tpu.matmul %87, %88, %cst_50 {dimension_numbers = #tpu.dot_dimension_numbers<[1], [1], [0], [0], [0, 0, 1, 0], [], []>} : vector<16x32xbf16>, vector<8x32xbf16>, vector<16x8xf32> -> vector<16x8xf32>
    %c2 = arith.constant 2 : index
    %c0_51 = arith.constant 0 : index
    %c0_52 = arith.constant 0 : index
    %91 = vector.load %arg19[%c2, %c0_51, %c0_52] : memref<4x16x1xf32, #tpu.memory_space<vmem>>, vector<1x16x1xf32>
    %92 = vector.shape_cast %91 : vector<1x16x1xf32> to vector<16x1xf32>
    %cst_53 = arith.constant dense<0xFF800000> : vector<16xf32>
    %93 = vector.multi_reduction <maximumf>, %90, %cst_53 [1] : vector<16x8xf32> to vector<16xf32>
    %94 = vector.shape_cast %93 : vector<16xf32> to vector<16x1xf32>
    %95 = arith.maximumf %92, %94 : vector<16x1xf32>
    %96 = arith.subf %92, %95 : vector<16x1xf32>
    %97 = math.exp %96 : vector<16x1xf32>
    %98 = vector.broadcast %95 : vector<16x1xf32> to vector<16x8xf32>
    %99 = arith.subf %90, %98 : vector<16x8xf32>
    %100 = math.exp %99 : vector<16x8xf32>
    %c2_54 = arith.constant 2 : index
    %c0_55 = arith.constant 0 : index
    %c0_56 = arith.constant 0 : index
    %101 = vector.load %arg20[%c2_54, %c0_55, %c0_56] : memref<4x16x1xf32, #tpu.memory_space<vmem>>, vector<1x16x1xf32>
    %102 = vector.shape_cast %101 : vector<1x16x1xf32> to vector<16x1xf32>
    %103 = arith.mulf %97, %102 : vector<16x1xf32>
    %cst_57 = arith.constant dense<0.000000e+00> : vector<16xf32>
    %104 = vector.multi_reduction <add>, %100, %cst_57 [1] : vector<16x8xf32> to vector<16xf32>
    %105 = vector.shape_cast %104 : vector<16xf32> to vector<16x1xf32>
    %106 = arith.addf %103, %105 : vector<16x1xf32>
    %c2_58 = arith.constant 2 : index
    %c0_59 = arith.constant 0 : index
    %c0_60 = arith.constant 0 : index
    %107 = vector.load %arg20[%c2_58, %c0_59, %c0_60] : memref<4x16x1xf32, #tpu.memory_space<vmem>>, vector<1x16x1xf32>
    %108 = vector.shape_cast %107 : vector<1x16x1xf32> to vector<16x1xf32>
    %109 = vector.shape_cast %106 : vector<16x1xf32> to vector<1x16x1xf32>
    tpu.vector_store %arg20[%c2_58, %c0_59, %c0_60], %109 {strides = array<i32>} : memref<4x16x1xf32, #tpu.memory_space<vmem>>, vector<1x16x1xf32>,
    %110 = arith.truncf %100 : vector<16x8xf32> to vector<16x8xbf16>
    %cst_61 = arith.constant dense<0.000000e+00> : vector<16x32xf32>
    %111 = tpu.matmul %110, %89, %cst_61 {dimension_numbers = #tpu.dot_dimension_numbers<[1], [0], [0], [1], [0, 0, 1, 1], [], []>} : vector<16x8xbf16>, vector<8x32xbf16>, vector<16x32xf32> -> vector<16x32xf32>
    %c0_62 = arith.constant 0 : index
    %c64 = arith.constant 64 : index
    %112 = vector.load %arg21[%c0_62, %c64] : memref<16x128xf32, #tpu.memory_space<vmem>>, vector<16x32xf32>
    %113 = vector.broadcast %97 : vector<16x1xf32> to vector<16x32xf32>
    %114 = arith.mulf %113, %112 : vector<16x32xf32>
    %115 = arith.addf %114, %111 : vector<16x32xf32>
    %c0_63 = arith.constant 0 : index
    %c64_64 = arith.constant 64 : index
    %116 = vector.load %arg21[%c0_63, %c64_64] : memref<16x128xf32, #tpu.memory_space<vmem>>, vector<16x32xf32>
    tpu.vector_store %arg21[%c0_63, %c64_64], %115 {strides = array<i32>} : memref<16x128xf32, #tpu.memory_space<vmem>>, vector<16x32xf32>,
    %c2_65 = arith.constant 2 : index
    %c0_66 = arith.constant 0 : index
    %c0_67 = arith.constant 0 : index
    %117 = vector.load %arg19[%c2_65, %c0_66, %c0_67] : memref<4x16x1xf32, #tpu.memory_space<vmem>>, vector<1x16x1xf32>
    %118 = vector.shape_cast %117 : vector<1x16x1xf32> to vector<16x1xf32>
    %119 = vector.shape_cast %95 : vector<16x1xf32> to vector<1x16x1xf32>
    tpu.vector_store %arg19[%c2_65, %c0_66, %c0_67], %119 {strides = array<i32>} : memref<4x16x1xf32, #tpu.memory_space<vmem>>, vector<1x16x1xf32>,
    %120 = vector.extract_strided_slice %17 {offsets = [0, 96], sizes = [16, 32], strides = [1, 1]} : vector<16x128xf32> to vector<16x32xf32>
    %121 = arith.truncf %120 : vector<16x32xf32> to vector<16x32xbf16>
    %122 = vector.extract_strided_slice %14 {offsets = [0, 96], sizes = [8, 32], strides = [1, 1]} : vector<8x128xbf16> to vector<8x32xbf16>
    %123 = vector.extract_strided_slice %16 {offsets = [0, 96], sizes = [8, 32], strides = [1, 1]} : vector<8x128xbf16> to vector<8x32xbf16>
    %cst_68 = arith.constant dense<0.000000e+00> : vector<16x8xf32>
    %124 = tpu.matmul %121, %122, %cst_68 {dimension_numbers = #tpu.dot_dimension_numbers<[1], [1], [0], [0], [0, 0, 1, 0], [], []>} : vector<16x32xbf16>, vector<8x32xbf16>, vector<16x8xf32> -> vector<16x8xf32>
    %c3 = arith.constant 3 : index
    %c0_69 = arith.constant 0 : index
    %c0_70 = arith.constant 0 : index
    %125 = vector.load %arg19[%c3, %c0_69, %c0_70] : memref<4x16x1xf32, #tpu.memory_space<vmem>>, vector<1x16x1xf32>
    %126 = vector.shape_cast %125 : vector<1x16x1xf32> to vector<16x1xf32>
    %cst_71 = arith.constant dense<0xFF800000> : vector<16xf32>
    %127 = vector.multi_reduction <maximumf>, %124, %cst_71 [1] : vector<16x8xf32> to vector<16xf32>
    %128 = vector.shape_cast %127 : vector<16xf32> to vector<16x1xf32>
    %129 = arith.maximumf %126, %128 : vector<16x1xf32>
    %130 = arith.subf %126, %129 : vector<16x1xf32>
    %131 = math.exp %130 : vector<16x1xf32>
    %132 = vector.broadcast %129 : vector<16x1xf32> to vector<16x8xf32>
    %133 = arith.subf %124, %132 : vector<16x8xf32>
    %134 = math.exp %133 : vector<16x8xf32>
    %c3_72 = arith.constant 3 : index
    %c0_73 = arith.constant 0 : index
    %c0_74 = arith.constant 0 : index
    %135 = vector.load %arg20[%c3_72, %c0_73, %c0_74] : memref<4x16x1xf32, #tpu.memory_space<vmem>>, vector<1x16x1xf32>
    %136 = vector.shape_cast %135 : vector<1x16x1xf32> to vector<16x1xf32>
    %137 = arith.mulf %131, %136 : vector<16x1xf32>
    %cst_75 = arith.constant dense<0.000000e+00> : vector<16xf32>
    %138 = vector.multi_reduction <add>, %134, %cst_75 [1] : vector<16x8xf32> to vector<16xf32>
    %139 = vector.shape_cast %138 : vector<16xf32> to vector<16x1xf32>
    %140 = arith.addf %137, %139 : vector<16x1xf32>
    %c3_76 = arith.constant 3 : index
    %c0_77 = arith.constant 0 : index
    %c0_78 = arith.constant 0 : index
    %141 = vector.load %arg20[%c3_76, %c0_77, %c0_78] : memref<4x16x1xf32, #tpu.memory_space<vmem>>, vector<1x16x1xf32>
    %142 = vector.shape_cast %141 : vector<1x16x1xf32> to vector<16x1xf32>
    %143 = vector.shape_cast %140 : vector<16x1xf32> to vector<1x16x1xf32>
    tpu.vector_store %arg20[%c3_76, %c0_77, %c0_78], %143 {strides = array<i32>} : memref<4x16x1xf32, #tpu.memory_space<vmem>>, vector<1x16x1xf32>,
    %144 = arith.truncf %134 : vector<16x8xf32> to vector<16x8xbf16>
    %cst_79 = arith.constant dense<0.000000e+00> : vector<16x32xf32>
    %145 = tpu.matmul %144, %123, %cst_79 {dimension_numbers = #tpu.dot_dimension_numbers<[1], [0], [0], [1], [0, 0, 1, 1], [], []>} : vector<16x8xbf16>, vector<8x32xbf16>, vector<16x32xf32> -> vector<16x32xf32>
    %c0_80 = arith.constant 0 : index
    %c96 = arith.constant 96 : index
    %146 = vector.load %arg21[%c0_80, %c96] : memref<16x128xf32, #tpu.memory_space<vmem>>, vector<16x32xf32>
    %147 = vector.broadcast %131 : vector<16x1xf32> to vector<16x32xf32>
    %148 = arith.mulf %147, %146 : vector<16x32xf32>
    %149 = arith.addf %148, %145 : vector<16x32xf32>
    %c0_81 = arith.constant 0 : index
    %c96_82 = arith.constant 96 : index
    %150 = vector.load %arg21[%c0_81, %c96_82] : memref<16x128xf32, #tpu.memory_space<vmem>>, vector<16x32xf32>
    tpu.vector_store %arg21[%c0_81, %c96_82], %149 {strides = array<i32>} : memref<16x128xf32, #tpu.memory_space<vmem>>, vector<16x32xf32>,
    %c3_83 = arith.constant 3 : index
    %c0_84 = arith.constant 0 : index
    %c0_85 = arith.constant 0 : index
    %151 = vector.load %arg19[%c3_83, %c0_84, %c0_85] : memref<4x16x1xf32, #tpu.memory_space<vmem>>, vector<1x16x1xf32>
    %152 = vector.shape_cast %151 : vector<1x16x1xf32> to vector<16x1xf32>
    %153 = vector.shape_cast %129 : vector<16x1xf32> to vector<1x16x1xf32>
    tpu.vector_store %arg19[%c3_83, %c0_84, %c0_85], %153 {strides = array<i32>} : memref<4x16x1xf32, #tpu.memory_space<vmem>>, vector<1x16x1xf32>,
    %c0_i32_86 = arith.constant 0 : i32
    %154 = arith.cmpi eq, %arg2, %c0_i32_86 : i32
    %155 = arith.extui %154 : i1 to i32
    %c0_i32_87 = arith.constant 0 : i32
    %156 = arith.cmpi ne, %155, %c0_i32_87 : i32
    scf.if %156 {
      %c0_88 = arith.constant 0 : index
      %c0_89 = arith.constant 0 : index
      %157 = vector.load %arg21[%c0_88, %c0_89] : memref<16x128xf32, #tpu.memory_space<vmem>>, vector<16x32xf32>
      %c0_90 = arith.constant 0 : index
      %c0_91 = arith.constant 0 : index
      %c0_92 = arith.constant 0 : index
      %158 = vector.load %arg20[%c0_90, %c0_91, %c0_92] : memref<4x16x1xf32, #tpu.memory_space<vmem>>, vector<1x16x1xf32>
      %159 = vector.shape_cast %158 : vector<1x16x1xf32> to vector<16x1xf32>
      %160 = tpu.reciprocal %159 {approx = true} : vector<16x1xf32> -> vector<16x1xf32>
      %161 = vector.broadcast %160 : vector<16x1xf32> to vector<16x32xf32>
      %162 = arith.mulf %157, %161 : vector<16x32xf32>
      %c0_93 = arith.constant 0 : index
      %c32_94 = arith.constant 32 : index
      %163 = vector.load %arg21[%c0_93, %c32_94] : memref<16x128xf32, #tpu.memory_space<vmem>>, vector<16x32xf32>
      %c1_95 = arith.constant 1 : index
      %c0_96 = arith.constant 0 : index
      %c0_97 = arith.constant 0 : index
      %164 = vector.load %arg20[%c1_95, %c0_96, %c0_97] : memref<4x16x1xf32, #tpu.memory_space<vmem>>, vector<1x16x1xf32>
      %165 = vector.shape_cast %164 : vector<1x16x1xf32> to vector<16x1xf32>
      %166 = tpu.reciprocal %165 {approx = true} : vector<16x1xf32> -> vector<16x1xf32>
      %167 = vector.broadcast %166 : vector<16x1xf32> to vector<16x32xf32>
      %168 = arith.mulf %163, %167 : vector<16x32xf32>
      %c0_98 = arith.constant 0 : index
      %c64_99 = arith.constant 64 : index
      %169 = vector.load %arg21[%c0_98, %c64_99] : memref<16x128xf32, #tpu.memory_space<vmem>>, vector<16x32xf32>
      %c2_100 = arith.constant 2 : index
      %c0_101 = arith.constant 0 : index
      %c0_102 = arith.constant 0 : index
      %170 = vector.load %arg20[%c2_100, %c0_101, %c0_102] : memref<4x16x1xf32, #tpu.memory_space<vmem>>, vector<1x16x1xf32>
      %171 = vector.shape_cast %170 : vector<1x16x1xf32> to vector<16x1xf32>
      %172 = tpu.reciprocal %171 {approx = true} : vector<16x1xf32> -> vector<16x1xf32>
      %173 = vector.broadcast %172 : vector<16x1xf32> to vector<16x32xf32>
      %174 = arith.mulf %169, %173 : vector<16x32xf32>
      %c0_103 = arith.constant 0 : index
      %c96_104 = arith.constant 96 : index
      %175 = vector.load %arg21[%c0_103, %c96_104] : memref<16x128xf32, #tpu.memory_space<vmem>>, vector<16x32xf32>
      %c3_105 = arith.constant 3 : index
      %c0_106 = arith.constant 0 : index
      %c0_107 = arith.constant 0 : index
      %176 = vector.load %arg20[%c3_105, %c0_106, %c0_107] : memref<4x16x1xf32, #tpu.memory_space<vmem>>, vector<1x16x1xf32>
      %177 = vector.shape_cast %176 : vector<1x16x1xf32> to vector<16x1xf32>
      %178 = tpu.reciprocal %177 {approx = true} : vector<16x1xf32> -> vector<16x1xf32>
      %179 = vector.broadcast %178 : vector<16x1xf32> to vector<16x32xf32>
      %180 = arith.mulf %175, %179 : vector<16x32xf32>
      %181 = tpu.concatenate %162, %168, %174, %180 in 1 : vector<16x32xf32>, vector<16x32xf32>, vector<16x32xf32>, vector<16x32xf32> -> vector<16x128xf32>
      %182 = arith.truncf %181 : vector<16x128xf32> to vector<16x128xbf16>
      %c0_108 = arith.constant 0 : index
      %c0_109 = arith.constant 0 : index
      %183 = vector.load %arg9[%c0_108, %c0_109] : memref<128x128xbf16, #tpu.memory_space<vmem>>, vector<128x128xbf16>
      %cst_110 = arith.constant dense<0.000000e+00> : vector<16x128xf32>
      %184 = tpu.matmul %182, %183, %cst_110 {dimension_numbers = #tpu.dot_dimension_numbers<[1], [0], [0], [1], [0, 0, 1, 1], [], []>} : vector<16x128xbf16>, vector<128x128xbf16>, vector<16x128xf32> -> vector<16x128xf32>
      %c0_111 = arith.constant 0 : index
      %c0_112 = arith.constant 0 : index
      %185 = vector.load %arg10[%c0_111, %c0_112] : memref<1x128xf32, #tpu.memory_space<vmem>>, vector<1x128xf32>
      %186 = vector.broadcast %185 : vector<1x128xf32> to vector<16x128xf32>
      %187 = arith.addf %184, %186 : vector<16x128xf32>
      %188 = arith.addf %1, %187 : vector<16x128xf32>
      %c0_113 = arith.constant 0 : index
      %c0_114 = arith.constant 0 : index
      %189 = vector.load %arg11[%c0_113, %c0_114] : memref<1x128xf32, #tpu.memory_space<vmem>>, vector<1x128xf32>
      %c0_115 = arith.constant 0 : index
      %c0_116 = arith.constant 0 : index
      %190 = vector.load %arg12[%c0_115, %c0_116] : memref<1x128xf32, #tpu.memory_space<vmem>>, vector<1x128xf32>
      %cst_117 = arith.constant dense<0.000000e+00> : vector<16xf32>
      %191 = vector.multi_reduction <add>, %188, %cst_117 [1] : vector<16x128xf32> to vector<16xf32>
      %192 = vector.shape_cast %191 : vector<16xf32> to vector<16x1xf32>
      %cst_118 = arith.constant 1.280000e+02 : f32
      %193 = vector.broadcast %cst_118 : f32 to vector<16x1xf32>
      %194 = arith.divf %192, %193 : vector<16x1xf32>
      %195 = vector.broadcast %194 : vector<16x1xf32> to vector<16x128xf32>
      %196 = arith.subf %188, %195 : vector<16x128xf32>
      %197 = arith.mulf %196, %196 : vector<16x128xf32>
      %cst_119 = arith.constant dense<0.000000e+00> : vector<16xf32>
      %198 = vector.multi_reduction <add>, %197, %cst_119 [1] : vector<16x128xf32> to vector<16xf32>
      %199 = vector.shape_cast %198 : vector<16xf32> to vector<16x1xf32>
      %cst_120 = arith.constant 1.280000e+02 : f32
      %200 = vector.broadcast %cst_120 : f32 to vector<16x1xf32>
      %201 = arith.divf %199, %200 : vector<16x1xf32>
      %cst_121 = arith.constant 9.99999974E-6 : f32
      %202 = vector.broadcast %cst_121 : f32 to vector<16x1xf32>
      %203 = arith.addf %201, %202 : vector<16x1xf32>
      %204 = math.rsqrt %203 : vector<16x1xf32>
      %205 = vector.broadcast %204 : vector<16x1xf32> to vector<16x128xf32>
      %206 = arith.mulf %196, %205 : vector<16x128xf32>
      %207 = vector.broadcast %189 : vector<1x128xf32> to vector<16x128xf32>
      %208 = arith.mulf %206, %207 : vector<16x128xf32>
      %209 = vector.broadcast %190 : vector<1x128xf32> to vector<16x128xf32>
      %210 = arith.addf %208, %209 : vector<16x128xf32>
      %211 = arith.truncf %210 : vector<16x128xf32> to vector<16x128xbf16>
      %c0_122 = arith.constant 0 : index
      %c0_123 = arith.constant 0 : index
      %c0_124 = arith.constant 0 : index
      %212 = vector.load %arg13[%c0_122, %c0_123, %c0_124] : memref<3x128x128xbf16, #tpu.memory_space<vmem>>, vector<1x128x128xbf16>
      %213 = vector.shape_cast %212 : vector<1x128x128xbf16> to vector<128x128xbf16>
      %cst_125 = arith.constant dense<0.000000e+00> : vector<16x128xf32>
      %214 = tpu.matmul %211, %213, %cst_125 {dimension_numbers = #tpu.dot_dimension_numbers<[1], [0], [0], [1], [0, 0, 1, 1], [], []>} : vector<16x128xbf16>, vector<128x128xbf16>, vector<16x128xf32> -> vector<16x128xf32>
      %c0_126 = arith.constant 0 : index
      %c0_127 = arith.constant 0 : index
      %c0_128 = arith.constant 0 : index
      %215 = vector.load %arg14[%c0_126, %c0_127, %c0_128] : memref<3x1x128xf32, #tpu.memory_space<vmem>>, vector<1x1x128xf32>
      %216 = vector.shape_cast %215 : vector<1x1x128xf32> to vector<1x128xf32>
      %217 = vector.broadcast %216 : vector<1x128xf32> to vector<16x128xf32>
      %218 = arith.addf %214, %217 : vector<16x128xf32>
      %cst_129 = arith.constant 0.000000e+00 : f32
      %219 = vector.broadcast %cst_129 : f32 to vector<16x128xf32>
      %220 = arith.maximumf %218, %219 : vector<16x128xf32>
      %221 = arith.truncf %220 : vector<16x128xf32> to vector<16x128xbf16>
      %c1_130 = arith.constant 1 : index
      %c0_131 = arith.constant 0 : index
      %c0_132 = arith.constant 0 : index
      %222 = vector.load %arg13[%c1_130, %c0_131, %c0_132] : memref<3x128x128xbf16, #tpu.memory_space<vmem>>, vector<1x128x128xbf16>
      %223 = vector.shape_cast %222 : vector<1x128x128xbf16> to vector<128x128xbf16>
      %cst_133 = arith.constant dense<0.000000e+00> : vector<16x128xf32>
      %224 = tpu.matmul %221, %223, %cst_133 {dimension_numbers = #tpu.dot_dimension_numbers<[1], [0], [0], [1], [0, 0, 1, 1], [], []>} : vector<16x128xbf16>, vector<128x128xbf16>, vector<16x128xf32> -> vector<16x128xf32>
      %c1_134 = arith.constant 1 : index
      %c0_135 = arith.constant 0 : index
      %c0_136 = arith.constant 0 : index
      %225 = vector.load %arg14[%c1_134, %c0_135, %c0_136] : memref<3x1x128xf32, #tpu.memory_space<vmem>>, vector<1x1x128xf32>
      %226 = vector.shape_cast %225 : vector<1x1x128xf32> to vector<1x128xf32>
      %227 = vector.broadcast %226 : vector<1x128xf32> to vector<16x128xf32>
      %228 = arith.addf %224, %227 : vector<16x128xf32>
      %cst_137 = arith.constant 0.000000e+00 : f32
      %229 = vector.broadcast %cst_137 : f32 to vector<16x128xf32>
      %230 = arith.maximumf %228, %229 : vector<16x128xf32>
      %231 = arith.truncf %230 : vector<16x128xf32> to vector<16x128xbf16>
      %c2_138 = arith.constant 2 : index
      %c0_139 = arith.constant 0 : index
      %c0_140 = arith.constant 0 : index
      %232 = vector.load %arg13[%c2_138, %c0_139, %c0_140] : memref<3x128x128xbf16, #tpu.memory_space<vmem>>, vector<1x128x128xbf16>
      %233 = vector.shape_cast %232 : vector<1x128x128xbf16> to vector<128x128xbf16>
      %cst_141 = arith.constant dense<0.000000e+00> : vector<16x128xf32>
      %234 = tpu.matmul %231, %233, %cst_141 {dimension_numbers = #tpu.dot_dimension_numbers<[1], [0], [0], [1], [0, 0, 1, 1], [], []>} : vector<16x128xbf16>, vector<128x128xbf16>, vector<16x128xf32> -> vector<16x128xf32>
      %c2_142 = arith.constant 2 : index
      %c0_143 = arith.constant 0 : index
      %c0_144 = arith.constant 0 : index
      %235 = vector.load %arg14[%c2_142, %c0_143, %c0_144] : memref<3x1x128xf32, #tpu.memory_space<vmem>>, vector<1x1x128xf32>
      %236 = vector.shape_cast %235 : vector<1x1x128xf32> to vector<1x128xf32>
      %237 = vector.broadcast %236 : vector<1x128xf32> to vector<16x128xf32>
      %238 = arith.addf %234, %237 : vector<16x128xf32>
      %cst_145 = arith.constant 0.000000e+00 : f32
      %239 = vector.broadcast %cst_145 : f32 to vector<16x128xf32>
      %240 = arith.maximumf %238, %239 : vector<16x128xf32>
      %241 = arith.addf %210, %240 : vector<16x128xf32>
      %c0_146 = arith.constant 0 : index
      %c0_147 = arith.constant 0 : index
      %242 = vector.load %arg15[%c0_146, %c0_147] : memref<1x128xf32, #tpu.memory_space<vmem>>, vector<1x128xf32>
      %c0_148 = arith.constant 0 : index
      %c0_149 = arith.constant 0 : index
      %243 = vector.load %arg16[%c0_148, %c0_149] : memref<1x128xf32, #tpu.memory_space<vmem>>, vector<1x128xf32>
      %cst_150 = arith.constant dense<0.000000e+00> : vector<16xf32>
      %244 = vector.multi_reduction <add>, %241, %cst_150 [1] : vector<16x128xf32> to vector<16xf32>
      %245 = vector.shape_cast %244 : vector<16xf32> to vector<16x1xf32>
      %cst_151 = arith.constant 1.280000e+02 : f32
      %246 = vector.broadcast %cst_151 : f32 to vector<16x1xf32>
      %247 = arith.divf %245, %246 : vector<16x1xf32>
      %248 = vector.broadcast %247 : vector<16x1xf32> to vector<16x128xf32>
      %249 = arith.subf %241, %248 : vector<16x128xf32>
      %250 = arith.mulf %249, %249 : vector<16x128xf32>
      %cst_152 = arith.constant dense<0.000000e+00> : vector<16xf32>
      %251 = vector.multi_reduction <add>, %250, %cst_152 [1] : vector<16x128xf32> to vector<16xf32>
      %252 = vector.shape_cast %251 : vector<16xf32> to vector<16x1xf32>
      %cst_153 = arith.constant 1.280000e+02 : f32
      %253 = vector.broadcast %cst_153 : f32 to vector<16x1xf32>
      %254 = arith.divf %252, %253 : vector<16x1xf32>
      %cst_154 = arith.constant 9.99999974E-6 : f32
      %255 = vector.broadcast %cst_154 : f32 to vector<16x1xf32>
      %256 = arith.addf %254, %255 : vector<16x1xf32>
      %257 = math.rsqrt %256 : vector<16x1xf32>
      %258 = vector.broadcast %257 : vector<16x1xf32> to vector<16x128xf32>
      %259 = arith.mulf %249, %258 : vector<16x128xf32>
      %260 = vector.broadcast %242 : vector<1x128xf32> to vector<16x128xf32>
      %261 = arith.mulf %259, %260 : vector<16x128xf32>
      %262 = vector.broadcast %243 : vector<1x128xf32> to vector<16x128xf32>
      %263 = arith.addf %261, %262 : vector<16x128xf32>
      %c0_155 = arith.constant 0 : index
      %c0_156 = arith.constant 0 : index
      %c0_157 = arith.constant 0 : index
      %264 = vector.load %arg17[%c0_155, %c0_156, %c0_157] : memref<1x16x128xf32, #tpu.memory_space<vmem>>, vector<1x16x128xf32>
      %265 = vector.shape_cast %264 : vector<1x16x128xf32> to vector<16x128xf32>
      %266 = vector.shape_cast %263 : vector<16x128xf32> to vector<1x16x128xf32>
      tpu.vector_store %arg17[%c0_155, %c0_156, %c0_157], %266 {strides = array<i32>} : memref<1x16x128xf32, #tpu.memory_space<vmem>>, vector<1x16x128xf32>,
    } else {
    }
    return
  }
  func.func @transform_0(%arg0: i32, %arg1: i32, %arg2: i32) -> (i32, i32, i32) {
    %c0_i32 = arith.constant 0 : i32
    %c0_i32_0 = arith.constant 0 : i32
    %c0_i32_1 = arith.constant 0 : i32
    return %c0_i32, %arg1, %c0_i32_0 : i32, i32, i32
  }
  func.func @transform_1(%arg0: i32, %arg1: i32, %arg2: i32) -> (i32, i32, i32) {
    %c0_i32 = arith.constant 0 : i32
    %c0_i32_0 = arith.constant 0 : i32
    return %arg0, %arg2, %c0_i32 : i32, i32, i32
  }
  func.func @transform_2(%arg0: i32, %arg1: i32, %arg2: i32) -> (i32, i32) {
    %c0_i32 = arith.constant 0 : i32
    %c0_i32_0 = arith.constant 0 : i32
    %c0_i32_1 = arith.constant 0 : i32
    return %c0_i32, %c0_i32_0 : i32, i32
  }
  func.func @transform_3(%arg0: i32, %arg1: i32, %arg2: i32) -> (i32, i32) {
    %c0_i32 = arith.constant 0 : i32
    %c0_i32_0 = arith.constant 0 : i32
    %c0_i32_1 = arith.constant 0 : i32
    return %c0_i32, %c0_i32_0 : i32, i32
  }
  func.func @transform_4(%arg0: i32, %arg1: i32, %arg2: i32) -> (i32, i32) {
    %c0_i32 = arith.constant 0 : i32
    %c0_i32_0 = arith.constant 0 : i32
    %c0_i32_1 = arith.constant 0 : i32
    return %c0_i32, %c0_i32_0 : i32, i32
  }
  func.func @transform_5(%arg0: i32, %arg1: i32, %arg2: i32) -> (i32, i32) {
    %c0_i32 = arith.constant 0 : i32
    %c0_i32_0 = arith.constant 0 : i32
    %c0_i32_1 = arith.constant 0 : i32
    return %c0_i32, %c0_i32_0 : i32, i32
  }
  func.func @transform_6(%arg0: i32, %arg1: i32, %arg2: i32) -> (i32, i32) {
    %c0_i32 = arith.constant 0 : i32
    %c0_i32_0 = arith.constant 0 : i32
    %c0_i32_1 = arith.constant 0 : i32
    return %c0_i32, %c0_i32_0 : i32, i32
  }
  func.func @transform_7(%arg0: i32, %arg1: i32, %arg2: i32) -> (i32, i32) {
    %c0_i32 = arith.constant 0 : i32
    %c0_i32_0 = arith.constant 0 : i32
    %c0_i32_1 = arith.constant 0 : i32
    return %c0_i32, %c0_i32_0 : i32, i32
  }
  func.func @transform_8(%arg0: i32, %arg1: i32, %arg2: i32) -> (i32, i32) {
    %c0_i32 = arith.constant 0 : i32
    %c0_i32_0 = arith.constant 0 : i32
    %c0_i32_1 = arith.constant 0 : i32
    return %c0_i32, %c0_i32_0 : i32, i32
  }
  func.func @transform_9(%arg0: i32, %arg1: i32, %arg2: i32) -> (i32, i32) {
    %c0_i32 = arith.constant 0 : i32
    %c0_i32_0 = arith.constant 0 : i32
    %c0_i32_1 = arith.constant 0 : i32
    return %c0_i32, %c0_i32_0 : i32, i32
  }
  func.func @transform_10(%arg0: i32, %arg1: i32, %arg2: i32) -> (i32, i32, i32) {
    %c0_i32 = arith.constant 0 : i32
    %c0_i32_0 = arith.constant 0 : i32
    %c0_i32_1 = arith.constant 0 : i32
    %c0_i32_2 = arith.constant 0 : i32
    return %c0_i32, %c0_i32_0, %c0_i32_1 : i32, i32, i32
  }
  func.func @transform_11(%arg0: i32, %arg1: i32, %arg2: i32) -> (i32, i32, i32) {
    %c0_i32 = arith.constant 0 : i32
    %c0_i32_0 = arith.constant 0 : i32
    %c0_i32_1 = arith.constant 0 : i32
    %c0_i32_2 = arith.constant 0 : i32
    return %c0_i32, %c0_i32_0, %c0_i32_1 : i32, i32, i32
  }
  func.func @transform_12(%arg0: i32, %arg1: i32, %arg2: i32) -> (i32, i32) {
    %c0_i32 = arith.constant 0 : i32
    %c0_i32_0 = arith.constant 0 : i32
    %c0_i32_1 = arith.constant 0 : i32
    return %c0_i32, %c0_i32_0 : i32, i32
  }
  func.func @transform_13(%arg0: i32, %arg1: i32, %arg2: i32) -> (i32, i32) {
    %c0_i32 = arith.constant 0 : i32
    %c0_i32_0 = arith.constant 0 : i32
    %c0_i32_1 = arith.constant 0 : i32
    return %c0_i32, %c0_i32_0 : i32, i32
  }
  func.func @transform_14(%arg0: i32, %arg1: i32, %arg2: i32) -> (i32, i32, i32) {
    %c0_i32 = arith.constant 0 : i32
    %c0_i32_0 = arith.constant 0 : i32
    return %arg0, %arg1, %c0_i32 : i32, i32, i32
  }
}

module attributes {stable_mosaic.version = 11 : i64} {
  func.func @_fused_mab_kernel(%arg0: i32, %arg1: i32, %arg2: i32, %arg3: memref<1x8x128xf32, #tpu.memory_space<vmem>>, %arg4: memref<1x16x128xf32, #tpu.memory_space<vmem>>, %arg5: memref<128x128xbf16, #tpu.memory_space<vmem>>, %arg6: memref<1x128xf32, #tpu.memory_space<vmem>>, %arg7: memref<128x256xbf16, #tpu.memory_space<vmem>>, %arg8: memref<1x256xf32, #tpu.memory_space<vmem>>, %arg9: memref<128x128xbf16, #tpu.memory_space<vmem>>, %arg10: memref<1x128xf32, #tpu.memory_space<vmem>>, %arg11: memref<1x128xf32, #tpu.memory_space<vmem>>, %arg12: memref<1x128xf32, #tpu.memory_space<vmem>>, %arg13: memref<3x128x128xbf16, #tpu.memory_space<vmem>>, %arg14: memref<3x1x128xf32, #tpu.memory_space<vmem>>, %arg15: memref<1x128xf32, #tpu.memory_space<vmem>>, %arg16: memref<1x128xf32, #tpu.memory_space<vmem>>, %arg17: memref<1x8x128xf32, #tpu.memory_space<vmem>>, %arg18: memref<8x128xf32, #tpu.memory_space<vmem>>, %arg19: memref<4x8x1xf32, #tpu.memory_space<vmem>>, %arg20: memref<4x8x1xf32, #tpu.memory_space<vmem>>, %arg21: memref<8x128xf32, #tpu.memory_space<vmem>>) attributes {dimension_semantics = [#tpu.dimension_semantics<parallel>, #tpu.dimension_semantics<parallel>, #tpu.dimension_semantics<arbitrary>], iteration_bounds = array<i64: 2, 1, 1>, scalar_prefetch = 0 : i64, scratch_operands = 4 : i64, tpu.core_type = #tpu.core_type<tc>, window_params = [{transform_indices = @transform_0, window_bounds = array<i64: 1, 8, 128>}, {transform_indices = @transform_1, window_bounds = array<i64: 1, 16, 128>}, {pipeline_mode = #tpu.pipeline_mode<synchronous>, transform_indices = @transform_2, window_bounds = array<i64: 128, 128>}, {pipeline_mode = #tpu.pipeline_mode<synchronous>, transform_indices = @transform_3, window_bounds = array<i64: 1, 128>}, {pipeline_mode = #tpu.pipeline_mode<synchronous>, transform_indices = @transform_4, window_bounds = array<i64: 128, 256>}, {pipeline_mode = #tpu.pipeline_mode<synchronous>, transform_indices = @transform_5, window_bounds = array<i64: 1, 256>}, {pipeline_mode = #tpu.pipeline_mode<synchronous>, transform_indices = @transform_6, window_bounds = array<i64: 128, 128>}, {pipeline_mode = #tpu.pipeline_mode<synchronous>, transform_indices = @transform_7, window_bounds = array<i64: 1, 128>}, {pipeline_mode = #tpu.pipeline_mode<synchronous>, transform_indices = @transform_8, window_bounds = array<i64: 1, 128>}, {pipeline_mode = #tpu.pipeline_mode<synchronous>, transform_indices = @transform_9, window_bounds = array<i64: 1, 128>}, {pipeline_mode = #tpu.pipeline_mode<synchronous>, transform_indices = @transform_10, window_bounds = array<i64: 3, 128, 128>}, {pipeline_mode = #tpu.pipeline_mode<synchronous>, transform_indices = @transform_11, window_bounds = array<i64: 3, 1, 128>}, {pipeline_mode = #tpu.pipeline_mode<synchronous>, transform_indices = @transform_12, window_bounds = array<i64: 1, 128>}, {pipeline_mode = #tpu.pipeline_mode<synchronous>, transform_indices = @transform_13, window_bounds = array<i64: 1, 128>}, {transform_indices = @transform_14, window_bounds = array<i64: 1, 8, 128>}]} {
    %c0 = arith.constant 0 : index
    %c0_0 = arith.constant 0 : index
    %c0_1 = arith.constant 0 : index
    %0 = vector.load %arg3[%c0, %c0_0, %c0_1] : memref<1x8x128xf32, #tpu.memory_space<vmem>>, vector<1x8x128xf32>
    %1 = vector.shape_cast %0 : vector<1x8x128xf32> to vector<8x128xf32>
    %c0_i32 = arith.constant 0 : i32
    %2 = arith.cmpi eq, %arg2, %c0_i32 : i32
    %3 = arith.extui %2 : i1 to i32
    %c0_i32_2 = arith.constant 0 : i32
    %4 = arith.cmpi ne, %3, %c0_i32_2 : i32
    scf.if %4 {
      %157 = arith.truncf %1 : vector<8x128xf32> to vector<8x128xbf16>
      %c0_88 = arith.constant 0 : index
      %c0_89 = arith.constant 0 : index
      %158 = vector.load %arg5[%c0_88, %c0_89] : memref<128x128xbf16, #tpu.memory_space<vmem>>, vector<128x128xbf16>
      %cst_90 = arith.constant dense<0.000000e+00> : vector<8x128xf32>
      %159 = tpu.matmul %157, %158, %cst_90 {dimension_numbers = #tpu.dot_dimension_numbers<[1], [0], [0], [1], [0, 0, 1, 1], [], []>} : vector<8x128xbf16>, vector<128x128xbf16>, vector<8x128xf32> -> vector<8x128xf32>
      %c0_91 = arith.constant 0 : index
      %c0_92 = arith.constant 0 : index
      %160 = vector.load %arg6[%c0_91, %c0_92] : memref<1x128xf32, #tpu.memory_space<vmem>>, vector<1x128xf32>
      %161 = vector.broadcast %160 : vector<1x128xf32> to vector<8x128xf32>
      %162 = arith.addf %159, %161 : vector<8x128xf32>
      %cst_93 = arith.constant 0.176776692 : f32
      %163 = vector.broadcast %cst_93 : f32 to vector<8x128xf32>
      %164 = arith.mulf %162, %163 : vector<8x128xf32>
      %c0_94 = arith.constant 0 : index
      %c0_95 = arith.constant 0 : index
      %165 = vector.load %arg18[%c0_94, %c0_95] : memref<8x128xf32, #tpu.memory_space<vmem>>, vector<8x128xf32>
      tpu.vector_store %arg18[%c0_94, %c0_95], %164 {strides = array<i32>} : memref<8x128xf32, #tpu.memory_space<vmem>>, vector<8x128xf32>,
      %cst_96 = arith.constant 0xFF800000 : f32
      %166 = vector.broadcast %cst_96 : f32 to vector<4x8x1xf32>
      %c0_97 = arith.constant 0 : index
      %c0_98 = arith.constant 0 : index
      %c0_99 = arith.constant 0 : index
      %167 = vector.load %arg19[%c0_97, %c0_98, %c0_99] : memref<4x8x1xf32, #tpu.memory_space<vmem>>, vector<4x8x1xf32>
      tpu.vector_store %arg19[%c0_97, %c0_98, %c0_99], %166 {strides = array<i32>} : memref<4x8x1xf32, #tpu.memory_space<vmem>>, vector<4x8x1xf32>,
      %cst_100 = arith.constant 0.000000e+00 : f32
      %168 = vector.broadcast %cst_100 : f32 to vector<4x8x1xf32>
      %c0_101 = arith.constant 0 : index
      %c0_102 = arith.constant 0 : index
      %c0_103 = arith.constant 0 : index
      %169 = vector.load %arg20[%c0_101, %c0_102, %c0_103] : memref<4x8x1xf32, #tpu.memory_space<vmem>>, vector<4x8x1xf32>
      tpu.vector_store %arg20[%c0_101, %c0_102, %c0_103], %168 {strides = array<i32>} : memref<4x8x1xf32, #tpu.memory_space<vmem>>, vector<4x8x1xf32>,
      %cst_104 = arith.constant 0.000000e+00 : f32
      %170 = vector.broadcast %cst_104 : f32 to vector<8x128xf32>
      %c0_105 = arith.constant 0 : index
      %c0_106 = arith.constant 0 : index
      %171 = vector.load %arg21[%c0_105, %c0_106] : memref<8x128xf32, #tpu.memory_space<vmem>>, vector<8x128xf32>
      tpu.vector_store %arg21[%c0_105, %c0_106], %170 {strides = array<i32>} : memref<8x128xf32, #tpu.memory_space<vmem>>, vector<8x128xf32>,
    } else {
    }
    %c0_3 = arith.constant 0 : index
    %c0_4 = arith.constant 0 : index
    %c0_5 = arith.constant 0 : index
    %5 = vector.load %arg4[%c0_3, %c0_4, %c0_5] : memref<1x16x128xf32, #tpu.memory_space<vmem>>, vector<1x16x128xf32>
    %6 = vector.shape_cast %5 : vector<1x16x128xf32> to vector<16x128xf32>
    %7 = arith.truncf %6 : vector<16x128xf32> to vector<16x128xbf16>
    %c0_6 = arith.constant 0 : index
    %c0_7 = arith.constant 0 : index
    %8 = vector.load %arg7[%c0_6, %c0_7] : memref<128x256xbf16, #tpu.memory_space<vmem>>, vector<128x256xbf16>
    %cst = arith.constant dense<0.000000e+00> : vector<16x256xf32>
    %9 = tpu.matmul %7, %8, %cst {dimension_numbers = #tpu.dot_dimension_numbers<[1], [0], [0], [1], [0, 0, 1, 1], [], []>} : vector<16x128xbf16>, vector<128x256xbf16>, vector<16x256xf32> -> vector<16x256xf32>
    %c0_8 = arith.constant 0 : index
    %c0_9 = arith.constant 0 : index
    %10 = vector.load %arg8[%c0_8, %c0_9] : memref<1x256xf32, #tpu.memory_space<vmem>>, vector<1x256xf32>
    %11 = vector.broadcast %10 : vector<1x256xf32> to vector<16x256xf32>
    %12 = arith.addf %9, %11 : vector<16x256xf32>
    %13 = vector.extract_strided_slice %12 {offsets = [0, 0], sizes = [16, 128], strides = [1, 1]} : vector<16x256xf32> to vector<16x128xf32>
    %14 = arith.truncf %13 : vector<16x128xf32> to vector<16x128xbf16>
    %15 = vector.extract_strided_slice %12 {offsets = [0, 128], sizes = [16, 128], strides = [1, 1]} : vector<16x256xf32> to vector<16x128xf32>
    %16 = arith.truncf %15 : vector<16x128xf32> to vector<16x128xbf16>
    %c0_10 = arith.constant 0 : index
    %c0_11 = arith.constant 0 : index
    %17 = vector.load %arg18[%c0_10, %c0_11] : memref<8x128xf32, #tpu.memory_space<vmem>>, vector<8x128xf32>
    %18 = vector.extract_strided_slice %17 {offsets = [0, 0], sizes = [8, 32], strides = [1, 1]} : vector<8x128xf32> to vector<8x32xf32>
    %19 = arith.truncf %18 : vector<8x32xf32> to vector<8x32xbf16>
    %20 = vector.extract_strided_slice %14 {offsets = [0, 0], sizes = [16, 32], strides = [1, 1]} : vector<16x128xbf16> to vector<16x32xbf16>
    %21 = vector.extract_strided_slice %16 {offsets = [0, 0], sizes = [16, 32], strides = [1, 1]} : vector<16x128xbf16> to vector<16x32xbf16>
    %cst_12 = arith.constant dense<0.000000e+00> : vector<8x16xf32>
    %22 = tpu.matmul %19, %20, %cst_12 {dimension_numbers = #tpu.dot_dimension_numbers<[1], [1], [0], [0], [0, 0, 1, 0], [], []>} : vector<8x32xbf16>, vector<16x32xbf16>, vector<8x16xf32> -> vector<8x16xf32>
    %c0_13 = arith.constant 0 : index
    %c0_14 = arith.constant 0 : index
    %c0_15 = arith.constant 0 : index
    %23 = vector.load %arg19[%c0_13, %c0_14, %c0_15] : memref<4x8x1xf32, #tpu.memory_space<vmem>>, vector<1x8x1xf32>
    %24 = vector.shape_cast %23 : vector<1x8x1xf32> to vector<8x1xf32>
    %cst_16 = arith.constant dense<0xFF800000> : vector<8xf32>
    %25 = vector.multi_reduction <maximumf>, %22, %cst_16 [1] : vector<8x16xf32> to vector<8xf32>
    %26 = vector.shape_cast %25 : vector<8xf32> to vector<8x1xf32>
    %27 = arith.maximumf %24, %26 : vector<8x1xf32>
    %28 = arith.subf %24, %27 : vector<8x1xf32>
    %29 = math.exp %28 : vector<8x1xf32>
    %30 = vector.broadcast %27 : vector<8x1xf32> to vector<8x16xf32>
    %31 = arith.subf %22, %30 : vector<8x16xf32>
    %32 = math.exp %31 : vector<8x16xf32>
    %c0_17 = arith.constant 0 : index
    %c0_18 = arith.constant 0 : index
    %c0_19 = arith.constant 0 : index
    %33 = vector.load %arg20[%c0_17, %c0_18, %c0_19] : memref<4x8x1xf32, #tpu.memory_space<vmem>>, vector<1x8x1xf32>
    %34 = vector.shape_cast %33 : vector<1x8x1xf32> to vector<8x1xf32>
    %35 = arith.mulf %29, %34 : vector<8x1xf32>
    %cst_20 = arith.constant dense<0.000000e+00> : vector<8xf32>
    %36 = vector.multi_reduction <add>, %32, %cst_20 [1] : vector<8x16xf32> to vector<8xf32>
    %37 = vector.shape_cast %36 : vector<8xf32> to vector<8x1xf32>
    %38 = arith.addf %35, %37 : vector<8x1xf32>
    %c0_21 = arith.constant 0 : index
    %c0_22 = arith.constant 0 : index
    %c0_23 = arith.constant 0 : index
    %39 = vector.load %arg20[%c0_21, %c0_22, %c0_23] : memref<4x8x1xf32, #tpu.memory_space<vmem>>, vector<1x8x1xf32>
    %40 = vector.shape_cast %39 : vector<1x8x1xf32> to vector<8x1xf32>
    %41 = vector.shape_cast %38 : vector<8x1xf32> to vector<1x8x1xf32>
    tpu.vector_store %arg20[%c0_21, %c0_22, %c0_23], %41 {strides = array<i32>} : memref<4x8x1xf32, #tpu.memory_space<vmem>>, vector<1x8x1xf32>,
    %42 = arith.truncf %32 : vector<8x16xf32> to vector<8x16xbf16>
    %cst_24 = arith.constant dense<0.000000e+00> : vector<8x32xf32>
    %43 = tpu.matmul %42, %21, %cst_24 {dimension_numbers = #tpu.dot_dimension_numbers<[1], [0], [0], [1], [0, 0, 1, 1], [], []>} : vector<8x16xbf16>, vector<16x32xbf16>, vector<8x32xf32> -> vector<8x32xf32>
    %c0_25 = arith.constant 0 : index
    %c0_26 = arith.constant 0 : index
    %44 = vector.load %arg21[%c0_25, %c0_26] : memref<8x128xf32, #tpu.memory_space<vmem>>, vector<8x32xf32>
    %45 = vector.broadcast %29 : vector<8x1xf32> to vector<8x32xf32>
    %46 = arith.mulf %45, %44 : vector<8x32xf32>
    %47 = arith.addf %46, %43 : vector<8x32xf32>
    %c0_27 = arith.constant 0 : index
    %c0_28 = arith.constant 0 : index
    %48 = vector.load %arg21[%c0_27, %c0_28] : memref<8x128xf32, #tpu.memory_space<vmem>>, vector<8x32xf32>
    tpu.vector_store %arg21[%c0_27, %c0_28], %47 {strides = array<i32>} : memref<8x128xf32, #tpu.memory_space<vmem>>, vector<8x32xf32>,
    %c0_29 = arith.constant 0 : index
    %c0_30 = arith.constant 0 : index
    %c0_31 = arith.constant 0 : index
    %49 = vector.load %arg19[%c0_29, %c0_30, %c0_31] : memref<4x8x1xf32, #tpu.memory_space<vmem>>, vector<1x8x1xf32>
    %50 = vector.shape_cast %49 : vector<1x8x1xf32> to vector<8x1xf32>
    %51 = vector.shape_cast %27 : vector<8x1xf32> to vector<1x8x1xf32>
    tpu.vector_store %arg19[%c0_29, %c0_30, %c0_31], %51 {strides = array<i32>} : memref<4x8x1xf32, #tpu.memory_space<vmem>>, vector<1x8x1xf32>,
    %52 = vector.extract_strided_slice %17 {offsets = [0, 32], sizes = [8, 32], strides = [1, 1]} : vector<8x128xf32> to vector<8x32xf32>
    %53 = arith.truncf %52 : vector<8x32xf32> to vector<8x32xbf16>
    %54 = vector.extract_strided_slice %14 {offsets = [0, 32], sizes = [16, 32], strides = [1, 1]} : vector<16x128xbf16> to vector<16x32xbf16>
    %55 = vector.extract_strided_slice %16 {offsets = [0, 32], sizes = [16, 32], strides = [1, 1]} : vector<16x128xbf16> to vector<16x32xbf16>
    %cst_32 = arith.constant dense<0.000000e+00> : vector<8x16xf32>
    %56 = tpu.matmul %53, %54, %cst_32 {dimension_numbers = #tpu.dot_dimension_numbers<[1], [1], [0], [0], [0, 0, 1, 0], [], []>} : vector<8x32xbf16>, vector<16x32xbf16>, vector<8x16xf32> -> vector<8x16xf32>
    %c1 = arith.constant 1 : index
    %c0_33 = arith.constant 0 : index
    %c0_34 = arith.constant 0 : index
    %57 = vector.load %arg19[%c1, %c0_33, %c0_34] : memref<4x8x1xf32, #tpu.memory_space<vmem>>, vector<1x8x1xf32>
    %58 = vector.shape_cast %57 : vector<1x8x1xf32> to vector<8x1xf32>
    %cst_35 = arith.constant dense<0xFF800000> : vector<8xf32>
    %59 = vector.multi_reduction <maximumf>, %56, %cst_35 [1] : vector<8x16xf32> to vector<8xf32>
    %60 = vector.shape_cast %59 : vector<8xf32> to vector<8x1xf32>
    %61 = arith.maximumf %58, %60 : vector<8x1xf32>
    %62 = arith.subf %58, %61 : vector<8x1xf32>
    %63 = math.exp %62 : vector<8x1xf32>
    %64 = vector.broadcast %61 : vector<8x1xf32> to vector<8x16xf32>
    %65 = arith.subf %56, %64 : vector<8x16xf32>
    %66 = math.exp %65 : vector<8x16xf32>
    %c1_36 = arith.constant 1 : index
    %c0_37 = arith.constant 0 : index
    %c0_38 = arith.constant 0 : index
    %67 = vector.load %arg20[%c1_36, %c0_37, %c0_38] : memref<4x8x1xf32, #tpu.memory_space<vmem>>, vector<1x8x1xf32>
    %68 = vector.shape_cast %67 : vector<1x8x1xf32> to vector<8x1xf32>
    %69 = arith.mulf %63, %68 : vector<8x1xf32>
    %cst_39 = arith.constant dense<0.000000e+00> : vector<8xf32>
    %70 = vector.multi_reduction <add>, %66, %cst_39 [1] : vector<8x16xf32> to vector<8xf32>
    %71 = vector.shape_cast %70 : vector<8xf32> to vector<8x1xf32>
    %72 = arith.addf %69, %71 : vector<8x1xf32>
    %c1_40 = arith.constant 1 : index
    %c0_41 = arith.constant 0 : index
    %c0_42 = arith.constant 0 : index
    %73 = vector.load %arg20[%c1_40, %c0_41, %c0_42] : memref<4x8x1xf32, #tpu.memory_space<vmem>>, vector<1x8x1xf32>
    %74 = vector.shape_cast %73 : vector<1x8x1xf32> to vector<8x1xf32>
    %75 = vector.shape_cast %72 : vector<8x1xf32> to vector<1x8x1xf32>
    tpu.vector_store %arg20[%c1_40, %c0_41, %c0_42], %75 {strides = array<i32>} : memref<4x8x1xf32, #tpu.memory_space<vmem>>, vector<1x8x1xf32>,
    %76 = arith.truncf %66 : vector<8x16xf32> to vector<8x16xbf16>
    %cst_43 = arith.constant dense<0.000000e+00> : vector<8x32xf32>
    %77 = tpu.matmul %76, %55, %cst_43 {dimension_numbers = #tpu.dot_dimension_numbers<[1], [0], [0], [1], [0, 0, 1, 1], [], []>} : vector<8x16xbf16>, vector<16x32xbf16>, vector<8x32xf32> -> vector<8x32xf32>
    %c0_44 = arith.constant 0 : index
    %c32 = arith.constant 32 : index
    %78 = vector.load %arg21[%c0_44, %c32] : memref<8x128xf32, #tpu.memory_space<vmem>>, vector<8x32xf32>
    %79 = vector.broadcast %63 : vector<8x1xf32> to vector<8x32xf32>
    %80 = arith.mulf %79, %78 : vector<8x32xf32>
    %81 = arith.addf %80, %77 : vector<8x32xf32>
    %c0_45 = arith.constant 0 : index
    %c32_46 = arith.constant 32 : index
    %82 = vector.load %arg21[%c0_45, %c32_46] : memref<8x128xf32, #tpu.memory_space<vmem>>, vector<8x32xf32>
    tpu.vector_store %arg21[%c0_45, %c32_46], %81 {strides = array<i32>} : memref<8x128xf32, #tpu.memory_space<vmem>>, vector<8x32xf32>,
    %c1_47 = arith.constant 1 : index
    %c0_48 = arith.constant 0 : index
    %c0_49 = arith.constant 0 : index
    %83 = vector.load %arg19[%c1_47, %c0_48, %c0_49] : memref<4x8x1xf32, #tpu.memory_space<vmem>>, vector<1x8x1xf32>
    %84 = vector.shape_cast %83 : vector<1x8x1xf32> to vector<8x1xf32>
    %85 = vector.shape_cast %61 : vector<8x1xf32> to vector<1x8x1xf32>
    tpu.vector_store %arg19[%c1_47, %c0_48, %c0_49], %85 {strides = array<i32>} : memref<4x8x1xf32, #tpu.memory_space<vmem>>, vector<1x8x1xf32>,
    %86 = vector.extract_strided_slice %17 {offsets = [0, 64], sizes = [8, 32], strides = [1, 1]} : vector<8x128xf32> to vector<8x32xf32>
    %87 = arith.truncf %86 : vector<8x32xf32> to vector<8x32xbf16>
    %88 = vector.extract_strided_slice %14 {offsets = [0, 64], sizes = [16, 32], strides = [1, 1]} : vector<16x128xbf16> to vector<16x32xbf16>
    %89 = vector.extract_strided_slice %16 {offsets = [0, 64], sizes = [16, 32], strides = [1, 1]} : vector<16x128xbf16> to vector<16x32xbf16>
    %cst_50 = arith.constant dense<0.000000e+00> : vector<8x16xf32>
    %90 = tpu.matmul %87, %88, %cst_50 {dimension_numbers = #tpu.dot_dimension_numbers<[1], [1], [0], [0], [0, 0, 1, 0], [], []>} : vector<8x32xbf16>, vector<16x32xbf16>, vector<8x16xf32> -> vector<8x16xf32>
    %c2 = arith.constant 2 : index
    %c0_51 = arith.constant 0 : index
    %c0_52 = arith.constant 0 : index
    %91 = vector.load %arg19[%c2, %c0_51, %c0_52] : memref<4x8x1xf32, #tpu.memory_space<vmem>>, vector<1x8x1xf32>
    %92 = vector.shape_cast %91 : vector<1x8x1xf32> to vector<8x1xf32>
    %cst_53 = arith.constant dense<0xFF800000> : vector<8xf32>
    %93 = vector.multi_reduction <maximumf>, %90, %cst_53 [1] : vector<8x16xf32> to vector<8xf32>
    %94 = vector.shape_cast %93 : vector<8xf32> to vector<8x1xf32>
    %95 = arith.maximumf %92, %94 : vector<8x1xf32>
    %96 = arith.subf %92, %95 : vector<8x1xf32>
    %97 = math.exp %96 : vector<8x1xf32>
    %98 = vector.broadcast %95 : vector<8x1xf32> to vector<8x16xf32>
    %99 = arith.subf %90, %98 : vector<8x16xf32>
    %100 = math.exp %99 : vector<8x16xf32>
    %c2_54 = arith.constant 2 : index
    %c0_55 = arith.constant 0 : index
    %c0_56 = arith.constant 0 : index
    %101 = vector.load %arg20[%c2_54, %c0_55, %c0_56] : memref<4x8x1xf32, #tpu.memory_space<vmem>>, vector<1x8x1xf32>
    %102 = vector.shape_cast %101 : vector<1x8x1xf32> to vector<8x1xf32>
    %103 = arith.mulf %97, %102 : vector<8x1xf32>
    %cst_57 = arith.constant dense<0.000000e+00> : vector<8xf32>
    %104 = vector.multi_reduction <add>, %100, %cst_57 [1] : vector<8x16xf32> to vector<8xf32>
    %105 = vector.shape_cast %104 : vector<8xf32> to vector<8x1xf32>
    %106 = arith.addf %103, %105 : vector<8x1xf32>
    %c2_58 = arith.constant 2 : index
    %c0_59 = arith.constant 0 : index
    %c0_60 = arith.constant 0 : index
    %107 = vector.load %arg20[%c2_58, %c0_59, %c0_60] : memref<4x8x1xf32, #tpu.memory_space<vmem>>, vector<1x8x1xf32>
    %108 = vector.shape_cast %107 : vector<1x8x1xf32> to vector<8x1xf32>
    %109 = vector.shape_cast %106 : vector<8x1xf32> to vector<1x8x1xf32>
    tpu.vector_store %arg20[%c2_58, %c0_59, %c0_60], %109 {strides = array<i32>} : memref<4x8x1xf32, #tpu.memory_space<vmem>>, vector<1x8x1xf32>,
    %110 = arith.truncf %100 : vector<8x16xf32> to vector<8x16xbf16>
    %cst_61 = arith.constant dense<0.000000e+00> : vector<8x32xf32>
    %111 = tpu.matmul %110, %89, %cst_61 {dimension_numbers = #tpu.dot_dimension_numbers<[1], [0], [0], [1], [0, 0, 1, 1], [], []>} : vector<8x16xbf16>, vector<16x32xbf16>, vector<8x32xf32> -> vector<8x32xf32>
    %c0_62 = arith.constant 0 : index
    %c64 = arith.constant 64 : index
    %112 = vector.load %arg21[%c0_62, %c64] : memref<8x128xf32, #tpu.memory_space<vmem>>, vector<8x32xf32>
    %113 = vector.broadcast %97 : vector<8x1xf32> to vector<8x32xf32>
    %114 = arith.mulf %113, %112 : vector<8x32xf32>
    %115 = arith.addf %114, %111 : vector<8x32xf32>
    %c0_63 = arith.constant 0 : index
    %c64_64 = arith.constant 64 : index
    %116 = vector.load %arg21[%c0_63, %c64_64] : memref<8x128xf32, #tpu.memory_space<vmem>>, vector<8x32xf32>
    tpu.vector_store %arg21[%c0_63, %c64_64], %115 {strides = array<i32>} : memref<8x128xf32, #tpu.memory_space<vmem>>, vector<8x32xf32>,
    %c2_65 = arith.constant 2 : index
    %c0_66 = arith.constant 0 : index
    %c0_67 = arith.constant 0 : index
    %117 = vector.load %arg19[%c2_65, %c0_66, %c0_67] : memref<4x8x1xf32, #tpu.memory_space<vmem>>, vector<1x8x1xf32>
    %118 = vector.shape_cast %117 : vector<1x8x1xf32> to vector<8x1xf32>
    %119 = vector.shape_cast %95 : vector<8x1xf32> to vector<1x8x1xf32>
    tpu.vector_store %arg19[%c2_65, %c0_66, %c0_67], %119 {strides = array<i32>} : memref<4x8x1xf32, #tpu.memory_space<vmem>>, vector<1x8x1xf32>,
    %120 = vector.extract_strided_slice %17 {offsets = [0, 96], sizes = [8, 32], strides = [1, 1]} : vector<8x128xf32> to vector<8x32xf32>
    %121 = arith.truncf %120 : vector<8x32xf32> to vector<8x32xbf16>
    %122 = vector.extract_strided_slice %14 {offsets = [0, 96], sizes = [16, 32], strides = [1, 1]} : vector<16x128xbf16> to vector<16x32xbf16>
    %123 = vector.extract_strided_slice %16 {offsets = [0, 96], sizes = [16, 32], strides = [1, 1]} : vector<16x128xbf16> to vector<16x32xbf16>
    %cst_68 = arith.constant dense<0.000000e+00> : vector<8x16xf32>
    %124 = tpu.matmul %121, %122, %cst_68 {dimension_numbers = #tpu.dot_dimension_numbers<[1], [1], [0], [0], [0, 0, 1, 0], [], []>} : vector<8x32xbf16>, vector<16x32xbf16>, vector<8x16xf32> -> vector<8x16xf32>
    %c3 = arith.constant 3 : index
    %c0_69 = arith.constant 0 : index
    %c0_70 = arith.constant 0 : index
    %125 = vector.load %arg19[%c3, %c0_69, %c0_70] : memref<4x8x1xf32, #tpu.memory_space<vmem>>, vector<1x8x1xf32>
    %126 = vector.shape_cast %125 : vector<1x8x1xf32> to vector<8x1xf32>
    %cst_71 = arith.constant dense<0xFF800000> : vector<8xf32>
    %127 = vector.multi_reduction <maximumf>, %124, %cst_71 [1] : vector<8x16xf32> to vector<8xf32>
    %128 = vector.shape_cast %127 : vector<8xf32> to vector<8x1xf32>
    %129 = arith.maximumf %126, %128 : vector<8x1xf32>
    %130 = arith.subf %126, %129 : vector<8x1xf32>
    %131 = math.exp %130 : vector<8x1xf32>
    %132 = vector.broadcast %129 : vector<8x1xf32> to vector<8x16xf32>
    %133 = arith.subf %124, %132 : vector<8x16xf32>
    %134 = math.exp %133 : vector<8x16xf32>
    %c3_72 = arith.constant 3 : index
    %c0_73 = arith.constant 0 : index
    %c0_74 = arith.constant 0 : index
    %135 = vector.load %arg20[%c3_72, %c0_73, %c0_74] : memref<4x8x1xf32, #tpu.memory_space<vmem>>, vector<1x8x1xf32>
    %136 = vector.shape_cast %135 : vector<1x8x1xf32> to vector<8x1xf32>
    %137 = arith.mulf %131, %136 : vector<8x1xf32>
    %cst_75 = arith.constant dense<0.000000e+00> : vector<8xf32>
    %138 = vector.multi_reduction <add>, %134, %cst_75 [1] : vector<8x16xf32> to vector<8xf32>
    %139 = vector.shape_cast %138 : vector<8xf32> to vector<8x1xf32>
    %140 = arith.addf %137, %139 : vector<8x1xf32>
    %c3_76 = arith.constant 3 : index
    %c0_77 = arith.constant 0 : index
    %c0_78 = arith.constant 0 : index
    %141 = vector.load %arg20[%c3_76, %c0_77, %c0_78] : memref<4x8x1xf32, #tpu.memory_space<vmem>>, vector<1x8x1xf32>
    %142 = vector.shape_cast %141 : vector<1x8x1xf32> to vector<8x1xf32>
    %143 = vector.shape_cast %140 : vector<8x1xf32> to vector<1x8x1xf32>
    tpu.vector_store %arg20[%c3_76, %c0_77, %c0_78], %143 {strides = array<i32>} : memref<4x8x1xf32, #tpu.memory_space<vmem>>, vector<1x8x1xf32>,
    %144 = arith.truncf %134 : vector<8x16xf32> to vector<8x16xbf16>
    %cst_79 = arith.constant dense<0.000000e+00> : vector<8x32xf32>
    %145 = tpu.matmul %144, %123, %cst_79 {dimension_numbers = #tpu.dot_dimension_numbers<[1], [0], [0], [1], [0, 0, 1, 1], [], []>} : vector<8x16xbf16>, vector<16x32xbf16>, vector<8x32xf32> -> vector<8x32xf32>
    %c0_80 = arith.constant 0 : index
    %c96 = arith.constant 96 : index
    %146 = vector.load %arg21[%c0_80, %c96] : memref<8x128xf32, #tpu.memory_space<vmem>>, vector<8x32xf32>
    %147 = vector.broadcast %131 : vector<8x1xf32> to vector<8x32xf32>
    %148 = arith.mulf %147, %146 : vector<8x32xf32>
    %149 = arith.addf %148, %145 : vector<8x32xf32>
    %c0_81 = arith.constant 0 : index
    %c96_82 = arith.constant 96 : index
    %150 = vector.load %arg21[%c0_81, %c96_82] : memref<8x128xf32, #tpu.memory_space<vmem>>, vector<8x32xf32>
    tpu.vector_store %arg21[%c0_81, %c96_82], %149 {strides = array<i32>} : memref<8x128xf32, #tpu.memory_space<vmem>>, vector<8x32xf32>,
    %c3_83 = arith.constant 3 : index
    %c0_84 = arith.constant 0 : index
    %c0_85 = arith.constant 0 : index
    %151 = vector.load %arg19[%c3_83, %c0_84, %c0_85] : memref<4x8x1xf32, #tpu.memory_space<vmem>>, vector<1x8x1xf32>
    %152 = vector.shape_cast %151 : vector<1x8x1xf32> to vector<8x1xf32>
    %153 = vector.shape_cast %129 : vector<8x1xf32> to vector<1x8x1xf32>
    tpu.vector_store %arg19[%c3_83, %c0_84, %c0_85], %153 {strides = array<i32>} : memref<4x8x1xf32, #tpu.memory_space<vmem>>, vector<1x8x1xf32>,
    %c0_i32_86 = arith.constant 0 : i32
    %154 = arith.cmpi eq, %arg2, %c0_i32_86 : i32
    %155 = arith.extui %154 : i1 to i32
    %c0_i32_87 = arith.constant 0 : i32
    %156 = arith.cmpi ne, %155, %c0_i32_87 : i32
    scf.if %156 {
      %c0_88 = arith.constant 0 : index
      %c0_89 = arith.constant 0 : index
      %157 = vector.load %arg21[%c0_88, %c0_89] : memref<8x128xf32, #tpu.memory_space<vmem>>, vector<8x32xf32>
      %c0_90 = arith.constant 0 : index
      %c0_91 = arith.constant 0 : index
      %c0_92 = arith.constant 0 : index
      %158 = vector.load %arg20[%c0_90, %c0_91, %c0_92] : memref<4x8x1xf32, #tpu.memory_space<vmem>>, vector<1x8x1xf32>
      %159 = vector.shape_cast %158 : vector<1x8x1xf32> to vector<8x1xf32>
      %160 = tpu.reciprocal %159 {approx = true} : vector<8x1xf32> -> vector<8x1xf32>
      %161 = vector.broadcast %160 : vector<8x1xf32> to vector<8x32xf32>
      %162 = arith.mulf %157, %161 : vector<8x32xf32>
      %c0_93 = arith.constant 0 : index
      %c32_94 = arith.constant 32 : index
      %163 = vector.load %arg21[%c0_93, %c32_94] : memref<8x128xf32, #tpu.memory_space<vmem>>, vector<8x32xf32>
      %c1_95 = arith.constant 1 : index
      %c0_96 = arith.constant 0 : index
      %c0_97 = arith.constant 0 : index
      %164 = vector.load %arg20[%c1_95, %c0_96, %c0_97] : memref<4x8x1xf32, #tpu.memory_space<vmem>>, vector<1x8x1xf32>
      %165 = vector.shape_cast %164 : vector<1x8x1xf32> to vector<8x1xf32>
      %166 = tpu.reciprocal %165 {approx = true} : vector<8x1xf32> -> vector<8x1xf32>
      %167 = vector.broadcast %166 : vector<8x1xf32> to vector<8x32xf32>
      %168 = arith.mulf %163, %167 : vector<8x32xf32>
      %c0_98 = arith.constant 0 : index
      %c64_99 = arith.constant 64 : index
      %169 = vector.load %arg21[%c0_98, %c64_99] : memref<8x128xf32, #tpu.memory_space<vmem>>, vector<8x32xf32>
      %c2_100 = arith.constant 2 : index
      %c0_101 = arith.constant 0 : index
      %c0_102 = arith.constant 0 : index
      %170 = vector.load %arg20[%c2_100, %c0_101, %c0_102] : memref<4x8x1xf32, #tpu.memory_space<vmem>>, vector<1x8x1xf32>
      %171 = vector.shape_cast %170 : vector<1x8x1xf32> to vector<8x1xf32>
      %172 = tpu.reciprocal %171 {approx = true} : vector<8x1xf32> -> vector<8x1xf32>
      %173 = vector.broadcast %172 : vector<8x1xf32> to vector<8x32xf32>
      %174 = arith.mulf %169, %173 : vector<8x32xf32>
      %c0_103 = arith.constant 0 : index
      %c96_104 = arith.constant 96 : index
      %175 = vector.load %arg21[%c0_103, %c96_104] : memref<8x128xf32, #tpu.memory_space<vmem>>, vector<8x32xf32>
      %c3_105 = arith.constant 3 : index
      %c0_106 = arith.constant 0 : index
      %c0_107 = arith.constant 0 : index
      %176 = vector.load %arg20[%c3_105, %c0_106, %c0_107] : memref<4x8x1xf32, #tpu.memory_space<vmem>>, vector<1x8x1xf32>
      %177 = vector.shape_cast %176 : vector<1x8x1xf32> to vector<8x1xf32>
      %178 = tpu.reciprocal %177 {approx = true} : vector<8x1xf32> -> vector<8x1xf32>
      %179 = vector.broadcast %178 : vector<8x1xf32> to vector<8x32xf32>
      %180 = arith.mulf %175, %179 : vector<8x32xf32>
      %181 = tpu.concatenate %162, %168, %174, %180 in 1 : vector<8x32xf32>, vector<8x32xf32>, vector<8x32xf32>, vector<8x32xf32> -> vector<8x128xf32>
      %182 = arith.truncf %181 : vector<8x128xf32> to vector<8x128xbf16>
      %c0_108 = arith.constant 0 : index
      %c0_109 = arith.constant 0 : index
      %183 = vector.load %arg9[%c0_108, %c0_109] : memref<128x128xbf16, #tpu.memory_space<vmem>>, vector<128x128xbf16>
      %cst_110 = arith.constant dense<0.000000e+00> : vector<8x128xf32>
      %184 = tpu.matmul %182, %183, %cst_110 {dimension_numbers = #tpu.dot_dimension_numbers<[1], [0], [0], [1], [0, 0, 1, 1], [], []>} : vector<8x128xbf16>, vector<128x128xbf16>, vector<8x128xf32> -> vector<8x128xf32>
      %c0_111 = arith.constant 0 : index
      %c0_112 = arith.constant 0 : index
      %185 = vector.load %arg10[%c0_111, %c0_112] : memref<1x128xf32, #tpu.memory_space<vmem>>, vector<1x128xf32>
      %186 = vector.broadcast %185 : vector<1x128xf32> to vector<8x128xf32>
      %187 = arith.addf %184, %186 : vector<8x128xf32>
      %188 = arith.addf %1, %187 : vector<8x128xf32>
      %c0_113 = arith.constant 0 : index
      %c0_114 = arith.constant 0 : index
      %189 = vector.load %arg11[%c0_113, %c0_114] : memref<1x128xf32, #tpu.memory_space<vmem>>, vector<1x128xf32>
      %c0_115 = arith.constant 0 : index
      %c0_116 = arith.constant 0 : index
      %190 = vector.load %arg12[%c0_115, %c0_116] : memref<1x128xf32, #tpu.memory_space<vmem>>, vector<1x128xf32>
      %cst_117 = arith.constant dense<0.000000e+00> : vector<8xf32>
      %191 = vector.multi_reduction <add>, %188, %cst_117 [1] : vector<8x128xf32> to vector<8xf32>
      %192 = vector.shape_cast %191 : vector<8xf32> to vector<8x1xf32>
      %cst_118 = arith.constant 1.280000e+02 : f32
      %193 = vector.broadcast %cst_118 : f32 to vector<8x1xf32>
      %194 = arith.divf %192, %193 : vector<8x1xf32>
      %195 = vector.broadcast %194 : vector<8x1xf32> to vector<8x128xf32>
      %196 = arith.subf %188, %195 : vector<8x128xf32>
      %197 = arith.mulf %196, %196 : vector<8x128xf32>
      %cst_119 = arith.constant dense<0.000000e+00> : vector<8xf32>
      %198 = vector.multi_reduction <add>, %197, %cst_119 [1] : vector<8x128xf32> to vector<8xf32>
      %199 = vector.shape_cast %198 : vector<8xf32> to vector<8x1xf32>
      %cst_120 = arith.constant 1.280000e+02 : f32
      %200 = vector.broadcast %cst_120 : f32 to vector<8x1xf32>
      %201 = arith.divf %199, %200 : vector<8x1xf32>
      %cst_121 = arith.constant 9.99999974E-6 : f32
      %202 = vector.broadcast %cst_121 : f32 to vector<8x1xf32>
      %203 = arith.addf %201, %202 : vector<8x1xf32>
      %204 = math.rsqrt %203 : vector<8x1xf32>
      %205 = vector.broadcast %204 : vector<8x1xf32> to vector<8x128xf32>
      %206 = arith.mulf %196, %205 : vector<8x128xf32>
      %207 = vector.broadcast %189 : vector<1x128xf32> to vector<8x128xf32>
      %208 = arith.mulf %206, %207 : vector<8x128xf32>
      %209 = vector.broadcast %190 : vector<1x128xf32> to vector<8x128xf32>
      %210 = arith.addf %208, %209 : vector<8x128xf32>
      %211 = arith.truncf %210 : vector<8x128xf32> to vector<8x128xbf16>
      %c0_122 = arith.constant 0 : index
      %c0_123 = arith.constant 0 : index
      %c0_124 = arith.constant 0 : index
      %212 = vector.load %arg13[%c0_122, %c0_123, %c0_124] : memref<3x128x128xbf16, #tpu.memory_space<vmem>>, vector<1x128x128xbf16>
      %213 = vector.shape_cast %212 : vector<1x128x128xbf16> to vector<128x128xbf16>
      %cst_125 = arith.constant dense<0.000000e+00> : vector<8x128xf32>
      %214 = tpu.matmul %211, %213, %cst_125 {dimension_numbers = #tpu.dot_dimension_numbers<[1], [0], [0], [1], [0, 0, 1, 1], [], []>} : vector<8x128xbf16>, vector<128x128xbf16>, vector<8x128xf32> -> vector<8x128xf32>
      %c0_126 = arith.constant 0 : index
      %c0_127 = arith.constant 0 : index
      %c0_128 = arith.constant 0 : index
      %215 = vector.load %arg14[%c0_126, %c0_127, %c0_128] : memref<3x1x128xf32, #tpu.memory_space<vmem>>, vector<1x1x128xf32>
      %216 = vector.shape_cast %215 : vector<1x1x128xf32> to vector<1x128xf32>
      %217 = vector.broadcast %216 : vector<1x128xf32> to vector<8x128xf32>
      %218 = arith.addf %214, %217 : vector<8x128xf32>
      %cst_129 = arith.constant 0.000000e+00 : f32
      %219 = vector.broadcast %cst_129 : f32 to vector<8x128xf32>
      %220 = arith.maximumf %218, %219 : vector<8x128xf32>
      %221 = arith.truncf %220 : vector<8x128xf32> to vector<8x128xbf16>
      %c1_130 = arith.constant 1 : index
      %c0_131 = arith.constant 0 : index
      %c0_132 = arith.constant 0 : index
      %222 = vector.load %arg13[%c1_130, %c0_131, %c0_132] : memref<3x128x128xbf16, #tpu.memory_space<vmem>>, vector<1x128x128xbf16>
      %223 = vector.shape_cast %222 : vector<1x128x128xbf16> to vector<128x128xbf16>
      %cst_133 = arith.constant dense<0.000000e+00> : vector<8x128xf32>
      %224 = tpu.matmul %221, %223, %cst_133 {dimension_numbers = #tpu.dot_dimension_numbers<[1], [0], [0], [1], [0, 0, 1, 1], [], []>} : vector<8x128xbf16>, vector<128x128xbf16>, vector<8x128xf32> -> vector<8x128xf32>
      %c1_134 = arith.constant 1 : index
      %c0_135 = arith.constant 0 : index
      %c0_136 = arith.constant 0 : index
      %225 = vector.load %arg14[%c1_134, %c0_135, %c0_136] : memref<3x1x128xf32, #tpu.memory_space<vmem>>, vector<1x1x128xf32>
      %226 = vector.shape_cast %225 : vector<1x1x128xf32> to vector<1x128xf32>
      %227 = vector.broadcast %226 : vector<1x128xf32> to vector<8x128xf32>
      %228 = arith.addf %224, %227 : vector<8x128xf32>
      %cst_137 = arith.constant 0.000000e+00 : f32
      %229 = vector.broadcast %cst_137 : f32 to vector<8x128xf32>
      %230 = arith.maximumf %228, %229 : vector<8x128xf32>
      %231 = arith.truncf %230 : vector<8x128xf32> to vector<8x128xbf16>
      %c2_138 = arith.constant 2 : index
      %c0_139 = arith.constant 0 : index
      %c0_140 = arith.constant 0 : index
      %232 = vector.load %arg13[%c2_138, %c0_139, %c0_140] : memref<3x128x128xbf16, #tpu.memory_space<vmem>>, vector<1x128x128xbf16>
      %233 = vector.shape_cast %232 : vector<1x128x128xbf16> to vector<128x128xbf16>
      %cst_141 = arith.constant dense<0.000000e+00> : vector<8x128xf32>
      %234 = tpu.matmul %231, %233, %cst_141 {dimension_numbers = #tpu.dot_dimension_numbers<[1], [0], [0], [1], [0, 0, 1, 1], [], []>} : vector<8x128xbf16>, vector<128x128xbf16>, vector<8x128xf32> -> vector<8x128xf32>
      %c2_142 = arith.constant 2 : index
      %c0_143 = arith.constant 0 : index
      %c0_144 = arith.constant 0 : index
      %235 = vector.load %arg14[%c2_142, %c0_143, %c0_144] : memref<3x1x128xf32, #tpu.memory_space<vmem>>, vector<1x1x128xf32>
      %236 = vector.shape_cast %235 : vector<1x1x128xf32> to vector<1x128xf32>
      %237 = vector.broadcast %236 : vector<1x128xf32> to vector<8x128xf32>
      %238 = arith.addf %234, %237 : vector<8x128xf32>
      %cst_145 = arith.constant 0.000000e+00 : f32
      %239 = vector.broadcast %cst_145 : f32 to vector<8x128xf32>
      %240 = arith.maximumf %238, %239 : vector<8x128xf32>
      %241 = arith.addf %210, %240 : vector<8x128xf32>
      %c0_146 = arith.constant 0 : index
      %c0_147 = arith.constant 0 : index
      %242 = vector.load %arg15[%c0_146, %c0_147] : memref<1x128xf32, #tpu.memory_space<vmem>>, vector<1x128xf32>
      %c0_148 = arith.constant 0 : index
      %c0_149 = arith.constant 0 : index
      %243 = vector.load %arg16[%c0_148, %c0_149] : memref<1x128xf32, #tpu.memory_space<vmem>>, vector<1x128xf32>
      %cst_150 = arith.constant dense<0.000000e+00> : vector<8xf32>
      %244 = vector.multi_reduction <add>, %241, %cst_150 [1] : vector<8x128xf32> to vector<8xf32>
      %245 = vector.shape_cast %244 : vector<8xf32> to vector<8x1xf32>
      %cst_151 = arith.constant 1.280000e+02 : f32
      %246 = vector.broadcast %cst_151 : f32 to vector<8x1xf32>
      %247 = arith.divf %245, %246 : vector<8x1xf32>
      %248 = vector.broadcast %247 : vector<8x1xf32> to vector<8x128xf32>
      %249 = arith.subf %241, %248 : vector<8x128xf32>
      %250 = arith.mulf %249, %249 : vector<8x128xf32>
      %cst_152 = arith.constant dense<0.000000e+00> : vector<8xf32>
      %251 = vector.multi_reduction <add>, %250, %cst_152 [1] : vector<8x128xf32> to vector<8xf32>
      %252 = vector.shape_cast %251 : vector<8xf32> to vector<8x1xf32>
      %cst_153 = arith.constant 1.280000e+02 : f32
      %253 = vector.broadcast %cst_153 : f32 to vector<8x1xf32>
      %254 = arith.divf %252, %253 : vector<8x1xf32>
      %cst_154 = arith.constant 9.99999974E-6 : f32
      %255 = vector.broadcast %cst_154 : f32 to vector<8x1xf32>
      %256 = arith.addf %254, %255 : vector<8x1xf32>
      %257 = math.rsqrt %256 : vector<8x1xf32>
      %258 = vector.broadcast %257 : vector<8x1xf32> to vector<8x128xf32>
      %259 = arith.mulf %249, %258 : vector<8x128xf32>
      %260 = vector.broadcast %242 : vector<1x128xf32> to vector<8x128xf32>
      %261 = arith.mulf %259, %260 : vector<8x128xf32>
      %262 = vector.broadcast %243 : vector<1x128xf32> to vector<8x128xf32>
      %263 = arith.addf %261, %262 : vector<8x128xf32>
      %c0_155 = arith.constant 0 : index
      %c0_156 = arith.constant 0 : index
      %c0_157 = arith.constant 0 : index
      %264 = vector.load %arg17[%c0_155, %c0_156, %c0_157] : memref<1x8x128xf32, #tpu.memory_space<vmem>>, vector<1x8x128xf32>
      %265 = vector.shape_cast %264 : vector<1x8x128xf32> to vector<8x128xf32>
      %266 = vector.shape_cast %263 : vector<8x128xf32> to vector<1x8x128xf32>
      tpu.vector_store %arg17[%c0_155, %c0_156, %c0_157], %266 {strides = array<i32>} : memref<1x8x128xf32, #tpu.memory_space<vmem>>, vector<1x8x128xf32>,
    } else {
    }
    return
  }
  func.func @transform_0(%arg0: i32, %arg1: i32, %arg2: i32) -> (i32, i32, i32) {
    %c0_i32 = arith.constant 0 : i32
    %c0_i32_0 = arith.constant 0 : i32
    return %arg0, %arg1, %c0_i32 : i32, i32, i32
  }
  func.func @transform_1(%arg0: i32, %arg1: i32, %arg2: i32) -> (i32, i32, i32) {
    %c0_i32 = arith.constant 0 : i32
    %c0_i32_0 = arith.constant 0 : i32
    return %arg0, %arg2, %c0_i32 : i32, i32, i32
  }
  func.func @transform_2(%arg0: i32, %arg1: i32, %arg2: i32) -> (i32, i32) {
    %c0_i32 = arith.constant 0 : i32
    %c0_i32_0 = arith.constant 0 : i32
    %c0_i32_1 = arith.constant 0 : i32
    return %c0_i32, %c0_i32_0 : i32, i32
  }
  func.func @transform_3(%arg0: i32, %arg1: i32, %arg2: i32) -> (i32, i32) {
    %c0_i32 = arith.constant 0 : i32
    %c0_i32_0 = arith.constant 0 : i32
    %c0_i32_1 = arith.constant 0 : i32
    return %c0_i32, %c0_i32_0 : i32, i32
  }
  func.func @transform_4(%arg0: i32, %arg1: i32, %arg2: i32) -> (i32, i32) {
    %c0_i32 = arith.constant 0 : i32
    %c0_i32_0 = arith.constant 0 : i32
    %c0_i32_1 = arith.constant 0 : i32
    return %c0_i32, %c0_i32_0 : i32, i32
  }
  func.func @transform_5(%arg0: i32, %arg1: i32, %arg2: i32) -> (i32, i32) {
    %c0_i32 = arith.constant 0 : i32
    %c0_i32_0 = arith.constant 0 : i32
    %c0_i32_1 = arith.constant 0 : i32
    return %c0_i32, %c0_i32_0 : i32, i32
  }
  func.func @transform_6(%arg0: i32, %arg1: i32, %arg2: i32) -> (i32, i32) {
    %c0_i32 = arith.constant 0 : i32
    %c0_i32_0 = arith.constant 0 : i32
    %c0_i32_1 = arith.constant 0 : i32
    return %c0_i32, %c0_i32_0 : i32, i32
  }
  func.func @transform_7(%arg0: i32, %arg1: i32, %arg2: i32) -> (i32, i32) {
    %c0_i32 = arith.constant 0 : i32
    %c0_i32_0 = arith.constant 0 : i32
    %c0_i32_1 = arith.constant 0 : i32
    return %c0_i32, %c0_i32_0 : i32, i32
  }
  func.func @transform_8(%arg0: i32, %arg1: i32, %arg2: i32) -> (i32, i32) {
    %c0_i32 = arith.constant 0 : i32
    %c0_i32_0 = arith.constant 0 : i32
    %c0_i32_1 = arith.constant 0 : i32
    return %c0_i32, %c0_i32_0 : i32, i32
  }
  func.func @transform_9(%arg0: i32, %arg1: i32, %arg2: i32) -> (i32, i32) {
    %c0_i32 = arith.constant 0 : i32
    %c0_i32_0 = arith.constant 0 : i32
    %c0_i32_1 = arith.constant 0 : i32
    return %c0_i32, %c0_i32_0 : i32, i32
  }
  func.func @transform_10(%arg0: i32, %arg1: i32, %arg2: i32) -> (i32, i32, i32) {
    %c0_i32 = arith.constant 0 : i32
    %c0_i32_0 = arith.constant 0 : i32
    %c0_i32_1 = arith.constant 0 : i32
    %c0_i32_2 = arith.constant 0 : i32
    return %c0_i32, %c0_i32_0, %c0_i32_1 : i32, i32, i32
  }
  func.func @transform_11(%arg0: i32, %arg1: i32, %arg2: i32) -> (i32, i32, i32) {
    %c0_i32 = arith.constant 0 : i32
    %c0_i32_0 = arith.constant 0 : i32
    %c0_i32_1 = arith.constant 0 : i32
    %c0_i32_2 = arith.constant 0 : i32
    return %c0_i32, %c0_i32_0, %c0_i32_1 : i32, i32, i32
  }
  func.func @transform_12(%arg0: i32, %arg1: i32, %arg2: i32) -> (i32, i32) {
    %c0_i32 = arith.constant 0 : i32
    %c0_i32_0 = arith.constant 0 : i32
    %c0_i32_1 = arith.constant 0 : i32
    return %c0_i32, %c0_i32_0 : i32, i32
  }
  func.func @transform_13(%arg0: i32, %arg1: i32, %arg2: i32) -> (i32, i32) {
    %c0_i32 = arith.constant 0 : i32
    %c0_i32_0 = arith.constant 0 : i32
    %c0_i32_1 = arith.constant 0 : i32
    return %c0_i32, %c0_i32_0 : i32, i32
  }
  func.func @transform_14(%arg0: i32, %arg1: i32, %arg2: i32) -> (i32, i32, i32) {
    %c0_i32 = arith.constant 0 : i32
    %c0_i32_0 = arith.constant 0 : i32
    return %arg0, %arg1, %c0_i32 : i32, i32, i32
  }
}

module attributes {stable_mosaic.version = 11 : i64} {
  func.func @_fused_mab_kernel(%arg0: i32, %arg1: i32, %arg2: i32, %arg3: memref<1x4x128xf32, #tpu.memory_space<vmem>>, %arg4: memref<1x8x128xf32, #tpu.memory_space<vmem>>, %arg5: memref<128x128xbf16, #tpu.memory_space<vmem>>, %arg6: memref<1x128xf32, #tpu.memory_space<vmem>>, %arg7: memref<128x256xbf16, #tpu.memory_space<vmem>>, %arg8: memref<1x256xf32, #tpu.memory_space<vmem>>, %arg9: memref<128x128xbf16, #tpu.memory_space<vmem>>, %arg10: memref<1x128xf32, #tpu.memory_space<vmem>>, %arg11: memref<1x128xf32, #tpu.memory_space<vmem>>, %arg12: memref<1x128xf32, #tpu.memory_space<vmem>>, %arg13: memref<3x128x128xbf16, #tpu.memory_space<vmem>>, %arg14: memref<3x1x128xf32, #tpu.memory_space<vmem>>, %arg15: memref<1x128xf32, #tpu.memory_space<vmem>>, %arg16: memref<1x128xf32, #tpu.memory_space<vmem>>, %arg17: memref<1x4x128xf32, #tpu.memory_space<vmem>>, %arg18: memref<4x128xf32, #tpu.memory_space<vmem>>, %arg19: memref<4x4x1xf32, #tpu.memory_space<vmem>>, %arg20: memref<4x4x1xf32, #tpu.memory_space<vmem>>, %arg21: memref<4x128xf32, #tpu.memory_space<vmem>>) attributes {dimension_semantics = [#tpu.dimension_semantics<parallel>, #tpu.dimension_semantics<parallel>, #tpu.dimension_semantics<arbitrary>], iteration_bounds = array<i64: 2, 1, 1>, scalar_prefetch = 0 : i64, scratch_operands = 4 : i64, tpu.core_type = #tpu.core_type<tc>, window_params = [{transform_indices = @transform_0, window_bounds = array<i64: 1, 4, 128>}, {transform_indices = @transform_1, window_bounds = array<i64: 1, 8, 128>}, {pipeline_mode = #tpu.pipeline_mode<synchronous>, transform_indices = @transform_2, window_bounds = array<i64: 128, 128>}, {pipeline_mode = #tpu.pipeline_mode<synchronous>, transform_indices = @transform_3, window_bounds = array<i64: 1, 128>}, {pipeline_mode = #tpu.pipeline_mode<synchronous>, transform_indices = @transform_4, window_bounds = array<i64: 128, 256>}, {pipeline_mode = #tpu.pipeline_mode<synchronous>, transform_indices = @transform_5, window_bounds = array<i64: 1, 256>}, {pipeline_mode = #tpu.pipeline_mode<synchronous>, transform_indices = @transform_6, window_bounds = array<i64: 128, 128>}, {pipeline_mode = #tpu.pipeline_mode<synchronous>, transform_indices = @transform_7, window_bounds = array<i64: 1, 128>}, {pipeline_mode = #tpu.pipeline_mode<synchronous>, transform_indices = @transform_8, window_bounds = array<i64: 1, 128>}, {pipeline_mode = #tpu.pipeline_mode<synchronous>, transform_indices = @transform_9, window_bounds = array<i64: 1, 128>}, {pipeline_mode = #tpu.pipeline_mode<synchronous>, transform_indices = @transform_10, window_bounds = array<i64: 3, 128, 128>}, {pipeline_mode = #tpu.pipeline_mode<synchronous>, transform_indices = @transform_11, window_bounds = array<i64: 3, 1, 128>}, {pipeline_mode = #tpu.pipeline_mode<synchronous>, transform_indices = @transform_12, window_bounds = array<i64: 1, 128>}, {pipeline_mode = #tpu.pipeline_mode<synchronous>, transform_indices = @transform_13, window_bounds = array<i64: 1, 128>}, {transform_indices = @transform_14, window_bounds = array<i64: 1, 4, 128>}]} {
    %c0 = arith.constant 0 : index
    %c0_0 = arith.constant 0 : index
    %c0_1 = arith.constant 0 : index
    %0 = vector.load %arg3[%c0, %c0_0, %c0_1] : memref<1x4x128xf32, #tpu.memory_space<vmem>>, vector<1x4x128xf32>
    %1 = vector.shape_cast %0 : vector<1x4x128xf32> to vector<4x128xf32>
    %c0_i32 = arith.constant 0 : i32
    %2 = arith.cmpi eq, %arg2, %c0_i32 : i32
    %3 = arith.extui %2 : i1 to i32
    %c0_i32_2 = arith.constant 0 : i32
    %4 = arith.cmpi ne, %3, %c0_i32_2 : i32
    scf.if %4 {
      %157 = arith.truncf %1 : vector<4x128xf32> to vector<4x128xbf16>
      %c0_88 = arith.constant 0 : index
      %c0_89 = arith.constant 0 : index
      %158 = vector.load %arg5[%c0_88, %c0_89] : memref<128x128xbf16, #tpu.memory_space<vmem>>, vector<128x128xbf16>
      %cst_90 = arith.constant dense<0.000000e+00> : vector<4x128xf32>
      %159 = tpu.matmul %157, %158, %cst_90 {dimension_numbers = #tpu.dot_dimension_numbers<[1], [0], [0], [1], [0, 0, 1, 1], [], []>} : vector<4x128xbf16>, vector<128x128xbf16>, vector<4x128xf32> -> vector<4x128xf32>
      %c0_91 = arith.constant 0 : index
      %c0_92 = arith.constant 0 : index
      %160 = vector.load %arg6[%c0_91, %c0_92] : memref<1x128xf32, #tpu.memory_space<vmem>>, vector<1x128xf32>
      %161 = vector.broadcast %160 : vector<1x128xf32> to vector<4x128xf32>
      %162 = arith.addf %159, %161 : vector<4x128xf32>
      %cst_93 = arith.constant 0.176776692 : f32
      %163 = vector.broadcast %cst_93 : f32 to vector<4x128xf32>
      %164 = arith.mulf %162, %163 : vector<4x128xf32>
      %c0_94 = arith.constant 0 : index
      %c0_95 = arith.constant 0 : index
      %165 = vector.load %arg18[%c0_94, %c0_95] : memref<4x128xf32, #tpu.memory_space<vmem>>, vector<4x128xf32>
      tpu.vector_store %arg18[%c0_94, %c0_95], %164 {strides = array<i32>} : memref<4x128xf32, #tpu.memory_space<vmem>>, vector<4x128xf32>,
      %cst_96 = arith.constant 0xFF800000 : f32
      %166 = vector.broadcast %cst_96 : f32 to vector<4x4x1xf32>
      %c0_97 = arith.constant 0 : index
      %c0_98 = arith.constant 0 : index
      %c0_99 = arith.constant 0 : index
      %167 = vector.load %arg19[%c0_97, %c0_98, %c0_99] : memref<4x4x1xf32, #tpu.memory_space<vmem>>, vector<4x4x1xf32>
      tpu.vector_store %arg19[%c0_97, %c0_98, %c0_99], %166 {strides = array<i32>} : memref<4x4x1xf32, #tpu.memory_space<vmem>>, vector<4x4x1xf32>,
      %cst_100 = arith.constant 0.000000e+00 : f32
      %168 = vector.broadcast %cst_100 : f32 to vector<4x4x1xf32>
      %c0_101 = arith.constant 0 : index
      %c0_102 = arith.constant 0 : index
      %c0_103 = arith.constant 0 : index
      %169 = vector.load %arg20[%c0_101, %c0_102, %c0_103] : memref<4x4x1xf32, #tpu.memory_space<vmem>>, vector<4x4x1xf32>
      tpu.vector_store %arg20[%c0_101, %c0_102, %c0_103], %168 {strides = array<i32>} : memref<4x4x1xf32, #tpu.memory_space<vmem>>, vector<4x4x1xf32>,
      %cst_104 = arith.constant 0.000000e+00 : f32
      %170 = vector.broadcast %cst_104 : f32 to vector<4x128xf32>
      %c0_105 = arith.constant 0 : index
      %c0_106 = arith.constant 0 : index
      %171 = vector.load %arg21[%c0_105, %c0_106] : memref<4x128xf32, #tpu.memory_space<vmem>>, vector<4x128xf32>
      tpu.vector_store %arg21[%c0_105, %c0_106], %170 {strides = array<i32>} : memref<4x128xf32, #tpu.memory_space<vmem>>, vector<4x128xf32>,
    } else {
    }
    %c0_3 = arith.constant 0 : index
    %c0_4 = arith.constant 0 : index
    %c0_5 = arith.constant 0 : index
    %5 = vector.load %arg4[%c0_3, %c0_4, %c0_5] : memref<1x8x128xf32, #tpu.memory_space<vmem>>, vector<1x8x128xf32>
    %6 = vector.shape_cast %5 : vector<1x8x128xf32> to vector<8x128xf32>
    %7 = arith.truncf %6 : vector<8x128xf32> to vector<8x128xbf16>
    %c0_6 = arith.constant 0 : index
    %c0_7 = arith.constant 0 : index
    %8 = vector.load %arg7[%c0_6, %c0_7] : memref<128x256xbf16, #tpu.memory_space<vmem>>, vector<128x256xbf16>
    %cst = arith.constant dense<0.000000e+00> : vector<8x256xf32>
    %9 = tpu.matmul %7, %8, %cst {dimension_numbers = #tpu.dot_dimension_numbers<[1], [0], [0], [1], [0, 0, 1, 1], [], []>} : vector<8x128xbf16>, vector<128x256xbf16>, vector<8x256xf32> -> vector<8x256xf32>
    %c0_8 = arith.constant 0 : index
    %c0_9 = arith.constant 0 : index
    %10 = vector.load %arg8[%c0_8, %c0_9] : memref<1x256xf32, #tpu.memory_space<vmem>>, vector<1x256xf32>
    %11 = vector.broadcast %10 : vector<1x256xf32> to vector<8x256xf32>
    %12 = arith.addf %9, %11 : vector<8x256xf32>
    %13 = vector.extract_strided_slice %12 {offsets = [0, 0], sizes = [8, 128], strides = [1, 1]} : vector<8x256xf32> to vector<8x128xf32>
    %14 = arith.truncf %13 : vector<8x128xf32> to vector<8x128xbf16>
    %15 = vector.extract_strided_slice %12 {offsets = [0, 128], sizes = [8, 128], strides = [1, 1]} : vector<8x256xf32> to vector<8x128xf32>
    %16 = arith.truncf %15 : vector<8x128xf32> to vector<8x128xbf16>
    %c0_10 = arith.constant 0 : index
    %c0_11 = arith.constant 0 : index
    %17 = vector.load %arg18[%c0_10, %c0_11] : memref<4x128xf32, #tpu.memory_space<vmem>>, vector<4x128xf32>
    %18 = vector.extract_strided_slice %17 {offsets = [0, 0], sizes = [4, 32], strides = [1, 1]} : vector<4x128xf32> to vector<4x32xf32>
    %19 = arith.truncf %18 : vector<4x32xf32> to vector<4x32xbf16>
    %20 = vector.extract_strided_slice %14 {offsets = [0, 0], sizes = [8, 32], strides = [1, 1]} : vector<8x128xbf16> to vector<8x32xbf16>
    %21 = vector.extract_strided_slice %16 {offsets = [0, 0], sizes = [8, 32], strides = [1, 1]} : vector<8x128xbf16> to vector<8x32xbf16>
    %cst_12 = arith.constant dense<0.000000e+00> : vector<4x8xf32>
    %22 = tpu.matmul %19, %20, %cst_12 {dimension_numbers = #tpu.dot_dimension_numbers<[1], [1], [0], [0], [0, 0, 1, 0], [], []>} : vector<4x32xbf16>, vector<8x32xbf16>, vector<4x8xf32> -> vector<4x8xf32>
    %c0_13 = arith.constant 0 : index
    %c0_14 = arith.constant 0 : index
    %c0_15 = arith.constant 0 : index
    %23 = vector.load %arg19[%c0_13, %c0_14, %c0_15] : memref<4x4x1xf32, #tpu.memory_space<vmem>>, vector<1x4x1xf32>
    %24 = vector.shape_cast %23 : vector<1x4x1xf32> to vector<4x1xf32>
    %cst_16 = arith.constant dense<0xFF800000> : vector<4xf32>
    %25 = vector.multi_reduction <maximumf>, %22, %cst_16 [1] : vector<4x8xf32> to vector<4xf32>
    %26 = vector.shape_cast %25 : vector<4xf32> to vector<4x1xf32>
    %27 = arith.maximumf %24, %26 : vector<4x1xf32>
    %28 = arith.subf %24, %27 : vector<4x1xf32>
    %29 = math.exp %28 : vector<4x1xf32>
    %30 = vector.broadcast %27 : vector<4x1xf32> to vector<4x8xf32>
    %31 = arith.subf %22, %30 : vector<4x8xf32>
    %32 = math.exp %31 : vector<4x8xf32>
    %c0_17 = arith.constant 0 : index
    %c0_18 = arith.constant 0 : index
    %c0_19 = arith.constant 0 : index
    %33 = vector.load %arg20[%c0_17, %c0_18, %c0_19] : memref<4x4x1xf32, #tpu.memory_space<vmem>>, vector<1x4x1xf32>
    %34 = vector.shape_cast %33 : vector<1x4x1xf32> to vector<4x1xf32>
    %35 = arith.mulf %29, %34 : vector<4x1xf32>
    %cst_20 = arith.constant dense<0.000000e+00> : vector<4xf32>
    %36 = vector.multi_reduction <add>, %32, %cst_20 [1] : vector<4x8xf32> to vector<4xf32>
    %37 = vector.shape_cast %36 : vector<4xf32> to vector<4x1xf32>
    %38 = arith.addf %35, %37 : vector<4x1xf32>
    %c0_21 = arith.constant 0 : index
    %c0_22 = arith.constant 0 : index
    %c0_23 = arith.constant 0 : index
    %39 = vector.load %arg20[%c0_21, %c0_22, %c0_23] : memref<4x4x1xf32, #tpu.memory_space<vmem>>, vector<1x4x1xf32>
    %40 = vector.shape_cast %39 : vector<1x4x1xf32> to vector<4x1xf32>
    %41 = vector.shape_cast %38 : vector<4x1xf32> to vector<1x4x1xf32>
    tpu.vector_store %arg20[%c0_21, %c0_22, %c0_23], %41 {strides = array<i32>} : memref<4x4x1xf32, #tpu.memory_space<vmem>>, vector<1x4x1xf32>,
    %42 = arith.truncf %32 : vector<4x8xf32> to vector<4x8xbf16>
    %cst_24 = arith.constant dense<0.000000e+00> : vector<4x32xf32>
    %43 = tpu.matmul %42, %21, %cst_24 {dimension_numbers = #tpu.dot_dimension_numbers<[1], [0], [0], [1], [0, 0, 1, 1], [], []>} : vector<4x8xbf16>, vector<8x32xbf16>, vector<4x32xf32> -> vector<4x32xf32>
    %c0_25 = arith.constant 0 : index
    %c0_26 = arith.constant 0 : index
    %44 = vector.load %arg21[%c0_25, %c0_26] : memref<4x128xf32, #tpu.memory_space<vmem>>, vector<4x32xf32>
    %45 = vector.broadcast %29 : vector<4x1xf32> to vector<4x32xf32>
    %46 = arith.mulf %45, %44 : vector<4x32xf32>
    %47 = arith.addf %46, %43 : vector<4x32xf32>
    %c0_27 = arith.constant 0 : index
    %c0_28 = arith.constant 0 : index
    %48 = vector.load %arg21[%c0_27, %c0_28] : memref<4x128xf32, #tpu.memory_space<vmem>>, vector<4x32xf32>
    tpu.vector_store %arg21[%c0_27, %c0_28], %47 {strides = array<i32>} : memref<4x128xf32, #tpu.memory_space<vmem>>, vector<4x32xf32>,
    %c0_29 = arith.constant 0 : index
    %c0_30 = arith.constant 0 : index
    %c0_31 = arith.constant 0 : index
    %49 = vector.load %arg19[%c0_29, %c0_30, %c0_31] : memref<4x4x1xf32, #tpu.memory_space<vmem>>, vector<1x4x1xf32>
    %50 = vector.shape_cast %49 : vector<1x4x1xf32> to vector<4x1xf32>
    %51 = vector.shape_cast %27 : vector<4x1xf32> to vector<1x4x1xf32>
    tpu.vector_store %arg19[%c0_29, %c0_30, %c0_31], %51 {strides = array<i32>} : memref<4x4x1xf32, #tpu.memory_space<vmem>>, vector<1x4x1xf32>,
    %52 = vector.extract_strided_slice %17 {offsets = [0, 32], sizes = [4, 32], strides = [1, 1]} : vector<4x128xf32> to vector<4x32xf32>
    %53 = arith.truncf %52 : vector<4x32xf32> to vector<4x32xbf16>
    %54 = vector.extract_strided_slice %14 {offsets = [0, 32], sizes = [8, 32], strides = [1, 1]} : vector<8x128xbf16> to vector<8x32xbf16>
    %55 = vector.extract_strided_slice %16 {offsets = [0, 32], sizes = [8, 32], strides = [1, 1]} : vector<8x128xbf16> to vector<8x32xbf16>
    %cst_32 = arith.constant dense<0.000000e+00> : vector<4x8xf32>
    %56 = tpu.matmul %53, %54, %cst_32 {dimension_numbers = #tpu.dot_dimension_numbers<[1], [1], [0], [0], [0, 0, 1, 0], [], []>} : vector<4x32xbf16>, vector<8x32xbf16>, vector<4x8xf32> -> vector<4x8xf32>
    %c1 = arith.constant 1 : index
    %c0_33 = arith.constant 0 : index
    %c0_34 = arith.constant 0 : index
    %57 = vector.load %arg19[%c1, %c0_33, %c0_34] : memref<4x4x1xf32, #tpu.memory_space<vmem>>, vector<1x4x1xf32>
    %58 = vector.shape_cast %57 : vector<1x4x1xf32> to vector<4x1xf32>
    %cst_35 = arith.constant dense<0xFF800000> : vector<4xf32>
    %59 = vector.multi_reduction <maximumf>, %56, %cst_35 [1] : vector<4x8xf32> to vector<4xf32>
    %60 = vector.shape_cast %59 : vector<4xf32> to vector<4x1xf32>
    %61 = arith.maximumf %58, %60 : vector<4x1xf32>
    %62 = arith.subf %58, %61 : vector<4x1xf32>
    %63 = math.exp %62 : vector<4x1xf32>
    %64 = vector.broadcast %61 : vector<4x1xf32> to vector<4x8xf32>
    %65 = arith.subf %56, %64 : vector<4x8xf32>
    %66 = math.exp %65 : vector<4x8xf32>
    %c1_36 = arith.constant 1 : index
    %c0_37 = arith.constant 0 : index
    %c0_38 = arith.constant 0 : index
    %67 = vector.load %arg20[%c1_36, %c0_37, %c0_38] : memref<4x4x1xf32, #tpu.memory_space<vmem>>, vector<1x4x1xf32>
    %68 = vector.shape_cast %67 : vector<1x4x1xf32> to vector<4x1xf32>
    %69 = arith.mulf %63, %68 : vector<4x1xf32>
    %cst_39 = arith.constant dense<0.000000e+00> : vector<4xf32>
    %70 = vector.multi_reduction <add>, %66, %cst_39 [1] : vector<4x8xf32> to vector<4xf32>
    %71 = vector.shape_cast %70 : vector<4xf32> to vector<4x1xf32>
    %72 = arith.addf %69, %71 : vector<4x1xf32>
    %c1_40 = arith.constant 1 : index
    %c0_41 = arith.constant 0 : index
    %c0_42 = arith.constant 0 : index
    %73 = vector.load %arg20[%c1_40, %c0_41, %c0_42] : memref<4x4x1xf32, #tpu.memory_space<vmem>>, vector<1x4x1xf32>
    %74 = vector.shape_cast %73 : vector<1x4x1xf32> to vector<4x1xf32>
    %75 = vector.shape_cast %72 : vector<4x1xf32> to vector<1x4x1xf32>
    tpu.vector_store %arg20[%c1_40, %c0_41, %c0_42], %75 {strides = array<i32>} : memref<4x4x1xf32, #tpu.memory_space<vmem>>, vector<1x4x1xf32>,
    %76 = arith.truncf %66 : vector<4x8xf32> to vector<4x8xbf16>
    %cst_43 = arith.constant dense<0.000000e+00> : vector<4x32xf32>
    %77 = tpu.matmul %76, %55, %cst_43 {dimension_numbers = #tpu.dot_dimension_numbers<[1], [0], [0], [1], [0, 0, 1, 1], [], []>} : vector<4x8xbf16>, vector<8x32xbf16>, vector<4x32xf32> -> vector<4x32xf32>
    %c0_44 = arith.constant 0 : index
    %c32 = arith.constant 32 : index
    %78 = vector.load %arg21[%c0_44, %c32] : memref<4x128xf32, #tpu.memory_space<vmem>>, vector<4x32xf32>
    %79 = vector.broadcast %63 : vector<4x1xf32> to vector<4x32xf32>
    %80 = arith.mulf %79, %78 : vector<4x32xf32>
    %81 = arith.addf %80, %77 : vector<4x32xf32>
    %c0_45 = arith.constant 0 : index
    %c32_46 = arith.constant 32 : index
    %82 = vector.load %arg21[%c0_45, %c32_46] : memref<4x128xf32, #tpu.memory_space<vmem>>, vector<4x32xf32>
    tpu.vector_store %arg21[%c0_45, %c32_46], %81 {strides = array<i32>} : memref<4x128xf32, #tpu.memory_space<vmem>>, vector<4x32xf32>,
    %c1_47 = arith.constant 1 : index
    %c0_48 = arith.constant 0 : index
    %c0_49 = arith.constant 0 : index
    %83 = vector.load %arg19[%c1_47, %c0_48, %c0_49] : memref<4x4x1xf32, #tpu.memory_space<vmem>>, vector<1x4x1xf32>
    %84 = vector.shape_cast %83 : vector<1x4x1xf32> to vector<4x1xf32>
    %85 = vector.shape_cast %61 : vector<4x1xf32> to vector<1x4x1xf32>
    tpu.vector_store %arg19[%c1_47, %c0_48, %c0_49], %85 {strides = array<i32>} : memref<4x4x1xf32, #tpu.memory_space<vmem>>, vector<1x4x1xf32>,
    %86 = vector.extract_strided_slice %17 {offsets = [0, 64], sizes = [4, 32], strides = [1, 1]} : vector<4x128xf32> to vector<4x32xf32>
    %87 = arith.truncf %86 : vector<4x32xf32> to vector<4x32xbf16>
    %88 = vector.extract_strided_slice %14 {offsets = [0, 64], sizes = [8, 32], strides = [1, 1]} : vector<8x128xbf16> to vector<8x32xbf16>
    %89 = vector.extract_strided_slice %16 {offsets = [0, 64], sizes = [8, 32], strides = [1, 1]} : vector<8x128xbf16> to vector<8x32xbf16>
    %cst_50 = arith.constant dense<0.000000e+00> : vector<4x8xf32>
    %90 = tpu.matmul %87, %88, %cst_50 {dimension_numbers = #tpu.dot_dimension_numbers<[1], [1], [0], [0], [0, 0, 1, 0], [], []>} : vector<4x32xbf16>, vector<8x32xbf16>, vector<4x8xf32> -> vector<4x8xf32>
    %c2 = arith.constant 2 : index
    %c0_51 = arith.constant 0 : index
    %c0_52 = arith.constant 0 : index
    %91 = vector.load %arg19[%c2, %c0_51, %c0_52] : memref<4x4x1xf32, #tpu.memory_space<vmem>>, vector<1x4x1xf32>
    %92 = vector.shape_cast %91 : vector<1x4x1xf32> to vector<4x1xf32>
    %cst_53 = arith.constant dense<0xFF800000> : vector<4xf32>
    %93 = vector.multi_reduction <maximumf>, %90, %cst_53 [1] : vector<4x8xf32> to vector<4xf32>
    %94 = vector.shape_cast %93 : vector<4xf32> to vector<4x1xf32>
    %95 = arith.maximumf %92, %94 : vector<4x1xf32>
    %96 = arith.subf %92, %95 : vector<4x1xf32>
    %97 = math.exp %96 : vector<4x1xf32>
    %98 = vector.broadcast %95 : vector<4x1xf32> to vector<4x8xf32>
    %99 = arith.subf %90, %98 : vector<4x8xf32>
    %100 = math.exp %99 : vector<4x8xf32>
    %c2_54 = arith.constant 2 : index
    %c0_55 = arith.constant 0 : index
    %c0_56 = arith.constant 0 : index
    %101 = vector.load %arg20[%c2_54, %c0_55, %c0_56] : memref<4x4x1xf32, #tpu.memory_space<vmem>>, vector<1x4x1xf32>
    %102 = vector.shape_cast %101 : vector<1x4x1xf32> to vector<4x1xf32>
    %103 = arith.mulf %97, %102 : vector<4x1xf32>
    %cst_57 = arith.constant dense<0.000000e+00> : vector<4xf32>
    %104 = vector.multi_reduction <add>, %100, %cst_57 [1] : vector<4x8xf32> to vector<4xf32>
    %105 = vector.shape_cast %104 : vector<4xf32> to vector<4x1xf32>
    %106 = arith.addf %103, %105 : vector<4x1xf32>
    %c2_58 = arith.constant 2 : index
    %c0_59 = arith.constant 0 : index
    %c0_60 = arith.constant 0 : index
    %107 = vector.load %arg20[%c2_58, %c0_59, %c0_60] : memref<4x4x1xf32, #tpu.memory_space<vmem>>, vector<1x4x1xf32>
    %108 = vector.shape_cast %107 : vector<1x4x1xf32> to vector<4x1xf32>
    %109 = vector.shape_cast %106 : vector<4x1xf32> to vector<1x4x1xf32>
    tpu.vector_store %arg20[%c2_58, %c0_59, %c0_60], %109 {strides = array<i32>} : memref<4x4x1xf32, #tpu.memory_space<vmem>>, vector<1x4x1xf32>,
    %110 = arith.truncf %100 : vector<4x8xf32> to vector<4x8xbf16>
    %cst_61 = arith.constant dense<0.000000e+00> : vector<4x32xf32>
    %111 = tpu.matmul %110, %89, %cst_61 {dimension_numbers = #tpu.dot_dimension_numbers<[1], [0], [0], [1], [0, 0, 1, 1], [], []>} : vector<4x8xbf16>, vector<8x32xbf16>, vector<4x32xf32> -> vector<4x32xf32>
    %c0_62 = arith.constant 0 : index
    %c64 = arith.constant 64 : index
    %112 = vector.load %arg21[%c0_62, %c64] : memref<4x128xf32, #tpu.memory_space<vmem>>, vector<4x32xf32>
    %113 = vector.broadcast %97 : vector<4x1xf32> to vector<4x32xf32>
    %114 = arith.mulf %113, %112 : vector<4x32xf32>
    %115 = arith.addf %114, %111 : vector<4x32xf32>
    %c0_63 = arith.constant 0 : index
    %c64_64 = arith.constant 64 : index
    %116 = vector.load %arg21[%c0_63, %c64_64] : memref<4x128xf32, #tpu.memory_space<vmem>>, vector<4x32xf32>
    tpu.vector_store %arg21[%c0_63, %c64_64], %115 {strides = array<i32>} : memref<4x128xf32, #tpu.memory_space<vmem>>, vector<4x32xf32>,
    %c2_65 = arith.constant 2 : index
    %c0_66 = arith.constant 0 : index
    %c0_67 = arith.constant 0 : index
    %117 = vector.load %arg19[%c2_65, %c0_66, %c0_67] : memref<4x4x1xf32, #tpu.memory_space<vmem>>, vector<1x4x1xf32>
    %118 = vector.shape_cast %117 : vector<1x4x1xf32> to vector<4x1xf32>
    %119 = vector.shape_cast %95 : vector<4x1xf32> to vector<1x4x1xf32>
    tpu.vector_store %arg19[%c2_65, %c0_66, %c0_67], %119 {strides = array<i32>} : memref<4x4x1xf32, #tpu.memory_space<vmem>>, vector<1x4x1xf32>,
    %120 = vector.extract_strided_slice %17 {offsets = [0, 96], sizes = [4, 32], strides = [1, 1]} : vector<4x128xf32> to vector<4x32xf32>
    %121 = arith.truncf %120 : vector<4x32xf32> to vector<4x32xbf16>
    %122 = vector.extract_strided_slice %14 {offsets = [0, 96], sizes = [8, 32], strides = [1, 1]} : vector<8x128xbf16> to vector<8x32xbf16>
    %123 = vector.extract_strided_slice %16 {offsets = [0, 96], sizes = [8, 32], strides = [1, 1]} : vector<8x128xbf16> to vector<8x32xbf16>
    %cst_68 = arith.constant dense<0.000000e+00> : vector<4x8xf32>
    %124 = tpu.matmul %121, %122, %cst_68 {dimension_numbers = #tpu.dot_dimension_numbers<[1], [1], [0], [0], [0, 0, 1, 0], [], []>} : vector<4x32xbf16>, vector<8x32xbf16>, vector<4x8xf32> -> vector<4x8xf32>
    %c3 = arith.constant 3 : index
    %c0_69 = arith.constant 0 : index
    %c0_70 = arith.constant 0 : index
    %125 = vector.load %arg19[%c3, %c0_69, %c0_70] : memref<4x4x1xf32, #tpu.memory_space<vmem>>, vector<1x4x1xf32>
    %126 = vector.shape_cast %125 : vector<1x4x1xf32> to vector<4x1xf32>
    %cst_71 = arith.constant dense<0xFF800000> : vector<4xf32>
    %127 = vector.multi_reduction <maximumf>, %124, %cst_71 [1] : vector<4x8xf32> to vector<4xf32>
    %128 = vector.shape_cast %127 : vector<4xf32> to vector<4x1xf32>
    %129 = arith.maximumf %126, %128 : vector<4x1xf32>
    %130 = arith.subf %126, %129 : vector<4x1xf32>
    %131 = math.exp %130 : vector<4x1xf32>
    %132 = vector.broadcast %129 : vector<4x1xf32> to vector<4x8xf32>
    %133 = arith.subf %124, %132 : vector<4x8xf32>
    %134 = math.exp %133 : vector<4x8xf32>
    %c3_72 = arith.constant 3 : index
    %c0_73 = arith.constant 0 : index
    %c0_74 = arith.constant 0 : index
    %135 = vector.load %arg20[%c3_72, %c0_73, %c0_74] : memref<4x4x1xf32, #tpu.memory_space<vmem>>, vector<1x4x1xf32>
    %136 = vector.shape_cast %135 : vector<1x4x1xf32> to vector<4x1xf32>
    %137 = arith.mulf %131, %136 : vector<4x1xf32>
    %cst_75 = arith.constant dense<0.000000e+00> : vector<4xf32>
    %138 = vector.multi_reduction <add>, %134, %cst_75 [1] : vector<4x8xf32> to vector<4xf32>
    %139 = vector.shape_cast %138 : vector<4xf32> to vector<4x1xf32>
    %140 = arith.addf %137, %139 : vector<4x1xf32>
    %c3_76 = arith.constant 3 : index
    %c0_77 = arith.constant 0 : index
    %c0_78 = arith.constant 0 : index
    %141 = vector.load %arg20[%c3_76, %c0_77, %c0_78] : memref<4x4x1xf32, #tpu.memory_space<vmem>>, vector<1x4x1xf32>
    %142 = vector.shape_cast %141 : vector<1x4x1xf32> to vector<4x1xf32>
    %143 = vector.shape_cast %140 : vector<4x1xf32> to vector<1x4x1xf32>
    tpu.vector_store %arg20[%c3_76, %c0_77, %c0_78], %143 {strides = array<i32>} : memref<4x4x1xf32, #tpu.memory_space<vmem>>, vector<1x4x1xf32>,
    %144 = arith.truncf %134 : vector<4x8xf32> to vector<4x8xbf16>
    %cst_79 = arith.constant dense<0.000000e+00> : vector<4x32xf32>
    %145 = tpu.matmul %144, %123, %cst_79 {dimension_numbers = #tpu.dot_dimension_numbers<[1], [0], [0], [1], [0, 0, 1, 1], [], []>} : vector<4x8xbf16>, vector<8x32xbf16>, vector<4x32xf32> -> vector<4x32xf32>
    %c0_80 = arith.constant 0 : index
    %c96 = arith.constant 96 : index
    %146 = vector.load %arg21[%c0_80, %c96] : memref<4x128xf32, #tpu.memory_space<vmem>>, vector<4x32xf32>
    %147 = vector.broadcast %131 : vector<4x1xf32> to vector<4x32xf32>
    %148 = arith.mulf %147, %146 : vector<4x32xf32>
    %149 = arith.addf %148, %145 : vector<4x32xf32>
    %c0_81 = arith.constant 0 : index
    %c96_82 = arith.constant 96 : index
    %150 = vector.load %arg21[%c0_81, %c96_82] : memref<4x128xf32, #tpu.memory_space<vmem>>, vector<4x32xf32>
    tpu.vector_store %arg21[%c0_81, %c96_82], %149 {strides = array<i32>} : memref<4x128xf32, #tpu.memory_space<vmem>>, vector<4x32xf32>,
    %c3_83 = arith.constant 3 : index
    %c0_84 = arith.constant 0 : index
    %c0_85 = arith.constant 0 : index
    %151 = vector.load %arg19[%c3_83, %c0_84, %c0_85] : memref<4x4x1xf32, #tpu.memory_space<vmem>>, vector<1x4x1xf32>
    %152 = vector.shape_cast %151 : vector<1x4x1xf32> to vector<4x1xf32>
    %153 = vector.shape_cast %129 : vector<4x1xf32> to vector<1x4x1xf32>
    tpu.vector_store %arg19[%c3_83, %c0_84, %c0_85], %153 {strides = array<i32>} : memref<4x4x1xf32, #tpu.memory_space<vmem>>, vector<1x4x1xf32>,
    %c0_i32_86 = arith.constant 0 : i32
    %154 = arith.cmpi eq, %arg2, %c0_i32_86 : i32
    %155 = arith.extui %154 : i1 to i32
    %c0_i32_87 = arith.constant 0 : i32
    %156 = arith.cmpi ne, %155, %c0_i32_87 : i32
    scf.if %156 {
      %c0_88 = arith.constant 0 : index
      %c0_89 = arith.constant 0 : index
      %157 = vector.load %arg21[%c0_88, %c0_89] : memref<4x128xf32, #tpu.memory_space<vmem>>, vector<4x32xf32>
      %c0_90 = arith.constant 0 : index
      %c0_91 = arith.constant 0 : index
      %c0_92 = arith.constant 0 : index
      %158 = vector.load %arg20[%c0_90, %c0_91, %c0_92] : memref<4x4x1xf32, #tpu.memory_space<vmem>>, vector<1x4x1xf32>
      %159 = vector.shape_cast %158 : vector<1x4x1xf32> to vector<4x1xf32>
      %160 = tpu.reciprocal %159 {approx = true} : vector<4x1xf32> -> vector<4x1xf32>
      %161 = vector.broadcast %160 : vector<4x1xf32> to vector<4x32xf32>
      %162 = arith.mulf %157, %161 : vector<4x32xf32>
      %c0_93 = arith.constant 0 : index
      %c32_94 = arith.constant 32 : index
      %163 = vector.load %arg21[%c0_93, %c32_94] : memref<4x128xf32, #tpu.memory_space<vmem>>, vector<4x32xf32>
      %c1_95 = arith.constant 1 : index
      %c0_96 = arith.constant 0 : index
      %c0_97 = arith.constant 0 : index
      %164 = vector.load %arg20[%c1_95, %c0_96, %c0_97] : memref<4x4x1xf32, #tpu.memory_space<vmem>>, vector<1x4x1xf32>
      %165 = vector.shape_cast %164 : vector<1x4x1xf32> to vector<4x1xf32>
      %166 = tpu.reciprocal %165 {approx = true} : vector<4x1xf32> -> vector<4x1xf32>
      %167 = vector.broadcast %166 : vector<4x1xf32> to vector<4x32xf32>
      %168 = arith.mulf %163, %167 : vector<4x32xf32>
      %c0_98 = arith.constant 0 : index
      %c64_99 = arith.constant 64 : index
      %169 = vector.load %arg21[%c0_98, %c64_99] : memref<4x128xf32, #tpu.memory_space<vmem>>, vector<4x32xf32>
      %c2_100 = arith.constant 2 : index
      %c0_101 = arith.constant 0 : index
      %c0_102 = arith.constant 0 : index
      %170 = vector.load %arg20[%c2_100, %c0_101, %c0_102] : memref<4x4x1xf32, #tpu.memory_space<vmem>>, vector<1x4x1xf32>
      %171 = vector.shape_cast %170 : vector<1x4x1xf32> to vector<4x1xf32>
      %172 = tpu.reciprocal %171 {approx = true} : vector<4x1xf32> -> vector<4x1xf32>
      %173 = vector.broadcast %172 : vector<4x1xf32> to vector<4x32xf32>
      %174 = arith.mulf %169, %173 : vector<4x32xf32>
      %c0_103 = arith.constant 0 : index
      %c96_104 = arith.constant 96 : index
      %175 = vector.load %arg21[%c0_103, %c96_104] : memref<4x128xf32, #tpu.memory_space<vmem>>, vector<4x32xf32>
      %c3_105 = arith.constant 3 : index
      %c0_106 = arith.constant 0 : index
      %c0_107 = arith.constant 0 : index
      %176 = vector.load %arg20[%c3_105, %c0_106, %c0_107] : memref<4x4x1xf32, #tpu.memory_space<vmem>>, vector<1x4x1xf32>
      %177 = vector.shape_cast %176 : vector<1x4x1xf32> to vector<4x1xf32>
      %178 = tpu.reciprocal %177 {approx = true} : vector<4x1xf32> -> vector<4x1xf32>
      %179 = vector.broadcast %178 : vector<4x1xf32> to vector<4x32xf32>
      %180 = arith.mulf %175, %179 : vector<4x32xf32>
      %181 = tpu.concatenate %162, %168, %174, %180 in 1 : vector<4x32xf32>, vector<4x32xf32>, vector<4x32xf32>, vector<4x32xf32> -> vector<4x128xf32>
      %182 = arith.truncf %181 : vector<4x128xf32> to vector<4x128xbf16>
      %c0_108 = arith.constant 0 : index
      %c0_109 = arith.constant 0 : index
      %183 = vector.load %arg9[%c0_108, %c0_109] : memref<128x128xbf16, #tpu.memory_space<vmem>>, vector<128x128xbf16>
      %cst_110 = arith.constant dense<0.000000e+00> : vector<4x128xf32>
      %184 = tpu.matmul %182, %183, %cst_110 {dimension_numbers = #tpu.dot_dimension_numbers<[1], [0], [0], [1], [0, 0, 1, 1], [], []>} : vector<4x128xbf16>, vector<128x128xbf16>, vector<4x128xf32> -> vector<4x128xf32>
      %c0_111 = arith.constant 0 : index
      %c0_112 = arith.constant 0 : index
      %185 = vector.load %arg10[%c0_111, %c0_112] : memref<1x128xf32, #tpu.memory_space<vmem>>, vector<1x128xf32>
      %186 = vector.broadcast %185 : vector<1x128xf32> to vector<4x128xf32>
      %187 = arith.addf %184, %186 : vector<4x128xf32>
      %188 = arith.addf %1, %187 : vector<4x128xf32>
      %c0_113 = arith.constant 0 : index
      %c0_114 = arith.constant 0 : index
      %189 = vector.load %arg11[%c0_113, %c0_114] : memref<1x128xf32, #tpu.memory_space<vmem>>, vector<1x128xf32>
      %c0_115 = arith.constant 0 : index
      %c0_116 = arith.constant 0 : index
      %190 = vector.load %arg12[%c0_115, %c0_116] : memref<1x128xf32, #tpu.memory_space<vmem>>, vector<1x128xf32>
      %cst_117 = arith.constant dense<0.000000e+00> : vector<4xf32>
      %191 = vector.multi_reduction <add>, %188, %cst_117 [1] : vector<4x128xf32> to vector<4xf32>
      %192 = vector.shape_cast %191 : vector<4xf32> to vector<4x1xf32>
      %cst_118 = arith.constant 1.280000e+02 : f32
      %193 = vector.broadcast %cst_118 : f32 to vector<4x1xf32>
      %194 = arith.divf %192, %193 : vector<4x1xf32>
      %195 = vector.broadcast %194 : vector<4x1xf32> to vector<4x128xf32>
      %196 = arith.subf %188, %195 : vector<4x128xf32>
      %197 = arith.mulf %196, %196 : vector<4x128xf32>
      %cst_119 = arith.constant dense<0.000000e+00> : vector<4xf32>
      %198 = vector.multi_reduction <add>, %197, %cst_119 [1] : vector<4x128xf32> to vector<4xf32>
      %199 = vector.shape_cast %198 : vector<4xf32> to vector<4x1xf32>
      %cst_120 = arith.constant 1.280000e+02 : f32
      %200 = vector.broadcast %cst_120 : f32 to vector<4x1xf32>
      %201 = arith.divf %199, %200 : vector<4x1xf32>
      %cst_121 = arith.constant 9.99999974E-6 : f32
      %202 = vector.broadcast %cst_121 : f32 to vector<4x1xf32>
      %203 = arith.addf %201, %202 : vector<4x1xf32>
      %204 = math.rsqrt %203 : vector<4x1xf32>
      %205 = vector.broadcast %204 : vector<4x1xf32> to vector<4x128xf32>
      %206 = arith.mulf %196, %205 : vector<4x128xf32>
      %207 = vector.broadcast %189 : vector<1x128xf32> to vector<4x128xf32>
      %208 = arith.mulf %206, %207 : vector<4x128xf32>
      %209 = vector.broadcast %190 : vector<1x128xf32> to vector<4x128xf32>
      %210 = arith.addf %208, %209 : vector<4x128xf32>
      %211 = arith.truncf %210 : vector<4x128xf32> to vector<4x128xbf16>
      %c0_122 = arith.constant 0 : index
      %c0_123 = arith.constant 0 : index
      %c0_124 = arith.constant 0 : index
      %212 = vector.load %arg13[%c0_122, %c0_123, %c0_124] : memref<3x128x128xbf16, #tpu.memory_space<vmem>>, vector<1x128x128xbf16>
      %213 = vector.shape_cast %212 : vector<1x128x128xbf16> to vector<128x128xbf16>
      %cst_125 = arith.constant dense<0.000000e+00> : vector<4x128xf32>
      %214 = tpu.matmul %211, %213, %cst_125 {dimension_numbers = #tpu.dot_dimension_numbers<[1], [0], [0], [1], [0, 0, 1, 1], [], []>} : vector<4x128xbf16>, vector<128x128xbf16>, vector<4x128xf32> -> vector<4x128xf32>
      %c0_126 = arith.constant 0 : index
      %c0_127 = arith.constant 0 : index
      %c0_128 = arith.constant 0 : index
      %215 = vector.load %arg14[%c0_126, %c0_127, %c0_128] : memref<3x1x128xf32, #tpu.memory_space<vmem>>, vector<1x1x128xf32>
      %216 = vector.shape_cast %215 : vector<1x1x128xf32> to vector<1x128xf32>
      %217 = vector.broadcast %216 : vector<1x128xf32> to vector<4x128xf32>
      %218 = arith.addf %214, %217 : vector<4x128xf32>
      %cst_129 = arith.constant 0.000000e+00 : f32
      %219 = vector.broadcast %cst_129 : f32 to vector<4x128xf32>
      %220 = arith.maximumf %218, %219 : vector<4x128xf32>
      %221 = arith.truncf %220 : vector<4x128xf32> to vector<4x128xbf16>
      %c1_130 = arith.constant 1 : index
      %c0_131 = arith.constant 0 : index
      %c0_132 = arith.constant 0 : index
      %222 = vector.load %arg13[%c1_130, %c0_131, %c0_132] : memref<3x128x128xbf16, #tpu.memory_space<vmem>>, vector<1x128x128xbf16>
      %223 = vector.shape_cast %222 : vector<1x128x128xbf16> to vector<128x128xbf16>
      %cst_133 = arith.constant dense<0.000000e+00> : vector<4x128xf32>
      %224 = tpu.matmul %221, %223, %cst_133 {dimension_numbers = #tpu.dot_dimension_numbers<[1], [0], [0], [1], [0, 0, 1, 1], [], []>} : vector<4x128xbf16>, vector<128x128xbf16>, vector<4x128xf32> -> vector<4x128xf32>
      %c1_134 = arith.constant 1 : index
      %c0_135 = arith.constant 0 : index
      %c0_136 = arith.constant 0 : index
      %225 = vector.load %arg14[%c1_134, %c0_135, %c0_136] : memref<3x1x128xf32, #tpu.memory_space<vmem>>, vector<1x1x128xf32>
      %226 = vector.shape_cast %225 : vector<1x1x128xf32> to vector<1x128xf32>
      %227 = vector.broadcast %226 : vector<1x128xf32> to vector<4x128xf32>
      %228 = arith.addf %224, %227 : vector<4x128xf32>
      %cst_137 = arith.constant 0.000000e+00 : f32
      %229 = vector.broadcast %cst_137 : f32 to vector<4x128xf32>
      %230 = arith.maximumf %228, %229 : vector<4x128xf32>
      %231 = arith.truncf %230 : vector<4x128xf32> to vector<4x128xbf16>
      %c2_138 = arith.constant 2 : index
      %c0_139 = arith.constant 0 : index
      %c0_140 = arith.constant 0 : index
      %232 = vector.load %arg13[%c2_138, %c0_139, %c0_140] : memref<3x128x128xbf16, #tpu.memory_space<vmem>>, vector<1x128x128xbf16>
      %233 = vector.shape_cast %232 : vector<1x128x128xbf16> to vector<128x128xbf16>
      %cst_141 = arith.constant dense<0.000000e+00> : vector<4x128xf32>
      %234 = tpu.matmul %231, %233, %cst_141 {dimension_numbers = #tpu.dot_dimension_numbers<[1], [0], [0], [1], [0, 0, 1, 1], [], []>} : vector<4x128xbf16>, vector<128x128xbf16>, vector<4x128xf32> -> vector<4x128xf32>
      %c2_142 = arith.constant 2 : index
      %c0_143 = arith.constant 0 : index
      %c0_144 = arith.constant 0 : index
      %235 = vector.load %arg14[%c2_142, %c0_143, %c0_144] : memref<3x1x128xf32, #tpu.memory_space<vmem>>, vector<1x1x128xf32>
      %236 = vector.shape_cast %235 : vector<1x1x128xf32> to vector<1x128xf32>
      %237 = vector.broadcast %236 : vector<1x128xf32> to vector<4x128xf32>
      %238 = arith.addf %234, %237 : vector<4x128xf32>
      %cst_145 = arith.constant 0.000000e+00 : f32
      %239 = vector.broadcast %cst_145 : f32 to vector<4x128xf32>
      %240 = arith.maximumf %238, %239 : vector<4x128xf32>
      %241 = arith.addf %210, %240 : vector<4x128xf32>
      %c0_146 = arith.constant 0 : index
      %c0_147 = arith.constant 0 : index
      %242 = vector.load %arg15[%c0_146, %c0_147] : memref<1x128xf32, #tpu.memory_space<vmem>>, vector<1x128xf32>
      %c0_148 = arith.constant 0 : index
      %c0_149 = arith.constant 0 : index
      %243 = vector.load %arg16[%c0_148, %c0_149] : memref<1x128xf32, #tpu.memory_space<vmem>>, vector<1x128xf32>
      %cst_150 = arith.constant dense<0.000000e+00> : vector<4xf32>
      %244 = vector.multi_reduction <add>, %241, %cst_150 [1] : vector<4x128xf32> to vector<4xf32>
      %245 = vector.shape_cast %244 : vector<4xf32> to vector<4x1xf32>
      %cst_151 = arith.constant 1.280000e+02 : f32
      %246 = vector.broadcast %cst_151 : f32 to vector<4x1xf32>
      %247 = arith.divf %245, %246 : vector<4x1xf32>
      %248 = vector.broadcast %247 : vector<4x1xf32> to vector<4x128xf32>
      %249 = arith.subf %241, %248 : vector<4x128xf32>
      %250 = arith.mulf %249, %249 : vector<4x128xf32>
      %cst_152 = arith.constant dense<0.000000e+00> : vector<4xf32>
      %251 = vector.multi_reduction <add>, %250, %cst_152 [1] : vector<4x128xf32> to vector<4xf32>
      %252 = vector.shape_cast %251 : vector<4xf32> to vector<4x1xf32>
      %cst_153 = arith.constant 1.280000e+02 : f32
      %253 = vector.broadcast %cst_153 : f32 to vector<4x1xf32>
      %254 = arith.divf %252, %253 : vector<4x1xf32>
      %cst_154 = arith.constant 9.99999974E-6 : f32
      %255 = vector.broadcast %cst_154 : f32 to vector<4x1xf32>
      %256 = arith.addf %254, %255 : vector<4x1xf32>
      %257 = math.rsqrt %256 : vector<4x1xf32>
      %258 = vector.broadcast %257 : vector<4x1xf32> to vector<4x128xf32>
      %259 = arith.mulf %249, %258 : vector<4x128xf32>
      %260 = vector.broadcast %242 : vector<1x128xf32> to vector<4x128xf32>
      %261 = arith.mulf %259, %260 : vector<4x128xf32>
      %262 = vector.broadcast %243 : vector<1x128xf32> to vector<4x128xf32>
      %263 = arith.addf %261, %262 : vector<4x128xf32>
      %c0_155 = arith.constant 0 : index
      %c0_156 = arith.constant 0 : index
      %c0_157 = arith.constant 0 : index
      %264 = vector.load %arg17[%c0_155, %c0_156, %c0_157] : memref<1x4x128xf32, #tpu.memory_space<vmem>>, vector<1x4x128xf32>
      %265 = vector.shape_cast %264 : vector<1x4x128xf32> to vector<4x128xf32>
      %266 = vector.shape_cast %263 : vector<4x128xf32> to vector<1x4x128xf32>
      tpu.vector_store %arg17[%c0_155, %c0_156, %c0_157], %266 {strides = array<i32>} : memref<1x4x128xf32, #tpu.memory_space<vmem>>, vector<1x4x128xf32>,
    } else {
    }
    return
  }
  func.func @transform_0(%arg0: i32, %arg1: i32, %arg2: i32) -> (i32, i32, i32) {
    %c0_i32 = arith.constant 0 : i32
    %c0_i32_0 = arith.constant 0 : i32
    %c0_i32_1 = arith.constant 0 : i32
    return %c0_i32, %arg1, %c0_i32_0 : i32, i32, i32
  }
  func.func @transform_1(%arg0: i32, %arg1: i32, %arg2: i32) -> (i32, i32, i32) {
    %c0_i32 = arith.constant 0 : i32
    %c0_i32_0 = arith.constant 0 : i32
    return %arg0, %arg2, %c0_i32 : i32, i32, i32
  }
  func.func @transform_2(%arg0: i32, %arg1: i32, %arg2: i32) -> (i32, i32) {
    %c0_i32 = arith.constant 0 : i32
    %c0_i32_0 = arith.constant 0 : i32
    %c0_i32_1 = arith.constant 0 : i32
    return %c0_i32, %c0_i32_0 : i32, i32
  }
  func.func @transform_3(%arg0: i32, %arg1: i32, %arg2: i32) -> (i32, i32) {
    %c0_i32 = arith.constant 0 : i32
    %c0_i32_0 = arith.constant 0 : i32
    %c0_i32_1 = arith.constant 0 : i32
    return %c0_i32, %c0_i32_0 : i32, i32
  }
  func.func @transform_4(%arg0: i32, %arg1: i32, %arg2: i32) -> (i32, i32) {
    %c0_i32 = arith.constant 0 : i32
    %c0_i32_0 = arith.constant 0 : i32
    %c0_i32_1 = arith.constant 0 : i32
    return %c0_i32, %c0_i32_0 : i32, i32
  }
  func.func @transform_5(%arg0: i32, %arg1: i32, %arg2: i32) -> (i32, i32) {
    %c0_i32 = arith.constant 0 : i32
    %c0_i32_0 = arith.constant 0 : i32
    %c0_i32_1 = arith.constant 0 : i32
    return %c0_i32, %c0_i32_0 : i32, i32
  }
  func.func @transform_6(%arg0: i32, %arg1: i32, %arg2: i32) -> (i32, i32) {
    %c0_i32 = arith.constant 0 : i32
    %c0_i32_0 = arith.constant 0 : i32
    %c0_i32_1 = arith.constant 0 : i32
    return %c0_i32, %c0_i32_0 : i32, i32
  }
  func.func @transform_7(%arg0: i32, %arg1: i32, %arg2: i32) -> (i32, i32) {
    %c0_i32 = arith.constant 0 : i32
    %c0_i32_0 = arith.constant 0 : i32
    %c0_i32_1 = arith.constant 0 : i32
    return %c0_i32, %c0_i32_0 : i32, i32
  }
  func.func @transform_8(%arg0: i32, %arg1: i32, %arg2: i32) -> (i32, i32) {
    %c0_i32 = arith.constant 0 : i32
    %c0_i32_0 = arith.constant 0 : i32
    %c0_i32_1 = arith.constant 0 : i32
    return %c0_i32, %c0_i32_0 : i32, i32
  }
  func.func @transform_9(%arg0: i32, %arg1: i32, %arg2: i32) -> (i32, i32) {
    %c0_i32 = arith.constant 0 : i32
    %c0_i32_0 = arith.constant 0 : i32
    %c0_i32_1 = arith.constant 0 : i32
    return %c0_i32, %c0_i32_0 : i32, i32
  }
  func.func @transform_10(%arg0: i32, %arg1: i32, %arg2: i32) -> (i32, i32, i32) {
    %c0_i32 = arith.constant 0 : i32
    %c0_i32_0 = arith.constant 0 : i32
    %c0_i32_1 = arith.constant 0 : i32
    %c0_i32_2 = arith.constant 0 : i32
    return %c0_i32, %c0_i32_0, %c0_i32_1 : i32, i32, i32
  }
  func.func @transform_11(%arg0: i32, %arg1: i32, %arg2: i32) -> (i32, i32, i32) {
    %c0_i32 = arith.constant 0 : i32
    %c0_i32_0 = arith.constant 0 : i32
    %c0_i32_1 = arith.constant 0 : i32
    %c0_i32_2 = arith.constant 0 : i32
    return %c0_i32, %c0_i32_0, %c0_i32_1 : i32, i32, i32
  }
  func.func @transform_12(%arg0: i32, %arg1: i32, %arg2: i32) -> (i32, i32) {
    %c0_i32 = arith.constant 0 : i32
    %c0_i32_0 = arith.constant 0 : i32
    %c0_i32_1 = arith.constant 0 : i32
    return %c0_i32, %c0_i32_0 : i32, i32
  }
  func.func @transform_13(%arg0: i32, %arg1: i32, %arg2: i32) -> (i32, i32) {
    %c0_i32 = arith.constant 0 : i32
    %c0_i32_0 = arith.constant 0 : i32
    %c0_i32_1 = arith.constant 0 : i32
    return %c0_i32, %c0_i32_0 : i32, i32
  }
  func.func @transform_14(%arg0: i32, %arg1: i32, %arg2: i32) -> (i32, i32, i32) {
    %c0_i32 = arith.constant 0 : i32
    %c0_i32_0 = arith.constant 0 : i32
    return %arg0, %arg1, %c0_i32 : i32, i32, i32
  }
}

module attributes {stable_mosaic.version = 11 : i64} {
  func.func @_fused_mab_kernel(%arg0: i32, %arg1: i32, %arg2: i32, %arg3: memref<1x4x128xf32, #tpu.memory_space<vmem>>, %arg4: memref<1x4x128xf32, #tpu.memory_space<vmem>>, %arg5: memref<128x128xbf16, #tpu.memory_space<vmem>>, %arg6: memref<1x128xf32, #tpu.memory_space<vmem>>, %arg7: memref<128x256xbf16, #tpu.memory_space<vmem>>, %arg8: memref<1x256xf32, #tpu.memory_space<vmem>>, %arg9: memref<128x128xbf16, #tpu.memory_space<vmem>>, %arg10: memref<1x128xf32, #tpu.memory_space<vmem>>, %arg11: memref<1x128xf32, #tpu.memory_space<vmem>>, %arg12: memref<1x128xf32, #tpu.memory_space<vmem>>, %arg13: memref<3x128x128xbf16, #tpu.memory_space<vmem>>, %arg14: memref<3x1x128xf32, #tpu.memory_space<vmem>>, %arg15: memref<1x128xf32, #tpu.memory_space<vmem>>, %arg16: memref<1x128xf32, #tpu.memory_space<vmem>>, %arg17: memref<1x4x128xf32, #tpu.memory_space<vmem>>, %arg18: memref<4x128xf32, #tpu.memory_space<vmem>>, %arg19: memref<4x4x1xf32, #tpu.memory_space<vmem>>, %arg20: memref<4x4x1xf32, #tpu.memory_space<vmem>>, %arg21: memref<4x128xf32, #tpu.memory_space<vmem>>) attributes {dimension_semantics = [#tpu.dimension_semantics<parallel>, #tpu.dimension_semantics<parallel>, #tpu.dimension_semantics<arbitrary>], iteration_bounds = array<i64: 2, 1, 1>, scalar_prefetch = 0 : i64, scratch_operands = 4 : i64, tpu.core_type = #tpu.core_type<tc>, window_params = [{transform_indices = @transform_0, window_bounds = array<i64: 1, 4, 128>}, {transform_indices = @transform_1, window_bounds = array<i64: 1, 4, 128>}, {pipeline_mode = #tpu.pipeline_mode<synchronous>, transform_indices = @transform_2, window_bounds = array<i64: 128, 128>}, {pipeline_mode = #tpu.pipeline_mode<synchronous>, transform_indices = @transform_3, window_bounds = array<i64: 1, 128>}, {pipeline_mode = #tpu.pipeline_mode<synchronous>, transform_indices = @transform_4, window_bounds = array<i64: 128, 256>}, {pipeline_mode = #tpu.pipeline_mode<synchronous>, transform_indices = @transform_5, window_bounds = array<i64: 1, 256>}, {pipeline_mode = #tpu.pipeline_mode<synchronous>, transform_indices = @transform_6, window_bounds = array<i64: 128, 128>}, {pipeline_mode = #tpu.pipeline_mode<synchronous>, transform_indices = @transform_7, window_bounds = array<i64: 1, 128>}, {pipeline_mode = #tpu.pipeline_mode<synchronous>, transform_indices = @transform_8, window_bounds = array<i64: 1, 128>}, {pipeline_mode = #tpu.pipeline_mode<synchronous>, transform_indices = @transform_9, window_bounds = array<i64: 1, 128>}, {pipeline_mode = #tpu.pipeline_mode<synchronous>, transform_indices = @transform_10, window_bounds = array<i64: 3, 128, 128>}, {pipeline_mode = #tpu.pipeline_mode<synchronous>, transform_indices = @transform_11, window_bounds = array<i64: 3, 1, 128>}, {pipeline_mode = #tpu.pipeline_mode<synchronous>, transform_indices = @transform_12, window_bounds = array<i64: 1, 128>}, {pipeline_mode = #tpu.pipeline_mode<synchronous>, transform_indices = @transform_13, window_bounds = array<i64: 1, 128>}, {transform_indices = @transform_14, window_bounds = array<i64: 1, 4, 128>}]} {
    %c0 = arith.constant 0 : index
    %c0_0 = arith.constant 0 : index
    %c0_1 = arith.constant 0 : index
    %0 = vector.load %arg3[%c0, %c0_0, %c0_1] : memref<1x4x128xf32, #tpu.memory_space<vmem>>, vector<1x4x128xf32>
    %1 = vector.shape_cast %0 : vector<1x4x128xf32> to vector<4x128xf32>
    %c0_i32 = arith.constant 0 : i32
    %2 = arith.cmpi eq, %arg2, %c0_i32 : i32
    %3 = arith.extui %2 : i1 to i32
    %c0_i32_2 = arith.constant 0 : i32
    %4 = arith.cmpi ne, %3, %c0_i32_2 : i32
    scf.if %4 {
      %157 = arith.truncf %1 : vector<4x128xf32> to vector<4x128xbf16>
      %c0_88 = arith.constant 0 : index
      %c0_89 = arith.constant 0 : index
      %158 = vector.load %arg5[%c0_88, %c0_89] : memref<128x128xbf16, #tpu.memory_space<vmem>>, vector<128x128xbf16>
      %cst_90 = arith.constant dense<0.000000e+00> : vector<4x128xf32>
      %159 = tpu.matmul %157, %158, %cst_90 {dimension_numbers = #tpu.dot_dimension_numbers<[1], [0], [0], [1], [0, 0, 1, 1], [], []>} : vector<4x128xbf16>, vector<128x128xbf16>, vector<4x128xf32> -> vector<4x128xf32>
      %c0_91 = arith.constant 0 : index
      %c0_92 = arith.constant 0 : index
      %160 = vector.load %arg6[%c0_91, %c0_92] : memref<1x128xf32, #tpu.memory_space<vmem>>, vector<1x128xf32>
      %161 = vector.broadcast %160 : vector<1x128xf32> to vector<4x128xf32>
      %162 = arith.addf %159, %161 : vector<4x128xf32>
      %cst_93 = arith.constant 0.176776692 : f32
      %163 = vector.broadcast %cst_93 : f32 to vector<4x128xf32>
      %164 = arith.mulf %162, %163 : vector<4x128xf32>
      %c0_94 = arith.constant 0 : index
      %c0_95 = arith.constant 0 : index
      %165 = vector.load %arg18[%c0_94, %c0_95] : memref<4x128xf32, #tpu.memory_space<vmem>>, vector<4x128xf32>
      tpu.vector_store %arg18[%c0_94, %c0_95], %164 {strides = array<i32>} : memref<4x128xf32, #tpu.memory_space<vmem>>, vector<4x128xf32>,
      %cst_96 = arith.constant 0xFF800000 : f32
      %166 = vector.broadcast %cst_96 : f32 to vector<4x4x1xf32>
      %c0_97 = arith.constant 0 : index
      %c0_98 = arith.constant 0 : index
      %c0_99 = arith.constant 0 : index
      %167 = vector.load %arg19[%c0_97, %c0_98, %c0_99] : memref<4x4x1xf32, #tpu.memory_space<vmem>>, vector<4x4x1xf32>
      tpu.vector_store %arg19[%c0_97, %c0_98, %c0_99], %166 {strides = array<i32>} : memref<4x4x1xf32, #tpu.memory_space<vmem>>, vector<4x4x1xf32>,
      %cst_100 = arith.constant 0.000000e+00 : f32
      %168 = vector.broadcast %cst_100 : f32 to vector<4x4x1xf32>
      %c0_101 = arith.constant 0 : index
      %c0_102 = arith.constant 0 : index
      %c0_103 = arith.constant 0 : index
      %169 = vector.load %arg20[%c0_101, %c0_102, %c0_103] : memref<4x4x1xf32, #tpu.memory_space<vmem>>, vector<4x4x1xf32>
      tpu.vector_store %arg20[%c0_101, %c0_102, %c0_103], %168 {strides = array<i32>} : memref<4x4x1xf32, #tpu.memory_space<vmem>>, vector<4x4x1xf32>,
      %cst_104 = arith.constant 0.000000e+00 : f32
      %170 = vector.broadcast %cst_104 : f32 to vector<4x128xf32>
      %c0_105 = arith.constant 0 : index
      %c0_106 = arith.constant 0 : index
      %171 = vector.load %arg21[%c0_105, %c0_106] : memref<4x128xf32, #tpu.memory_space<vmem>>, vector<4x128xf32>
      tpu.vector_store %arg21[%c0_105, %c0_106], %170 {strides = array<i32>} : memref<4x128xf32, #tpu.memory_space<vmem>>, vector<4x128xf32>,
    } else {
    }
    %c0_3 = arith.constant 0 : index
    %c0_4 = arith.constant 0 : index
    %c0_5 = arith.constant 0 : index
    %5 = vector.load %arg4[%c0_3, %c0_4, %c0_5] : memref<1x4x128xf32, #tpu.memory_space<vmem>>, vector<1x4x128xf32>
    %6 = vector.shape_cast %5 : vector<1x4x128xf32> to vector<4x128xf32>
    %7 = arith.truncf %6 : vector<4x128xf32> to vector<4x128xbf16>
    %c0_6 = arith.constant 0 : index
    %c0_7 = arith.constant 0 : index
    %8 = vector.load %arg7[%c0_6, %c0_7] : memref<128x256xbf16, #tpu.memory_space<vmem>>, vector<128x256xbf16>
    %cst = arith.constant dense<0.000000e+00> : vector<4x256xf32>
    %9 = tpu.matmul %7, %8, %cst {dimension_numbers = #tpu.dot_dimension_numbers<[1], [0], [0], [1], [0, 0, 1, 1], [], []>} : vector<4x128xbf16>, vector<128x256xbf16>, vector<4x256xf32> -> vector<4x256xf32>
    %c0_8 = arith.constant 0 : index
    %c0_9 = arith.constant 0 : index
    %10 = vector.load %arg8[%c0_8, %c0_9] : memref<1x256xf32, #tpu.memory_space<vmem>>, vector<1x256xf32>
    %11 = vector.broadcast %10 : vector<1x256xf32> to vector<4x256xf32>
    %12 = arith.addf %9, %11 : vector<4x256xf32>
    %13 = vector.extract_strided_slice %12 {offsets = [0, 0], sizes = [4, 128], strides = [1, 1]} : vector<4x256xf32> to vector<4x128xf32>
    %14 = arith.truncf %13 : vector<4x128xf32> to vector<4x128xbf16>
    %15 = vector.extract_strided_slice %12 {offsets = [0, 128], sizes = [4, 128], strides = [1, 1]} : vector<4x256xf32> to vector<4x128xf32>
    %16 = arith.truncf %15 : vector<4x128xf32> to vector<4x128xbf16>
    %c0_10 = arith.constant 0 : index
    %c0_11 = arith.constant 0 : index
    %17 = vector.load %arg18[%c0_10, %c0_11] : memref<4x128xf32, #tpu.memory_space<vmem>>, vector<4x128xf32>
    %18 = vector.extract_strided_slice %17 {offsets = [0, 0], sizes = [4, 32], strides = [1, 1]} : vector<4x128xf32> to vector<4x32xf32>
    %19 = arith.truncf %18 : vector<4x32xf32> to vector<4x32xbf16>
    %20 = vector.extract_strided_slice %14 {offsets = [0, 0], sizes = [4, 32], strides = [1, 1]} : vector<4x128xbf16> to vector<4x32xbf16>
    %21 = vector.extract_strided_slice %16 {offsets = [0, 0], sizes = [4, 32], strides = [1, 1]} : vector<4x128xbf16> to vector<4x32xbf16>
    %cst_12 = arith.constant dense<0.000000e+00> : vector<4x4xf32>
    %22 = tpu.matmul %19, %20, %cst_12 {dimension_numbers = #tpu.dot_dimension_numbers<[1], [1], [0], [0], [0, 0, 1, 0], [], []>} : vector<4x32xbf16>, vector<4x32xbf16>, vector<4x4xf32> -> vector<4x4xf32>
    %c0_13 = arith.constant 0 : index
    %c0_14 = arith.constant 0 : index
    %c0_15 = arith.constant 0 : index
    %23 = vector.load %arg19[%c0_13, %c0_14, %c0_15] : memref<4x4x1xf32, #tpu.memory_space<vmem>>, vector<1x4x1xf32>
    %24 = vector.shape_cast %23 : vector<1x4x1xf32> to vector<4x1xf32>
    %cst_16 = arith.constant dense<0xFF800000> : vector<4xf32>
    %25 = vector.multi_reduction <maximumf>, %22, %cst_16 [1] : vector<4x4xf32> to vector<4xf32>
    %26 = vector.shape_cast %25 : vector<4xf32> to vector<4x1xf32>
    %27 = arith.maximumf %24, %26 : vector<4x1xf32>
    %28 = arith.subf %24, %27 : vector<4x1xf32>
    %29 = math.exp %28 : vector<4x1xf32>
    %30 = vector.broadcast %27 : vector<4x1xf32> to vector<4x4xf32>
    %31 = arith.subf %22, %30 : vector<4x4xf32>
    %32 = math.exp %31 : vector<4x4xf32>
    %c0_17 = arith.constant 0 : index
    %c0_18 = arith.constant 0 : index
    %c0_19 = arith.constant 0 : index
    %33 = vector.load %arg20[%c0_17, %c0_18, %c0_19] : memref<4x4x1xf32, #tpu.memory_space<vmem>>, vector<1x4x1xf32>
    %34 = vector.shape_cast %33 : vector<1x4x1xf32> to vector<4x1xf32>
    %35 = arith.mulf %29, %34 : vector<4x1xf32>
    %cst_20 = arith.constant dense<0.000000e+00> : vector<4xf32>
    %36 = vector.multi_reduction <add>, %32, %cst_20 [1] : vector<4x4xf32> to vector<4xf32>
    %37 = vector.shape_cast %36 : vector<4xf32> to vector<4x1xf32>
    %38 = arith.addf %35, %37 : vector<4x1xf32>
    %c0_21 = arith.constant 0 : index
    %c0_22 = arith.constant 0 : index
    %c0_23 = arith.constant 0 : index
    %39 = vector.load %arg20[%c0_21, %c0_22, %c0_23] : memref<4x4x1xf32, #tpu.memory_space<vmem>>, vector<1x4x1xf32>
    %40 = vector.shape_cast %39 : vector<1x4x1xf32> to vector<4x1xf32>
    %41 = vector.shape_cast %38 : vector<4x1xf32> to vector<1x4x1xf32>
    tpu.vector_store %arg20[%c0_21, %c0_22, %c0_23], %41 {strides = array<i32>} : memref<4x4x1xf32, #tpu.memory_space<vmem>>, vector<1x4x1xf32>,
    %42 = arith.truncf %32 : vector<4x4xf32> to vector<4x4xbf16>
    %cst_24 = arith.constant dense<0.000000e+00> : vector<4x32xf32>
    %43 = tpu.matmul %42, %21, %cst_24 {dimension_numbers = #tpu.dot_dimension_numbers<[1], [0], [0], [1], [0, 0, 1, 1], [], []>} : vector<4x4xbf16>, vector<4x32xbf16>, vector<4x32xf32> -> vector<4x32xf32>
    %c0_25 = arith.constant 0 : index
    %c0_26 = arith.constant 0 : index
    %44 = vector.load %arg21[%c0_25, %c0_26] : memref<4x128xf32, #tpu.memory_space<vmem>>, vector<4x32xf32>
    %45 = vector.broadcast %29 : vector<4x1xf32> to vector<4x32xf32>
    %46 = arith.mulf %45, %44 : vector<4x32xf32>
    %47 = arith.addf %46, %43 : vector<4x32xf32>
    %c0_27 = arith.constant 0 : index
    %c0_28 = arith.constant 0 : index
    %48 = vector.load %arg21[%c0_27, %c0_28] : memref<4x128xf32, #tpu.memory_space<vmem>>, vector<4x32xf32>
    tpu.vector_store %arg21[%c0_27, %c0_28], %47 {strides = array<i32>} : memref<4x128xf32, #tpu.memory_space<vmem>>, vector<4x32xf32>,
    %c0_29 = arith.constant 0 : index
    %c0_30 = arith.constant 0 : index
    %c0_31 = arith.constant 0 : index
    %49 = vector.load %arg19[%c0_29, %c0_30, %c0_31] : memref<4x4x1xf32, #tpu.memory_space<vmem>>, vector<1x4x1xf32>
    %50 = vector.shape_cast %49 : vector<1x4x1xf32> to vector<4x1xf32>
    %51 = vector.shape_cast %27 : vector<4x1xf32> to vector<1x4x1xf32>
    tpu.vector_store %arg19[%c0_29, %c0_30, %c0_31], %51 {strides = array<i32>} : memref<4x4x1xf32, #tpu.memory_space<vmem>>, vector<1x4x1xf32>,
    %52 = vector.extract_strided_slice %17 {offsets = [0, 32], sizes = [4, 32], strides = [1, 1]} : vector<4x128xf32> to vector<4x32xf32>
    %53 = arith.truncf %52 : vector<4x32xf32> to vector<4x32xbf16>
    %54 = vector.extract_strided_slice %14 {offsets = [0, 32], sizes = [4, 32], strides = [1, 1]} : vector<4x128xbf16> to vector<4x32xbf16>
    %55 = vector.extract_strided_slice %16 {offsets = [0, 32], sizes = [4, 32], strides = [1, 1]} : vector<4x128xbf16> to vector<4x32xbf16>
    %cst_32 = arith.constant dense<0.000000e+00> : vector<4x4xf32>
    %56 = tpu.matmul %53, %54, %cst_32 {dimension_numbers = #tpu.dot_dimension_numbers<[1], [1], [0], [0], [0, 0, 1, 0], [], []>} : vector<4x32xbf16>, vector<4x32xbf16>, vector<4x4xf32> -> vector<4x4xf32>
    %c1 = arith.constant 1 : index
    %c0_33 = arith.constant 0 : index
    %c0_34 = arith.constant 0 : index
    %57 = vector.load %arg19[%c1, %c0_33, %c0_34] : memref<4x4x1xf32, #tpu.memory_space<vmem>>, vector<1x4x1xf32>
    %58 = vector.shape_cast %57 : vector<1x4x1xf32> to vector<4x1xf32>
    %cst_35 = arith.constant dense<0xFF800000> : vector<4xf32>
    %59 = vector.multi_reduction <maximumf>, %56, %cst_35 [1] : vector<4x4xf32> to vector<4xf32>
    %60 = vector.shape_cast %59 : vector<4xf32> to vector<4x1xf32>
    %61 = arith.maximumf %58, %60 : vector<4x1xf32>
    %62 = arith.subf %58, %61 : vector<4x1xf32>
    %63 = math.exp %62 : vector<4x1xf32>
    %64 = vector.broadcast %61 : vector<4x1xf32> to vector<4x4xf32>
    %65 = arith.subf %56, %64 : vector<4x4xf32>
    %66 = math.exp %65 : vector<4x4xf32>
    %c1_36 = arith.constant 1 : index
    %c0_37 = arith.constant 0 : index
    %c0_38 = arith.constant 0 : index
    %67 = vector.load %arg20[%c1_36, %c0_37, %c0_38] : memref<4x4x1xf32, #tpu.memory_space<vmem>>, vector<1x4x1xf32>
    %68 = vector.shape_cast %67 : vector<1x4x1xf32> to vector<4x1xf32>
    %69 = arith.mulf %63, %68 : vector<4x1xf32>
    %cst_39 = arith.constant dense<0.000000e+00> : vector<4xf32>
    %70 = vector.multi_reduction <add>, %66, %cst_39 [1] : vector<4x4xf32> to vector<4xf32>
    %71 = vector.shape_cast %70 : vector<4xf32> to vector<4x1xf32>
    %72 = arith.addf %69, %71 : vector<4x1xf32>
    %c1_40 = arith.constant 1 : index
    %c0_41 = arith.constant 0 : index
    %c0_42 = arith.constant 0 : index
    %73 = vector.load %arg20[%c1_40, %c0_41, %c0_42] : memref<4x4x1xf32, #tpu.memory_space<vmem>>, vector<1x4x1xf32>
    %74 = vector.shape_cast %73 : vector<1x4x1xf32> to vector<4x1xf32>
    %75 = vector.shape_cast %72 : vector<4x1xf32> to vector<1x4x1xf32>
    tpu.vector_store %arg20[%c1_40, %c0_41, %c0_42], %75 {strides = array<i32>} : memref<4x4x1xf32, #tpu.memory_space<vmem>>, vector<1x4x1xf32>,
    %76 = arith.truncf %66 : vector<4x4xf32> to vector<4x4xbf16>
    %cst_43 = arith.constant dense<0.000000e+00> : vector<4x32xf32>
    %77 = tpu.matmul %76, %55, %cst_43 {dimension_numbers = #tpu.dot_dimension_numbers<[1], [0], [0], [1], [0, 0, 1, 1], [], []>} : vector<4x4xbf16>, vector<4x32xbf16>, vector<4x32xf32> -> vector<4x32xf32>
    %c0_44 = arith.constant 0 : index
    %c32 = arith.constant 32 : index
    %78 = vector.load %arg21[%c0_44, %c32] : memref<4x128xf32, #tpu.memory_space<vmem>>, vector<4x32xf32>
    %79 = vector.broadcast %63 : vector<4x1xf32> to vector<4x32xf32>
    %80 = arith.mulf %79, %78 : vector<4x32xf32>
    %81 = arith.addf %80, %77 : vector<4x32xf32>
    %c0_45 = arith.constant 0 : index
    %c32_46 = arith.constant 32 : index
    %82 = vector.load %arg21[%c0_45, %c32_46] : memref<4x128xf32, #tpu.memory_space<vmem>>, vector<4x32xf32>
    tpu.vector_store %arg21[%c0_45, %c32_46], %81 {strides = array<i32>} : memref<4x128xf32, #tpu.memory_space<vmem>>, vector<4x32xf32>,
    %c1_47 = arith.constant 1 : index
    %c0_48 = arith.constant 0 : index
    %c0_49 = arith.constant 0 : index
    %83 = vector.load %arg19[%c1_47, %c0_48, %c0_49] : memref<4x4x1xf32, #tpu.memory_space<vmem>>, vector<1x4x1xf32>
    %84 = vector.shape_cast %83 : vector<1x4x1xf32> to vector<4x1xf32>
    %85 = vector.shape_cast %61 : vector<4x1xf32> to vector<1x4x1xf32>
    tpu.vector_store %arg19[%c1_47, %c0_48, %c0_49], %85 {strides = array<i32>} : memref<4x4x1xf32, #tpu.memory_space<vmem>>, vector<1x4x1xf32>,
    %86 = vector.extract_strided_slice %17 {offsets = [0, 64], sizes = [4, 32], strides = [1, 1]} : vector<4x128xf32> to vector<4x32xf32>
    %87 = arith.truncf %86 : vector<4x32xf32> to vector<4x32xbf16>
    %88 = vector.extract_strided_slice %14 {offsets = [0, 64], sizes = [4, 32], strides = [1, 1]} : vector<4x128xbf16> to vector<4x32xbf16>
    %89 = vector.extract_strided_slice %16 {offsets = [0, 64], sizes = [4, 32], strides = [1, 1]} : vector<4x128xbf16> to vector<4x32xbf16>
    %cst_50 = arith.constant dense<0.000000e+00> : vector<4x4xf32>
    %90 = tpu.matmul %87, %88, %cst_50 {dimension_numbers = #tpu.dot_dimension_numbers<[1], [1], [0], [0], [0, 0, 1, 0], [], []>} : vector<4x32xbf16>, vector<4x32xbf16>, vector<4x4xf32> -> vector<4x4xf32>
    %c2 = arith.constant 2 : index
    %c0_51 = arith.constant 0 : index
    %c0_52 = arith.constant 0 : index
    %91 = vector.load %arg19[%c2, %c0_51, %c0_52] : memref<4x4x1xf32, #tpu.memory_space<vmem>>, vector<1x4x1xf32>
    %92 = vector.shape_cast %91 : vector<1x4x1xf32> to vector<4x1xf32>
    %cst_53 = arith.constant dense<0xFF800000> : vector<4xf32>
    %93 = vector.multi_reduction <maximumf>, %90, %cst_53 [1] : vector<4x4xf32> to vector<4xf32>
    %94 = vector.shape_cast %93 : vector<4xf32> to vector<4x1xf32>
    %95 = arith.maximumf %92, %94 : vector<4x1xf32>
    %96 = arith.subf %92, %95 : vector<4x1xf32>
    %97 = math.exp %96 : vector<4x1xf32>
    %98 = vector.broadcast %95 : vector<4x1xf32> to vector<4x4xf32>
    %99 = arith.subf %90, %98 : vector<4x4xf32>
    %100 = math.exp %99 : vector<4x4xf32>
    %c2_54 = arith.constant 2 : index
    %c0_55 = arith.constant 0 : index
    %c0_56 = arith.constant 0 : index
    %101 = vector.load %arg20[%c2_54, %c0_55, %c0_56] : memref<4x4x1xf32, #tpu.memory_space<vmem>>, vector<1x4x1xf32>
    %102 = vector.shape_cast %101 : vector<1x4x1xf32> to vector<4x1xf32>
    %103 = arith.mulf %97, %102 : vector<4x1xf32>
    %cst_57 = arith.constant dense<0.000000e+00> : vector<4xf32>
    %104 = vector.multi_reduction <add>, %100, %cst_57 [1] : vector<4x4xf32> to vector<4xf32>
    %105 = vector.shape_cast %104 : vector<4xf32> to vector<4x1xf32>
    %106 = arith.addf %103, %105 : vector<4x1xf32>
    %c2_58 = arith.constant 2 : index
    %c0_59 = arith.constant 0 : index
    %c0_60 = arith.constant 0 : index
    %107 = vector.load %arg20[%c2_58, %c0_59, %c0_60] : memref<4x4x1xf32, #tpu.memory_space<vmem>>, vector<1x4x1xf32>
    %108 = vector.shape_cast %107 : vector<1x4x1xf32> to vector<4x1xf32>
    %109 = vector.shape_cast %106 : vector<4x1xf32> to vector<1x4x1xf32>
    tpu.vector_store %arg20[%c2_58, %c0_59, %c0_60], %109 {strides = array<i32>} : memref<4x4x1xf32, #tpu.memory_space<vmem>>, vector<1x4x1xf32>,
    %110 = arith.truncf %100 : vector<4x4xf32> to vector<4x4xbf16>
    %cst_61 = arith.constant dense<0.000000e+00> : vector<4x32xf32>
    %111 = tpu.matmul %110, %89, %cst_61 {dimension_numbers = #tpu.dot_dimension_numbers<[1], [0], [0], [1], [0, 0, 1, 1], [], []>} : vector<4x4xbf16>, vector<4x32xbf16>, vector<4x32xf32> -> vector<4x32xf32>
    %c0_62 = arith.constant 0 : index
    %c64 = arith.constant 64 : index
    %112 = vector.load %arg21[%c0_62, %c64] : memref<4x128xf32, #tpu.memory_space<vmem>>, vector<4x32xf32>
    %113 = vector.broadcast %97 : vector<4x1xf32> to vector<4x32xf32>
    %114 = arith.mulf %113, %112 : vector<4x32xf32>
    %115 = arith.addf %114, %111 : vector<4x32xf32>
    %c0_63 = arith.constant 0 : index
    %c64_64 = arith.constant 64 : index
    %116 = vector.load %arg21[%c0_63, %c64_64] : memref<4x128xf32, #tpu.memory_space<vmem>>, vector<4x32xf32>
    tpu.vector_store %arg21[%c0_63, %c64_64], %115 {strides = array<i32>} : memref<4x128xf32, #tpu.memory_space<vmem>>, vector<4x32xf32>,
    %c2_65 = arith.constant 2 : index
    %c0_66 = arith.constant 0 : index
    %c0_67 = arith.constant 0 : index
    %117 = vector.load %arg19[%c2_65, %c0_66, %c0_67] : memref<4x4x1xf32, #tpu.memory_space<vmem>>, vector<1x4x1xf32>
    %118 = vector.shape_cast %117 : vector<1x4x1xf32> to vector<4x1xf32>
    %119 = vector.shape_cast %95 : vector<4x1xf32> to vector<1x4x1xf32>
    tpu.vector_store %arg19[%c2_65, %c0_66, %c0_67], %119 {strides = array<i32>} : memref<4x4x1xf32, #tpu.memory_space<vmem>>, vector<1x4x1xf32>,
    %120 = vector.extract_strided_slice %17 {offsets = [0, 96], sizes = [4, 32], strides = [1, 1]} : vector<4x128xf32> to vector<4x32xf32>
    %121 = arith.truncf %120 : vector<4x32xf32> to vector<4x32xbf16>
    %122 = vector.extract_strided_slice %14 {offsets = [0, 96], sizes = [4, 32], strides = [1, 1]} : vector<4x128xbf16> to vector<4x32xbf16>
    %123 = vector.extract_strided_slice %16 {offsets = [0, 96], sizes = [4, 32], strides = [1, 1]} : vector<4x128xbf16> to vector<4x32xbf16>
    %cst_68 = arith.constant dense<0.000000e+00> : vector<4x4xf32>
    %124 = tpu.matmul %121, %122, %cst_68 {dimension_numbers = #tpu.dot_dimension_numbers<[1], [1], [0], [0], [0, 0, 1, 0], [], []>} : vector<4x32xbf16>, vector<4x32xbf16>, vector<4x4xf32> -> vector<4x4xf32>
    %c3 = arith.constant 3 : index
    %c0_69 = arith.constant 0 : index
    %c0_70 = arith.constant 0 : index
    %125 = vector.load %arg19[%c3, %c0_69, %c0_70] : memref<4x4x1xf32, #tpu.memory_space<vmem>>, vector<1x4x1xf32>
    %126 = vector.shape_cast %125 : vector<1x4x1xf32> to vector<4x1xf32>
    %cst_71 = arith.constant dense<0xFF800000> : vector<4xf32>
    %127 = vector.multi_reduction <maximumf>, %124, %cst_71 [1] : vector<4x4xf32> to vector<4xf32>
    %128 = vector.shape_cast %127 : vector<4xf32> to vector<4x1xf32>
    %129 = arith.maximumf %126, %128 : vector<4x1xf32>
    %130 = arith.subf %126, %129 : vector<4x1xf32>
    %131 = math.exp %130 : vector<4x1xf32>
    %132 = vector.broadcast %129 : vector<4x1xf32> to vector<4x4xf32>
    %133 = arith.subf %124, %132 : vector<4x4xf32>
    %134 = math.exp %133 : vector<4x4xf32>
    %c3_72 = arith.constant 3 : index
    %c0_73 = arith.constant 0 : index
    %c0_74 = arith.constant 0 : index
    %135 = vector.load %arg20[%c3_72, %c0_73, %c0_74] : memref<4x4x1xf32, #tpu.memory_space<vmem>>, vector<1x4x1xf32>
    %136 = vector.shape_cast %135 : vector<1x4x1xf32> to vector<4x1xf32>
    %137 = arith.mulf %131, %136 : vector<4x1xf32>
    %cst_75 = arith.constant dense<0.000000e+00> : vector<4xf32>
    %138 = vector.multi_reduction <add>, %134, %cst_75 [1] : vector<4x4xf32> to vector<4xf32>
    %139 = vector.shape_cast %138 : vector<4xf32> to vector<4x1xf32>
    %140 = arith.addf %137, %139 : vector<4x1xf32>
    %c3_76 = arith.constant 3 : index
    %c0_77 = arith.constant 0 : index
    %c0_78 = arith.constant 0 : index
    %141 = vector.load %arg20[%c3_76, %c0_77, %c0_78] : memref<4x4x1xf32, #tpu.memory_space<vmem>>, vector<1x4x1xf32>
    %142 = vector.shape_cast %141 : vector<1x4x1xf32> to vector<4x1xf32>
    %143 = vector.shape_cast %140 : vector<4x1xf32> to vector<1x4x1xf32>
    tpu.vector_store %arg20[%c3_76, %c0_77, %c0_78], %143 {strides = array<i32>} : memref<4x4x1xf32, #tpu.memory_space<vmem>>, vector<1x4x1xf32>,
    %144 = arith.truncf %134 : vector<4x4xf32> to vector<4x4xbf16>
    %cst_79 = arith.constant dense<0.000000e+00> : vector<4x32xf32>
    %145 = tpu.matmul %144, %123, %cst_79 {dimension_numbers = #tpu.dot_dimension_numbers<[1], [0], [0], [1], [0, 0, 1, 1], [], []>} : vector<4x4xbf16>, vector<4x32xbf16>, vector<4x32xf32> -> vector<4x32xf32>
    %c0_80 = arith.constant 0 : index
    %c96 = arith.constant 96 : index
    %146 = vector.load %arg21[%c0_80, %c96] : memref<4x128xf32, #tpu.memory_space<vmem>>, vector<4x32xf32>
    %147 = vector.broadcast %131 : vector<4x1xf32> to vector<4x32xf32>
    %148 = arith.mulf %147, %146 : vector<4x32xf32>
    %149 = arith.addf %148, %145 : vector<4x32xf32>
    %c0_81 = arith.constant 0 : index
    %c96_82 = arith.constant 96 : index
    %150 = vector.load %arg21[%c0_81, %c96_82] : memref<4x128xf32, #tpu.memory_space<vmem>>, vector<4x32xf32>
    tpu.vector_store %arg21[%c0_81, %c96_82], %149 {strides = array<i32>} : memref<4x128xf32, #tpu.memory_space<vmem>>, vector<4x32xf32>,
    %c3_83 = arith.constant 3 : index
    %c0_84 = arith.constant 0 : index
    %c0_85 = arith.constant 0 : index
    %151 = vector.load %arg19[%c3_83, %c0_84, %c0_85] : memref<4x4x1xf32, #tpu.memory_space<vmem>>, vector<1x4x1xf32>
    %152 = vector.shape_cast %151 : vector<1x4x1xf32> to vector<4x1xf32>
    %153 = vector.shape_cast %129 : vector<4x1xf32> to vector<1x4x1xf32>
    tpu.vector_store %arg19[%c3_83, %c0_84, %c0_85], %153 {strides = array<i32>} : memref<4x4x1xf32, #tpu.memory_space<vmem>>, vector<1x4x1xf32>,
    %c0_i32_86 = arith.constant 0 : i32
    %154 = arith.cmpi eq, %arg2, %c0_i32_86 : i32
    %155 = arith.extui %154 : i1 to i32
    %c0_i32_87 = arith.constant 0 : i32
    %156 = arith.cmpi ne, %155, %c0_i32_87 : i32
    scf.if %156 {
      %c0_88 = arith.constant 0 : index
      %c0_89 = arith.constant 0 : index
      %157 = vector.load %arg21[%c0_88, %c0_89] : memref<4x128xf32, #tpu.memory_space<vmem>>, vector<4x32xf32>
      %c0_90 = arith.constant 0 : index
      %c0_91 = arith.constant 0 : index
      %c0_92 = arith.constant 0 : index
      %158 = vector.load %arg20[%c0_90, %c0_91, %c0_92] : memref<4x4x1xf32, #tpu.memory_space<vmem>>, vector<1x4x1xf32>
      %159 = vector.shape_cast %158 : vector<1x4x1xf32> to vector<4x1xf32>
      %160 = tpu.reciprocal %159 {approx = true} : vector<4x1xf32> -> vector<4x1xf32>
      %161 = vector.broadcast %160 : vector<4x1xf32> to vector<4x32xf32>
      %162 = arith.mulf %157, %161 : vector<4x32xf32>
      %c0_93 = arith.constant 0 : index
      %c32_94 = arith.constant 32 : index
      %163 = vector.load %arg21[%c0_93, %c32_94] : memref<4x128xf32, #tpu.memory_space<vmem>>, vector<4x32xf32>
      %c1_95 = arith.constant 1 : index
      %c0_96 = arith.constant 0 : index
      %c0_97 = arith.constant 0 : index
      %164 = vector.load %arg20[%c1_95, %c0_96, %c0_97] : memref<4x4x1xf32, #tpu.memory_space<vmem>>, vector<1x4x1xf32>
      %165 = vector.shape_cast %164 : vector<1x4x1xf32> to vector<4x1xf32>
      %166 = tpu.reciprocal %165 {approx = true} : vector<4x1xf32> -> vector<4x1xf32>
      %167 = vector.broadcast %166 : vector<4x1xf32> to vector<4x32xf32>
      %168 = arith.mulf %163, %167 : vector<4x32xf32>
      %c0_98 = arith.constant 0 : index
      %c64_99 = arith.constant 64 : index
      %169 = vector.load %arg21[%c0_98, %c64_99] : memref<4x128xf32, #tpu.memory_space<vmem>>, vector<4x32xf32>
      %c2_100 = arith.constant 2 : index
      %c0_101 = arith.constant 0 : index
      %c0_102 = arith.constant 0 : index
      %170 = vector.load %arg20[%c2_100, %c0_101, %c0_102] : memref<4x4x1xf32, #tpu.memory_space<vmem>>, vector<1x4x1xf32>
      %171 = vector.shape_cast %170 : vector<1x4x1xf32> to vector<4x1xf32>
      %172 = tpu.reciprocal %171 {approx = true} : vector<4x1xf32> -> vector<4x1xf32>
      %173 = vector.broadcast %172 : vector<4x1xf32> to vector<4x32xf32>
      %174 = arith.mulf %169, %173 : vector<4x32xf32>
      %c0_103 = arith.constant 0 : index
      %c96_104 = arith.constant 96 : index
      %175 = vector.load %arg21[%c0_103, %c96_104] : memref<4x128xf32, #tpu.memory_space<vmem>>, vector<4x32xf32>
      %c3_105 = arith.constant 3 : index
      %c0_106 = arith.constant 0 : index
      %c0_107 = arith.constant 0 : index
      %176 = vector.load %arg20[%c3_105, %c0_106, %c0_107] : memref<4x4x1xf32, #tpu.memory_space<vmem>>, vector<1x4x1xf32>
      %177 = vector.shape_cast %176 : vector<1x4x1xf32> to vector<4x1xf32>
      %178 = tpu.reciprocal %177 {approx = true} : vector<4x1xf32> -> vector<4x1xf32>
      %179 = vector.broadcast %178 : vector<4x1xf32> to vector<4x32xf32>
      %180 = arith.mulf %175, %179 : vector<4x32xf32>
      %181 = tpu.concatenate %162, %168, %174, %180 in 1 : vector<4x32xf32>, vector<4x32xf32>, vector<4x32xf32>, vector<4x32xf32> -> vector<4x128xf32>
      %182 = arith.truncf %181 : vector<4x128xf32> to vector<4x128xbf16>
      %c0_108 = arith.constant 0 : index
      %c0_109 = arith.constant 0 : index
      %183 = vector.load %arg9[%c0_108, %c0_109] : memref<128x128xbf16, #tpu.memory_space<vmem>>, vector<128x128xbf16>
      %cst_110 = arith.constant dense<0.000000e+00> : vector<4x128xf32>
      %184 = tpu.matmul %182, %183, %cst_110 {dimension_numbers = #tpu.dot_dimension_numbers<[1], [0], [0], [1], [0, 0, 1, 1], [], []>} : vector<4x128xbf16>, vector<128x128xbf16>, vector<4x128xf32> -> vector<4x128xf32>
      %c0_111 = arith.constant 0 : index
      %c0_112 = arith.constant 0 : index
      %185 = vector.load %arg10[%c0_111, %c0_112] : memref<1x128xf32, #tpu.memory_space<vmem>>, vector<1x128xf32>
      %186 = vector.broadcast %185 : vector<1x128xf32> to vector<4x128xf32>
      %187 = arith.addf %184, %186 : vector<4x128xf32>
      %188 = arith.addf %1, %187 : vector<4x128xf32>
      %c0_113 = arith.constant 0 : index
      %c0_114 = arith.constant 0 : index
      %189 = vector.load %arg11[%c0_113, %c0_114] : memref<1x128xf32, #tpu.memory_space<vmem>>, vector<1x128xf32>
      %c0_115 = arith.constant 0 : index
      %c0_116 = arith.constant 0 : index
      %190 = vector.load %arg12[%c0_115, %c0_116] : memref<1x128xf32, #tpu.memory_space<vmem>>, vector<1x128xf32>
      %cst_117 = arith.constant dense<0.000000e+00> : vector<4xf32>
      %191 = vector.multi_reduction <add>, %188, %cst_117 [1] : vector<4x128xf32> to vector<4xf32>
      %192 = vector.shape_cast %191 : vector<4xf32> to vector<4x1xf32>
      %cst_118 = arith.constant 1.280000e+02 : f32
      %193 = vector.broadcast %cst_118 : f32 to vector<4x1xf32>
      %194 = arith.divf %192, %193 : vector<4x1xf32>
      %195 = vector.broadcast %194 : vector<4x1xf32> to vector<4x128xf32>
      %196 = arith.subf %188, %195 : vector<4x128xf32>
      %197 = arith.mulf %196, %196 : vector<4x128xf32>
      %cst_119 = arith.constant dense<0.000000e+00> : vector<4xf32>
      %198 = vector.multi_reduction <add>, %197, %cst_119 [1] : vector<4x128xf32> to vector<4xf32>
      %199 = vector.shape_cast %198 : vector<4xf32> to vector<4x1xf32>
      %cst_120 = arith.constant 1.280000e+02 : f32
      %200 = vector.broadcast %cst_120 : f32 to vector<4x1xf32>
      %201 = arith.divf %199, %200 : vector<4x1xf32>
      %cst_121 = arith.constant 9.99999974E-6 : f32
      %202 = vector.broadcast %cst_121 : f32 to vector<4x1xf32>
      %203 = arith.addf %201, %202 : vector<4x1xf32>
      %204 = math.rsqrt %203 : vector<4x1xf32>
      %205 = vector.broadcast %204 : vector<4x1xf32> to vector<4x128xf32>
      %206 = arith.mulf %196, %205 : vector<4x128xf32>
      %207 = vector.broadcast %189 : vector<1x128xf32> to vector<4x128xf32>
      %208 = arith.mulf %206, %207 : vector<4x128xf32>
      %209 = vector.broadcast %190 : vector<1x128xf32> to vector<4x128xf32>
      %210 = arith.addf %208, %209 : vector<4x128xf32>
      %211 = arith.truncf %210 : vector<4x128xf32> to vector<4x128xbf16>
      %c0_122 = arith.constant 0 : index
      %c0_123 = arith.constant 0 : index
      %c0_124 = arith.constant 0 : index
      %212 = vector.load %arg13[%c0_122, %c0_123, %c0_124] : memref<3x128x128xbf16, #tpu.memory_space<vmem>>, vector<1x128x128xbf16>
      %213 = vector.shape_cast %212 : vector<1x128x128xbf16> to vector<128x128xbf16>
      %cst_125 = arith.constant dense<0.000000e+00> : vector<4x128xf32>
      %214 = tpu.matmul %211, %213, %cst_125 {dimension_numbers = #tpu.dot_dimension_numbers<[1], [0], [0], [1], [0, 0, 1, 1], [], []>} : vector<4x128xbf16>, vector<128x128xbf16>, vector<4x128xf32> -> vector<4x128xf32>
      %c0_126 = arith.constant 0 : index
      %c0_127 = arith.constant 0 : index
      %c0_128 = arith.constant 0 : index
      %215 = vector.load %arg14[%c0_126, %c0_127, %c0_128] : memref<3x1x128xf32, #tpu.memory_space<vmem>>, vector<1x1x128xf32>
      %216 = vector.shape_cast %215 : vector<1x1x128xf32> to vector<1x128xf32>
      %217 = vector.broadcast %216 : vector<1x128xf32> to vector<4x128xf32>
      %218 = arith.addf %214, %217 : vector<4x128xf32>
      %cst_129 = arith.constant 0.000000e+00 : f32
      %219 = vector.broadcast %cst_129 : f32 to vector<4x128xf32>
      %220 = arith.maximumf %218, %219 : vector<4x128xf32>
      %221 = arith.truncf %220 : vector<4x128xf32> to vector<4x128xbf16>
      %c1_130 = arith.constant 1 : index
      %c0_131 = arith.constant 0 : index
      %c0_132 = arith.constant 0 : index
      %222 = vector.load %arg13[%c1_130, %c0_131, %c0_132] : memref<3x128x128xbf16, #tpu.memory_space<vmem>>, vector<1x128x128xbf16>
      %223 = vector.shape_cast %222 : vector<1x128x128xbf16> to vector<128x128xbf16>
      %cst_133 = arith.constant dense<0.000000e+00> : vector<4x128xf32>
      %224 = tpu.matmul %221, %223, %cst_133 {dimension_numbers = #tpu.dot_dimension_numbers<[1], [0], [0], [1], [0, 0, 1, 1], [], []>} : vector<4x128xbf16>, vector<128x128xbf16>, vector<4x128xf32> -> vector<4x128xf32>
      %c1_134 = arith.constant 1 : index
      %c0_135 = arith.constant 0 : index
      %c0_136 = arith.constant 0 : index
      %225 = vector.load %arg14[%c1_134, %c0_135, %c0_136] : memref<3x1x128xf32, #tpu.memory_space<vmem>>, vector<1x1x128xf32>
      %226 = vector.shape_cast %225 : vector<1x1x128xf32> to vector<1x128xf32>
      %227 = vector.broadcast %226 : vector<1x128xf32> to vector<4x128xf32>
      %228 = arith.addf %224, %227 : vector<4x128xf32>
      %cst_137 = arith.constant 0.000000e+00 : f32
      %229 = vector.broadcast %cst_137 : f32 to vector<4x128xf32>
      %230 = arith.maximumf %228, %229 : vector<4x128xf32>
      %231 = arith.truncf %230 : vector<4x128xf32> to vector<4x128xbf16>
      %c2_138 = arith.constant 2 : index
      %c0_139 = arith.constant 0 : index
      %c0_140 = arith.constant 0 : index
      %232 = vector.load %arg13[%c2_138, %c0_139, %c0_140] : memref<3x128x128xbf16, #tpu.memory_space<vmem>>, vector<1x128x128xbf16>
      %233 = vector.shape_cast %232 : vector<1x128x128xbf16> to vector<128x128xbf16>
      %cst_141 = arith.constant dense<0.000000e+00> : vector<4x128xf32>
      %234 = tpu.matmul %231, %233, %cst_141 {dimension_numbers = #tpu.dot_dimension_numbers<[1], [0], [0], [1], [0, 0, 1, 1], [], []>} : vector<4x128xbf16>, vector<128x128xbf16>, vector<4x128xf32> -> vector<4x128xf32>
      %c2_142 = arith.constant 2 : index
      %c0_143 = arith.constant 0 : index
      %c0_144 = arith.constant 0 : index
      %235 = vector.load %arg14[%c2_142, %c0_143, %c0_144] : memref<3x1x128xf32, #tpu.memory_space<vmem>>, vector<1x1x128xf32>
      %236 = vector.shape_cast %235 : vector<1x1x128xf32> to vector<1x128xf32>
      %237 = vector.broadcast %236 : vector<1x128xf32> to vector<4x128xf32>
      %238 = arith.addf %234, %237 : vector<4x128xf32>
      %cst_145 = arith.constant 0.000000e+00 : f32
      %239 = vector.broadcast %cst_145 : f32 to vector<4x128xf32>
      %240 = arith.maximumf %238, %239 : vector<4x128xf32>
      %241 = arith.addf %210, %240 : vector<4x128xf32>
      %c0_146 = arith.constant 0 : index
      %c0_147 = arith.constant 0 : index
      %242 = vector.load %arg15[%c0_146, %c0_147] : memref<1x128xf32, #tpu.memory_space<vmem>>, vector<1x128xf32>
      %c0_148 = arith.constant 0 : index
      %c0_149 = arith.constant 0 : index
      %243 = vector.load %arg16[%c0_148, %c0_149] : memref<1x128xf32, #tpu.memory_space<vmem>>, vector<1x128xf32>
      %cst_150 = arith.constant dense<0.000000e+00> : vector<4xf32>
      %244 = vector.multi_reduction <add>, %241, %cst_150 [1] : vector<4x128xf32> to vector<4xf32>
      %245 = vector.shape_cast %244 : vector<4xf32> to vector<4x1xf32>
      %cst_151 = arith.constant 1.280000e+02 : f32
      %246 = vector.broadcast %cst_151 : f32 to vector<4x1xf32>
      %247 = arith.divf %245, %246 : vector<4x1xf32>
      %248 = vector.broadcast %247 : vector<4x1xf32> to vector<4x128xf32>
      %249 = arith.subf %241, %248 : vector<4x128xf32>
      %250 = arith.mulf %249, %249 : vector<4x128xf32>
      %cst_152 = arith.constant dense<0.000000e+00> : vector<4xf32>
      %251 = vector.multi_reduction <add>, %250, %cst_152 [1] : vector<4x128xf32> to vector<4xf32>
      %252 = vector.shape_cast %251 : vector<4xf32> to vector<4x1xf32>
      %cst_153 = arith.constant 1.280000e+02 : f32
      %253 = vector.broadcast %cst_153 : f32 to vector<4x1xf32>
      %254 = arith.divf %252, %253 : vector<4x1xf32>
      %cst_154 = arith.constant 9.99999974E-6 : f32
      %255 = vector.broadcast %cst_154 : f32 to vector<4x1xf32>
      %256 = arith.addf %254, %255 : vector<4x1xf32>
      %257 = math.rsqrt %256 : vector<4x1xf32>
      %258 = vector.broadcast %257 : vector<4x1xf32> to vector<4x128xf32>
      %259 = arith.mulf %249, %258 : vector<4x128xf32>
      %260 = vector.broadcast %242 : vector<1x128xf32> to vector<4x128xf32>
      %261 = arith.mulf %259, %260 : vector<4x128xf32>
      %262 = vector.broadcast %243 : vector<1x128xf32> to vector<4x128xf32>
      %263 = arith.addf %261, %262 : vector<4x128xf32>
      %c0_155 = arith.constant 0 : index
      %c0_156 = arith.constant 0 : index
      %c0_157 = arith.constant 0 : index
      %264 = vector.load %arg17[%c0_155, %c0_156, %c0_157] : memref<1x4x128xf32, #tpu.memory_space<vmem>>, vector<1x4x128xf32>
      %265 = vector.shape_cast %264 : vector<1x4x128xf32> to vector<4x128xf32>
      %266 = vector.shape_cast %263 : vector<4x128xf32> to vector<1x4x128xf32>
      tpu.vector_store %arg17[%c0_155, %c0_156, %c0_157], %266 {strides = array<i32>} : memref<1x4x128xf32, #tpu.memory_space<vmem>>, vector<1x4x128xf32>,
    } else {
    }
    return
  }
  func.func @transform_0(%arg0: i32, %arg1: i32, %arg2: i32) -> (i32, i32, i32) {
    %c0_i32 = arith.constant 0 : i32
    %c0_i32_0 = arith.constant 0 : i32
    return %arg0, %arg1, %c0_i32 : i32, i32, i32
  }
  func.func @transform_1(%arg0: i32, %arg1: i32, %arg2: i32) -> (i32, i32, i32) {
    %c0_i32 = arith.constant 0 : i32
    %c0_i32_0 = arith.constant 0 : i32
    return %arg0, %arg2, %c0_i32 : i32, i32, i32
  }
  func.func @transform_2(%arg0: i32, %arg1: i32, %arg2: i32) -> (i32, i32) {
    %c0_i32 = arith.constant 0 : i32
    %c0_i32_0 = arith.constant 0 : i32
    %c0_i32_1 = arith.constant 0 : i32
    return %c0_i32, %c0_i32_0 : i32, i32
  }
  func.func @transform_3(%arg0: i32, %arg1: i32, %arg2: i32) -> (i32, i32) {
    %c0_i32 = arith.constant 0 : i32
    %c0_i32_0 = arith.constant 0 : i32
    %c0_i32_1 = arith.constant 0 : i32
    return %c0_i32, %c0_i32_0 : i32, i32
  }
  func.func @transform_4(%arg0: i32, %arg1: i32, %arg2: i32) -> (i32, i32) {
    %c0_i32 = arith.constant 0 : i32
    %c0_i32_0 = arith.constant 0 : i32
    %c0_i32_1 = arith.constant 0 : i32
    return %c0_i32, %c0_i32_0 : i32, i32
  }
  func.func @transform_5(%arg0: i32, %arg1: i32, %arg2: i32) -> (i32, i32) {
    %c0_i32 = arith.constant 0 : i32
    %c0_i32_0 = arith.constant 0 : i32
    %c0_i32_1 = arith.constant 0 : i32
    return %c0_i32, %c0_i32_0 : i32, i32
  }
  func.func @transform_6(%arg0: i32, %arg1: i32, %arg2: i32) -> (i32, i32) {
    %c0_i32 = arith.constant 0 : i32
    %c0_i32_0 = arith.constant 0 : i32
    %c0_i32_1 = arith.constant 0 : i32
    return %c0_i32, %c0_i32_0 : i32, i32
  }
  func.func @transform_7(%arg0: i32, %arg1: i32, %arg2: i32) -> (i32, i32) {
    %c0_i32 = arith.constant 0 : i32
    %c0_i32_0 = arith.constant 0 : i32
    %c0_i32_1 = arith.constant 0 : i32
    return %c0_i32, %c0_i32_0 : i32, i32
  }
  func.func @transform_8(%arg0: i32, %arg1: i32, %arg2: i32) -> (i32, i32) {
    %c0_i32 = arith.constant 0 : i32
    %c0_i32_0 = arith.constant 0 : i32
    %c0_i32_1 = arith.constant 0 : i32
    return %c0_i32, %c0_i32_0 : i32, i32
  }
  func.func @transform_9(%arg0: i32, %arg1: i32, %arg2: i32) -> (i32, i32) {
    %c0_i32 = arith.constant 0 : i32
    %c0_i32_0 = arith.constant 0 : i32
    %c0_i32_1 = arith.constant 0 : i32
    return %c0_i32, %c0_i32_0 : i32, i32
  }
  func.func @transform_10(%arg0: i32, %arg1: i32, %arg2: i32) -> (i32, i32, i32) {
    %c0_i32 = arith.constant 0 : i32
    %c0_i32_0 = arith.constant 0 : i32
    %c0_i32_1 = arith.constant 0 : i32
    %c0_i32_2 = arith.constant 0 : i32
    return %c0_i32, %c0_i32_0, %c0_i32_1 : i32, i32, i32
  }
  func.func @transform_11(%arg0: i32, %arg1: i32, %arg2: i32) -> (i32, i32, i32) {
    %c0_i32 = arith.constant 0 : i32
    %c0_i32_0 = arith.constant 0 : i32
    %c0_i32_1 = arith.constant 0 : i32
    %c0_i32_2 = arith.constant 0 : i32
    return %c0_i32, %c0_i32_0, %c0_i32_1 : i32, i32, i32
  }
  func.func @transform_12(%arg0: i32, %arg1: i32, %arg2: i32) -> (i32, i32) {
    %c0_i32 = arith.constant 0 : i32
    %c0_i32_0 = arith.constant 0 : i32
    %c0_i32_1 = arith.constant 0 : i32
    return %c0_i32, %c0_i32_0 : i32, i32
  }
  func.func @transform_13(%arg0: i32, %arg1: i32, %arg2: i32) -> (i32, i32) {
    %c0_i32 = arith.constant 0 : i32
    %c0_i32_0 = arith.constant 0 : i32
    %c0_i32_1 = arith.constant 0 : i32
    return %c0_i32, %c0_i32_0 : i32, i32
  }
  func.func @transform_14(%arg0: i32, %arg1: i32, %arg2: i32) -> (i32, i32, i32) {
    %c0_i32 = arith.constant 0 : i32
    %c0_i32_0 = arith.constant 0 : i32
    return %arg0, %arg1, %c0_i32 : i32, i32, i32
  }
}

module attributes {stable_mosaic.version = 11 : i64} {
  func.func @_linear_kernel(%arg0: i32, %arg1: memref<2x512xf32, #tpu.memory_space<vmem>>, %arg2: memref<512x128xf32, #tpu.memory_space<vmem>>, %arg3: memref<1x128xf32, #tpu.memory_space<vmem>>, %arg4: memref<2x128xf32, #tpu.memory_space<vmem>>) attributes {dimension_semantics = [#tpu.dimension_semantics<parallel>], iteration_bounds = array<i64: 1>, scalar_prefetch = 0 : i64, scratch_operands = 0 : i64, tpu.core_type = #tpu.core_type<tc>, window_params = [{transform_indices = @transform_0, window_bounds = array<i64: 2, 512>}, {pipeline_mode = #tpu.pipeline_mode<synchronous>, transform_indices = @transform_1, window_bounds = array<i64: 512, 128>}, {pipeline_mode = #tpu.pipeline_mode<synchronous>, transform_indices = @transform_2, window_bounds = array<i64: 1, 128>}, {transform_indices = @transform_3, window_bounds = array<i64: 2, 128>}]} {
    %c0 = arith.constant 0 : index
    %c0_0 = arith.constant 0 : index
    %0 = vector.load %arg1[%c0, %c0_0] : memref<2x512xf32, #tpu.memory_space<vmem>>, vector<2x512xf32>
    %c0_1 = arith.constant 0 : index
    %c0_2 = arith.constant 0 : index
    %1 = vector.load %arg2[%c0_1, %c0_2] : memref<512x128xf32, #tpu.memory_space<vmem>>, vector<512x128xf32>
    %2 = arith.truncf %0 : vector<2x512xf32> to vector<2x512xbf16>
    %3 = arith.truncf %1 : vector<512x128xf32> to vector<512x128xbf16>
    %cst = arith.constant dense<0.000000e+00> : vector<2x128xf32>
    %4 = tpu.matmul %2, %3, %cst {dimension_numbers = #tpu.dot_dimension_numbers<[1], [0], [0], [1], [0, 0, 1, 1], [], []>} : vector<2x512xbf16>, vector<512x128xbf16>, vector<2x128xf32> -> vector<2x128xf32>
    %c0_3 = arith.constant 0 : index
    %c0_4 = arith.constant 0 : index
    %5 = vector.load %arg3[%c0_3, %c0_4] : memref<1x128xf32, #tpu.memory_space<vmem>>, vector<1x128xf32>
    %6 = vector.broadcast %5 : vector<1x128xf32> to vector<2x128xf32>
    %7 = arith.addf %4, %6 : vector<2x128xf32>
    %c0_5 = arith.constant 0 : index
    %c0_6 = arith.constant 0 : index
    %8 = vector.load %arg4[%c0_5, %c0_6] : memref<2x128xf32, #tpu.memory_space<vmem>>, vector<2x128xf32>
    tpu.vector_store %arg4[%c0_5, %c0_6], %7 {strides = array<i32>} : memref<2x128xf32, #tpu.memory_space<vmem>>, vector<2x128xf32>,
    return
  }
  func.func @transform_0(%arg0: i32) -> (i32, i32) {
    %c0_i32 = arith.constant 0 : i32
    %c0_i32_0 = arith.constant 0 : i32
    return %arg0, %c0_i32 : i32, i32
  }
  func.func @transform_1(%arg0: i32) -> (i32, i32) {
    %c0_i32 = arith.constant 0 : i32
    %c0_i32_0 = arith.constant 0 : i32
    %c0_i32_1 = arith.constant 0 : i32
    return %c0_i32, %c0_i32_0 : i32, i32
  }
  func.func @transform_2(%arg0: i32) -> (i32, i32) {
    %c0_i32 = arith.constant 0 : i32
    %c0_i32_0 = arith.constant 0 : i32
    %c0_i32_1 = arith.constant 0 : i32
    return %c0_i32, %c0_i32_0 : i32, i32
  }
  func.func @transform_3(%arg0: i32) -> (i32, i32) {
    %c0_i32 = arith.constant 0 : i32
    %c0_i32_0 = arith.constant 0 : i32
    return %arg0, %c0_i32 : i32, i32
  }
}

</mosaic_0001>

<llo_original>
// kernel: set_transformer_forward.8
$region0: #{set_transformer_forward.8}
  #allocation0 [shape = 'u32[]', space=smem, size = 0x4, offset = 0x4, fixed_abs, tag = 'smem constant byte address 0x4 - core index']
  #allocation1 [shape = 'u32[72,128]{1,0:T(1,128)}', space=vmem, size = 0x9000, scoped, tag = 'internal scratch']
  %s0 = inlined_call_operand.vmem [shape: f32[16,4], index: 0, kind: input, shape index: {}]
  %s1 = inlined_call_operand.vmem [shape: f32[4,128], index: 1, kind: input, shape index: {}]
  %s2 = inlined_call_operand.vmem [shape: f32[1,128], index: 2, kind: input, shape index: {}]
  %s3 = inlined_call_operand.vmem [shape: f32[16,128], index: 3, kind: output, shape index: {}]
  %s4 = sld [smem:[#allocation0]]
  $region22: #{set_transformer_forward.8} parent=0
    _
  %s6 = ssub.s32 1, %s4
  %s7 = scalar_select 0, %s6, %s4
  // Predicated region
  $region2: #{set_transformer_forward.8} parent=0 // pred_check
    _
  $region3: #{set_transformer_forward.8} parent=0 // pred_check_branch
    %9 = sbr.rel (0) target = $region5
  $region4: #{set_transformer_forward.8} parent=0 // pred_region
    _
  $region5: #{set_transformer_forward.8} parent=0 // pred_fallthru
    _
  // Predicated region
  $region6: #{set_transformer_forward.8} parent=0 // pred_check
    _
  $region7: #{set_transformer_forward.8} parent=0 // pred_check_branch
    %11 = sbr.rel (0) target = $region9
  $region8: #{set_transformer_forward.8} parent=0 // pred_region
    _
  $region9: #{set_transformer_forward.8} parent=0 // pred_fallthru
    _
  // Predicated region
  $region10: #{set_transformer_forward.8} parent=0 // pred_check
    _
  $region11: #{set_transformer_forward.8} parent=0 // pred_check_branch
    %13 = sbr.rel (0) target = $region13
  $region12: #{set_transformer_forward.8} parent=0 // pred_region
    _
  $region13: #{set_transformer_forward.8} parent=0 // pred_fallthru
    _
  %v14 = vld [vmem:[%s0] sm:$0xff]
  %v15 = vld [vmem:[%s0 + $0x8] sm:$0xff]
  %v16 = vld [vmem:[%s1] sm:$0xf]
  %18 = vset.pattern.permute.xlu0 0
  %19 = vperm.xlu0 %18, %v14
  %v20 = vpop.permute.xlu0 %19
  %23 = vset.pattern.permute.xlu0 0
  %24 = vperm.xlu0 %23, %v15
  %v25 = vpop.permute.xlu0 %24
  %v27 = vperm.slane %v16, 0
  %v28 = vmul.f32 %v20, %v27
  %v29 = vmul.f32 %v25, %v27
  %v30 = vadd.f32 %v28, 0.0
  %v31 = vadd.f32 %v29, 0.0
  %32 = vset.pattern.permute.xlu0 1
  %33 = vperm.xlu0 %32, %v14
  %v34 = vpop.permute.xlu0 %33
  %36 = vset.pattern.permute.xlu0 1
  %37 = vperm.xlu0 %36, %v15
  %v38 = vpop.permute.xlu0 %37
  %v40 = vperm.slane %v16, 1
  %v41 = vmul.f32 %v34, %v40
  %v42 = vmul.f32 %v38, %v40
  %v43 = vadd.f32 %v30, %v41
  %v44 = vadd.f32 %v31, %v42
  %45 = vset.pattern.permute.xlu0 2
  %46 = vperm.xlu0 %45, %v14
  %v47 = vpop.permute.xlu0 %46
  %49 = vset.pattern.permute.xlu0 2
  %50 = vperm.xlu0 %49, %v15
  %v51 = vpop.permute.xlu0 %50
  %v53 = vperm.slane %v16, 2
  %v54 = vmul.f32 %v47, %v53
  %v55 = vmul.f32 %v51, %v53
  %v56 = vadd.f32 %v43, %v54
  %v57 = vadd.f32 %v44, %v55
  %58 = vset.pattern.permute.xlu0 3
  %59 = vperm.xlu0 %58, %v14
  %v60 = vpop.permute.xlu0 %59
  %62 = vset.pattern.permute.xlu0 3
  %63 = vperm.xlu0 %62, %v15
  %v64 = vpop.permute.xlu0 %63
  %v66 = vperm.slane %v16, 3
  %v67 = vmul.f32 %v60, %v66
  %v68 = vmul.f32 %v64, %v66
  %v69 = vadd.f32 %v56, %v67
  %v70 = vadd.f32 %v57, %v68
  %v71 = vld [vmem:[%s2] sm:$0x1]
  %v73 = vperm.slane %v71, 0
  %v75 = vadd.f32 %v69, %v73
  %v76 = vadd.f32 %v70, %v73
  %v77 = vmax.f32 %v75, 0.0
  %v78 = vmax.f32 %v76, 0.0
  %79 = vst [vmem:[%s3] sm:$0xff] %v77
  %80 = vst [vmem:[%s3 + $0x8] sm:$0xff] %v78
  // Predicated region
  $region14: #{set_transformer_forward.8} parent=0 // pred_check
    _
  $region15: #{set_transformer_forward.8} parent=0 // pred_check_branch
    %82 = sbr.rel (0) target = $region17
  $region16: #{set_transformer_forward.8} parent=0 // pred_region
    _
  $region17: #{set_transformer_forward.8} parent=0 // pred_fallthru
    _
  // Predicated region
  $region18: #{set_transformer_forward.8} parent=0 // pred_check
    _
  $region19: #{set_transformer_forward.8} parent=0 // pred_check_branch
    %84 = sbr.rel (0) target = $region21
  $region20: #{set_transformer_forward.8} parent=0 // pred_region
    _
  $region21: #{set_transformer_forward.8} parent=0 // pred_fallthru
    _

// kernel: set_transformer_forward.10
$region0: #{set_transformer_forward.10}
  #allocation0 [shape = 'u32[]', space=smem, size = 0x4, offset = 0x4, fixed_abs, tag = 'smem constant byte address 0x4 - core index']
  #allocation1 [shape = 'u32[72,128]{1,0:T(1,128)}', space=vmem, size = 0x9000, scoped, tag = 'internal scratch']
  #allocation2 [shape = 'f32[8,128]{1,0:T(8,128)}', space=vmem, size = 0x1000, scoped, tag = 'scratch operand']
  #allocation3 [shape = 'f32[4,8,1]{2,1,0:T(8,128)}', space=vmem, size = 0x4000, scoped, tag = 'scratch operand']
  #allocation4 [shape = 'f32[4,8,1]{2,1,0:T(8,128)}', space=vmem, size = 0x4000, scoped, tag = 'scratch operand']
  #allocation5 [shape = 'f32[8,128]{1,0:T(8,128)}', space=vmem, size = 0x1000, scoped, tag = 'scratch operand']
  %s0 = inlined_call_operand.vmem [shape: f32[2,8,128], index: 0, kind: input, shape index: {}]
  %s1 = inlined_call_operand.vmem [shape: f32[2,16,128], index: 1, kind: input, shape index: {}]
  %s2 = inlined_call_operand.vmem [shape: bf16[128,128], index: 2, kind: input, shape index: {}]
  %s3 = inlined_call_operand.vmem [shape: f32[1,128], index: 3, kind: input, shape index: {}]
  %s4 = inlined_call_operand.vmem [shape: bf16[128,256], index: 4, kind: input, shape index: {}]
  %s5 = inlined_call_operand.vmem [shape: f32[1,256], index: 5, kind: input, shape index: {}]
  %s6 = inlined_call_operand.vmem [shape: bf16[128,128], index: 6, kind: input, shape index: {}]
  %s7 = inlined_call_operand.vmem [shape: f32[1,128], index: 7, kind: input, shape index: {}]
  %s8 = inlined_call_operand.vmem [shape: f32[1,128], index: 8, kind: input, shape index: {}]
  %s9 = inlined_call_operand.vmem [shape: f32[1,128], index: 9, kind: input, shape index: {}]
  %s10 = inlined_call_operand.vmem [shape: bf16[3,128,128], index: 10, kind: input, shape index: {}]
  %s11 = inlined_call_operand.vmem [shape: f32[3,1,128], index: 11, kind: input, shape index: {}]
  %s12 = inlined_call_operand.vmem [shape: f32[1,128], index: 12, kind: input, shape index: {}]
  %s13 = inlined_call_operand.vmem [shape: f32[1,128], index: 13, kind: input, shape index: {}]
  %s14 = inlined_call_operand.vmem [shape: f32[2,8,128], index: 14, kind: output, shape index: {}]
  %s15 = sld [smem:[#allocation0]]
  $region97: #{set_transformer_forward.10} parent=0
    _
  %s17 = ssub.s32 1, %s15
  %s18 = scalar_select 0, %s17, %s15
  loop: start=0, step=1, limit=4
  $region2: #{set_transformer_forward.10} parent=0 // loop_pre_header
    _
  $region3: #{set_transformer_forward.10} parent=0 // loop_header
    %s20 = sphi 0, %s24
    %p21 = scmp.ge.s32.totalorder %s20, 4
    %s27 = sphi 0, %s46
    %s28 = sphi 0, %s42
    %s29 = sphi 0, %s38
    %s30 = sphi 0, %s27
    %s31 = sphi 0, %s28
    %s32 = sphi 0, %s29
    %s33 = sphi 0, %s30
    %s34 = sphi 0, %s31
    %s35 = sphi 0, %s32
    %s51 = sphi 0, %s53
    %s54 = sphi 0, %s51
    %s55 = sphi 0, %s54
    %s71 = sphi 0, %s55
    %s79 = sphi 0, %s81
    %s82 = sphi 0, %s79
    %s83 = sphi 0, %s82
    %s99 = sphi 0, %s83
    %s103 = sphi 0, %s103
    %s105 = sphi 0, %s103
    %s106 = sphi 0, %s105
    %s120 = sphi 0, %s106
    %s124 = sphi 0, %s124
    %s126 = sphi 0, %s124
    %s127 = sphi 0, %s126
    %s141 = sphi 0, %s127
    %s145 = sphi 0, %s145
    %s147 = sphi 0, %s145
    %s148 = sphi 0, %s147
    %s162 = sphi 0, %s148
    %s166 = sphi 0, %s166
    %s168 = sphi 0, %s166
    %s169 = sphi 0, %s168
    %s183 = sphi 0, %s169
    %s187 = sphi 0, %s187
    %s189 = sphi 0, %s187
    %s190 = sphi 0, %s189
    %s204 = sphi 0, %s190
    %s208 = sphi 0, %s208
    %s210 = sphi 0, %s208
    %s211 = sphi 0, %s210
    %s225 = sphi 0, %s211
    %s229 = sphi 0, %s229
    %s231 = sphi 0, %s229
    %s232 = sphi 0, %s231
    %s246 = sphi 0, %s232
    %s250 = sphi 0, %s250
    %s252 = sphi 0, %s250
    %s253 = sphi 0, %s252
    %s267 = sphi 0, %s253
    %s271 = sphi 0, %s271
    %s273 = sphi 0, %s271
    %s274 = sphi 0, %s273
    %s288 = sphi 0, %s274
    %s292 = sphi 0, %s292
    %s294 = sphi 0, %s292
    %s295 = sphi 0, %s294
    %s309 = sphi 0, %s295
    %s313 = sphi 0, %s313
    %s315 = sphi 0, %s313
    %s316 = sphi 0, %s315
    %s330 = sphi 0, %s316
    %s334 = sphi 0, %s334
    %s336 = sphi 0, %s334
    %s337 = sphi 0, %s336
    %s351 = sphi 0, %s337
    %s359 = sphi 0, %s361
    %s362 = sphi 0, %s359
    %s363 = sphi 0, %s362
    %s379 = sphi 0, %s363
  $region4: #{set_transformer_forward.10} parent=0 // loop_header_branch
    %23 = sbr.rel (%p21) target = $region8
  $region5: #{set_transformer_forward.10} parent=0 // loop_body
    %s25 = ssub.s32 %s20, 1
    %s26 = ssub.s32 %s20, 2
    %s36 = sadd.s32 1, %s29
    %p37 = scmp.ge.s32.totalorder %s36, 1
    %s38 = scalar_select %p37, 0, %s36
    %s39 = sadd.s32 1, %s28
    %s40 = scalar_select %p37, %s39, %s28
    %p41 = scmp.ge.s32.totalorder %s40, 1
    %s42 = scalar_select %p41, 0, %s40
    %s43 = sadd.s32 1, %s27
    %s44 = scalar_select %p41, %s43, %s27
    %p45 = scmp.ge.s32.totalorder %s44, 2
    %s46 = scalar_select %p45, 0, %s44
    %s47 = ssub.s32 %s27, %s46
    %s48 = ssub.s32 %s28, %s42
    %s49 = sor.u32 %s47, %s48
    %p50 = scmp.eq.s32.totalorder %s49, 0
    %s52 = sadd.s32 %s51, 1
    %s53 = scalar_select %p50, %s51, %s52
    %p56 = pneg %p50
    %p57 = scmp.eq.s32.totalorder %s20, 1
    %p58 = por %p56, %p57
    %p59 = scmp.ne.s32.totalorder %s51, %s54
    %p60 = scmp.eq.s32.totalorder %s20, 0
    %p61 = por %p59, %p60
    %p62 = scmp.ne.s32.totalorder %s51, %s54
    %p63 = scmp.eq.s32.totalorder %s25, 1
    %p64 = por %p62, %p63
    %p65 = scmp.ne.s32.totalorder %s54, %s55
    %p66 = scmp.eq.s32.totalorder %s25, 0
    %p67 = por %p65, %p66
    %p68 = scmp.ne.s32.totalorder %s54, %s55
    %p69 = scmp.eq.s32.totalorder %s26, 1
    %p70 = por %p68, %p69
    %p72 = scmp.ne.s32.totalorder %s55, %s71
    %p73 = scmp.eq.s32.totalorder %s26, 0
    %p74 = por %p72, %p73
    %s75 = ssub.s32 %s27, %s46
    %s76 = ssub.s32 %s29, %s38
    %s77 = sor.u32 %s75, %s76
    %p78 = scmp.eq.s32.totalorder %s77, 0
    %s80 = sadd.s32 %s79, 1
    %s81 = scalar_select %p78, %s79, %s80
    %p84 = pneg %p78
    %p85 = scmp.eq.s32.totalorder %s20, 1
    %p86 = por %p84, %p85
    %p87 = scmp.ne.s32.totalorder %s79, %s82
    %p88 = scmp.eq.s32.totalorder %s20, 0
    %p89 = por %p87, %p88
    %p90 = scmp.ne.s32.totalorder %s79, %s82
    %p91 = scmp.eq.s32.totalorder %s25, 1
    %p92 = por %p90, %p91
    %p93 = scmp.ne.s32.totalorder %s82, %s83
    %p94 = scmp.eq.s32.totalorder %s25, 0
    %p95 = por %p93, %p94
    %p96 = scmp.ne.s32.totalorder %s82, %s83
    %p97 = scmp.eq.s32.totalorder %s26, 1
    %p98 = por %p96, %p97
    %p100 = scmp.ne.s32.totalorder %s83, %s99
    %p101 = scmp.eq.s32.totalorder %s26, 0
    %p102 = por %p100, %p101
    %s104 = sadd.s32 %s103, 1
    %p107 = scmp.eq.s32.totalorder %s20, 1
    %p108 = scmp.ne.s32.totalorder %s103, %s105
    %p109 = scmp.eq.s32.totalorder %s20, 0
    %p110 = por %p108, %p109
    %p111 = scmp.ne.s32.totalorder %s103, %s105
    %p112 = scmp.eq.s32.totalorder %s25, 1
    %p113 = por %p111, %p112
    %p114 = scmp.ne.s32.totalorder %s105, %s106
    %p115 = scmp.eq.s32.totalorder %s25, 0
    %p116 = por %p114, %p115
    %p117 = scmp.ne.s32.totalorder %s105, %s106
    %p118 = scmp.eq.s32.totalorder %s26, 1
    %p119 = por %p117, %p118
    %p121 = scmp.ne.s32.totalorder %s106, %s120
    %p122 = scmp.eq.s32.totalorder %s26, 0
    %p123 = por %p121, %p122
    %s125 = sadd.s32 %s124, 1
    %p128 = scmp.eq.s32.totalorder %s20, 1
    %p129 = scmp.ne.s32.totalorder %s124, %s126
    %p130 = scmp.eq.s32.totalorder %s20, 0
    %p131 = por %p129, %p130
    %p132 = scmp.ne.s32.totalorder %s124, %s126
    %p133 = scmp.eq.s32.totalorder %s25, 1
    %p134 = por %p132, %p133
    %p135 = scmp.ne.s32.totalorder %s126, %s127
    %p136 = scmp.eq.s32.totalorder %s25, 0
    %p137 = por %p135, %p136
    %p138 = scmp.ne.s32.totalorder %s126, %s127
    %p139 = scmp.eq.s32.totalorder %s26, 1
    %p140 = por %p138, %p139
    %p142 = scmp.ne.s32.totalorder %s127, %s141
    %p143 = scmp.eq.s32.totalorder %s26, 0
    %p144 = por %p142, %p143
    %s146 = sadd.s32 %s145, 1
    %p149 = scmp.eq.s32.totalorder %s20, 1
    %p150 = scmp.ne.s32.totalorder %s145, %s147
    %p151 = scmp.eq.s32.totalorder %s20, 0
    %p152 = por %p150, %p151
    %p153 = scmp.ne.s32.totalorder %s145, %s147
    %p154 = scmp.eq.s32.totalorder %s25, 1
    %p155 = por %p153, %p154
    %p156 = scmp.ne.s32.totalorder %s147, %s148
    %p157 = scmp.eq.s32.totalorder %s25, 0
    %p158 = por %p156, %p157
    %p159 = scmp.ne.s32.totalorder %s147, %s148
    %p160 = scmp.eq.s32.totalorder %s26, 1
    %p161 = por %p159, %p160
    %p163 = scmp.ne.s32.totalorder %s148, %s162
    %p164 = scmp.eq.s32.totalorder %s26, 0
    %p165 = por %p163, %p164
    %s167 = sadd.s32 %s166, 1
    %p170 = scmp.eq.s32.totalorder %s20, 1
    %p171 = scmp.ne.s32.totalorder %s166, %s168
    %p172 = scmp.eq.s32.totalorder %s20, 0
    %p173 = por %p171, %p172
    %p174 = scmp.ne.s32.totalorder %s166, %s168
    %p175 = scmp.eq.s32.totalorder %s25, 1
    %p176 = por %p174, %p175
    %p177 = scmp.ne.s32.totalorder %s168, %s169
    %p178 = scmp.eq.s32.totalorder %s25, 0
    %p179 = por %p177, %p178
    %p180 = scmp.ne.s32.totalorder %s168, %s169
    %p181 = scmp.eq.s32.totalorder %s26, 1
    %p182 = por %p180, %p181
    %p184 = scmp.ne.s32.totalorder %s169, %s183
    %p185 = scmp.eq.s32.totalorder %s26, 0
    %p186 = por %p184, %p185
    %s188 = sadd.s32 %s187, 1
    %p191 = scmp.eq.s32.totalorder %s20, 1
    %p192 = scmp.ne.s32.totalorder %s187, %s189
    %p193 = scmp.eq.s32.totalorder %s20, 0
    %p194 = por %p192, %p193
    %p195 = scmp.ne.s32.totalorder %s187, %s189
    %p196 = scmp.eq.s32.totalorder %s25, 1
    %p197 = por %p195, %p196
    %p198 = scmp.ne.s32.totalorder %s189, %s190
    %p199 = scmp.eq.s32.totalorder %s25, 0
    %p200 = por %p198, %p199
    %p201 = scmp.ne.s32.totalorder %s189, %s190
    %p202 = scmp.eq.s32.totalorder %s26, 1
    %p203 = por %p201, %p202
    %p205 = scmp.ne.s32.totalorder %s190, %s204
    %p206 = scmp.eq.s32.totalorder %s26, 0
    %p207 = por %p205, %p206
    %s209 = sadd.s32 %s208, 1
    %p212 = scmp.eq.s32.totalorder %s20, 1
    %p213 = scmp.ne.s32.totalorder %s208, %s210
    %p214 = scmp.eq.s32.totalorder %s20, 0
    %p215 = por %p213, %p214
    %p216 = scmp.ne.s32.totalorder %s208, %s210
    %p217 = scmp.eq.s32.totalorder %s25, 1
    %p218 = por %p216, %p217
    %p219 = scmp.ne.s32.totalorder %s210, %s211
    %p220 = scmp.eq.s32.totalorder %s25, 0
    %p221 = por %p219, %p220
    %p222 = scmp.ne.s32.totalorder %s210, %s211
    %p223 = scmp.eq.s32.totalorder %s26, 1
    %p224 = por %p222, %p223
    %p226 = scmp.ne.s32.totalorder %s211, %s225
    %p227 = scmp.eq.s32.totalorder %s26, 0
    %p228 = por %p226, %p227
    %s230 = sadd.s32 %s229, 1
    %p233 = scmp.eq.s32.totalorder %s20, 1
    %p234 = scmp.ne.s32.totalorder %s229, %s231
    %p235 = scmp.eq.s32.totalorder %s20, 0
    %p236 = por %p234, %p235
    %p237 = scmp.ne.s32.totalorder %s229, %s231
    %p238 = scmp.eq.s32.totalorder %s25, 1
    %p239 = por %p237, %p238
    %p240 = scmp.ne.s32.totalorder %s231, %s232
    %p241 = scmp.eq.s32.totalorder %s25, 0
    %p242 = por %p240, %p241
    %p243 = scmp.ne.s32.totalorder %s231, %s232
    %p244 = scmp.eq.s32.totalorder %s26, 1
    %p245 = por %p243, %p244
    %p247 = scmp.ne.s32.totalorder %s232, %s246
    %p248 = scmp.eq.s32.totalorder %s26, 0
    %p249 = por %p247, %p248
    %s251 = sadd.s32 %s250, 1
    %p254 = scmp.eq.s32.totalorder %s20, 1
    %p255 = scmp.ne.s32.totalorder %s250, %s252
    %p256 = scmp.eq.s32.totalorder %s20, 0
    %p257 = por %p255, %p256
    %p258 = scmp.ne.s32.totalorder %s250, %s252
    %p259 = scmp.eq.s32.totalorder %s25, 1
    %p260 = por %p258, %p259
    %p261 = scmp.ne.s32.totalorder %s252, %s253
    %p262 = scmp.eq.s32.totalorder %s25, 0
    %p263 = por %p261, %p262
    %p264 = scmp.ne.s32.totalorder %s252, %s253
    %p265 = scmp.eq.s32.totalorder %s26, 1
    %p266 = por %p264, %p265
    %p268 = scmp.ne.s32.totalorder %s253, %s267
    %p269 = scmp.eq.s32.totalorder %s26, 0
    %p270 = por %p268, %p269
    %s272 = sadd.s32 %s271, 1
    %p275 = scmp.eq.s32.totalorder %s20, 1
    %p276 = scmp.ne.s32.totalorder %s271, %s273
    %p277 = scmp.eq.s32.totalorder %s20, 0
    %p278 = por %p276, %p277
    %p279 = scmp.ne.s32.totalorder %s271, %s273
    %p280 = scmp.eq.s32.totalorder %s25, 1
    %p281 = por %p279, %p280
    %p282 = scmp.ne.s32.totalorder %s273, %s274
    %p283 = scmp.eq.s32.totalorder %s25, 0
    %p284 = por %p282, %p283
    %p285 = scmp.ne.s32.totalorder %s273, %s274
    %p286 = scmp.eq.s32.totalorder %s26, 1
    %p287 = por %p285, %p286
    %p289 = scmp.ne.s32.totalorder %s274, %s288
    %p290 = scmp.eq.s32.totalorder %s26, 0
    %p291 = por %p289, %p290
    %s293 = sadd.s32 %s292, 1
    %p296 = scmp.eq.s32.totalorder %s20, 1
    %p297 = scmp.ne.s32.totalorder %s292, %s294
    %p298 = scmp.eq.s32.totalorder %s20, 0
    %p299 = por %p297, %p298
    %p300 = scmp.ne.s32.totalorder %s292, %s294
    %p301 = scmp.eq.s32.totalorder %s25, 1
    %p302 = por %p300, %p301
    %p303 = scmp.ne.s32.totalorder %s294, %s295
    %p304 = scmp.eq.s32.totalorder %s25, 0
    %p305 = por %p303, %p304
    %p306 = scmp.ne.s32.totalorder %s294, %s295
    %p307 = scmp.eq.s32.totalorder %s26, 1
    %p308 = por %p306, %p307
    %p310 = scmp.ne.s32.totalorder %s295, %s309
    %p311 = scmp.eq.s32.totalorder %s26, 0
    %p312 = por %p310, %p311
    %s314 = sadd.s32 %s313, 1
    %p317 = scmp.eq.s32.totalorder %s20, 1
    %p318 = scmp.ne.s32.totalorder %s313, %s315
    %p319 = scmp.eq.s32.totalorder %s20, 0
    %p320 = por %p318, %p319
    %p321 = scmp.ne.s32.totalorder %s313, %s315
    %p322 = scmp.eq.s32.totalorder %s25, 1
    %p323 = por %p321, %p322
    %p324 = scmp.ne.s32.totalorder %s315, %s316
    %p325 = scmp.eq.s32.totalorder %s25, 0
    %p326 = por %p324, %p325
    %p327 = scmp.ne.s32.totalorder %s315, %s316
    %p328 = scmp.eq.s32.totalorder %s26, 1
    %p329 = por %p327, %p328
    %p331 = scmp.ne.s32.totalorder %s316, %s330
    %p332 = scmp.eq.s32.totalorder %s26, 0
    %p333 = por %p331, %p332
    %s335 = sadd.s32 %s334, 1
    %p338 = scmp.eq.s32.totalorder %s20, 1
    %p339 = scmp.ne.s32.totalorder %s334, %s336
    %p340 = scmp.eq.s32.totalorder %s20, 0
    %p341 = por %p339, %p340
    %p342 = scmp.ne.s32.totalorder %s334, %s336
    %p343 = scmp.eq.s32.totalorder %s25, 1
    %p344 = por %p342, %p343
    %p345 = scmp.ne.s32.totalorder %s336, %s337
    %p346 = scmp.eq.s32.totalorder %s25, 0
    %p347 = por %p345, %p346
    %p348 = scmp.ne.s32.totalorder %s336, %s337
    %p349 = scmp.eq.s32.totalorder %s26, 1
    %p350 = por %p348, %p349
    %p352 = scmp.ne.s32.totalorder %s337, %s351
    %p353 = scmp.eq.s32.totalorder %s26, 0
    %p354 = por %p352, %p353
    %s355 = ssub.s32 %s27, %s46
    %s356 = ssub.s32 %s28, %s42
    %s357 = sor.u32 %s355, %s356
    %p358 = scmp.eq.s32.totalorder %s357, 0
    %s360 = sadd.s32 %s359, 1
    %s361 = scalar_select %p358, %s359, %s360
    %p364 = pneg %p358
    %p365 = scmp.eq.s32.totalorder %s20, 1
    %p366 = por %p364, %p365
    %p367 = scmp.ne.s32.totalorder %s359, %s362
    %p368 = scmp.eq.s32.totalorder %s20, 0
    %p369 = por %p367, %p368
    %p370 = scmp.ne.s32.totalorder %s359, %s362
    %p371 = scmp.eq.s32.totalorder %s25, 1
    %p372 = por %p370, %p371
    %p373 = scmp.ne.s32.totalorder %s362, %s363
    %p374 = scmp.eq.s32.totalorder %s25, 0
    %p375 = por %p373, %p374
    %p376 = scmp.ne.s32.totalorder %s362, %s363
    %p377 = scmp.eq.s32.totalorder %s26, 1
    %p378 = por %p376, %p377
    %p380 = scmp.ne.s32.totalorder %s363, %s379
    %p381 = scmp.eq.s32.totalorder %s26, 0
    %p382 = por %p380, %p381
    %p383 = scmp.le.s32.totalorder 1, %s20
    %p384 = scmp.lt.s32.totalorder %s20, 3
    %p385 = pnand %p383, %p384
    %p386 = pneg %p385
    // Predicated region
    $region9: #{set_transformer_forward.10} parent=5 // pred_check
      _
    $region10: #{set_transformer_forward.10} parent=5 // pred_check_branch
      %388 = sbr.rel (%p385) target = $region12
    $region11: #{set_transformer_forward.10} parent=5 // pred_region
      %s389 = ssub.s32 %s20, 1
      // Predicated region
      $region13: #{set_transformer_forward.10} parent=11 // pred_check
        %p390 = pneg %p116
      $region14: #{set_transformer_forward.10} parent=11 // pred_check_branch
        %392 = sbr.rel (%p390) target = $region16
      $region15: #{set_transformer_forward.10} parent=11 // pred_region
        _
      $region16: #{set_transformer_forward.10} parent=11 // pred_fallthru
        _
      // Predicated region
      $region17: #{set_transformer_forward.10} parent=11 // pred_check
        %p393 = pneg %p137
      $region18: #{set_transformer_forward.10} parent=11 // pred_check_branch
        %395 = sbr.rel (%p393) target = $region20
      $region19: #{set_transformer_forward.10} parent=11 // pred_region
        _
      $region20: #{set_transformer_forward.10} parent=11 // pred_fallthru
        _
      // Predicated region
      $region21: #{set_transformer_forward.10} parent=11 // pred_check
        %p396 = pneg %p158
      $region22: #{set_transformer_forward.10} parent=11 // pred_check_branch
        %398 = sbr.rel (%p396) target = $region24
      $region23: #{set_transformer_forward.10} parent=11 // pred_region
        _
      $region24: #{set_transformer_forward.10} parent=11 // pred_fallthru
        _
      // Predicated region
      $region25: #{set_transformer_forward.10} parent=11 // pred_check
        %p399 = pneg %p179
      $region26: #{set_transformer_forward.10} parent=11 // pred_check_branch
        %401 = sbr.rel (%p399) target = $region28
      $region27: #{set_transformer_forward.10} parent=11 // pred_region
        _
      $region28: #{set_transformer_forward.10} parent=11 // pred_fallthru
        _
      // Predicated region
      $region29: #{set_transformer_forward.10} parent=11 // pred_check
        %p402 = pneg %p200
      $region30: #{set_transformer_forward.10} parent=11 // pred_check_branch
        %404 = sbr.rel (%p402) target = $region32
      $region31: #{set_transformer_forward.10} parent=11 // pred_region
        _
      $region32: #{set_transformer_forward.10} parent=11 // pred_fallthru
        _
      // Predicated region
      $region33: #{set_transformer_forward.10} parent=11 // pred_check
        %p405 = pneg %p221
      $region34: #{set_transformer_forward.10} parent=11 // pred_check_branch
        %407 = sbr.rel (%p405) target = $region36
      $region35: #{set_transformer_forward.10} parent=11 // pred_region
        _
      $region36: #{set_transformer_forward.10} parent=11 // pred_fallthru
        _
      // Predicated region
      $region37: #{set_transformer_forward.10} parent=11 // pred_check
        %p408 = pneg %p242
      $region38: #{set_transformer_forward.10} parent=11 // pred_check_branch
        %410 = sbr.rel (%p408) target = $region40
      $region39: #{set_transformer_forward.10} parent=11 // pred_region
        _
      $region40: #{set_transformer_forward.10} parent=11 // pred_fallthru
        _
      // Predicated region
      $region41: #{set_transformer_forward.10} parent=11 // pred_check
        %p411 = pneg %p263
      $region42: #{set_transformer_forward.10} parent=11 // pred_check_branch
        %413 = sbr.rel (%p411) target = $region44
      $region43: #{set_transformer_forward.10} parent=11 // pred_region
        _
      $region44: #{set_transformer_forward.10} parent=11 // pred_fallthru
        _
      // Predicated region
      $region45: #{set_transformer_forward.10} parent=11 // pred_check
        %p414 = pneg %p284
      $region46: #{set_transformer_forward.10} parent=11 // pred_check_branch
        %416 = sbr.rel (%p414) target = $region48
      $region47: #{set_transformer_forward.10} parent=11 // pred_region
        _
      $region48: #{set_transformer_forward.10} parent=11 // pred_fallthru
        _
      // Predicated region
      $region49: #{set_transformer_forward.10} parent=11 // pred_check
        %p417 = pneg %p305
      $region50: #{set_transformer_forward.10} parent=11 // pred_check_branch
        %419 = sbr.rel (%p417) target = $region52
      $region51: #{set_transformer_forward.10} parent=11 // pred_region
        _
      $region52: #{set_transformer_forward.10} parent=11 // pred_fallthru
        _
      // Predicated region
      $region53: #{set_transformer_forward.10} parent=11 // pred_check
        %p420 = pneg %p326
      $region54: #{set_transformer_forward.10} parent=11 // pred_check_branch
        %422 = sbr.rel (%p420) target = $region56
      $region55: #{set_transformer_forward.10} parent=11 // pred_region
        _
      $region56: #{set_transformer_forward.10} parent=11 // pred_fallthru
        _
      // Predicated region
      $region57: #{set_transformer_forward.10} parent=11 // pred_check
        %p423 = pneg %p347
      $region58: #{set_transformer_forward.10} parent=11 // pred_check_branch
        %425 = sbr.rel (%p423) target = $region60
      $region59: #{set_transformer_forward.10} parent=11 // pred_region
        _
      $region60: #{set_transformer_forward.10} parent=11 // pred_fallthru
        _
    $region12: #{set_transformer_forward.10} parent=5 // pred_fallthru
      _
    %p426 = scmp.lt.s32.totalorder %s20, 2
    // Predicated region
    $region61: #{set_transformer_forward.10} parent=5 // pred_check
      %p427 = pneg %p426
    $region62: #{set_transformer_forward.10} parent=5 // pred_check_branch
      %429 = sbr.rel (%p427) target = $region64
    $region63: #{set_transformer_forward.10} parent=5 // pred_region
      // Predicated region
      $region65: #{set_transformer_forward.10} parent=63 // pred_check
        %p430 = pneg %p61
      $region66: #{set_transformer_forward.10} parent=63 // pred_check_branch
        %432 = sbr.rel (%p430) target = $region68
      $region67: #{set_transformer_forward.10} parent=63 // pred_region
        %p433 = scmp.lt.s32.totalorder %s27, 1
        %s434 = scalar_select %p433, %s27, 1
        %p435 = scmp.lt.s32.totalorder %s28, 0
        %s436 = scalar_select %p435, %s28, 0
        %s437 = sadd.s32 %s436, %s434
        %s438 = smul.addr %s437, 8
        %s439 = scalar_lea.vmem %s0, %s438
      $region68: #{set_transformer_forward.10} parent=63 // pred_fallthru
        _
      // Predicated region
      $region69: #{set_transformer_forward.10} parent=63 // pred_check
        %p440 = pneg %p89
      $region70: #{set_transformer_forward.10} parent=63 // pred_check_branch
        %442 = sbr.rel (%p440) target = $region72
      $region71: #{set_transformer_forward.10} parent=63 // pred_region
        %s443 = smul.u32 2, %s29
        %p444 = scmp.lt.s32.totalorder %s27, 1
        %s445 = scalar_select %p444, %s27, 1
        %p446 = scmp.lt.s32.totalorder %s443, 1
        %s447 = scalar_select %p446, %s443, 1
        %s448 = smul.addr %s445, 2
        %s449 = sadd.s32 %s447, %s448
        %s450 = smul.addr %s449, 8
        %s451 = scalar_lea.vmem %s1, %s450
        %s452 = smul.u32 2, %s29
      $region72: #{set_transformer_forward.10} parent=63 // pred_fallthru
        _
    $region64: #{set_transformer_forward.10} parent=5 // pred_fallthru
      _
    %p453 = scmp.le.s32.totalorder 1, %s20
    %p454 = scmp.lt.s32.totalorder %s20, 3
    %p455 = pnand %p453, %p454
    %p456 = pneg %p455
    // Predicated region
    $region73: #{set_transformer_forward.10} parent=5 // pred_check
      _
    $region74: #{set_transformer_forward.10} parent=5 // pred_check_branch
      %458 = sbr.rel (%p455) target = $region76
    $region75: #{set_transformer_forward.10} parent=5 // pred_region
      %s459 = ssub.s32 %s20, 1
      %p460 = scmp.lt.s32.totalorder %s30, 1
      %s461 = scalar_select %p460, %s30, 1
      %p462 = scmp.lt.s32.totalorder %s31, 0
      %s463 = scalar_select %p462, %s31, 0
      %s464 = sadd.s32 %s463, %s461
      %s465 = smul.addr %s464, 8
      %s466 = scalar_lea.vmem %s0, %s465
      %p467 = pneg %p67
      %p468 = pneg %p64
      %s469 = smul.u32 2, %s32
      %p470 = scmp.lt.s32.totalorder %s30, 1
      %s471 = scalar_select %p470, %s30, 1
      %p472 = scmp.lt.s32.totalorder %s469, 1
      %s473 = scalar_select %p472, %s469, 1
      %s474 = smul.addr %s471, 2
      %s475 = sadd.s32 %s473, %s474
      %s476 = smul.addr %s475, 8
      %s477 = scalar_lea.vmem %s1, %s476
      %p478 = pneg %p95
      %p479 = pneg %p92
      %p480 = pneg %p116
      %p481 = pneg %p113
      %p482 = pneg %p137
      %p483 = pneg %p134
      %p484 = pneg %p158
      %p485 = pneg %p155
      %p486 = pneg %p179
      %p487 = pneg %p176
      %p488 = pneg %p200
      %p489 = pneg %p197
      %p490 = pneg %p221
      %p491 = pneg %p218
      %p492 = pneg %p242
      %p493 = pneg %p239
      %p494 = pneg %p263
      %p495 = pneg %p260
      %p496 = pneg %p284
      %p497 = pneg %p281
      %p498 = pneg %p305
      %p499 = pneg %p302
      %p500 = pneg %p326
      %p501 = pneg %p323
      %p502 = pneg %p347
      %p503 = pneg %p344
      %p504 = pneg %p375
      %p505 = pneg %p372
      %p506 = scmp.lt.s32.totalorder %s30, 1
      %s507 = scalar_select %p506, %s30, 1
      %p508 = scmp.lt.s32.totalorder %s31, 0
      %s509 = scalar_select %p508, %s31, 0
      %s510 = sadd.s32 %s509, %s507
      %s511 = smul.addr %s510, 8
      %s512 = scalar_lea.vmem %s14, %s511
      %p513 = scmp.lt.s32.totalorder %s30, 1
      %s514 = scalar_select %p513, %s30, 1
      %p515 = scmp.lt.s32.totalorder %s31, 0
      %s516 = scalar_select %p515, %s31, 0
      %s517 = sadd.s32 %s516, %s514
      %s518 = smul.addr %s517, 8
      %s519 = scalar_lea.vmem %s0, %s518
      %s520 = smul.u32 2, %s32
      %p521 = scmp.lt.s32.totalorder %s30, 1
      %s522 = scalar_select %p521, %s30, 1
      %p523 = scmp.lt.s32.totalorder %s520, 1
      %s524 = scalar_select %p523, %s520, 1
      %s525 = smul.addr %s522, 2
      %s526 = sadd.s32 %s524, %s525
      %s527 = smul.addr %s526, 8
      %s528 = scalar_lea.vmem %s1, %s527
      %s529 = smul.u32 2, %s32
      %p530 = scmp.lt.s32.totalorder %s30, 1
      %s531 = scalar_select %p530, %s30, 1
      %p532 = scmp.lt.s32.totalorder %s31, 0
      %s533 = scalar_select %p532, %s31, 0
      %s534 = sadd.s32 %s533, %s531
      %s535 = smul.addr %s534, 8
      %s536 = scalar_lea.vmem %s14, %s535
      %v538 = vld [vmem:[%s519] sm:$0xff]
      %p539 = scmp.eq.s32.totalorder %s32, 0
      // Predicated region
      $region77: #{set_transformer_forward.10} parent=75 // pred_check
        %p540 = pneg %p539
      $region78: #{set_transformer_forward.10} parent=75 // pred_check_branch
        %542 = sbr.rel (%p540) target = $region80
      $region79: #{set_transformer_forward.10} parent=75 // pred_region
        %v543 = vpack.c.bf16 %v538, %v538
        %v544 = vld [vmem:[%s2] sm:$0xf]
        %v545 = vld [vmem:[%s2 + $0x4] sm:$0xf]
        %v546 = vld [vmem:[%s2 + $0x8] sm:$0xf]
        %v547 = vld [vmem:[%s2 + $0xc] sm:$0xf]
        %v548 = vld [vmem:[%s2 + $0x10] sm:$0xf]
        %v549 = vld [vmem:[%s2 + $0x14] sm:$0xf]
        %v550 = vld [vmem:[%s2 + $0x18] sm:$0xf]
        %v551 = vld [vmem:[%s2 + $0x1c] sm:$0xf]
        %v552 = vld [vmem:[%s2 + $0x20] sm:$0xf]
        %v553 = vld [vmem:[%s2 + $0x24] sm:$0xf]
        %v554 = vld [vmem:[%s2 + $0x28] sm:$0xf]
        %v555 = vld [vmem:[%s2 + $0x2c] sm:$0xf]
        %v556 = vld [vmem:[%s2 + $0x30] sm:$0xf]
        %v557 = vld [vmem:[%s2 + $0x34] sm:$0xf]
        %v558 = vld [vmem:[%s2 + $0x38] sm:$0xf]
        %v559 = vld [vmem:[%s2 + $0x3c] sm:$0xf]
        %v560 = vld [vmem:[%s3] sm:$0x1]
        %v562 = vperm.slane %v560, 0
        %v580 = vunpack.c.l.b16 %v544
        %v581 = vunpack.c.l.b16 %v545
        %v582 = vunpack.c.l.b16 %v546
        %v583 = vunpack.c.l.b16 %v547
        %v584 = vunpack.c.l.b16 %v548
        %v585 = vunpack.c.l.b16 %v549
        %v586 = vunpack.c.l.b16 %v550
        %v587 = vunpack.c.l.b16 %v551
        %v588 = vunpack.c.l.b16 %v552
        %v589 = vunpack.c.l.b16 %v553
        %v590 = vunpack.c.l.b16 %v554
        %v591 = vunpack.c.l.b16 %v555
        %v592 = vunpack.c.l.b16 %v556
        %v593 = vunpack.c.l.b16 %v557
        %v594 = vunpack.c.l.b16 %v558
        %v595 = vunpack.c.l.b16 %v559
        %v596 = vpack.c.b16 %v581, %v580
        %v597 = vpack.c.b16 %v583, %v582
        %v598 = vpack.c.b16 %v585, %v584
        %v599 = vpack.c.b16 %v587, %v586
        %v600 = vpack.c.b16 %v589, %v588
        %v601 = vpack.c.b16 %v591, %v590
        %v602 = vpack.c.b16 %v593, %v592
        %v603 = vpack.c.b16 %v595, %v594
        %612 = vmatpush.bf16.msra.mxu0 %v603
        %613 = vmatpush.bf16.msra.mxu0 %v602
        %614 = vmatpush.bf16.msra.mxu0 %v601
        %615 = vmatpush.bf16.msra.mxu0 %v600
        %616 = vmatpush.bf16.msra.mxu0 %v599
        %617 = vmatpush.bf16.msra.mxu0 %v598
        %618 = vmatpush.bf16.msra.mxu0 %v597
        %619 = vmatpush.bf16.msra.mxu0 %v596
        %620 = vmatmul.bf16.gmra.mxu0 %v543
        %v621 = vpop.f32.mrf.mxu0
        %v622 = vadd.f32 %v562, %v621
        %v623 = vpop.f32.mrf.mxu0
        %624 = vdwg.mxu0
        %v625 = vmul.f32 %v622, 0.17677669
        %626 = vst [vmem:[#allocation2] sm:$0xff] %v625
        %vm627 = vcmask 7168
        %628 = vst.msk [vmem:[#allocation3] sm:$0xff] %vm627, -inf
        %629 = vst.msk [vmem:[#allocation3 + $0x8] sm:$0xff] %vm627, -inf
        %630 = vst.msk [vmem:[#allocation3 + $0x10] sm:$0xff] %vm627, -inf
        %631 = vst.msk [vmem:[#allocation3 + $0x18] sm:$0xff] %vm627, -inf
        %632 = vst.msk [vmem:[#allocation4] sm:$0xff] %vm627, 0.0
        %633 = vst.msk [vmem:[#allocation4 + $0x8] sm:$0xff] %vm627, 0.0
        %634 = vst.msk [vmem:[#allocation4 + $0x10] sm:$0xff] %vm627, 0.0
        %635 = vst.msk [vmem:[#allocation4 + $0x18] sm:$0xff] %vm627, 0.0
        %636 = vst [vmem:[#allocation5] sm:$0xff] 0.0
      $region80: #{set_transformer_forward.10} parent=75 // pred_fallthru
        _
      %v637 = vld [vmem:[%s528] sm:$0xff]
      %v638 = vld [vmem:[%s528 + $0x8] sm:$0xff]
      %v639 = vpack.c.bf16 %v638, %v637
      %v640 = vld [vmem:[%s4] sm:$0xff]
      %v641 = vld [vmem:[%s4 + $0x8] sm:$0xff]
      %v642 = vld [vmem:[%s4 + $0x10] sm:$0xff]
      %v643 = vld [vmem:[%s4 + $0x18] sm:$0xff]
      %v644 = vld [vmem:[%s4 + $0x20] sm:$0xff]
      %v645 = vld [vmem:[%s4 + $0x28] sm:$0xff]
      %v646 = vld [vmem:[%s4 + $0x30] sm:$0xff]
      %v647 = vld [vmem:[%s4 + $0x38] sm:$0xff]
      %v648 = vld [vmem:[%s4 + $0x40] sm:$0xff]
      %v649 = vld [vmem:[%s4 + $0x48] sm:$0xff]
      %v650 = vld [vmem:[%s4 + $0x50] sm:$0xff]
      %v651 = vld [vmem:[%s4 + $0x58] sm:$0xff]
      %v652 = vld [vmem:[%s4 + $0x60] sm:$0xff]
      %v653 = vld [vmem:[%s4 + $0x68] sm:$0xff]
      %v654 = vld [vmem:[%s4 + $0x70] sm:$0xff]
      %v655 = vld [vmem:[%s4 + $0x78] sm:$0xff]
      %v656 = vld [vmem:[%s5] sm:$0x3]
      %v658 = vperm.slane %v656, 0
      %v659 = vperm.slane %v656, 1
      %v678 = vunpack.c.l.b16 %v640
      %v679 = vunpack.c.h.b16 %v640
      %v680 = vunpack.c.l.b16 %v641
      %v681 = vunpack.c.h.b16 %v641
      %v682 = vunpack.c.l.b16 %v642
      %v683 = vunpack.c.h.b16 %v642
      %v684 = vunpack.c.l.b16 %v643
      %v685 = vunpack.c.h.b16 %v643
      %v686 = vunpack.c.l.b16 %v644
      %v687 = vunpack.c.h.b16 %v644
      %v688 = vunpack.c.l.b16 %v645
      %v689 = vunpack.c.h.b16 %v645
      %v690 = vunpack.c.l.b16 %v646
      %v691 = vunpack.c.h.b16 %v646
      %v692 = vunpack.c.l.b16 %v647
      %v693 = vunpack.c.h.b16 %v647
      %v694 = vunpack.c.l.b16 %v648
      %v695 = vunpack.c.h.b16 %v648
      %v696 = vunpack.c.l.b16 %v649
      %v697 = vunpack.c.h.b16 %v649
      %v698 = vunpack.c.l.b16 %v650
      %v699 = vunpack.c.h.b16 %v650
      %v700 = vunpack.c.l.b16 %v651
      %v701 = vunpack.c.h.b16 %v651
      %v702 = vunpack.c.l.b16 %v652
      %v703 = vunpack.c.h.b16 %v652
      %v704 = vunpack.c.l.b16 %v653
      %v705 = vunpack.c.h.b16 %v653
      %v706 = vunpack.c.l.b16 %v654
      %v707 = vunpack.c.h.b16 %v654
      %v708 = vunpack.c.l.b16 %v655
      %v709 = vunpack.c.h.b16 %v655
      %v710 = vpack.c.b16 %v680, %v678
      %v711 = vpack.c.b16 %v681, %v679
      %v712 = vpack.c.b16 %v684, %v682
      %v713 = vpack.c.b16 %v685, %v683
      %v714 = vpack.c.b16 %v688, %v686
      %v715 = vpack.c.b16 %v689, %v687
      %v716 = vpack.c.b16 %v692, %v690
      %v717 = vpack.c.b16 %v693, %v691
      %v718 = vpack.c.b16 %v696, %v694
      %v719 = vpack.c.b16 %v697, %v695
      %v720 = vpack.c.b16 %v700, %v698
      %v721 = vpack.c.b16 %v701, %v699
      %v722 = vpack.c.b16 %v704, %v702
      %v723 = vpack.c.b16 %v705, %v703
      %v724 = vpack.c.b16 %v708, %v706
      %v725 = vpack.c.b16 %v709, %v707
      %742 = vmatpush.bf16.msra.mxu0 %v724
      %743 = vmatpush.bf16.msra.mxu0 %v722
      %744 = vmatpush.bf16.msra.mxu0 %v720
      %745 = vmatpush.bf16.msra.mxu0 %v718
      %746 = vmatpush.bf16.msra.mxu0 %v716
      %747 = vmatpush.bf16.msra.mxu0 %v714
      %748 = vmatpush.bf16.msra.mxu0 %v712
      %749 = vmatpush.bf16.msra.mxu0 %v710
      %750 = vmatmul.bf16.gmra.mxu0 %v639
      %v751 = vpop.f32.mrf.mxu0
      %v752 = vadd.f32 %v658, %v751
      %v753 = vpop.f32.mrf.mxu0
      %v754 = vadd.f32 %v658, %v753
      %755 = vdwg.mxu0
      %756 = vmatpush.bf16.msra.mxu0 %v725
      %757 = vmatpush.bf16.msra.mxu0 %v723
      %758 = vmatpush.bf16.msra.mxu0 %v721
      %759 = vmatpush.bf16.msra.mxu0 %v719
      %760 = vmatpush.bf16.msra.mxu0 %v717
      %761 = vmatpush.bf16.msra.mxu0 %v715
      %762 = vmatpush.bf16.msra.mxu0 %v713
      %763 = vmatpush.bf16.msra.mxu0 %v711
      %764 = vmatmul.bf16.gmra.mxu0 %v639
      %v765 = vpop.f32.mrf.mxu0
      %v766 = vadd.f32 %v659, %v765
      %v767 = vpop.f32.mrf.mxu0
      %v768 = vadd.f32 %v659, %v767
      %769 = vdwg.mxu0
      %v770 = vpack.c.bf16 %v752, %v752
      %v771 = vpack.c.bf16 %v754, %v754
      %v772 = vpack.c.bf16 %v766, %v766
      %v773 = vpack.c.bf16 %v768, %v768
      %v774 = vld [vmem:[#allocation2] sm:$0xff]
      %v775 = vpack.c.bf16 %v774, %v774
      %v778 = vunpack.c.l.b16 %v770
      %v779 = vunpack.c.l.b16 %v771
      %v780 = vpack.c.b16 %v779, %v778
      %vm781 = vcmask 261120
      %v783 = vsel %vm781, %v775, 0
      %v786 = vsel %vm781, %v780, 0
      %788 = vmatpush.bf16.xpose.msra.mxu0 0
      %789 = vmatpush.bf16.xpose.msra.mxu0 0
      %790 = vmatpush.bf16.xpose.msra.mxu0 0
      %791 = vmatpush.bf16.xpose.msra.mxu0 0
      %792 = vmatpush.bf16.xpose.msra.mxu0 0
      %793 = vmatpush.bf16.xpose.msra.mxu0 0
      %794 = vmatpush.bf16.xpose.msra.mxu0 0
      %795 = vmatpush.bf16.xpose.msra.mxu0 %v786
      %796 = vmatmul.bf16.gmra.mxu0 %v783
      %v797 = vpop.f32.mrf.mxu0
      %v798 = vadd.f32 0.0, %v797
      %v799 = vpop.f32.mrf.mxu0
      %800 = vdwg.mxu0
      %v801 = vld [vmem:[#allocation3] sm:$0xff]
      %vm802 = vcmask 130048
      %v803 = vsel %vm802, %v798, -inf
      %804 = vmax.xlane.f32.xlu0 %v803
      %v805 = vpop.xlane.xlu0 %804
      %v806 = vmax.f32 %v801, %v805
      %v807 = vsub.f32 %v801, %v806
      %v808 = vmul.f32 %v807, 1.442695
      %v809 = vpow.pop %v808
      %811 = vset.pattern.permute.xlu0 0
      %812 = vperm.xlu0 %811, %v806
      %v813 = vpop.permute.xlu0 %812
      %v815 = vsub.f32 %v798, %v813
      %v816 = vmul.f32 %v815, 1.442695
      %v817 = vpow.pop %v816
      %v818 = vld [vmem:[#allocation4] sm:$0xff]
      %v819 = vmul.f32 %v809, %v818
      %v820 = vsel %vm802, %v817, 0.0
      %821 = vadd.xlane.f32.xlu0 %v820
      %v822 = vpop.xlane.xlu0 %821
      %v823 = vadd.f32 %v819, %v822
      %vm824 = vcmask 7168
      %825 = vst.msk [vmem:[#allocation4] sm:$0xff] %vm824, %v823
      %v826 = vpack.c.bf16 %v817, %v817
      %v829 = vunpack.c.l.b16 %v772
      %v830 = vunpack.c.l.b16 %v773
      %v831 = vpack.c.b16 %v830, %v829
      %v834 = vsel %vm802, %v826, 0
      %836 = vmatpush.bf16.msra.mxu0 0
      %837 = vmatpush.bf16.msra.mxu0 0
      %838 = vmatpush.bf16.msra.mxu0 0
      %839 = vmatpush.bf16.msra.mxu0 0
      %840 = vmatpush.bf16.msra.mxu0 0
      %841 = vmatpush.bf16.msra.mxu0 0
      %842 = vmatpush.bf16.msra.mxu0 0
      %843 = vmatpush.bf16.msra.mxu0 %v831
      %844 = vmatmul.bf16.gmra.mxu0 %v834
      %v845 = vpop.f32.mrf.mxu0
      %v846 = vadd.f32 0.0, %v845
      %v847 = vpop.f32.mrf.mxu0
      %848 = vdwg.mxu0
      %v849 = vld [vmem:[#allocation5] sm:$0xff]
      %851 = vset.pattern.permute.xlu0 0
      %852 = vperm.xlu0 %851, %v809
      %v853 = vpop.permute.xlu0 %852
      %v855 = vmul.f32 %v853, %v849
      %v856 = vadd.f32 %v855, %v846
      %857 = vst.msk [vmem:[#allocation5] sm:$0xff] %vm781, %v856
      %858 = vst.msk [vmem:[#allocation3] sm:$0xff] %vm824, %v806
      %860 = vrot.lane.b32.xlu0 %v775, 96
      %v861 = vpop.permute.xlu0 %860
      %862 = vrot.lane.b32.xlu0 %v780, 96
      %v863 = vpop.permute.xlu0 %862
      %v865 = vsel %vm781, %v861, 0
      %v868 = vsel %vm781, %v863, 0
      %870 = vmatpush.bf16.xpose.msra.mxu0 0
      %871 = vmatpush.bf16.xpose.msra.mxu0 0
      %872 = vmatpush.bf16.xpose.msra.mxu0 0
      %873 = vmatpush.bf16.xpose.msra.mxu0 0
      %874 = vmatpush.bf16.xpose.msra.mxu0 0
      %875 = vmatpush.bf16.xpose.msra.mxu0 0
      %876 = vmatpush.bf16.xpose.msra.mxu0 0
      %877 = vmatpush.bf16.xpose.msra.mxu0 %v868
      %878 = vmatmul.bf16.gmra.mxu0 %v865
      %v879 = vpop.f32.mrf.mxu0
      %v880 = vadd.f32 0.0, %v879
      %v881 = vpop.f32.mrf.mxu0
      %882 = vdwg.mxu0
      %s883 = scalar_lea.vmem [#allocation3], 8
      %v884 = vld [vmem:[%s883] sm:$0xff]
      %v885 = vsel %vm802, %v880, -inf
      %886 = vmax.xlane.f32.xlu0 %v885
      %v887 = vpop.xlane.xlu0 %886
      %v888 = vmax.f32 %v884, %v887
      %v889 = vsub.f32 %v884, %v888
      %v890 = vmul.f32 %v889, 1.442695
      %v891 = vpow.pop %v890
      %893 = vset.pattern.permute.xlu0 0
      %894 = vperm.xlu0 %893, %v888
      %v895 = vpop.permute.xlu0 %894
      %v897 = vsub.f32 %v880, %v895
      %v898 = vmul.f32 %v897, 1.442695
      %v899 = vpow.pop %v898
      %s900 = scalar_lea.vmem [#allocation4], 8
      %v901 = vld [vmem:[%s900] sm:$0xff]
      %v902 = vmul.f32 %v891, %v901
      %v903 = vsel %vm802, %v899, 0.0
      %904 = vadd.xlane.f32.xlu0 %v903
      %v905 = vpop.xlane.xlu0 %904
      %v906 = vadd.f32 %v902, %v905
      %907 = vst.msk [vmem:[%s900] sm:$0xff] %vm824, %v906
      %v908 = vpack.c.bf16 %v899, %v899
      %909 = vrot.lane.b32.xlu0 %v831, 96
      %v910 = vpop.permute.xlu0 %909
      %v913 = vsel %vm802, %v908, 0
      %915 = vmatpush.bf16.msra.mxu0 0
      %916 = vmatpush.bf16.msra.mxu0 0
      %917 = vmatpush.bf16.msra.mxu0 0
      %918 = vmatpush.bf16.msra.mxu0 0
      %919 = vmatpush.bf16.msra.mxu0 0
      %920 = vmatpush.bf16.msra.mxu0 0
      %921 = vmatpush.bf16.msra.mxu0 0
      %922 = vmatpush.bf16.msra.mxu0 %v910
      %923 = vmatmul.bf16.gmra.mxu0 %v913
      %v924 = vpop.f32.mrf.mxu0
      %v925 = vadd.f32 0.0, %v924
      %v926 = vpop.f32.mrf.mxu0
      %927 = vdwg.mxu0
      %v928 = vld [vmem:[#allocation5] sm:$0xff]
      %930 = vset.pattern.permute.xlu0 0
      %931 = vperm.xlu0 %930, %v891
      %v932 = vpop.permute.xlu0 %931
      %v934 = vmul.f32 %v932, %v928
      %936 = vrot.lane.b32.xlu0 %v925, 32
      %v937 = vpop.permute.xlu0 %936
      %v939 = vadd.f32 %v934, %v937
      %vm940 = vcmask 523520
      %941 = vst.msk [vmem:[#allocation5] sm:$0xff] %vm940, %v939
      %942 = vst.msk [vmem:[%s883] sm:$0xff] %vm824, %v888
      %943 = vrot.lane.b32.xlu0 %v775, 64
      %v944 = vpop.permute.xlu0 %943
      %945 = vrot.lane.b32.xlu0 %v780, 64
      %v946 = vpop.permute.xlu0 %945
      %v948 = vsel %vm781, %v944, 0
      %v951 = vsel %vm781, %v946, 0
      %953 = vmatpush.bf16.xpose.msra.mxu0 0
      %954 = vmatpush.bf16.xpose.msra.mxu0 0
      %955 = vmatpush.bf16.xpose.msra.mxu0 0
      %956 = vmatpush.bf16.xpose.msra.mxu0 0
      %957 = vmatpush.bf16.xpose.msra.mxu0 0
      %958 = vmatpush.bf16.xpose.msra.mxu0 0
      %959 = vmatpush.bf16.xpose.msra.mxu0 0
      %960 = vmatpush.bf16.xpose.msra.mxu0 %v951
      %961 = vmatmul.bf16.gmra.mxu0 %v948
      %v962 = vpop.f32.mrf.mxu0
      %v963 = vadd.f32 0.0, %v962
      %v964 = vpop.f32.mrf.mxu0
      %965 = vdwg.mxu0
      %s966 = scalar_lea.vmem [#allocation3], 16
      %v967 = vld [vmem:[%s966] sm:$0xff]
      %v968 = vsel %vm802, %v963, -inf
      %969 = vmax.xlane.f32.xlu0 %v968
      %v970 = vpop.xlane.xlu0 %969
      %v971 = vmax.f32 %v967, %v970
      %v972 = vsub.f32 %v967, %v971
      %v973 = vmul.f32 %v972, 1.442695
      %v974 = vpow.pop %v973
      %976 = vset.pattern.permute.xlu0 0
      %977 = vperm.xlu0 %976, %v971
      %v978 = vpop.permute.xlu0 %977
      %v980 = vsub.f32 %v963, %v978
      %v981 = vmul.f32 %v980, 1.442695
      %v982 = vpow.pop %v981
      %s983 = scalar_lea.vmem [#allocation4], 16
      %v984 = vld [vmem:[%s983] sm:$0xff]
      %v985 = vmul.f32 %v974, %v984
      %v986 = vsel %vm802, %v982, 0.0
      %987 = vadd.xlane.f32.xlu0 %v986
      %v988 = vpop.xlane.xlu0 %987
      %v989 = vadd.f32 %v985, %v988
      %990 = vst.msk [vmem:[%s983] sm:$0xff] %vm824, %v989
      %v991 = vpack.c.bf16 %v982, %v982
      %992 = vrot.lane.b32.xlu0 %v831, 64
      %v993 = vpop.permute.xlu0 %992
      %v996 = vsel %vm802, %v991, 0
      %998 = vmatpush.bf16.msra.mxu0 0
      %999 = vmatpush.bf16.msra.mxu0 0
      %1000 = vmatpush.bf16.msra.mxu0 0
      %1001 = vmatpush.bf16.msra.mxu0 0
      %1002 = vmatpush.bf16.msra.mxu0 0
      %1003 = vmatpush.bf16.msra.mxu0 0
      %1004 = vmatpush.bf16.msra.mxu0 0
      %1005 = vmatpush.bf16.msra.mxu0 %v993
      %1006 = vmatmul.bf16.gmra.mxu0 %v996
      %v1007 = vpop.f32.mrf.mxu0
      %v1008 = vadd.f32 0.0, %v1007
      %v1009 = vpop.f32.mrf.mxu0
      %1010 = vdwg.mxu0
      %v1011 = vld [vmem:[#allocation5] sm:$0xff]
      %1013 = vset.pattern.permute.xlu0 0
      %1014 = vperm.xlu0 %1013, %v974
      %v1015 = vpop.permute.xlu0 %1014
      %v1017 = vmul.f32 %v1015, %v1011
      %1019 = vrot.lane.b32.xlu0 %v1008, 64
      %v1020 = vpop.permute.xlu0 %1019
      %v1022 = vadd.f32 %v1017, %v1020
      %vm1023 = vcmask 785920
      %1024 = vst.msk [vmem:[#allocation5] sm:$0xff] %vm1023, %v1022
      %1025 = vst.msk [vmem:[%s966] sm:$0xff] %vm824, %v971
      %1026 = vrot.lane.b32.xlu0 %v775, 32
      %v1027 = vpop.permute.xlu0 %1026
      %1028 = vrot.lane.b32.xlu0 %v780, 32
      %v1029 = vpop.permute.xlu0 %1028
      %v1031 = vsel %vm781, %v1027, 0
      %v1034 = vsel %vm781, %v1029, 0
      %1036 = vmatpush.bf16.xpose.msra.mxu0 0
      %1037 = vmatpush.bf16.xpose.msra.mxu0 0
      %1038 = vmatpush.bf16.xpose.msra.mxu0 0
      %1039 = vmatpush.bf16.xpose.msra.mxu0 0
      %1040 = vmatpush.bf16.xpose.msra.mxu0 0
      %1041 = vmatpush.bf16.xpose.msra.mxu0 0
      %1042 = vmatpush.bf16.xpose.msra.mxu0 0
      %1043 = vmatpush.bf16.xpose.msra.mxu0 %v1034
      %1044 = vmatmul.bf16.gmra.mxu0 %v1031
      %v1045 = vpop.f32.mrf.mxu0
      %v1046 = vadd.f32 0.0, %v1045
      %v1047 = vpop.f32.mrf.mxu0
      %1048 = vdwg.mxu0
      %s1049 = scalar_lea.vmem [#allocation3], 24
      %v1050 = vld [vmem:[%s1049] sm:$0xff]
      %v1051 = vsel %vm802, %v1046, -inf
      %1052 = vmax.xlane.f32.xlu0 %v1051
      %v1053 = vpop.xlane.xlu0 %1052
      %v1054 = vmax.f32 %v1050, %v1053
      %v1055 = vsub.f32 %v1050, %v1054
      %v1056 = vmul.f32 %v1055, 1.442695
      %v1057 = vpow.pop %v1056
      %1059 = vset.pattern.permute.xlu0 0
      %1060 = vperm.xlu0 %1059, %v1054
      %v1061 = vpop.permute.xlu0 %1060
      %v1063 = vsub.f32 %v1046, %v1061
      %v1064 = vmul.f32 %v1063, 1.442695
      %v1065 = vpow.pop %v1064
      %s1066 = scalar_lea.vmem [#allocation4], 24
      %v1067 = vld [vmem:[%s1066] sm:$0xff]
      %v1068 = vmul.f32 %v1057, %v1067
      %v1069 = vsel %vm802, %v1065, 0.0
      %1070 = vadd.xlane.f32.xlu0 %v1069
      %v1071 = vpop.xlane.xlu0 %1070
      %v1072 = vadd.f32 %v1068, %v1071
      %1073 = vst.msk [vmem:[%s1066] sm:$0xff] %vm824, %v1072
      %v1074 = vpack.c.bf16 %v1065, %v1065
      %1075 = vrot.lane.b32.xlu0 %v831, 32
      %v1076 = vpop.permute.xlu0 %1075
      %v1079 = vsel %vm802, %v1074, 0
      %1081 = vmatpush.bf16.msra.mxu0 0
      %1082 = vmatpush.bf16.msra.mxu0 0
      %1083 = vmatpush.bf16.msra.mxu0 0
      %1084 = vmatpush.bf16.msra.mxu0 0
      %1085 = vmatpush.bf16.msra.mxu0 0
      %1086 = vmatpush.bf16.msra.mxu0 0
      %1087 = vmatpush.bf16.msra.mxu0 0
      %1088 = vmatpush.bf16.msra.mxu0 %v1076
      %1089 = vmatmul.bf16.gmra.mxu0 %v1079
      %v1090 = vpop.f32.mrf.mxu0
      %v1091 = vadd.f32 0.0, %v1090
      %v1092 = vpop.f32.mrf.mxu0
      %1093 = vdwg.mxu0
      %v1094 = vld [vmem:[#allocation5] sm:$0xff]
      %1096 = vset.pattern.permute.xlu0 0
      %1097 = vperm.xlu0 %1096, %v1057
      %v1098 = vpop.permute.xlu0 %1097
      %v1100 = vmul.f32 %v1098, %v1094
      %1102 = vrot.lane.b32.xlu0 %v1091, 96
      %v1103 = vpop.permute.xlu0 %1102
      %v1105 = vadd.f32 %v1100, %v1103
      %vm1106 = vcmask 1048320
      %1107 = vst.msk [vmem:[#allocation5] sm:$0xff] %vm1106, %v1105
      %1108 = vst.msk [vmem:[%s1049] sm:$0xff] %vm824, %v1054
      // Predicated region
      $region81: #{set_transformer_forward.10} parent=75 // pred_check
        %p1109 = pneg %p539
      $region82: #{set_transformer_forward.10} parent=75 // pred_check_branch
        %1111 = sbr.rel (%p1109) target = $region84
      $region83: #{set_transformer_forward.10} parent=75 // pred_region
        %v1112 = vld [vmem:[#allocation5] sm:$0xff]
        %v1113 = vld [vmem:[#allocation4] sm:$0xff]
        %v1114 = vrcp.pop %v1113
        %1116 = vset.pattern.permute.xlu0 0
        %1117 = vperm.xlu0 %1116, %v1114
        %v1118 = vpop.permute.xlu0 %1117
        %v1120 = vmul.f32 %v1112, %v1118
        %v1121 = vld [vmem:[%s900] sm:$0xff]
        %v1122 = vrcp.pop %v1121
        %1124 = vset.pattern.permute.xlu0 0
        %1125 = vperm.xlu0 %1124, %v1122
        %v1126 = vpop.permute.xlu0 %1125
        %v1128 = vmul.f32 %v1112, %v1126
        %v1129 = vld [vmem:[%s983] sm:$0xff]
        %v1130 = vrcp.pop %v1129
        %1132 = vset.pattern.permute.xlu0 0
        %1133 = vperm.xlu0 %1132, %v1130
        %v1134 = vpop.permute.xlu0 %1133
        %v1136 = vmul.f32 %v1112, %v1134
        %v1137 = vld [vmem:[%s1066] sm:$0xff]
        %v1138 = vrcp.pop %v1137
        %1140 = vset.pattern.permute.xlu0 0
        %1141 = vperm.xlu0 %1140, %v1138
        %v1142 = vpop.permute.xlu0 %1141
        %v1144 = vmul.f32 %v1112, %v1142
        %v1145 = vsel %vm781, %v1120, %v1128
        %vm1146 = vcmask 523264
        %v1147 = vsel %vm1146, %v1145, %v1136
        %vm1148 = vcmask 785408
        %v1149 = vsel %vm1148, %v1147, %v1144
        %v1150 = vpack.c.bf16 %v1149, %v1149
        %v1151 = vld [vmem:[%s6] sm:$0xf]
        %v1152 = vld [vmem:[%s6 + $0x4] sm:$0xf]
        %v1153 = vld [vmem:[%s6 + $0x8] sm:$0xf]
        %v1154 = vld [vmem:[%s6 + $0xc] sm:$0xf]
        %v1155 = vld [vmem:[%s6 + $0x10] sm:$0xf]
        %v1156 = vld [vmem:[%s6 + $0x14] sm:$0xf]
        %v1157 = vld [vmem:[%s6 + $0x18] sm:$0xf]
        %v1158 = vld [vmem:[%s6 + $0x1c] sm:$0xf]
        %v1159 = vld [vmem:[%s6 + $0x20] sm:$0xf]
        %v1160 = vld [vmem:[%s6 + $0x24] sm:$0xf]
        %v1161 = vld [vmem:[%s6 + $0x28] sm:$0xf]
        %v1162 = vld [vmem:[%s6 + $0x2c] sm:$0xf]
        %v1163 = vld [vmem:[%s6 + $0x30] sm:$0xf]
        %v1164 = vld [vmem:[%s6 + $0x34] sm:$0xf]
        %v1165 = vld [vmem:[%s6 + $0x38] sm:$0xf]
        %v1166 = vld [vmem:[%s6 + $0x3c] sm:$0xf]
        %v1167 = vld [vmem:[%s7] sm:$0x1]
        %v1169 = vperm.slane %v1167, 0
        %v1187 = vunpack.c.l.b16 %v1151
        %v1188 = vunpack.c.l.b16 %v1152
        %v1189 = vunpack.c.l.b16 %v1153
        %v1190 = vunpack.c.l.b16 %v1154
        %v1191 = vunpack.c.l.b16 %v1155
        %v1192 = vunpack.c.l.b16 %v1156
        %v1193 = vunpack.c.l.b16 %v1157
        %v1194 = vunpack.c.l.b16 %v1158
        %v1195 = vunpack.c.l.b16 %v1159
        %v1196 = vunpack.c.l.b16 %v1160
        %v1197 = vunpack.c.l.b16 %v1161
        %v1198 = vunpack.c.l.b16 %v1162
        %v1199 = vunpack.c.l.b16 %v1163
        %v1200 = vunpack.c.l.b16 %v1164
        %v1201 = vunpack.c.l.b16 %v1165
        %v1202 = vunpack.c.l.b16 %v1166
        %v1203 = vpack.c.b16 %v1188, %v1187
        %v1204 = vpack.c.b16 %v1190, %v1189
        %v1205 = vpack.c.b16 %v1192, %v1191
        %v1206 = vpack.c.b16 %v1194, %v1193
        %v1207 = vpack.c.b16 %v1196, %v1195
        %v1208 = vpack.c.b16 %v1198, %v1197
        %v1209 = vpack.c.b16 %v1200, %v1199
        %v1210 = vpack.c.b16 %v1202, %v1201
        %1219 = vmatpush.bf16.msra.mxu0 %v1210
        %1220 = vmatpush.bf16.msra.mxu0 %v1209
        %1221 = vmatpush.bf16.msra.mxu0 %v1208
        %1222 = vmatpush.bf16.msra.mxu0 %v1207
        %1223 = vmatpush.bf16.msra.mxu0 %v1206
        %1224 = vmatpush.bf16.msra.mxu0 %v1205
        %1225 = vmatpush.bf16.msra.mxu0 %v1204
        %1226 = vmatpush.bf16.msra.mxu0 %v1203
        %1227 = vmatmul.bf16.gmra.mxu0 %v1150
        %v1228 = vpop.f32.mrf.mxu0
        %v1229 = vadd.f32 %v1169, %v1228
        %v1230 = vpop.f32.mrf.mxu0
        %1231 = vdwg.mxu0
        %v1232 = vadd.f32 %v538, %v1229
        %v1233 = vld [vmem:[%s8] sm:$0x1]
        %v1234 = vld [vmem:[%s9] sm:$0x1]
        %1235 = vadd.xlane.f32.xlu0 %v1232
        %v1236 = vpop.xlane.xlu0 %1235
        %v1237 = vrcp.pop 128.0
        %v1238 = vmul.f32 128.0, %v1237
        %v1239 = vsub.f32 1.0, %v1238
        %v1240 = vmul.f32 %v1237, %v1239
        %v1241 = vadd.f32 %v1237, %v1240
        %vm1242 = vweird.f32 %v1237
        %v1243 = vsel %vm1242, %v1237, %v1241
        %v1244 = vmul.f32 %v1236, %v1243
        %v1245 = vsub.f32 %v1232, %v1244
        %v1246 = vmul.f32 %v1245, %v1245
        %1247 = vadd.xlane.f32.xlu0 %v1246
        %v1248 = vpop.xlane.xlu0 %1247
        %v1249 = vmul.f32 %v1248, %v1243
        %v1250 = vadd.f32 %v1249, 1e-05
        %v1251 = vrsqrt.pop %v1250
        %v1252 = vmul.f32 %v1251, %v1250
        %v1253 = vmul.f32 %v1252, %v1251
        %v1254 = vmul.f32 0.5, %v1253
        %v1255 = vsub.f32 1.5, %v1254
        %v1256 = vmul.f32 %v1251, %v1255
        %vm1257 = vweird.f32 %v1250
        %vm1258 = vweird.f32 %v1251
        %vm1259 = vmor %vm1257, %vm1258
        %v1260 = vsel %vm1259, %v1251, %v1256
        %v1261 = vmul.f32 %v1245, %v1260
        %v1263 = vperm.slane %v1233, 0
        %v1265 = vmul.f32 %v1261, %v1263
        %v1267 = vperm.slane %v1234, 0
        %v1269 = vadd.f32 %v1265, %v1267
        %v1270 = vpack.c.bf16 %v1269, %v1269
        %v1271 = vld [vmem:[%s10] sm:$0xf]
        %v1272 = vld [vmem:[%s10 + $0x4] sm:$0xf]
        %v1273 = vld [vmem:[%s10 + $0x8] sm:$0xf]
        %v1274 = vld [vmem:[%s10 + $0xc] sm:$0xf]
        %v1275 = vld [vmem:[%s10 + $0x10] sm:$0xf]
        %v1276 = vld [vmem:[%s10 + $0x14] sm:$0xf]
        %v1277 = vld [vmem:[%s10 + $0x18] sm:$0xf]
        %v1278 = vld [vmem:[%s10 + $0x1c] sm:$0xf]
        %v1279 = vld [vmem:[%s10 + $0x20] sm:$0xf]
        %v1280 = vld [vmem:[%s10 + $0x24] sm:$0xf]
        %v1281 = vld [vmem:[%s10 + $0x28] sm:$0xf]
        %v1282 = vld [vmem:[%s10 + $0x2c] sm:$0xf]
        %v1283 = vld [vmem:[%s10 + $0x30] sm:$0xf]
        %v1284 = vld [vmem:[%s10 + $0x34] sm:$0xf]
        %v1285 = vld [vmem:[%s10 + $0x38] sm:$0xf]
        %v1286 = vld [vmem:[%s10 + $0x3c] sm:$0xf]
        %v1287 = vld [vmem:[%s11] sm:$0x1]
        %v1289 = vperm.slane %v1287, 0
        %v1307 = vunpack.c.l.b16 %v1271
        %v1308 = vunpack.c.l.b16 %v1272
        %v1309 = vunpack.c.l.b16 %v1273
        %v1310 = vunpack.c.l.b16 %v1274
        %v1311 = vunpack.c.l.b16 %v1275
        %v1312 = vunpack.c.l.b16 %v1276
        %v1313 = vunpack.c.l.b16 %v1277
        %v1314 = vunpack.c.l.b16 %v1278
        %v1315 = vunpack.c.l.b16 %v1279
        %v1316 = vunpack.c.l.b16 %v1280
        %v1317 = vunpack.c.l.b16 %v1281
        %v1318 = vunpack.c.l.b16 %v1282
        %v1319 = vunpack.c.l.b16 %v1283
        %v1320 = vunpack.c.l.b16 %v1284
        %v1321 = vunpack.c.l.b16 %v1285
        %v1322 = vunpack.c.l.b16 %v1286
        %v1323 = vpack.c.b16 %v1308, %v1307
        %v1324 = vpack.c.b16 %v1310, %v1309
        %v1325 = vpack.c.b16 %v1312, %v1311
        %v1326 = vpack.c.b16 %v1314, %v1313
        %v1327 = vpack.c.b16 %v1316, %v1315
        %v1328 = vpack.c.b16 %v1318, %v1317
        %v1329 = vpack.c.b16 %v1320, %v1319
        %v1330 = vpack.c.b16 %v1322, %v1321
        %1339 = vmatpush.bf16.msra.mxu0 %v1330
        %1340 = vmatpush.bf16.msra.mxu0 %v1329
        %1341 = vmatpush.bf16.msra.mxu0 %v1328
        %1342 = vmatpush.bf16.msra.mxu0 %v1327
        %1343 = vmatpush.bf16.msra.mxu0 %v1326
        %1344 = vmatpush.bf16.msra.mxu0 %v1325
        %1345 = vmatpush.bf16.msra.mxu0 %v1324
        %1346 = vmatpush.bf16.msra.mxu0 %v1323
        %1347 = vmatmul.bf16.gmra.mxu0 %v1270
        %v1348 = vpop.f32.mrf.mxu0
        %v1349 = vadd.f32 %v1289, %v1348
        %v1350 = vpop.f32.mrf.mxu0
        %1351 = vdwg.mxu0
        %v1352 = vmax.f32 %v1349, 0.0
        %v1353 = vpack.c.bf16 %v1352, %v1352
        %s1354 = scalar_lea.vmem %s10, 64
        %v1355 = vld [vmem:[%s1354] sm:$0xf]
        %v1356 = vld [vmem:[%s1354 + $0x4] sm:$0xf]
        %v1357 = vld [vmem:[%s1354 + $0x8] sm:$0xf]
        %v1358 = vld [vmem:[%s1354 + $0xc] sm:$0xf]
        %v1359 = vld [vmem:[%s1354 + $0x10] sm:$0xf]
        %v1360 = vld [vmem:[%s1354 + $0x14] sm:$0xf]
        %v1361 = vld [vmem:[%s1354 + $0x18] sm:$0xf]
        %v1362 = vld [vmem:[%s1354 + $0x1c] sm:$0xf]
        %v1363 = vld [vmem:[%s1354 + $0x20] sm:$0xf]
        %v1364 = vld [vmem:[%s1354 + $0x24] sm:$0xf]
        %v1365 = vld [vmem:[%s1354 + $0x28] sm:$0xf]
        %v1366 = vld [vmem:[%s1354 + $0x2c] sm:$0xf]
        %v1367 = vld [vmem:[%s1354 + $0x30] sm:$0xf]
        %v1368 = vld [vmem:[%s1354 + $0x34] sm:$0xf]
        %v1369 = vld [vmem:[%s1354 + $0x38] sm:$0xf]
        %v1370 = vld [vmem:[%s1354 + $0x3c] sm:$0xf]
        %s1371 = scalar_lea.vmem %s11, 1
        %v1372 = vld [vmem:[%s1371] sm:$0x1]
        %v1374 = vperm.slane %v1372, 0
        %v1392 = vunpack.c.l.b16 %v1355
        %v1393 = vunpack.c.l.b16 %v1356
        %v1394 = vunpack.c.l.b16 %v1357
        %v1395 = vunpack.c.l.b16 %v1358
        %v1396 = vunpack.c.l.b16 %v1359
        %v1397 = vunpack.c.l.b16 %v1360
        %v1398 = vunpack.c.l.b16 %v1361
        %v1399 = vunpack.c.l.b16 %v1362
        %v1400 = vunpack.c.l.b16 %v1363
        %v1401 = vunpack.c.l.b16 %v1364
        %v1402 = vunpack.c.l.b16 %v1365
        %v1403 = vunpack.c.l.b16 %v1366
        %v1404 = vunpack.c.l.b16 %v1367
        %v1405 = vunpack.c.l.b16 %v1368
        %v1406 = vunpack.c.l.b16 %v1369
        %v1407 = vunpack.c.l.b16 %v1370
        %v1408 = vpack.c.b16 %v1393, %v1392
        %v1409 = vpack.c.b16 %v1395, %v1394
        %v1410 = vpack.c.b16 %v1397, %v1396
        %v1411 = vpack.c.b16 %v1399, %v1398
        %v1412 = vpack.c.b16 %v1401, %v1400
        %v1413 = vpack.c.b16 %v1403, %v1402
        %v1414 = vpack.c.b16 %v1405, %v1404
        %v1415 = vpack.c.b16 %v1407, %v1406
        %1424 = vmatpush.bf16.msra.mxu0 %v1415
        %1425 = vmatpush.bf16.msra.mxu0 %v1414
        %1426 = vmatpush.bf16.msra.mxu0 %v1413
        %1427 = vmatpush.bf16.msra.mxu0 %v1412
        %1428 = vmatpush.bf16.msra.mxu0 %v1411
        %1429 = vmatpush.bf16.msra.mxu0 %v1410
        %1430 = vmatpush.bf16.msra.mxu0 %v1409
        %1431 = vmatpush.bf16.msra.mxu0 %v1408
        %1432 = vmatmul.bf16.gmra.mxu0 %v1353
        %v1433 = vpop.f32.mrf.mxu0
        %v1434 = vadd.f32 %v1374, %v1433
        %v1435 = vpop.f32.mrf.mxu0
        %1436 = vdwg.mxu0
        %v1437 = vmax.f32 %v1434, 0.0
        %v1438 = vpack.c.bf16 %v1437, %v1437
        %s1439 = scalar_lea.vmem %s10, 128
        %v1440 = vld [vmem:[%s1439] sm:$0xf]
        %v1441 = vld [vmem:[%s1439 + $0x4] sm:$0xf]
        %v1442 = vld [vmem:[%s1439 + $0x8] sm:$0xf]
        %v1443 = vld [vmem:[%s1439 + $0xc] sm:$0xf]
        %v1444 = vld [vmem:[%s1439 + $0x10] sm:$0xf]
        %v1445 = vld [vmem:[%s1439 + $0x14] sm:$0xf]
        %v1446 = vld [vmem:[%s1439 + $0x18] sm:$0xf]
        %v1447 = vld [vmem:[%s1439 + $0x1c] sm:$0xf]
        %v1448 = vld [vmem:[%s1439 + $0x20] sm:$0xf]
        %v1449 = vld [vmem:[%s1439 + $0x24] sm:$0xf]
        %v1450 = vld [vmem:[%s1439 + $0x28] sm:$0xf]
        %v1451 = vld [vmem:[%s1439 + $0x2c] sm:$0xf]
        %v1452 = vld [vmem:[%s1439 + $0x30] sm:$0xf]
        %v1453 = vld [vmem:[%s1439 + $0x34] sm:$0xf]
        %v1454 = vld [vmem:[%s1439 + $0x38] sm:$0xf]
        %v1455 = vld [vmem:[%s1439 + $0x3c] sm:$0xf]
        %s1456 = scalar_lea.vmem %s11, 2
        %v1457 = vld [vmem:[%s1456] sm:$0x1]
        %v1459 = vperm.slane %v1457, 0
        %v1477 = vunpack.c.l.b16 %v1440
        %v1478 = vunpack.c.l.b16 %v1441
        %v1479 = vunpack.c.l.b16 %v1442
        %v1480 = vunpack.c.l.b16 %v1443
        %v1481 = vunpack.c.l.b16 %v1444
        %v1482 = vunpack.c.l.b16 %v1445
        %v1483 = vunpack.c.l.b16 %v1446
        %v1484 = vunpack.c.l.b16 %v1447
        %v1485 = vunpack.c.l.b16 %v1448
        %v1486 = vunpack.c.l.b16 %v1449
        %v1487 = vunpack.c.l.b16 %v1450
        %v1488 = vunpack.c.l.b16 %v1451
        %v1489 = vunpack.c.l.b16 %v1452
        %v1490 = vunpack.c.l.b16 %v1453
        %v1491 = vunpack.c.l.b16 %v1454
        %v1492 = vunpack.c.l.b16 %v1455
        %v1493 = vpack.c.b16 %v1478, %v1477
        %v1494 = vpack.c.b16 %v1480, %v1479
        %v1495 = vpack.c.b16 %v1482, %v1481
        %v1496 = vpack.c.b16 %v1484, %v1483
        %v1497 = vpack.c.b16 %v1486, %v1485
        %v1498 = vpack.c.b16 %v1488, %v1487
        %v1499 = vpack.c.b16 %v1490, %v1489
        %v1500 = vpack.c.b16 %v1492, %v1491
        %1509 = vmatpush.bf16.msra.mxu0 %v1500
        %1510 = vmatpush.bf16.msra.mxu0 %v1499
        %1511 = vmatpush.bf16.msra.mxu0 %v1498
        %1512 = vmatpush.bf16.msra.mxu0 %v1497
        %1513 = vmatpush.bf16.msra.mxu0 %v1496
        %1514 = vmatpush.bf16.msra.mxu0 %v1495
        %1515 = vmatpush.bf16.msra.mxu0 %v1494
        %1516 = vmatpush.bf16.msra.mxu0 %v1493
        %1517 = vmatmul.bf16.gmra.mxu0 %v1438
        %v1518 = vpop.f32.mrf.mxu0
        %v1519 = vadd.f32 %v1459, %v1518
        %v1520 = vpop.f32.mrf.mxu0
        %1521 = vdwg.mxu0
        %v1522 = vmax.f32 %v1519, 0.0
        %v1523 = vadd.f32 %v1269, %v1522
        %v1524 = vld [vmem:[%s12] sm:$0x1]
        %v1525 = vld [vmem:[%s13] sm:$0x1]
        %1526 = vadd.xlane.f32.xlu0 %v1523
        %v1527 = vpop.xlane.xlu0 %1526
        %v1528 = vmul.f32 %v1527, %v1243
        %v1529 = vsub.f32 %v1523, %v1528
        %v1530 = vmul.f32 %v1529, %v1529
        %1531 = vadd.xlane.f32.xlu0 %v1530
        %v1532 = vpop.xlane.xlu0 %1531
        %v1533 = vmul.f32 %v1532, %v1243
        %v1534 = vadd.f32 %v1533, 1e-05
        %v1535 = vrsqrt.pop %v1534
        %v1536 = vmul.f32 %v1535, %v1534
        %v1537 = vmul.f32 %v1536, %v1535
        %v1538 = vmul.f32 0.5, %v1537
        %v1539 = vsub.f32 1.5, %v1538
        %v1540 = vmul.f32 %v1535, %v1539
        %vm1541 = vweird.f32 %v1534
        %vm1542 = vweird.f32 %v1535
        %vm1543 = vmor %vm1541, %vm1542
        %v1544 = vsel %vm1543, %v1535, %v1540
        %v1545 = vmul.f32 %v1529, %v1544
        %v1547 = vperm.slane %v1524, 0
        %v1549 = vmul.f32 %v1545, %v1547
        %v1551 = vperm.slane %v1525, 0
        %v1553 = vadd.f32 %v1549, %v1551
        %1554 = vst [vmem:[%s536] sm:$0xff] %v1553
      $region84: #{set_transformer_forward.10} parent=75 // pred_fallthru
        _
      %p1555 = scmp.lt.s32.totalorder %s30, 1
      %s1556 = scalar_select %p1555, %s30, 1
      %p1557 = scmp.lt.s32.totalorder %s31, 0
      %s1558 = scalar_select %p1557, %s31, 0
      %s1559 = sadd.s32 %s1558, %s1556
      %s1560 = smul.addr %s1559, 8
      %s1561 = scalar_lea.vmem %s14, %s1560
      // Predicated region
      $region85: #{set_transformer_forward.10} parent=75 // pred_check
        %p1562 = pneg %p372
      $region86: #{set_transformer_forward.10} parent=75 // pred_check_branch
        %1564 = sbr.rel (%p1562) target = $region88
      $region87: #{set_transformer_forward.10} parent=75 // pred_region
        _
      $region88: #{set_transformer_forward.10} parent=75 // pred_fallthru
        _
    $region76: #{set_transformer_forward.10} parent=5 // pred_fallthru
      _
    %p1565 = scmp.le.s32.totalorder 2, %s20
    // Predicated region
    $region89: #{set_transformer_forward.10} parent=5 // pred_check
      %p1566 = pneg %p1565
    $region90: #{set_transformer_forward.10} parent=5 // pred_check_branch
      %1568 = sbr.rel (%p1566) target = $region92
    $region91: #{set_transformer_forward.10} parent=5 // pred_region
      %s1569 = ssub.s32 %s20, 2
      // Predicated region
      $region93: #{set_transformer_forward.10} parent=91 // pred_check
        %p1570 = pneg %p378
      $region94: #{set_transformer_forward.10} parent=91 // pred_check_branch
        %1572 = sbr.rel (%p1570) target = $region96
      $region95: #{set_transformer_forward.10} parent=91 // pred_region
        %p1573 = scmp.lt.s32.totalorder %s33, 1
        %s1574 = scalar_select %p1573, %s33, 1
        %p1575 = scmp.lt.s32.totalorder %s34, 0
        %s1576 = scalar_select %p1575, %s34, 0
        %s1577 = sadd.s32 %s1576, %s1574
        %s1578 = smul.addr %s1577, 8
        %s1579 = scalar_lea.vmem %s14, %s1578
      $region96: #{set_transformer_forward.10} parent=91 // pred_fallthru
        _
    $region92: #{set_transformer_forward.10} parent=5 // pred_fallthru
      _
  $region6: #{set_transformer_forward.10} parent=0 // loop_footer
    %s24 = sadd.s32 1, %s20
  $region7: #{set_transformer_forward.10} parent=0 // loop_footer_branch
    %19 = sbr.rel target = $region3
  $region8: #{set_transformer_forward.10} parent=0 // loop_exit
    _

// kernel: set_transformer_forward.9
$region0: #{set_transformer_forward.9}
  #allocation0 [shape = 'u32[]', space=smem, size = 0x4, offset = 0x4, fixed_abs, tag = 'smem constant byte address 0x4 - core index']
  #allocation1 [shape = 'u32[72,128]{1,0:T(1,128)}', space=vmem, size = 0x9000, scoped, tag = 'internal scratch']
  #allocation2 [shape = 'f32[16,128]{1,0:T(8,128)}', space=vmem, size = 0x2000, scoped, tag = 'scratch operand']
  #allocation3 [shape = 'f32[4,16,1]{2,1,0:T(8,128)}', space=vmem, size = 0x8000, scoped, tag = 'scratch operand']
  #allocation4 [shape = 'f32[4,16,1]{2,1,0:T(8,128)}', space=vmem, size = 0x8000, scoped, tag = 'scratch operand']
  #allocation5 [shape = 'f32[16,128]{1,0:T(8,128)}', space=vmem, size = 0x2000, scoped, tag = 'scratch operand']
  %s0 = inlined_call_operand.vmem [shape: f32[1,16,128], index: 0, kind: input, shape index: {}]
  %s1 = inlined_call_operand.vmem [shape: f32[2,8,128], index: 1, kind: input, shape index: {}]
  %s2 = inlined_call_operand.vmem [shape: bf16[128,128], index: 2, kind: input, shape index: {}]
  %s3 = inlined_call_operand.vmem [shape: f32[1,128], index: 3, kind: input, shape index: {}]
  %s4 = inlined_call_operand.vmem [shape: bf16[128,256], index: 4, kind: input, shape index: {}]
  %s5 = inlined_call_operand.vmem [shape: f32[1,256], index: 5, kind: input, shape index: {}]
  %s6 = inlined_call_operand.vmem [shape: bf16[128,128], index: 6, kind: input, shape index: {}]
  %s7 = inlined_call_operand.vmem [shape: f32[1,128], index: 7, kind: input, shape index: {}]
  %s8 = inlined_call_operand.vmem [shape: f32[1,128], index: 8, kind: input, shape index: {}]
  %s9 = inlined_call_operand.vmem [shape: f32[1,128], index: 9, kind: input, shape index: {}]
  %s10 = inlined_call_operand.vmem [shape: bf16[3,128,128], index: 10, kind: input, shape index: {}]
  %s11 = inlined_call_operand.vmem [shape: f32[3,1,128], index: 11, kind: input, shape index: {}]
  %s12 = inlined_call_operand.vmem [shape: f32[1,128], index: 12, kind: input, shape index: {}]
  %s13 = inlined_call_operand.vmem [shape: f32[1,128], index: 13, kind: input, shape index: {}]
  %s14 = inlined_call_operand.vmem [shape: f32[2,16,128], index: 14, kind: output, shape index: {}]
  %s15 = sld [smem:[#allocation0]]
  $region97: #{set_transformer_forward.9} parent=0
    _
  %s17 = ssub.s32 1, %s15
  %s18 = scalar_select 0, %s17, %s15
  loop: start=0, step=1, limit=4
  $region2: #{set_transformer_forward.9} parent=0 // loop_pre_header
    _
  $region3: #{set_transformer_forward.9} parent=0 // loop_header
    %s20 = sphi 0, %s24
    %p21 = scmp.ge.s32.totalorder %s20, 4
    %s27 = sphi 0, %s46
    %s28 = sphi 0, %s42
    %s29 = sphi 0, %s38
    %s30 = sphi 0, %s27
    %s31 = sphi 0, %s28
    %s32 = sphi 0, %s29
    %s33 = sphi 0, %s30
    %s34 = sphi 0, %s31
    %s35 = sphi 0, %s32
    %s49 = sphi 0, %s51
    %s52 = sphi 0, %s49
    %s53 = sphi 0, %s52
    %s69 = sphi 0, %s53
    %s77 = sphi 0, %s79
    %s80 = sphi 0, %s77
    %s81 = sphi 0, %s80
    %s97 = sphi 0, %s81
    %s101 = sphi 0, %s101
    %s103 = sphi 0, %s101
    %s104 = sphi 0, %s103
    %s118 = sphi 0, %s104
    %s122 = sphi 0, %s122
    %s124 = sphi 0, %s122
    %s125 = sphi 0, %s124
    %s139 = sphi 0, %s125
    %s143 = sphi 0, %s143
    %s145 = sphi 0, %s143
    %s146 = sphi 0, %s145
    %s160 = sphi 0, %s146
    %s164 = sphi 0, %s164
    %s166 = sphi 0, %s164
    %s167 = sphi 0, %s166
    %s181 = sphi 0, %s167
    %s185 = sphi 0, %s185
    %s187 = sphi 0, %s185
    %s188 = sphi 0, %s187
    %s202 = sphi 0, %s188
    %s206 = sphi 0, %s206
    %s208 = sphi 0, %s206
    %s209 = sphi 0, %s208
    %s223 = sphi 0, %s209
    %s227 = sphi 0, %s227
    %s229 = sphi 0, %s227
    %s230 = sphi 0, %s229
    %s244 = sphi 0, %s230
    %s248 = sphi 0, %s248
    %s250 = sphi 0, %s248
    %s251 = sphi 0, %s250
    %s265 = sphi 0, %s251
    %s269 = sphi 0, %s269
    %s271 = sphi 0, %s269
    %s272 = sphi 0, %s271
    %s286 = sphi 0, %s272
    %s290 = sphi 0, %s290
    %s292 = sphi 0, %s290
    %s293 = sphi 0, %s292
    %s307 = sphi 0, %s293
    %s311 = sphi 0, %s311
    %s313 = sphi 0, %s311
    %s314 = sphi 0, %s313
    %s328 = sphi 0, %s314
    %s332 = sphi 0, %s332
    %s334 = sphi 0, %s332
    %s335 = sphi 0, %s334
    %s349 = sphi 0, %s335
    %s357 = sphi 0, %s359
    %s360 = sphi 0, %s357
    %s361 = sphi 0, %s360
    %s377 = sphi 0, %s361
  $region4: #{set_transformer_forward.9} parent=0 // loop_header_branch
    %23 = sbr.rel (%p21) target = $region8
  $region5: #{set_transformer_forward.9} parent=0 // loop_body
    %s25 = ssub.s32 %s20, 1
    %s26 = ssub.s32 %s20, 2
    %s36 = sadd.s32 1, %s29
    %p37 = scmp.ge.s32.totalorder %s36, 1
    %s38 = scalar_select %p37, 0, %s36
    %s39 = sadd.s32 1, %s28
    %s40 = scalar_select %p37, %s39, %s28
    %p41 = scmp.ge.s32.totalorder %s40, 1
    %s42 = scalar_select %p41, 0, %s40
    %s43 = sadd.s32 1, %s27
    %s44 = scalar_select %p41, %s43, %s27
    %p45 = scmp.ge.s32.totalorder %s44, 2
    %s46 = scalar_select %p45, 0, %s44
    %s47 = ssub.s32 %s28, %s42
    %p48 = scmp.eq.s32.totalorder %s47, 0
    %s50 = sadd.s32 %s49, 1
    %s51 = scalar_select %p48, %s49, %s50
    %p54 = pneg %p48
    %p55 = scmp.eq.s32.totalorder %s20, 1
    %p56 = por %p54, %p55
    %p57 = scmp.ne.s32.totalorder %s49, %s52
    %p58 = scmp.eq.s32.totalorder %s20, 0
    %p59 = por %p57, %p58
    %p60 = scmp.ne.s32.totalorder %s49, %s52
    %p61 = scmp.eq.s32.totalorder %s25, 1
    %p62 = por %p60, %p61
    %p63 = scmp.ne.s32.totalorder %s52, %s53
    %p64 = scmp.eq.s32.totalorder %s25, 0
    %p65 = por %p63, %p64
    %p66 = scmp.ne.s32.totalorder %s52, %s53
    %p67 = scmp.eq.s32.totalorder %s26, 1
    %p68 = por %p66, %p67
    %p70 = scmp.ne.s32.totalorder %s53, %s69
    %p71 = scmp.eq.s32.totalorder %s26, 0
    %p72 = por %p70, %p71
    %s73 = ssub.s32 %s27, %s46
    %s74 = ssub.s32 %s29, %s38
    %s75 = sor.u32 %s73, %s74
    %p76 = scmp.eq.s32.totalorder %s75, 0
    %s78 = sadd.s32 %s77, 1
    %s79 = scalar_select %p76, %s77, %s78
    %p82 = pneg %p76
    %p83 = scmp.eq.s32.totalorder %s20, 1
    %p84 = por %p82, %p83
    %p85 = scmp.ne.s32.totalorder %s77, %s80
    %p86 = scmp.eq.s32.totalorder %s20, 0
    %p87 = por %p85, %p86
    %p88 = scmp.ne.s32.totalorder %s77, %s80
    %p89 = scmp.eq.s32.totalorder %s25, 1
    %p90 = por %p88, %p89
    %p91 = scmp.ne.s32.totalorder %s80, %s81
    %p92 = scmp.eq.s32.totalorder %s25, 0
    %p93 = por %p91, %p92
    %p94 = scmp.ne.s32.totalorder %s80, %s81
    %p95 = scmp.eq.s32.totalorder %s26, 1
    %p96 = por %p94, %p95
    %p98 = scmp.ne.s32.totalorder %s81, %s97
    %p99 = scmp.eq.s32.totalorder %s26, 0
    %p100 = por %p98, %p99
    %s102 = sadd.s32 %s101, 1
    %p105 = scmp.eq.s32.totalorder %s20, 1
    %p106 = scmp.ne.s32.totalorder %s101, %s103
    %p107 = scmp.eq.s32.totalorder %s20, 0
    %p108 = por %p106, %p107
    %p109 = scmp.ne.s32.totalorder %s101, %s103
    %p110 = scmp.eq.s32.totalorder %s25, 1
    %p111 = por %p109, %p110
    %p112 = scmp.ne.s32.totalorder %s103, %s104
    %p113 = scmp.eq.s32.totalorder %s25, 0
    %p114 = por %p112, %p113
    %p115 = scmp.ne.s32.totalorder %s103, %s104
    %p116 = scmp.eq.s32.totalorder %s26, 1
    %p117 = por %p115, %p116
    %p119 = scmp.ne.s32.totalorder %s104, %s118
    %p120 = scmp.eq.s32.totalorder %s26, 0
    %p121 = por %p119, %p120
    %s123 = sadd.s32 %s122, 1
    %p126 = scmp.eq.s32.totalorder %s20, 1
    %p127 = scmp.ne.s32.totalorder %s122, %s124
    %p128 = scmp.eq.s32.totalorder %s20, 0
    %p129 = por %p127, %p128
    %p130 = scmp.ne.s32.totalorder %s122, %s124
    %p131 = scmp.eq.s32.totalorder %s25, 1
    %p132 = por %p130, %p131
    %p133 = scmp.ne.s32.totalorder %s124, %s125
    %p134 = scmp.eq.s32.totalorder %s25, 0
    %p135 = por %p133, %p134
    %p136 = scmp.ne.s32.totalorder %s124, %s125
    %p137 = scmp.eq.s32.totalorder %s26, 1
    %p138 = por %p136, %p137
    %p140 = scmp.ne.s32.totalorder %s125, %s139
    %p141 = scmp.eq.s32.totalorder %s26, 0
    %p142 = por %p140, %p141
    %s144 = sadd.s32 %s143, 1
    %p147 = scmp.eq.s32.totalorder %s20, 1
    %p148 = scmp.ne.s32.totalorder %s143, %s145
    %p149 = scmp.eq.s32.totalorder %s20, 0
    %p150 = por %p148, %p149
    %p151 = scmp.ne.s32.totalorder %s143, %s145
    %p152 = scmp.eq.s32.totalorder %s25, 1
    %p153 = por %p151, %p152
    %p154 = scmp.ne.s32.totalorder %s145, %s146
    %p155 = scmp.eq.s32.totalorder %s25, 0
    %p156 = por %p154, %p155
    %p157 = scmp.ne.s32.totalorder %s145, %s146
    %p158 = scmp.eq.s32.totalorder %s26, 1
    %p159 = por %p157, %p158
    %p161 = scmp.ne.s32.totalorder %s146, %s160
    %p162 = scmp.eq.s32.totalorder %s26, 0
    %p163 = por %p161, %p162
    %s165 = sadd.s32 %s164, 1
    %p168 = scmp.eq.s32.totalorder %s20, 1
    %p169 = scmp.ne.s32.totalorder %s164, %s166
    %p170 = scmp.eq.s32.totalorder %s20, 0
    %p171 = por %p169, %p170
    %p172 = scmp.ne.s32.totalorder %s164, %s166
    %p173 = scmp.eq.s32.totalorder %s25, 1
    %p174 = por %p172, %p173
    %p175 = scmp.ne.s32.totalorder %s166, %s167
    %p176 = scmp.eq.s32.totalorder %s25, 0
    %p177 = por %p175, %p176
    %p178 = scmp.ne.s32.totalorder %s166, %s167
    %p179 = scmp.eq.s32.totalorder %s26, 1
    %p180 = por %p178, %p179
    %p182 = scmp.ne.s32.totalorder %s167, %s181
    %p183 = scmp.eq.s32.totalorder %s26, 0
    %p184 = por %p182, %p183
    %s186 = sadd.s32 %s185, 1
    %p189 = scmp.eq.s32.totalorder %s20, 1
    %p190 = scmp.ne.s32.totalorder %s185, %s187
    %p191 = scmp.eq.s32.totalorder %s20, 0
    %p192 = por %p190, %p191
    %p193 = scmp.ne.s32.totalorder %s185, %s187
    %p194 = scmp.eq.s32.totalorder %s25, 1
    %p195 = por %p193, %p194
    %p196 = scmp.ne.s32.totalorder %s187, %s188
    %p197 = scmp.eq.s32.totalorder %s25, 0
    %p198 = por %p196, %p197
    %p199 = scmp.ne.s32.totalorder %s187, %s188
    %p200 = scmp.eq.s32.totalorder %s26, 1
    %p201 = por %p199, %p200
    %p203 = scmp.ne.s32.totalorder %s188, %s202
    %p204 = scmp.eq.s32.totalorder %s26, 0
    %p205 = por %p203, %p204
    %s207 = sadd.s32 %s206, 1
    %p210 = scmp.eq.s32.totalorder %s20, 1
    %p211 = scmp.ne.s32.totalorder %s206, %s208
    %p212 = scmp.eq.s32.totalorder %s20, 0
    %p213 = por %p211, %p212
    %p214 = scmp.ne.s32.totalorder %s206, %s208
    %p215 = scmp.eq.s32.totalorder %s25, 1
    %p216 = por %p214, %p215
    %p217 = scmp.ne.s32.totalorder %s208, %s209
    %p218 = scmp.eq.s32.totalorder %s25, 0
    %p219 = por %p217, %p218
    %p220 = scmp.ne.s32.totalorder %s208, %s209
    %p221 = scmp.eq.s32.totalorder %s26, 1
    %p222 = por %p220, %p221
    %p224 = scmp.ne.s32.totalorder %s209, %s223
    %p225 = scmp.eq.s32.totalorder %s26, 0
    %p226 = por %p224, %p225
    %s228 = sadd.s32 %s227, 1
    %p231 = scmp.eq.s32.totalorder %s20, 1
    %p232 = scmp.ne.s32.totalorder %s227, %s229
    %p233 = scmp.eq.s32.totalorder %s20, 0
    %p234 = por %p232, %p233
    %p235 = scmp.ne.s32.totalorder %s227, %s229
    %p236 = scmp.eq.s32.totalorder %s25, 1
    %p237 = por %p235, %p236
    %p238 = scmp.ne.s32.totalorder %s229, %s230
    %p239 = scmp.eq.s32.totalorder %s25, 0
    %p240 = por %p238, %p239
    %p241 = scmp.ne.s32.totalorder %s229, %s230
    %p242 = scmp.eq.s32.totalorder %s26, 1
    %p243 = por %p241, %p242
    %p245 = scmp.ne.s32.totalorder %s230, %s244
    %p246 = scmp.eq.s32.totalorder %s26, 0
    %p247 = por %p245, %p246
    %s249 = sadd.s32 %s248, 1
    %p252 = scmp.eq.s32.totalorder %s20, 1
    %p253 = scmp.ne.s32.totalorder %s248, %s250
    %p254 = scmp.eq.s32.totalorder %s20, 0
    %p255 = por %p253, %p254
    %p256 = scmp.ne.s32.totalorder %s248, %s250
    %p257 = scmp.eq.s32.totalorder %s25, 1
    %p258 = por %p256, %p257
    %p259 = scmp.ne.s32.totalorder %s250, %s251
    %p260 = scmp.eq.s32.totalorder %s25, 0
    %p261 = por %p259, %p260
    %p262 = scmp.ne.s32.totalorder %s250, %s251
    %p263 = scmp.eq.s32.totalorder %s26, 1
    %p264 = por %p262, %p263
    %p266 = scmp.ne.s32.totalorder %s251, %s265
    %p267 = scmp.eq.s32.totalorder %s26, 0
    %p268 = por %p266, %p267
    %s270 = sadd.s32 %s269, 1
    %p273 = scmp.eq.s32.totalorder %s20, 1
    %p274 = scmp.ne.s32.totalorder %s269, %s271
    %p275 = scmp.eq.s32.totalorder %s20, 0
    %p276 = por %p274, %p275
    %p277 = scmp.ne.s32.totalorder %s269, %s271
    %p278 = scmp.eq.s32.totalorder %s25, 1
    %p279 = por %p277, %p278
    %p280 = scmp.ne.s32.totalorder %s271, %s272
    %p281 = scmp.eq.s32.totalorder %s25, 0
    %p282 = por %p280, %p281
    %p283 = scmp.ne.s32.totalorder %s271, %s272
    %p284 = scmp.eq.s32.totalorder %s26, 1
    %p285 = por %p283, %p284
    %p287 = scmp.ne.s32.totalorder %s272, %s286
    %p288 = scmp.eq.s32.totalorder %s26, 0
    %p289 = por %p287, %p288
    %s291 = sadd.s32 %s290, 1
    %p294 = scmp.eq.s32.totalorder %s20, 1
    %p295 = scmp.ne.s32.totalorder %s290, %s292
    %p296 = scmp.eq.s32.totalorder %s20, 0
    %p297 = por %p295, %p296
    %p298 = scmp.ne.s32.totalorder %s290, %s292
    %p299 = scmp.eq.s32.totalorder %s25, 1
    %p300 = por %p298, %p299
    %p301 = scmp.ne.s32.totalorder %s292, %s293
    %p302 = scmp.eq.s32.totalorder %s25, 0
    %p303 = por %p301, %p302
    %p304 = scmp.ne.s32.totalorder %s292, %s293
    %p305 = scmp.eq.s32.totalorder %s26, 1
    %p306 = por %p304, %p305
    %p308 = scmp.ne.s32.totalorder %s293, %s307
    %p309 = scmp.eq.s32.totalorder %s26, 0
    %p310 = por %p308, %p309
    %s312 = sadd.s32 %s311, 1
    %p315 = scmp.eq.s32.totalorder %s20, 1
    %p316 = scmp.ne.s32.totalorder %s311, %s313
    %p317 = scmp.eq.s32.totalorder %s20, 0
    %p318 = por %p316, %p317
    %p319 = scmp.ne.s32.totalorder %s311, %s313
    %p320 = scmp.eq.s32.totalorder %s25, 1
    %p321 = por %p319, %p320
    %p322 = scmp.ne.s32.totalorder %s313, %s314
    %p323 = scmp.eq.s32.totalorder %s25, 0
    %p324 = por %p322, %p323
    %p325 = scmp.ne.s32.totalorder %s313, %s314
    %p326 = scmp.eq.s32.totalorder %s26, 1
    %p327 = por %p325, %p326
    %p329 = scmp.ne.s32.totalorder %s314, %s328
    %p330 = scmp.eq.s32.totalorder %s26, 0
    %p331 = por %p329, %p330
    %s333 = sadd.s32 %s332, 1
    %p336 = scmp.eq.s32.totalorder %s20, 1
    %p337 = scmp.ne.s32.totalorder %s332, %s334
    %p338 = scmp.eq.s32.totalorder %s20, 0
    %p339 = por %p337, %p338
    %p340 = scmp.ne.s32.totalorder %s332, %s334
    %p341 = scmp.eq.s32.totalorder %s25, 1
    %p342 = por %p340, %p341
    %p343 = scmp.ne.s32.totalorder %s334, %s335
    %p344 = scmp.eq.s32.totalorder %s25, 0
    %p345 = por %p343, %p344
    %p346 = scmp.ne.s32.totalorder %s334, %s335
    %p347 = scmp.eq.s32.totalorder %s26, 1
    %p348 = por %p346, %p347
    %p350 = scmp.ne.s32.totalorder %s335, %s349
    %p351 = scmp.eq.s32.totalorder %s26, 0
    %p352 = por %p350, %p351
    %s353 = ssub.s32 %s27, %s46
    %s354 = ssub.s32 %s28, %s42
    %s355 = sor.u32 %s353, %s354
    %p356 = scmp.eq.s32.totalorder %s355, 0
    %s358 = sadd.s32 %s357, 1
    %s359 = scalar_select %p356, %s357, %s358
    %p362 = pneg %p356
    %p363 = scmp.eq.s32.totalorder %s20, 1
    %p364 = por %p362, %p363
    %p365 = scmp.ne.s32.totalorder %s357, %s360
    %p366 = scmp.eq.s32.totalorder %s20, 0
    %p367 = por %p365, %p366
    %p368 = scmp.ne.s32.totalorder %s357, %s360
    %p369 = scmp.eq.s32.totalorder %s25, 1
    %p370 = por %p368, %p369
    %p371 = scmp.ne.s32.totalorder %s360, %s361
    %p372 = scmp.eq.s32.totalorder %s25, 0
    %p373 = por %p371, %p372
    %p374 = scmp.ne.s32.totalorder %s360, %s361
    %p375 = scmp.eq.s32.totalorder %s26, 1
    %p376 = por %p374, %p375
    %p378 = scmp.ne.s32.totalorder %s361, %s377
    %p379 = scmp.eq.s32.totalorder %s26, 0
    %p380 = por %p378, %p379
    %p381 = scmp.le.s32.totalorder 1, %s20
    %p382 = scmp.lt.s32.totalorder %s20, 3
    %p383 = pnand %p381, %p382
    %p384 = pneg %p383
    // Predicated region
    $region9: #{set_transformer_forward.9} parent=5 // pred_check
      _
    $region10: #{set_transformer_forward.9} parent=5 // pred_check_branch
      %386 = sbr.rel (%p383) target = $region12
    $region11: #{set_transformer_forward.9} parent=5 // pred_region
      %s387 = ssub.s32 %s20, 1
      // Predicated region
      $region13: #{set_transformer_forward.9} parent=11 // pred_check
        %p388 = pneg %p65
      $region14: #{set_transformer_forward.9} parent=11 // pred_check_branch
        %390 = sbr.rel (%p388) target = $region16
      $region15: #{set_transformer_forward.9} parent=11 // pred_region
        %s391 = smul.u32 2, %s31
        %p392 = scmp.lt.s32.totalorder %s391, 1
        %s393 = scalar_select %p392, %s391, 1
        %s394 = smul.addr %s393, 8
        %s395 = scalar_lea.vmem %s0, %s394
        %s396 = smul.u32 2, %s31
      $region16: #{set_transformer_forward.9} parent=11 // pred_fallthru
        _
      // Predicated region
      $region17: #{set_transformer_forward.9} parent=11 // pred_check
        %p397 = pneg %p114
      $region18: #{set_transformer_forward.9} parent=11 // pred_check_branch
        %399 = sbr.rel (%p397) target = $region20
      $region19: #{set_transformer_forward.9} parent=11 // pred_region
        _
      $region20: #{set_transformer_forward.9} parent=11 // pred_fallthru
        _
      // Predicated region
      $region21: #{set_transformer_forward.9} parent=11 // pred_check
        %p400 = pneg %p135
      $region22: #{set_transformer_forward.9} parent=11 // pred_check_branch
        %402 = sbr.rel (%p400) target = $region24
      $region23: #{set_transformer_forward.9} parent=11 // pred_region
        _
      $region24: #{set_transformer_forward.9} parent=11 // pred_fallthru
        _
      // Predicated region
      $region25: #{set_transformer_forward.9} parent=11 // pred_check
        %p403 = pneg %p156
      $region26: #{set_transformer_forward.9} parent=11 // pred_check_branch
        %405 = sbr.rel (%p403) target = $region28
      $region27: #{set_transformer_forward.9} parent=11 // pred_region
        _
      $region28: #{set_transformer_forward.9} parent=11 // pred_fallthru
        _
      // Predicated region
      $region29: #{set_transformer_forward.9} parent=11 // pred_check
        %p406 = pneg %p177
      $region30: #{set_transformer_forward.9} parent=11 // pred_check_branch
        %408 = sbr.rel (%p406) target = $region32
      $region31: #{set_transformer_forward.9} parent=11 // pred_region
        _
      $region32: #{set_transformer_forward.9} parent=11 // pred_fallthru
        _
      // Predicated region
      $region33: #{set_transformer_forward.9} parent=11 // pred_check
        %p409 = pneg %p198
      $region34: #{set_transformer_forward.9} parent=11 // pred_check_branch
        %411 = sbr.rel (%p409) target = $region36
      $region35: #{set_transformer_forward.9} parent=11 // pred_region
        _
      $region36: #{set_transformer_forward.9} parent=11 // pred_fallthru
        _
      // Predicated region
      $region37: #{set_transformer_forward.9} parent=11 // pred_check
        %p412 = pneg %p219
      $region38: #{set_transformer_forward.9} parent=11 // pred_check_branch
        %414 = sbr.rel (%p412) target = $region40
      $region39: #{set_transformer_forward.9} parent=11 // pred_region
        _
      $region40: #{set_transformer_forward.9} parent=11 // pred_fallthru
        _
      // Predicated region
      $region41: #{set_transformer_forward.9} parent=11 // pred_check
        %p415 = pneg %p240
      $region42: #{set_transformer_forward.9} parent=11 // pred_check_branch
        %417 = sbr.rel (%p415) target = $region44
      $region43: #{set_transformer_forward.9} parent=11 // pred_region
        _
      $region44: #{set_transformer_forward.9} parent=11 // pred_fallthru
        _
      // Predicated region
      $region45: #{set_transformer_forward.9} parent=11 // pred_check
        %p418 = pneg %p261
      $region46: #{set_transformer_forward.9} parent=11 // pred_check_branch
        %420 = sbr.rel (%p418) target = $region48
      $region47: #{set_transformer_forward.9} parent=11 // pred_region
        _
      $region48: #{set_transformer_forward.9} parent=11 // pred_fallthru
        _
      // Predicated region
      $region49: #{set_transformer_forward.9} parent=11 // pred_check
        %p421 = pneg %p282
      $region50: #{set_transformer_forward.9} parent=11 // pred_check_branch
        %423 = sbr.rel (%p421) target = $region52
      $region51: #{set_transformer_forward.9} parent=11 // pred_region
        _
      $region52: #{set_transformer_forward.9} parent=11 // pred_fallthru
        _
      // Predicated region
      $region53: #{set_transformer_forward.9} parent=11 // pred_check
        %p424 = pneg %p303
      $region54: #{set_transformer_forward.9} parent=11 // pred_check_branch
        %426 = sbr.rel (%p424) target = $region56
      $region55: #{set_transformer_forward.9} parent=11 // pred_region
        _
      $region56: #{set_transformer_forward.9} parent=11 // pred_fallthru
        _
      // Predicated region
      $region57: #{set_transformer_forward.9} parent=11 // pred_check
        %p427 = pneg %p324
      $region58: #{set_transformer_forward.9} parent=11 // pred_check_branch
        %429 = sbr.rel (%p427) target = $region60
      $region59: #{set_transformer_forward.9} parent=11 // pred_region
        _
      $region60: #{set_transformer_forward.9} parent=11 // pred_fallthru
        _
      // Predicated region
      $region61: #{set_transformer_forward.9} parent=11 // pred_check
        %p430 = pneg %p345
      $region62: #{set_transformer_forward.9} parent=11 // pred_check_branch
        %432 = sbr.rel (%p430) target = $region64
      $region63: #{set_transformer_forward.9} parent=11 // pred_region
        _
      $region64: #{set_transformer_forward.9} parent=11 // pred_fallthru
        _
    $region12: #{set_transformer_forward.9} parent=5 // pred_fallthru
      _
    %p433 = scmp.lt.s32.totalorder %s20, 2
    // Predicated region
    $region65: #{set_transformer_forward.9} parent=5 // pred_check
      %p434 = pneg %p433
    $region66: #{set_transformer_forward.9} parent=5 // pred_check_branch
      %436 = sbr.rel (%p434) target = $region68
    $region67: #{set_transformer_forward.9} parent=5 // pred_region
      // Predicated region
      $region69: #{set_transformer_forward.9} parent=67 // pred_check
        %p437 = pneg %p87
      $region70: #{set_transformer_forward.9} parent=67 // pred_check_branch
        %439 = sbr.rel (%p437) target = $region72
      $region71: #{set_transformer_forward.9} parent=67 // pred_region
        %p440 = scmp.lt.s32.totalorder %s27, 1
        %s441 = scalar_select %p440, %s27, 1
        %p442 = scmp.lt.s32.totalorder %s29, 0
        %s443 = scalar_select %p442, %s29, 0
        %s444 = sadd.s32 %s443, %s441
        %s445 = smul.addr %s444, 8
        %s446 = scalar_lea.vmem %s1, %s445
      $region72: #{set_transformer_forward.9} parent=67 // pred_fallthru
        _
    $region68: #{set_transformer_forward.9} parent=5 // pred_fallthru
      _
    %p447 = scmp.le.s32.totalorder 1, %s20
    %p448 = scmp.lt.s32.totalorder %s20, 3
    %p449 = pnand %p447, %p448
    %p450 = pneg %p449
    // Predicated region
    $region73: #{set_transformer_forward.9} parent=5 // pred_check
      _
    $region74: #{set_transformer_forward.9} parent=5 // pred_check_branch
      %452 = sbr.rel (%p449) target = $region76
    $region75: #{set_transformer_forward.9} parent=5 // pred_region
      %s453 = ssub.s32 %s20, 1
      %s454 = smul.u32 2, %s31
      %p455 = scmp.lt.s32.totalorder %s454, 1
      %s456 = scalar_select %p455, %s454, 1
      %s457 = smul.addr %s456, 8
      %s458 = scalar_lea.vmem %s0, %s457
      %p459 = pneg %p65
      %p460 = pneg %p62
      %p461 = scmp.lt.s32.totalorder %s30, 1
      %s462 = scalar_select %p461, %s30, 1
      %p463 = scmp.lt.s32.totalorder %s32, 0
      %s464 = scalar_select %p463, %s32, 0
      %s465 = sadd.s32 %s464, %s462
      %s466 = smul.addr %s465, 8
      %s467 = scalar_lea.vmem %s1, %s466
      %p468 = pneg %p93
      %p469 = pneg %p90
      %p470 = pneg %p114
      %p471 = pneg %p111
      %p472 = pneg %p135
      %p473 = pneg %p132
      %p474 = pneg %p156
      %p475 = pneg %p153
      %p476 = pneg %p177
      %p477 = pneg %p174
      %p478 = pneg %p198
      %p479 = pneg %p195
      %p480 = pneg %p219
      %p481 = pneg %p216
      %p482 = pneg %p240
      %p483 = pneg %p237
      %p484 = pneg %p261
      %p485 = pneg %p258
      %p486 = pneg %p282
      %p487 = pneg %p279
      %p488 = pneg %p303
      %p489 = pneg %p300
      %p490 = pneg %p324
      %p491 = pneg %p321
      %p492 = pneg %p345
      %p493 = pneg %p342
      %p494 = pneg %p373
      %p495 = pneg %p370
      %s496 = smul.u32 2, %s31
      %p497 = scmp.lt.s32.totalorder %s30, 1
      %s498 = scalar_select %p497, %s30, 1
      %p499 = scmp.lt.s32.totalorder %s496, 1
      %s500 = scalar_select %p499, %s496, 1
      %s501 = smul.addr %s498, 2
      %s502 = sadd.s32 %s500, %s501
      %s503 = smul.addr %s502, 8
      %s504 = scalar_lea.vmem %s14, %s503
      %s505 = smul.u32 2, %s31
      %p506 = scmp.lt.s32.totalorder %s505, 1
      %s507 = scalar_select %p506, %s505, 1
      %s508 = smul.addr %s507, 8
      %s509 = scalar_lea.vmem %s0, %s508
      %s510 = smul.u32 2, %s31
      %p511 = scmp.lt.s32.totalorder %s30, 1
      %s512 = scalar_select %p511, %s30, 1
      %p513 = scmp.lt.s32.totalorder %s32, 0
      %s514 = scalar_select %p513, %s32, 0
      %s515 = sadd.s32 %s514, %s512
      %s516 = smul.addr %s515, 8
      %s517 = scalar_lea.vmem %s1, %s516
      %s518 = smul.u32 2, %s31
      %p519 = scmp.lt.s32.totalorder %s30, 1
      %s520 = scalar_select %p519, %s30, 1
      %p521 = scmp.lt.s32.totalorder %s518, 1
      %s522 = scalar_select %p521, %s518, 1
      %s523 = smul.addr %s520, 2
      %s524 = sadd.s32 %s522, %s523
      %s525 = smul.addr %s524, 8
      %s526 = scalar_lea.vmem %s14, %s525
      %s527 = smul.u32 2, %s31
      %v529 = vld [vmem:[%s509] sm:$0xff]
      %v530 = vld [vmem:[%s509 + $0x8] sm:$0xff]
      %p531 = scmp.eq.s32.totalorder %s32, 0
      // Predicated region
      $region77: #{set_transformer_forward.9} parent=75 // pred_check
        %p532 = pneg %p531
      $region78: #{set_transformer_forward.9} parent=75 // pred_check_branch
        %534 = sbr.rel (%p532) target = $region80
      $region79: #{set_transformer_forward.9} parent=75 // pred_region
        %v535 = vpack.c.bf16 %v530, %v529
        %v536 = vld [vmem:[%s2] sm:$0xf]
        %v537 = vld [vmem:[%s2 + $0x4] sm:$0xf]
        %v538 = vld [vmem:[%s2 + $0x8] sm:$0xf]
        %v539 = vld [vmem:[%s2 + $0xc] sm:$0xf]
        %v540 = vld [vmem:[%s2 + $0x10] sm:$0xf]
        %v541 = vld [vmem:[%s2 + $0x14] sm:$0xf]
        %v542 = vld [vmem:[%s2 + $0x18] sm:$0xf]
        %v543 = vld [vmem:[%s2 + $0x1c] sm:$0xf]
        %v544 = vld [vmem:[%s2 + $0x20] sm:$0xf]
        %v545 = vld [vmem:[%s2 + $0x24] sm:$0xf]
        %v546 = vld [vmem:[%s2 + $0x28] sm:$0xf]
        %v547 = vld [vmem:[%s2 + $0x2c] sm:$0xf]
        %v548 = vld [vmem:[%s2 + $0x30] sm:$0xf]
        %v549 = vld [vmem:[%s2 + $0x34] sm:$0xf]
        %v550 = vld [vmem:[%s2 + $0x38] sm:$0xf]
        %v551 = vld [vmem:[%s2 + $0x3c] sm:$0xf]
        %v552 = vld [vmem:[%s3] sm:$0x1]
        %v554 = vperm.slane %v552, 0
        %v572 = vunpack.c.l.b16 %v536
        %v573 = vunpack.c.l.b16 %v537
        %v574 = vunpack.c.l.b16 %v538
        %v575 = vunpack.c.l.b16 %v539
        %v576 = vunpack.c.l.b16 %v540
        %v577 = vunpack.c.l.b16 %v541
        %v578 = vunpack.c.l.b16 %v542
        %v579 = vunpack.c.l.b16 %v543
        %v580 = vunpack.c.l.b16 %v544
        %v581 = vunpack.c.l.b16 %v545
        %v582 = vunpack.c.l.b16 %v546
        %v583 = vunpack.c.l.b16 %v547
        %v584 = vunpack.c.l.b16 %v548
        %v585 = vunpack.c.l.b16 %v549
        %v586 = vunpack.c.l.b16 %v550
        %v587 = vunpack.c.l.b16 %v551
        %v588 = vpack.c.b16 %v573, %v572
        %v589 = vpack.c.b16 %v575, %v574
        %v590 = vpack.c.b16 %v577, %v576
        %v591 = vpack.c.b16 %v579, %v578
        %v592 = vpack.c.b16 %v581, %v580
        %v593 = vpack.c.b16 %v583, %v582
        %v594 = vpack.c.b16 %v585, %v584
        %v595 = vpack.c.b16 %v587, %v586
        %604 = vmatpush.bf16.msra.mxu0 %v595
        %605 = vmatpush.bf16.msra.mxu0 %v594
        %606 = vmatpush.bf16.msra.mxu0 %v593
        %607 = vmatpush.bf16.msra.mxu0 %v592
        %608 = vmatpush.bf16.msra.mxu0 %v591
        %609 = vmatpush.bf16.msra.mxu0 %v590
        %610 = vmatpush.bf16.msra.mxu0 %v589
        %611 = vmatpush.bf16.msra.mxu0 %v588
        %612 = vmatmul.bf16.gmra.mxu0 %v535
        %v613 = vpop.f32.mrf.mxu0
        %v614 = vadd.f32 %v554, %v613
        %v615 = vpop.f32.mrf.mxu0
        %v616 = vadd.f32 %v554, %v615
        %617 = vdwg.mxu0
        %v618 = vmul.f32 %v614, 0.17677669
        %v619 = vmul.f32 %v616, 0.17677669
        %620 = vst [vmem:[#allocation2] sm:$0xff] %v618
        %621 = vst [vmem:[#allocation2 + $0x8] sm:$0xff] %v619
        %vm622 = vcmask 7168
        %623 = vst.msk [vmem:[#allocation3] sm:$0xff] %vm622, -inf
        %624 = vst.msk [vmem:[#allocation3 + $0x8] sm:$0xff] %vm622, -inf
        %625 = vst.msk [vmem:[#allocation3 + $0x10] sm:$0xff] %vm622, -inf
        %626 = vst.msk [vmem:[#allocation3 + $0x18] sm:$0xff] %vm622, -inf
        %627 = vst.msk [vmem:[#allocation3 + $0x20] sm:$0xff] %vm622, -inf
        %628 = vst.msk [vmem:[#allocation3 + $0x28] sm:$0xff] %vm622, -inf
        %629 = vst.msk [vmem:[#allocation3 + $0x30] sm:$0xff] %vm622, -inf
        %630 = vst.msk [vmem:[#allocation3 + $0x38] sm:$0xff] %vm622, -inf
        %631 = vst.msk [vmem:[#allocation4] sm:$0xff] %vm622, 0.0
        %632 = vst.msk [vmem:[#allocation4 + $0x8] sm:$0xff] %vm622, 0.0
        %633 = vst.msk [vmem:[#allocation4 + $0x10] sm:$0xff] %vm622, 0.0
        %634 = vst.msk [vmem:[#allocation4 + $0x18] sm:$0xff] %vm622, 0.0
        %635 = vst.msk [vmem:[#allocation4 + $0x20] sm:$0xff] %vm622, 0.0
        %636 = vst.msk [vmem:[#allocation4 + $0x28] sm:$0xff] %vm622, 0.0
        %637 = vst.msk [vmem:[#allocation4 + $0x30] sm:$0xff] %vm622, 0.0
        %638 = vst.msk [vmem:[#allocation4 + $0x38] sm:$0xff] %vm622, 0.0
        %639 = vst [vmem:[#allocation5] sm:$0xff] 0.0
        %640 = vst [vmem:[#allocation5 + $0x8] sm:$0xff] 0.0
      $region80: #{set_transformer_forward.9} parent=75 // pred_fallthru
        _
      %v641 = vld [vmem:[%s517] sm:$0xff]
      %v642 = vpack.c.bf16 %v641, %v641
      %v643 = vld [vmem:[%s4] sm:$0xff]
      %v644 = vld [vmem:[%s4 + $0x8] sm:$0xff]
      %v645 = vld [vmem:[%s4 + $0x10] sm:$0xff]
      %v646 = vld [vmem:[%s4 + $0x18] sm:$0xff]
      %v647 = vld [vmem:[%s4 + $0x20] sm:$0xff]
      %v648 = vld [vmem:[%s4 + $0x28] sm:$0xff]
      %v649 = vld [vmem:[%s4 + $0x30] sm:$0xff]
      %v650 = vld [vmem:[%s4 + $0x38] sm:$0xff]
      %v651 = vld [vmem:[%s4 + $0x40] sm:$0xff]
      %v652 = vld [vmem:[%s4 + $0x48] sm:$0xff]
      %v653 = vld [vmem:[%s4 + $0x50] sm:$0xff]
      %v654 = vld [vmem:[%s4 + $0x58] sm:$0xff]
      %v655 = vld [vmem:[%s4 + $0x60] sm:$0xff]
      %v656 = vld [vmem:[%s4 + $0x68] sm:$0xff]
      %v657 = vld [vmem:[%s4 + $0x70] sm:$0xff]
      %v658 = vld [vmem:[%s4 + $0x78] sm:$0xff]
      %v659 = vld [vmem:[%s5] sm:$0x3]
      %v661 = vperm.slane %v659, 0
      %v662 = vperm.slane %v659, 1
      %v681 = vunpack.c.l.b16 %v643
      %v682 = vunpack.c.h.b16 %v643
      %v683 = vunpack.c.l.b16 %v644
      %v684 = vunpack.c.h.b16 %v644
      %v685 = vunpack.c.l.b16 %v645
      %v686 = vunpack.c.h.b16 %v645
      %v687 = vunpack.c.l.b16 %v646
      %v688 = vunpack.c.h.b16 %v646
      %v689 = vunpack.c.l.b16 %v647
      %v690 = vunpack.c.h.b16 %v647
      %v691 = vunpack.c.l.b16 %v648
      %v692 = vunpack.c.h.b16 %v648
      %v693 = vunpack.c.l.b16 %v649
      %v694 = vunpack.c.h.b16 %v649
      %v695 = vunpack.c.l.b16 %v650
      %v696 = vunpack.c.h.b16 %v650
      %v697 = vunpack.c.l.b16 %v651
      %v698 = vunpack.c.h.b16 %v651
      %v699 = vunpack.c.l.b16 %v652
      %v700 = vunpack.c.h.b16 %v652
      %v701 = vunpack.c.l.b16 %v653
      %v702 = vunpack.c.h.b16 %v653
      %v703 = vunpack.c.l.b16 %v654
      %v704 = vunpack.c.h.b16 %v654
      %v705 = vunpack.c.l.b16 %v655
      %v706 = vunpack.c.h.b16 %v655
      %v707 = vunpack.c.l.b16 %v656
      %v708 = vunpack.c.h.b16 %v656
      %v709 = vunpack.c.l.b16 %v657
      %v710 = vunpack.c.h.b16 %v657
      %v711 = vunpack.c.l.b16 %v658
      %v712 = vunpack.c.h.b16 %v658
      %v713 = vpack.c.b16 %v683, %v681
      %v714 = vpack.c.b16 %v684, %v682
      %v715 = vpack.c.b16 %v687, %v685
      %v716 = vpack.c.b16 %v688, %v686
      %v717 = vpack.c.b16 %v691, %v689
      %v718 = vpack.c.b16 %v692, %v690
      %v719 = vpack.c.b16 %v695, %v693
      %v720 = vpack.c.b16 %v696, %v694
      %v721 = vpack.c.b16 %v699, %v697
      %v722 = vpack.c.b16 %v700, %v698
      %v723 = vpack.c.b16 %v703, %v701
      %v724 = vpack.c.b16 %v704, %v702
      %v725 = vpack.c.b16 %v707, %v705
      %v726 = vpack.c.b16 %v708, %v706
      %v727 = vpack.c.b16 %v711, %v709
      %v728 = vpack.c.b16 %v712, %v710
      %745 = vmatpush.bf16.msra.mxu0 %v727
      %746 = vmatpush.bf16.msra.mxu0 %v725
      %747 = vmatpush.bf16.msra.mxu0 %v723
      %748 = vmatpush.bf16.msra.mxu0 %v721
      %749 = vmatpush.bf16.msra.mxu0 %v719
      %750 = vmatpush.bf16.msra.mxu0 %v717
      %751 = vmatpush.bf16.msra.mxu0 %v715
      %752 = vmatpush.bf16.msra.mxu0 %v713
      %753 = vmatmul.bf16.gmra.mxu0 %v642
      %v754 = vpop.f32.mrf.mxu0
      %v755 = vadd.f32 %v661, %v754
      %v756 = vpop.f32.mrf.mxu0
      %757 = vdwg.mxu0
      %758 = vmatpush.bf16.msra.mxu0 %v728
      %759 = vmatpush.bf16.msra.mxu0 %v726
      %760 = vmatpush.bf16.msra.mxu0 %v724
      %761 = vmatpush.bf16.msra.mxu0 %v722
      %762 = vmatpush.bf16.msra.mxu0 %v720
      %763 = vmatpush.bf16.msra.mxu0 %v718
      %764 = vmatpush.bf16.msra.mxu0 %v716
      %765 = vmatpush.bf16.msra.mxu0 %v714
      %766 = vmatmul.bf16.gmra.mxu0 %v642
      %v767 = vpop.f32.mrf.mxu0
      %v768 = vadd.f32 %v662, %v767
      %v769 = vpop.f32.mrf.mxu0
      %770 = vdwg.mxu0
      %v771 = vpack.c.bf16 %v755, %v755
      %v772 = vpack.c.bf16 %v768, %v768
      %v773 = vld [vmem:[#allocation2] sm:$0xff]
      %v774 = vld [vmem:[#allocation2 + $0x8] sm:$0xff]
      %v775 = vpack.c.bf16 %v774, %v773
      %vm776 = vcmask 261120
      %v778 = vsel %vm776, %v775, 0
      %v781 = vsel %vm776, %v771, 0
      %783 = vmatpush.bf16.xpose.msra.mxu0 0
      %784 = vmatpush.bf16.xpose.msra.mxu0 0
      %785 = vmatpush.bf16.xpose.msra.mxu0 0
      %786 = vmatpush.bf16.xpose.msra.mxu0 0
      %787 = vmatpush.bf16.xpose.msra.mxu0 0
      %788 = vmatpush.bf16.xpose.msra.mxu0 0
      %789 = vmatpush.bf16.xpose.msra.mxu0 0
      %790 = vmatpush.bf16.xpose.msra.mxu0 %v781
      %791 = vmatmul.bf16.gmra.mxu0 %v778
      %v792 = vpop.f32.mrf.mxu0
      %v793 = vadd.f32 0.0, %v792
      %v794 = vpop.f32.mrf.mxu0
      %v795 = vadd.f32 0.0, %v794
      %796 = vdwg.mxu0
      %v797 = vld [vmem:[#allocation3] sm:$0xff]
      %v798 = vld [vmem:[#allocation3 + $0x8] sm:$0xff]
      %vm799 = vcmask 64512
      %v800 = vsel %vm799, %v793, -inf
      %801 = vmax.xlane.f32.xlu0 %v800
      %v802 = vpop.xlane.xlu0 %801
      %v803 = vsel %vm799, %v795, -inf
      %804 = vmax.xlane.f32.xlu0 %v803
      %v805 = vpop.xlane.xlu0 %804
      %v806 = vmax.f32 %v797, %v802
      %v807 = vmax.f32 %v798, %v805
      %v808 = vsub.f32 %v797, %v806
      %v809 = vsub.f32 %v798, %v807
      %v810 = vmul.f32 %v808, 1.442695
      %v811 = vpow.pop %v810
      %v812 = vmul.f32 %v809, 1.442695
      %v813 = vpow.pop %v812
      %815 = vset.pattern.permute.xlu0 0
      %816 = vperm.xlu0 %815, %v806
      %v817 = vpop.permute.xlu0 %816
      %820 = vset.pattern.permute.xlu0 0
      %821 = vperm.xlu0 %820, %v807
      %v822 = vpop.permute.xlu0 %821
      %v824 = vsub.f32 %v793, %v817
      %v825 = vsub.f32 %v795, %v822
      %v826 = vmul.f32 %v824, 1.442695
      %v827 = vpow.pop %v826
      %v828 = vmul.f32 %v825, 1.442695
      %v829 = vpow.pop %v828
      %v830 = vld [vmem:[#allocation4] sm:$0xff]
      %v831 = vld [vmem:[#allocation4 + $0x8] sm:$0xff]
      %v832 = vmul.f32 %v811, %v830
      %v833 = vmul.f32 %v813, %v831
      %v834 = vsel %vm799, %v827, 0.0
      %835 = vadd.xlane.f32.xlu0 %v834
      %v836 = vpop.xlane.xlu0 %835
      %v837 = vsel %vm799, %v829, 0.0
      %838 = vadd.xlane.f32.xlu0 %v837
      %v839 = vpop.xlane.xlu0 %838
      %v840 = vadd.f32 %v832, %v836
      %v841 = vadd.f32 %v833, %v839
      %vm842 = vcmask 7168
      %843 = vst.msk [vmem:[#allocation4] sm:$0xff] %vm842, %v840
      %844 = vst.msk [vmem:[#allocation4 + $0x8] sm:$0xff] %vm842, %v841
      %v845 = vpack.c.bf16 %v829, %v827
      %v847 = vsel %vm799, %v845, 0
      %vm849 = vcmask 1043456
      %v851 = vsel %vm849, %v772, 0
      %853 = vmatpush.bf16.msra.mxu0 0
      %854 = vmatpush.bf16.msra.mxu0 0
      %855 = vmatpush.bf16.msra.mxu0 0
      %856 = vmatpush.bf16.msra.mxu0 0
      %857 = vmatpush.bf16.msra.mxu0 0
      %858 = vmatpush.bf16.msra.mxu0 0
      %859 = vmatpush.bf16.msra.mxu0 0
      %860 = vmatpush.bf16.msra.mxu0 %v851
      %861 = vmatmul.bf16.gmra.mxu0 %v847
      %v862 = vpop.f32.mrf.mxu0
      %v863 = vadd.f32 0.0, %v862
      %v864 = vpop.f32.mrf.mxu0
      %v865 = vadd.f32 0.0, %v864
      %866 = vdwg.mxu0
      %v867 = vld [vmem:[#allocation5] sm:$0xff]
      %v868 = vld [vmem:[#allocation5 + $0x8] sm:$0xff]
      %870 = vset.pattern.permute.xlu0 0
      %871 = vperm.xlu0 %870, %v811
      %v872 = vpop.permute.xlu0 %871
      %875 = vset.pattern.permute.xlu0 0
      %876 = vperm.xlu0 %875, %v813
      %v877 = vpop.permute.xlu0 %876
      %v879 = vmul.f32 %v872, %v867
      %v880 = vmul.f32 %v877, %v868
      %v881 = vadd.f32 %v879, %v863
      %v882 = vadd.f32 %v880, %v865
      %883 = vst.msk [vmem:[#allocation5] sm:$0xff] %vm776, %v881
      %884 = vst.msk [vmem:[#allocation5 + $0x8] sm:$0xff] %vm776, %v882
      %885 = vst.msk [vmem:[#allocation3] sm:$0xff] %vm842, %v806
      %886 = vst.msk [vmem:[#allocation3 + $0x8] sm:$0xff] %vm842, %v807
      %888 = vrot.lane.b32.xlu0 %v775, 96
      %v889 = vpop.permute.xlu0 %888
      %v891 = vunpack.c.l.b16 %v771
      %v892 = vpack.c.b16 %v891, %v891
      %893 = vrot.lane.b32.xlu0 %v892, 96
      %v894 = vpop.permute.xlu0 %893
      %v896 = vsel %vm776, %v889, 0
      %v899 = vsel %vm776, %v894, 0
      %901 = vmatpush.bf16.xpose.msra.mxu0 0
      %902 = vmatpush.bf16.xpose.msra.mxu0 0
      %903 = vmatpush.bf16.xpose.msra.mxu0 0
      %904 = vmatpush.bf16.xpose.msra.mxu0 0
      %905 = vmatpush.bf16.xpose.msra.mxu0 0
      %906 = vmatpush.bf16.xpose.msra.mxu0 0
      %907 = vmatpush.bf16.xpose.msra.mxu0 0
      %908 = vmatpush.bf16.xpose.msra.mxu0 %v899
      %909 = vmatmul.bf16.gmra.mxu0 %v896
      %v910 = vpop.f32.mrf.mxu0
      %v911 = vadd.f32 0.0, %v910
      %v912 = vpop.f32.mrf.mxu0
      %v913 = vadd.f32 0.0, %v912
      %914 = vdwg.mxu0
      %s915 = scalar_lea.vmem [#allocation3], 16
      %v916 = vld [vmem:[%s915] sm:$0xff]
      %v917 = vld [vmem:[%s915 + $0x8] sm:$0xff]
      %v918 = vsel %vm799, %v911, -inf
      %919 = vmax.xlane.f32.xlu0 %v918
      %v920 = vpop.xlane.xlu0 %919
      %v921 = vsel %vm799, %v913, -inf
      %922 = vmax.xlane.f32.xlu0 %v921
      %v923 = vpop.xlane.xlu0 %922
      %v924 = vmax.f32 %v916, %v920
      %v925 = vmax.f32 %v917, %v923
      %v926 = vsub.f32 %v916, %v924
      %v927 = vsub.f32 %v917, %v925
      %v928 = vmul.f32 %v926, 1.442695
      %v929 = vpow.pop %v928
      %v930 = vmul.f32 %v927, 1.442695
      %v931 = vpow.pop %v930
      %933 = vset.pattern.permute.xlu0 0
      %934 = vperm.xlu0 %933, %v924
      %v935 = vpop.permute.xlu0 %934
      %938 = vset.pattern.permute.xlu0 0
      %939 = vperm.xlu0 %938, %v925
      %v940 = vpop.permute.xlu0 %939
      %v942 = vsub.f32 %v911, %v935
      %v943 = vsub.f32 %v913, %v940
      %v944 = vmul.f32 %v942, 1.442695
      %v945 = vpow.pop %v944
      %v946 = vmul.f32 %v943, 1.442695
      %v947 = vpow.pop %v946
      %s948 = scalar_lea.vmem [#allocation4], 16
      %v949 = vld [vmem:[%s948] sm:$0xff]
      %v950 = vld [vmem:[%s948 + $0x8] sm:$0xff]
      %v951 = vmul.f32 %v929, %v949
      %v952 = vmul.f32 %v931, %v950
      %v953 = vsel %vm799, %v945, 0.0
      %954 = vadd.xlane.f32.xlu0 %v953
      %v955 = vpop.xlane.xlu0 %954
      %v956 = vsel %vm799, %v947, 0.0
      %957 = vadd.xlane.f32.xlu0 %v956
      %v958 = vpop.xlane.xlu0 %957
      %v959 = vadd.f32 %v951, %v955
      %v960 = vadd.f32 %v952, %v958
      %961 = vst.msk [vmem:[%s948] sm:$0xff] %vm842, %v959
      %962 = vst.msk [vmem:[%s948 + $0x8] sm:$0xff] %vm842, %v960
      %v963 = vpack.c.bf16 %v947, %v945
      %v965 = vunpack.c.l.b16 %v772
      %v966 = vpack.c.b16 %v965, %v965
      %967 = vrot.lane.b32.xlu0 %v966, 96
      %v968 = vpop.permute.xlu0 %967
      %v970 = vsel %vm799, %v963, 0
      %v973 = vsel %vm849, %v968, 0
      %975 = vmatpush.bf16.msra.mxu0 0
      %976 = vmatpush.bf16.msra.mxu0 0
      %977 = vmatpush.bf16.msra.mxu0 0
      %978 = vmatpush.bf16.msra.mxu0 0
      %979 = vmatpush.bf16.msra.mxu0 0
      %980 = vmatpush.bf16.msra.mxu0 0
      %981 = vmatpush.bf16.msra.mxu0 0
      %982 = vmatpush.bf16.msra.mxu0 %v973
      %983 = vmatmul.bf16.gmra.mxu0 %v970
      %v984 = vpop.f32.mrf.mxu0
      %v985 = vadd.f32 0.0, %v984
      %v986 = vpop.f32.mrf.mxu0
      %v987 = vadd.f32 0.0, %v986
      %988 = vdwg.mxu0
      %v989 = vld [vmem:[#allocation5] sm:$0xff]
      %v990 = vld [vmem:[#allocation5 + $0x8] sm:$0xff]
      %992 = vset.pattern.permute.xlu0 0
      %993 = vperm.xlu0 %992, %v929
      %v994 = vpop.permute.xlu0 %993
      %997 = vset.pattern.permute.xlu0 0
      %998 = vperm.xlu0 %997, %v931
      %v999 = vpop.permute.xlu0 %998
      %v1001 = vmul.f32 %v994, %v989
      %v1002 = vmul.f32 %v999, %v990
      %1005 = vrot.lane.b32.xlu0 %v985, 32
      %v1006 = vpop.permute.xlu0 %1005
      %1007 = vrot.lane.b32.xlu0 %v987, 32
      %v1008 = vpop.permute.xlu0 %1007
      %v1011 = vadd.f32 %v1001, %v1006
      %v1012 = vadd.f32 %v1002, %v1008
      %vm1013 = vcmask 523520
      %1014 = vst.msk [vmem:[#allocation5] sm:$0xff] %vm1013, %v1011
      %1015 = vst.msk [vmem:[#allocation5 + $0x8] sm:$0xff] %vm1013, %v1012
      %1016 = vst.msk [vmem:[%s915] sm:$0xff] %vm842, %v924
      %1017 = vst.msk [vmem:[%s915 + $0x8] sm:$0xff] %vm842, %v925
      %1018 = vrot.lane.b32.xlu0 %v775, 64
      %v1019 = vpop.permute.xlu0 %1018
      %1020 = vrot.lane.b32.xlu0 %v892, 64
      %v1021 = vpop.permute.xlu0 %1020
      %v1023 = vsel %vm776, %v1019, 0
      %v1026 = vsel %vm776, %v1021, 0
      %1028 = vmatpush.bf16.xpose.msra.mxu0 0
      %1029 = vmatpush.bf16.xpose.msra.mxu0 0
      %1030 = vmatpush.bf16.xpose.msra.mxu0 0
      %1031 = vmatpush.bf16.xpose.msra.mxu0 0
      %1032 = vmatpush.bf16.xpose.msra.mxu0 0
      %1033 = vmatpush.bf16.xpose.msra.mxu0 0
      %1034 = vmatpush.bf16.xpose.msra.mxu0 0
      %1035 = vmatpush.bf16.xpose.msra.mxu0 %v1026
      %1036 = vmatmul.bf16.gmra.mxu0 %v1023
      %v1037 = vpop.f32.mrf.mxu0
      %v1038 = vadd.f32 0.0, %v1037
      %v1039 = vpop.f32.mrf.mxu0
      %v1040 = vadd.f32 0.0, %v1039
      %1041 = vdwg.mxu0
      %s1042 = scalar_lea.vmem [#allocation3], 32
      %v1043 = vld [vmem:[%s1042] sm:$0xff]
      %v1044 = vld [vmem:[%s1042 + $0x8] sm:$0xff]
      %v1045 = vsel %vm799, %v1038, -inf
      %1046 = vmax.xlane.f32.xlu0 %v1045
      %v1047 = vpop.xlane.xlu0 %1046
      %v1048 = vsel %vm799, %v1040, -inf
      %1049 = vmax.xlane.f32.xlu0 %v1048
      %v1050 = vpop.xlane.xlu0 %1049
      %v1051 = vmax.f32 %v1043, %v1047
      %v1052 = vmax.f32 %v1044, %v1050
      %v1053 = vsub.f32 %v1043, %v1051
      %v1054 = vsub.f32 %v1044, %v1052
      %v1055 = vmul.f32 %v1053, 1.442695
      %v1056 = vpow.pop %v1055
      %v1057 = vmul.f32 %v1054, 1.442695
      %v1058 = vpow.pop %v1057
      %1060 = vset.pattern.permute.xlu0 0
      %1061 = vperm.xlu0 %1060, %v1051
      %v1062 = vpop.permute.xlu0 %1061
      %1065 = vset.pattern.permute.xlu0 0
      %1066 = vperm.xlu0 %1065, %v1052
      %v1067 = vpop.permute.xlu0 %1066
      %v1069 = vsub.f32 %v1038, %v1062
      %v1070 = vsub.f32 %v1040, %v1067
      %v1071 = vmul.f32 %v1069, 1.442695
      %v1072 = vpow.pop %v1071
      %v1073 = vmul.f32 %v1070, 1.442695
      %v1074 = vpow.pop %v1073
      %s1075 = scalar_lea.vmem [#allocation4], 32
      %v1076 = vld [vmem:[%s1075] sm:$0xff]
      %v1077 = vld [vmem:[%s1075 + $0x8] sm:$0xff]
      %v1078 = vmul.f32 %v1056, %v1076
      %v1079 = vmul.f32 %v1058, %v1077
      %v1080 = vsel %vm799, %v1072, 0.0
      %1081 = vadd.xlane.f32.xlu0 %v1080
      %v1082 = vpop.xlane.xlu0 %1081
      %v1083 = vsel %vm799, %v1074, 0.0
      %1084 = vadd.xlane.f32.xlu0 %v1083
      %v1085 = vpop.xlane.xlu0 %1084
      %v1086 = vadd.f32 %v1078, %v1082
      %v1087 = vadd.f32 %v1079, %v1085
      %1088 = vst.msk [vmem:[%s1075] sm:$0xff] %vm842, %v1086
      %1089 = vst.msk [vmem:[%s1075 + $0x8] sm:$0xff] %vm842, %v1087
      %v1090 = vpack.c.bf16 %v1074, %v1072
      %1091 = vrot.lane.b32.xlu0 %v966, 64
      %v1092 = vpop.permute.xlu0 %1091
      %v1094 = vsel %vm799, %v1090, 0
      %v1097 = vsel %vm849, %v1092, 0
      %1099 = vmatpush.bf16.msra.mxu0 0
      %1100 = vmatpush.bf16.msra.mxu0 0
      %1101 = vmatpush.bf16.msra.mxu0 0
      %1102 = vmatpush.bf16.msra.mxu0 0
      %1103 = vmatpush.bf16.msra.mxu0 0
      %1104 = vmatpush.bf16.msra.mxu0 0
      %1105 = vmatpush.bf16.msra.mxu0 0
      %1106 = vmatpush.bf16.msra.mxu0 %v1097
      %1107 = vmatmul.bf16.gmra.mxu0 %v1094
      %v1108 = vpop.f32.mrf.mxu0
      %v1109 = vadd.f32 0.0, %v1108
      %v1110 = vpop.f32.mrf.mxu0
      %v1111 = vadd.f32 0.0, %v1110
      %1112 = vdwg.mxu0
      %v1113 = vld [vmem:[#allocation5] sm:$0xff]
      %v1114 = vld [vmem:[#allocation5 + $0x8] sm:$0xff]
      %1116 = vset.pattern.permute.xlu0 0
      %1117 = vperm.xlu0 %1116, %v1056
      %v1118 = vpop.permute.xlu0 %1117
      %1121 = vset.pattern.permute.xlu0 0
      %1122 = vperm.xlu0 %1121, %v1058
      %v1123 = vpop.permute.xlu0 %1122
      %v1125 = vmul.f32 %v1118, %v1113
      %v1126 = vmul.f32 %v1123, %v1114
      %1129 = vrot.lane.b32.xlu0 %v1109, 64
      %v1130 = vpop.permute.xlu0 %1129
      %1131 = vrot.lane.b32.xlu0 %v1111, 64
      %v1132 = vpop.permute.xlu0 %1131
      %v1135 = vadd.f32 %v1125, %v1130
      %v1136 = vadd.f32 %v1126, %v1132
      %vm1137 = vcmask 785920
      %1138 = vst.msk [vmem:[#allocation5] sm:$0xff] %vm1137, %v1135
      %1139 = vst.msk [vmem:[#allocation5 + $0x8] sm:$0xff] %vm1137, %v1136
      %1140 = vst.msk [vmem:[%s1042] sm:$0xff] %vm842, %v1051
      %1141 = vst.msk [vmem:[%s1042 + $0x8] sm:$0xff] %vm842, %v1052
      %1142 = vrot.lane.b32.xlu0 %v775, 32
      %v1143 = vpop.permute.xlu0 %1142
      %1144 = vrot.lane.b32.xlu0 %v892, 32
      %v1145 = vpop.permute.xlu0 %1144
      %v1147 = vsel %vm776, %v1143, 0
      %v1150 = vsel %vm776, %v1145, 0
      %1152 = vmatpush.bf16.xpose.msra.mxu0 0
      %1153 = vmatpush.bf16.xpose.msra.mxu0 0
      %1154 = vmatpush.bf16.xpose.msra.mxu0 0
      %1155 = vmatpush.bf16.xpose.msra.mxu0 0
      %1156 = vmatpush.bf16.xpose.msra.mxu0 0
      %1157 = vmatpush.bf16.xpose.msra.mxu0 0
      %1158 = vmatpush.bf16.xpose.msra.mxu0 0
      %1159 = vmatpush.bf16.xpose.msra.mxu0 %v1150
      %1160 = vmatmul.bf16.gmra.mxu0 %v1147
      %v1161 = vpop.f32.mrf.mxu0
      %v1162 = vadd.f32 0.0, %v1161
      %v1163 = vpop.f32.mrf.mxu0
      %v1164 = vadd.f32 0.0, %v1163
      %1165 = vdwg.mxu0
      %s1166 = scalar_lea.vmem [#allocation3], 48
      %v1167 = vld [vmem:[%s1166] sm:$0xff]
      %v1168 = vld [vmem:[%s1166 + $0x8] sm:$0xff]
      %v1169 = vsel %vm799, %v1162, -inf
      %1170 = vmax.xlane.f32.xlu0 %v1169
      %v1171 = vpop.xlane.xlu0 %1170
      %v1172 = vsel %vm799, %v1164, -inf
      %1173 = vmax.xlane.f32.xlu0 %v1172
      %v1174 = vpop.xlane.xlu0 %1173
      %v1175 = vmax.f32 %v1167, %v1171
      %v1176 = vmax.f32 %v1168, %v1174
      %v1177 = vsub.f32 %v1167, %v1175
      %v1178 = vsub.f32 %v1168, %v1176
      %v1179 = vmul.f32 %v1177, 1.442695
      %v1180 = vpow.pop %v1179
      %v1181 = vmul.f32 %v1178, 1.442695
      %v1182 = vpow.pop %v1181
      %1184 = vset.pattern.permute.xlu0 0
      %1185 = vperm.xlu0 %1184, %v1175
      %v1186 = vpop.permute.xlu0 %1185
      %1189 = vset.pattern.permute.xlu0 0
      %1190 = vperm.xlu0 %1189, %v1176
      %v1191 = vpop.permute.xlu0 %1190
      %v1193 = vsub.f32 %v1162, %v1186
      %v1194 = vsub.f32 %v1164, %v1191
      %v1195 = vmul.f32 %v1193, 1.442695
      %v1196 = vpow.pop %v1195
      %v1197 = vmul.f32 %v1194, 1.442695
      %v1198 = vpow.pop %v1197
      %s1199 = scalar_lea.vmem [#allocation4], 48
      %v1200 = vld [vmem:[%s1199] sm:$0xff]
      %v1201 = vld [vmem:[%s1199 + $0x8] sm:$0xff]
      %v1202 = vmul.f32 %v1180, %v1200
      %v1203 = vmul.f32 %v1182, %v1201
      %v1204 = vsel %vm799, %v1196, 0.0
      %1205 = vadd.xlane.f32.xlu0 %v1204
      %v1206 = vpop.xlane.xlu0 %1205
      %v1207 = vsel %vm799, %v1198, 0.0
      %1208 = vadd.xlane.f32.xlu0 %v1207
      %v1209 = vpop.xlane.xlu0 %1208
      %v1210 = vadd.f32 %v1202, %v1206
      %v1211 = vadd.f32 %v1203, %v1209
      %1212 = vst.msk [vmem:[%s1199] sm:$0xff] %vm842, %v1210
      %1213 = vst.msk [vmem:[%s1199 + $0x8] sm:$0xff] %vm842, %v1211
      %v1214 = vpack.c.bf16 %v1198, %v1196
      %1215 = vrot.lane.b32.xlu0 %v966, 32
      %v1216 = vpop.permute.xlu0 %1215
      %v1218 = vsel %vm799, %v1214, 0
      %v1221 = vsel %vm849, %v1216, 0
      %1223 = vmatpush.bf16.msra.mxu0 0
      %1224 = vmatpush.bf16.msra.mxu0 0
      %1225 = vmatpush.bf16.msra.mxu0 0
      %1226 = vmatpush.bf16.msra.mxu0 0
      %1227 = vmatpush.bf16.msra.mxu0 0
      %1228 = vmatpush.bf16.msra.mxu0 0
      %1229 = vmatpush.bf16.msra.mxu0 0
      %1230 = vmatpush.bf16.msra.mxu0 %v1221
      %1231 = vmatmul.bf16.gmra.mxu0 %v1218
      %v1232 = vpop.f32.mrf.mxu0
      %v1233 = vadd.f32 0.0, %v1232
      %v1234 = vpop.f32.mrf.mxu0
      %v1235 = vadd.f32 0.0, %v1234
      %1236 = vdwg.mxu0
      %v1237 = vld [vmem:[#allocation5] sm:$0xff]
      %v1238 = vld [vmem:[#allocation5 + $0x8] sm:$0xff]
      %1240 = vset.pattern.permute.xlu0 0
      %1241 = vperm.xlu0 %1240, %v1180
      %v1242 = vpop.permute.xlu0 %1241
      %1245 = vset.pattern.permute.xlu0 0
      %1246 = vperm.xlu0 %1245, %v1182
      %v1247 = vpop.permute.xlu0 %1246
      %v1249 = vmul.f32 %v1242, %v1237
      %v1250 = vmul.f32 %v1247, %v1238
      %1253 = vrot.lane.b32.xlu0 %v1233, 96
      %v1254 = vpop.permute.xlu0 %1253
      %1255 = vrot.lane.b32.xlu0 %v1235, 96
      %v1256 = vpop.permute.xlu0 %1255
      %v1259 = vadd.f32 %v1249, %v1254
      %v1260 = vadd.f32 %v1250, %v1256
      %vm1261 = vcmask 1048320
      %1262 = vst.msk [vmem:[#allocation5] sm:$0xff] %vm1261, %v1259
      %1263 = vst.msk [vmem:[#allocation5 + $0x8] sm:$0xff] %vm1261, %v1260
      %1264 = vst.msk [vmem:[%s1166] sm:$0xff] %vm842, %v1175
      %1265 = vst.msk [vmem:[%s1166 + $0x8] sm:$0xff] %vm842, %v1176
      // Predicated region
      $region81: #{set_transformer_forward.9} parent=75 // pred_check
        %p1266 = pneg %p531
      $region82: #{set_transformer_forward.9} parent=75 // pred_check_branch
        %1268 = sbr.rel (%p1266) target = $region84
      $region83: #{set_transformer_forward.9} parent=75 // pred_region
        %v1269 = vld [vmem:[#allocation5] sm:$0xff]
        %v1270 = vld [vmem:[#allocation5 + $0x8] sm:$0xff]
        %v1271 = vld [vmem:[#allocation4] sm:$0xff]
        %v1272 = vld [vmem:[#allocation4 + $0x8] sm:$0xff]
        %v1273 = vrcp.pop %v1271
        %v1274 = vrcp.pop %v1272
        %1276 = vset.pattern.permute.xlu0 0
        %1277 = vperm.xlu0 %1276, %v1273
        %v1278 = vpop.permute.xlu0 %1277
        %1281 = vset.pattern.permute.xlu0 0
        %1282 = vperm.xlu0 %1281, %v1274
        %v1283 = vpop.permute.xlu0 %1282
        %v1285 = vmul.f32 %v1269, %v1278
        %v1286 = vmul.f32 %v1270, %v1283
        %v1287 = vld [vmem:[%s948] sm:$0xff]
        %v1288 = vld [vmem:[%s948 + $0x8] sm:$0xff]
        %v1289 = vrcp.pop %v1287
        %v1290 = vrcp.pop %v1288
        %1292 = vset.pattern.permute.xlu0 0
        %1293 = vperm.xlu0 %1292, %v1289
        %v1294 = vpop.permute.xlu0 %1293
        %1297 = vset.pattern.permute.xlu0 0
        %1298 = vperm.xlu0 %1297, %v1290
        %v1299 = vpop.permute.xlu0 %1298
        %v1301 = vmul.f32 %v1269, %v1294
        %v1302 = vmul.f32 %v1270, %v1299
        %v1303 = vld [vmem:[%s1075] sm:$0xff]
        %v1304 = vld [vmem:[%s1075 + $0x8] sm:$0xff]
        %v1305 = vrcp.pop %v1303
        %v1306 = vrcp.pop %v1304
        %1308 = vset.pattern.permute.xlu0 0
        %1309 = vperm.xlu0 %1308, %v1305
        %v1310 = vpop.permute.xlu0 %1309
        %1313 = vset.pattern.permute.xlu0 0
        %1314 = vperm.xlu0 %1313, %v1306
        %v1315 = vpop.permute.xlu0 %1314
        %v1317 = vmul.f32 %v1269, %v1310
        %v1318 = vmul.f32 %v1270, %v1315
        %v1319 = vld [vmem:[%s1199] sm:$0xff]
        %v1320 = vld [vmem:[%s1199 + $0x8] sm:$0xff]
        %v1321 = vrcp.pop %v1319
        %v1322 = vrcp.pop %v1320
        %1324 = vset.pattern.permute.xlu0 0
        %1325 = vperm.xlu0 %1324, %v1321
        %v1326 = vpop.permute.xlu0 %1325
        %1329 = vset.pattern.permute.xlu0 0
        %1330 = vperm.xlu0 %1329, %v1322
        %v1331 = vpop.permute.xlu0 %1330
        %v1333 = vmul.f32 %v1269, %v1326
        %v1334 = vmul.f32 %v1270, %v1331
        %v1335 = vsel %vm776, %v1285, %v1301
        %v1336 = vsel %vm776, %v1286, %v1302
        %vm1337 = vcmask 523264
        %v1338 = vsel %vm1337, %v1335, %v1317
        %v1339 = vsel %vm1337, %v1336, %v1318
        %vm1340 = vcmask 785408
        %v1341 = vsel %vm1340, %v1338, %v1333
        %v1342 = vsel %vm1340, %v1339, %v1334
        %v1343 = vpack.c.bf16 %v1342, %v1341
        %v1344 = vld [vmem:[%s6] sm:$0xf]
        %v1345 = vld [vmem:[%s6 + $0x4] sm:$0xf]
        %v1346 = vld [vmem:[%s6 + $0x8] sm:$0xf]
        %v1347 = vld [vmem:[%s6 + $0xc] sm:$0xf]
        %v1348 = vld [vmem:[%s6 + $0x10] sm:$0xf]
        %v1349 = vld [vmem:[%s6 + $0x14] sm:$0xf]
        %v1350 = vld [vmem:[%s6 + $0x18] sm:$0xf]
        %v1351 = vld [vmem:[%s6 + $0x1c] sm:$0xf]
        %v1352 = vld [vmem:[%s6 + $0x20] sm:$0xf]
        %v1353 = vld [vmem:[%s6 + $0x24] sm:$0xf]
        %v1354 = vld [vmem:[%s6 + $0x28] sm:$0xf]
        %v1355 = vld [vmem:[%s6 + $0x2c] sm:$0xf]
        %v1356 = vld [vmem:[%s6 + $0x30] sm:$0xf]
        %v1357 = vld [vmem:[%s6 + $0x34] sm:$0xf]
        %v1358 = vld [vmem:[%s6 + $0x38] sm:$0xf]
        %v1359 = vld [vmem:[%s6 + $0x3c] sm:$0xf]
        %v1360 = vld [vmem:[%s7] sm:$0x1]
        %v1362 = vperm.slane %v1360, 0
        %v1380 = vunpack.c.l.b16 %v1344
        %v1381 = vunpack.c.l.b16 %v1345
        %v1382 = vunpack.c.l.b16 %v1346
        %v1383 = vunpack.c.l.b16 %v1347
        %v1384 = vunpack.c.l.b16 %v1348
        %v1385 = vunpack.c.l.b16 %v1349
        %v1386 = vunpack.c.l.b16 %v1350
        %v1387 = vunpack.c.l.b16 %v1351
        %v1388 = vunpack.c.l.b16 %v1352
        %v1389 = vunpack.c.l.b16 %v1353
        %v1390 = vunpack.c.l.b16 %v1354
        %v1391 = vunpack.c.l.b16 %v1355
        %v1392 = vunpack.c.l.b16 %v1356
        %v1393 = vunpack.c.l.b16 %v1357
        %v1394 = vunpack.c.l.b16 %v1358
        %v1395 = vunpack.c.l.b16 %v1359
        %v1396 = vpack.c.b16 %v1381, %v1380
        %v1397 = vpack.c.b16 %v1383, %v1382
        %v1398 = vpack.c.b16 %v1385, %v1384
        %v1399 = vpack.c.b16 %v1387, %v1386
        %v1400 = vpack.c.b16 %v1389, %v1388
        %v1401 = vpack.c.b16 %v1391, %v1390
        %v1402 = vpack.c.b16 %v1393, %v1392
        %v1403 = vpack.c.b16 %v1395, %v1394
        %1412 = vmatpush.bf16.msra.mxu0 %v1403
        %1413 = vmatpush.bf16.msra.mxu0 %v1402
        %1414 = vmatpush.bf16.msra.mxu0 %v1401
        %1415 = vmatpush.bf16.msra.mxu0 %v1400
        %1416 = vmatpush.bf16.msra.mxu0 %v1399
        %1417 = vmatpush.bf16.msra.mxu0 %v1398
        %1418 = vmatpush.bf16.msra.mxu0 %v1397
        %1419 = vmatpush.bf16.msra.mxu0 %v1396
        %1420 = vmatmul.bf16.gmra.mxu0 %v1343
        %v1421 = vpop.f32.mrf.mxu0
        %v1422 = vadd.f32 %v1362, %v1421
        %v1423 = vpop.f32.mrf.mxu0
        %v1424 = vadd.f32 %v1362, %v1423
        %1425 = vdwg.mxu0
        %v1426 = vadd.f32 %v529, %v1422
        %v1427 = vadd.f32 %v530, %v1424
        %v1428 = vld [vmem:[%s8] sm:$0x1]
        %v1429 = vld [vmem:[%s9] sm:$0x1]
        %1430 = vadd.xlane.f32.xlu0 %v1426
        %v1431 = vpop.xlane.xlu0 %1430
        %1432 = vadd.xlane.f32.xlu0 %v1427
        %v1433 = vpop.xlane.xlu0 %1432
        %v1434 = vrcp.pop 128.0
        %v1435 = vmul.f32 128.0, %v1434
        %v1436 = vsub.f32 1.0, %v1435
        %v1437 = vmul.f32 %v1434, %v1436
        %v1438 = vadd.f32 %v1434, %v1437
        %vm1439 = vweird.f32 %v1434
        %v1440 = vsel %vm1439, %v1434, %v1438
        %v1441 = vmul.f32 %v1431, %v1440
        %v1442 = vmul.f32 %v1433, %v1440
        %v1443 = vsub.f32 %v1426, %v1441
        %v1444 = vsub.f32 %v1427, %v1442
        %v1445 = vmul.f32 %v1443, %v1443
        %v1446 = vmul.f32 %v1444, %v1444
        %1447 = vadd.xlane.f32.xlu0 %v1445
        %v1448 = vpop.xlane.xlu0 %1447
        %1449 = vadd.xlane.f32.xlu0 %v1446
        %v1450 = vpop.xlane.xlu0 %1449
        %v1451 = vmul.f32 %v1448, %v1440
        %v1452 = vmul.f32 %v1450, %v1440
        %v1453 = vadd.f32 %v1451, 1e-05
        %v1454 = vadd.f32 %v1452, 1e-05
        %v1455 = vrsqrt.pop %v1453
        %v1456 = vmul.f32 %v1455, %v1453
        %v1457 = vmul.f32 %v1456, %v1455
        %v1458 = vmul.f32 0.5, %v1457
        %v1459 = vsub.f32 1.5, %v1458
        %v1460 = vmul.f32 %v1455, %v1459
        %vm1461 = vweird.f32 %v1453
        %vm1462 = vweird.f32 %v1455
        %vm1463 = vmor %vm1461, %vm1462
        %v1464 = vsel %vm1463, %v1455, %v1460
        %v1465 = vrsqrt.pop %v1454
        %v1466 = vmul.f32 %v1465, %v1454
        %v1467 = vmul.f32 %v1466, %v1465
        %v1468 = vmul.f32 0.5, %v1467
        %v1469 = vsub.f32 1.5, %v1468
        %v1470 = vmul.f32 %v1465, %v1469
        %vm1471 = vweird.f32 %v1454
        %vm1472 = vweird.f32 %v1465
        %vm1473 = vmor %vm1471, %vm1472
        %v1474 = vsel %vm1473, %v1465, %v1470
        %v1475 = vmul.f32 %v1443, %v1464
        %v1476 = vmul.f32 %v1444, %v1474
        %v1478 = vperm.slane %v1428, 0
        %v1480 = vmul.f32 %v1475, %v1478
        %v1481 = vmul.f32 %v1476, %v1478
        %v1483 = vperm.slane %v1429, 0
        %v1485 = vadd.f32 %v1480, %v1483
        %v1486 = vadd.f32 %v1481, %v1483
        %v1487 = vpack.c.bf16 %v1486, %v1485
        %v1488 = vld [vmem:[%s10] sm:$0xf]
        %v1489 = vld [vmem:[%s10 + $0x4] sm:$0xf]
        %v1490 = vld [vmem:[%s10 + $0x8] sm:$0xf]
        %v1491 = vld [vmem:[%s10 + $0xc] sm:$0xf]
        %v1492 = vld [vmem:[%s10 + $0x10] sm:$0xf]
        %v1493 = vld [vmem:[%s10 + $0x14] sm:$0xf]
        %v1494 = vld [vmem:[%s10 + $0x18] sm:$0xf]
        %v1495 = vld [vmem:[%s10 + $0x1c] sm:$0xf]
        %v1496 = vld [vmem:[%s10 + $0x20] sm:$0xf]
        %v1497 = vld [vmem:[%s10 + $0x24] sm:$0xf]
        %v1498 = vld [vmem:[%s10 + $0x28] sm:$0xf]
        %v1499 = vld [vmem:[%s10 + $0x2c] sm:$0xf]
        %v1500 = vld [vmem:[%s10 + $0x30] sm:$0xf]
        %v1501 = vld [vmem:[%s10 + $0x34] sm:$0xf]
        %v1502 = vld [vmem:[%s10 + $0x38] sm:$0xf]
        %v1503 = vld [vmem:[%s10 + $0x3c] sm:$0xf]
        %v1504 = vld [vmem:[%s11] sm:$0x1]
        %v1506 = vperm.slane %v1504, 0
        %v1524 = vunpack.c.l.b16 %v1488
        %v1525 = vunpack.c.l.b16 %v1489
        %v1526 = vunpack.c.l.b16 %v1490
        %v1527 = vunpack.c.l.b16 %v1491
        %v1528 = vunpack.c.l.b16 %v1492
        %v1529 = vunpack.c.l.b16 %v1493
        %v1530 = vunpack.c.l.b16 %v1494
        %v1531 = vunpack.c.l.b16 %v1495
        %v1532 = vunpack.c.l.b16 %v1496
        %v1533 = vunpack.c.l.b16 %v1497
        %v1534 = vunpack.c.l.b16 %v1498
        %v1535 = vunpack.c.l.b16 %v1499
        %v1536 = vunpack.c.l.b16 %v1500
        %v1537 = vunpack.c.l.b16 %v1501
        %v1538 = vunpack.c.l.b16 %v1502
        %v1539 = vunpack.c.l.b16 %v1503
        %v1540 = vpack.c.b16 %v1525, %v1524
        %v1541 = vpack.c.b16 %v1527, %v1526
        %v1542 = vpack.c.b16 %v1529, %v1528
        %v1543 = vpack.c.b16 %v1531, %v1530
        %v1544 = vpack.c.b16 %v1533, %v1532
        %v1545 = vpack.c.b16 %v1535, %v1534
        %v1546 = vpack.c.b16 %v1537, %v1536
        %v1547 = vpack.c.b16 %v1539, %v1538
        %1556 = vmatpush.bf16.msra.mxu0 %v1547
        %1557 = vmatpush.bf16.msra.mxu0 %v1546
        %1558 = vmatpush.bf16.msra.mxu0 %v1545
        %1559 = vmatpush.bf16.msra.mxu0 %v1544
        %1560 = vmatpush.bf16.msra.mxu0 %v1543
        %1561 = vmatpush.bf16.msra.mxu0 %v1542
        %1562 = vmatpush.bf16.msra.mxu0 %v1541
        %1563 = vmatpush.bf16.msra.mxu0 %v1540
        %1564 = vmatmul.bf16.gmra.mxu0 %v1487
        %v1565 = vpop.f32.mrf.mxu0
        %v1566 = vadd.f32 %v1506, %v1565
        %v1567 = vpop.f32.mrf.mxu0
        %v1568 = vadd.f32 %v1506, %v1567
        %1569 = vdwg.mxu0
        %v1570 = vmax.f32 %v1566, 0.0
        %v1571 = vmax.f32 %v1568, 0.0
        %v1572 = vpack.c.bf16 %v1571, %v1570
        %s1573 = scalar_lea.vmem %s10, 64
        %v1574 = vld [vmem:[%s1573] sm:$0xf]
        %v1575 = vld [vmem:[%s1573 + $0x4] sm:$0xf]
        %v1576 = vld [vmem:[%s1573 + $0x8] sm:$0xf]
        %v1577 = vld [vmem:[%s1573 + $0xc] sm:$0xf]
        %v1578 = vld [vmem:[%s1573 + $0x10] sm:$0xf]
        %v1579 = vld [vmem:[%s1573 + $0x14] sm:$0xf]
        %v1580 = vld [vmem:[%s1573 + $0x18] sm:$0xf]
        %v1581 = vld [vmem:[%s1573 + $0x1c] sm:$0xf]
        %v1582 = vld [vmem:[%s1573 + $0x20] sm:$0xf]
        %v1583 = vld [vmem:[%s1573 + $0x24] sm:$0xf]
        %v1584 = vld [vmem:[%s1573 + $0x28] sm:$0xf]
        %v1585 = vld [vmem:[%s1573 + $0x2c] sm:$0xf]
        %v1586 = vld [vmem:[%s1573 + $0x30] sm:$0xf]
        %v1587 = vld [vmem:[%s1573 + $0x34] sm:$0xf]
        %v1588 = vld [vmem:[%s1573 + $0x38] sm:$0xf]
        %v1589 = vld [vmem:[%s1573 + $0x3c] sm:$0xf]
        %s1590 = scalar_lea.vmem %s11, 1
        %v1591 = vld [vmem:[%s1590] sm:$0x1]
        %v1593 = vperm.slane %v1591, 0
        %v1611 = vunpack.c.l.b16 %v1574
        %v1612 = vunpack.c.l.b16 %v1575
        %v1613 = vunpack.c.l.b16 %v1576
        %v1614 = vunpack.c.l.b16 %v1577
        %v1615 = vunpack.c.l.b16 %v1578
        %v1616 = vunpack.c.l.b16 %v1579
        %v1617 = vunpack.c.l.b16 %v1580
        %v1618 = vunpack.c.l.b16 %v1581
        %v1619 = vunpack.c.l.b16 %v1582
        %v1620 = vunpack.c.l.b16 %v1583
        %v1621 = vunpack.c.l.b16 %v1584
        %v1622 = vunpack.c.l.b16 %v1585
        %v1623 = vunpack.c.l.b16 %v1586
        %v1624 = vunpack.c.l.b16 %v1587
        %v1625 = vunpack.c.l.b16 %v1588
        %v1626 = vunpack.c.l.b16 %v1589
        %v1627 = vpack.c.b16 %v1612, %v1611
        %v1628 = vpack.c.b16 %v1614, %v1613
        %v1629 = vpack.c.b16 %v1616, %v1615
        %v1630 = vpack.c.b16 %v1618, %v1617
        %v1631 = vpack.c.b16 %v1620, %v1619
        %v1632 = vpack.c.b16 %v1622, %v1621
        %v1633 = vpack.c.b16 %v1624, %v1623
        %v1634 = vpack.c.b16 %v1626, %v1625
        %1643 = vmatpush.bf16.msra.mxu0 %v1634
        %1644 = vmatpush.bf16.msra.mxu0 %v1633
        %1645 = vmatpush.bf16.msra.mxu0 %v1632
        %1646 = vmatpush.bf16.msra.mxu0 %v1631
        %1647 = vmatpush.bf16.msra.mxu0 %v1630
        %1648 = vmatpush.bf16.msra.mxu0 %v1629
        %1649 = vmatpush.bf16.msra.mxu0 %v1628
        %1650 = vmatpush.bf16.msra.mxu0 %v1627
        %1651 = vmatmul.bf16.gmra.mxu0 %v1572
        %v1652 = vpop.f32.mrf.mxu0
        %v1653 = vadd.f32 %v1593, %v1652
        %v1654 = vpop.f32.mrf.mxu0
        %v1655 = vadd.f32 %v1593, %v1654
        %1656 = vdwg.mxu0
        %v1657 = vmax.f32 %v1653, 0.0
        %v1658 = vmax.f32 %v1655, 0.0
        %v1659 = vpack.c.bf16 %v1658, %v1657
        %s1660 = scalar_lea.vmem %s10, 128
        %v1661 = vld [vmem:[%s1660] sm:$0xf]
        %v1662 = vld [vmem:[%s1660 + $0x4] sm:$0xf]
        %v1663 = vld [vmem:[%s1660 + $0x8] sm:$0xf]
        %v1664 = vld [vmem:[%s1660 + $0xc] sm:$0xf]
        %v1665 = vld [vmem:[%s1660 + $0x10] sm:$0xf]
        %v1666 = vld [vmem:[%s1660 + $0x14] sm:$0xf]
        %v1667 = vld [vmem:[%s1660 + $0x18] sm:$0xf]
        %v1668 = vld [vmem:[%s1660 + $0x1c] sm:$0xf]
        %v1669 = vld [vmem:[%s1660 + $0x20] sm:$0xf]
        %v1670 = vld [vmem:[%s1660 + $0x24] sm:$0xf]
        %v1671 = vld [vmem:[%s1660 + $0x28] sm:$0xf]
        %v1672 = vld [vmem:[%s1660 + $0x2c] sm:$0xf]
        %v1673 = vld [vmem:[%s1660 + $0x30] sm:$0xf]
        %v1674 = vld [vmem:[%s1660 + $0x34] sm:$0xf]
        %v1675 = vld [vmem:[%s1660 + $0x38] sm:$0xf]
        %v1676 = vld [vmem:[%s1660 + $0x3c] sm:$0xf]
        %s1677 = scalar_lea.vmem %s11, 2
        %v1678 = vld [vmem:[%s1677] sm:$0x1]
        %v1680 = vperm.slane %v1678, 0
        %v1698 = vunpack.c.l.b16 %v1661
        %v1699 = vunpack.c.l.b16 %v1662
        %v1700 = vunpack.c.l.b16 %v1663
        %v1701 = vunpack.c.l.b16 %v1664
        %v1702 = vunpack.c.l.b16 %v1665
        %v1703 = vunpack.c.l.b16 %v1666
        %v1704 = vunpack.c.l.b16 %v1667
        %v1705 = vunpack.c.l.b16 %v1668
        %v1706 = vunpack.c.l.b16 %v1669
        %v1707 = vunpack.c.l.b16 %v1670
        %v1708 = vunpack.c.l.b16 %v1671
        %v1709 = vunpack.c.l.b16 %v1672
        %v1710 = vunpack.c.l.b16 %v1673
        %v1711 = vunpack.c.l.b16 %v1674
        %v1712 = vunpack.c.l.b16 %v1675
        %v1713 = vunpack.c.l.b16 %v1676
        %v1714 = vpack.c.b16 %v1699, %v1698
        %v1715 = vpack.c.b16 %v1701, %v1700
        %v1716 = vpack.c.b16 %v1703, %v1702
        %v1717 = vpack.c.b16 %v1705, %v1704
        %v1718 = vpack.c.b16 %v1707, %v1706
        %v1719 = vpack.c.b16 %v1709, %v1708
        %v1720 = vpack.c.b16 %v1711, %v1710
        %v1721 = vpack.c.b16 %v1713, %v1712
        %1730 = vmatpush.bf16.msra.mxu0 %v1721
        %1731 = vmatpush.bf16.msra.mxu0 %v1720
        %1732 = vmatpush.bf16.msra.mxu0 %v1719
        %1733 = vmatpush.bf16.msra.mxu0 %v1718
        %1734 = vmatpush.bf16.msra.mxu0 %v1717
        %1735 = vmatpush.bf16.msra.mxu0 %v1716
        %1736 = vmatpush.bf16.msra.mxu0 %v1715
        %1737 = vmatpush.bf16.msra.mxu0 %v1714
        %1738 = vmatmul.bf16.gmra.mxu0 %v1659
        %v1739 = vpop.f32.mrf.mxu0
        %v1740 = vadd.f32 %v1680, %v1739
        %v1741 = vpop.f32.mrf.mxu0
        %v1742 = vadd.f32 %v1680, %v1741
        %1743 = vdwg.mxu0
        %v1744 = vmax.f32 %v1740, 0.0
        %v1745 = vmax.f32 %v1742, 0.0
        %v1746 = vadd.f32 %v1485, %v1744
        %v1747 = vadd.f32 %v1486, %v1745
        %v1748 = vld [vmem:[%s12] sm:$0x1]
        %v1749 = vld [vmem:[%s13] sm:$0x1]
        %1750 = vadd.xlane.f32.xlu0 %v1746
        %v1751 = vpop.xlane.xlu0 %1750
        %1752 = vadd.xlane.f32.xlu0 %v1747
        %v1753 = vpop.xlane.xlu0 %1752
        %v1754 = vmul.f32 %v1751, %v1440
        %v1755 = vmul.f32 %v1753, %v1440
        %v1756 = vsub.f32 %v1746, %v1754
        %v1757 = vsub.f32 %v1747, %v1755
        %v1758 = vmul.f32 %v1756, %v1756
        %v1759 = vmul.f32 %v1757, %v1757
        %1760 = vadd.xlane.f32.xlu0 %v1758
        %v1761 = vpop.xlane.xlu0 %1760
        %1762 = vadd.xlane.f32.xlu0 %v1759
        %v1763 = vpop.xlane.xlu0 %1762
        %v1764 = vmul.f32 %v1761, %v1440
        %v1765 = vmul.f32 %v1763, %v1440
        %v1766 = vadd.f32 %v1764, 1e-05
        %v1767 = vadd.f32 %v1765, 1e-05
        %v1768 = vrsqrt.pop %v1766
        %v1769 = vmul.f32 %v1768, %v1766
        %v1770 = vmul.f32 %v1769, %v1768
        %v1771 = vmul.f32 0.5, %v1770
        %v1772 = vsub.f32 1.5, %v1771
        %v1773 = vmul.f32 %v1768, %v1772
        %vm1774 = vweird.f32 %v1766
        %vm1775 = vweird.f32 %v1768
        %vm1776 = vmor %vm1774, %vm1775
        %v1777 = vsel %vm1776, %v1768, %v1773
        %v1778 = vrsqrt.pop %v1767
        %v1779 = vmul.f32 %v1778, %v1767
        %v1780 = vmul.f32 %v1779, %v1778
        %v1781 = vmul.f32 0.5, %v1780
        %v1782 = vsub.f32 1.5, %v1781
        %v1783 = vmul.f32 %v1778, %v1782
        %vm1784 = vweird.f32 %v1767
        %vm1785 = vweird.f32 %v1778
        %vm1786 = vmor %vm1784, %vm1785
        %v1787 = vsel %vm1786, %v1778, %v1783
        %v1788 = vmul.f32 %v1756, %v1777
        %v1789 = vmul.f32 %v1757, %v1787
        %v1791 = vperm.slane %v1748, 0
        %v1793 = vmul.f32 %v1788, %v1791
        %v1794 = vmul.f32 %v1789, %v1791
        %v1796 = vperm.slane %v1749, 0
        %v1798 = vadd.f32 %v1793, %v1796
        %v1799 = vadd.f32 %v1794, %v1796
        %1800 = vst [vmem:[%s526] sm:$0xff] %v1798
        %1801 = vst [vmem:[%s526 + $0x8] sm:$0xff] %v1799
      $region84: #{set_transformer_forward.9} parent=75 // pred_fallthru
        _
      %s1802 = smul.u32 2, %s31
      %p1803 = scmp.lt.s32.totalorder %s30, 1
      %s1804 = scalar_select %p1803, %s30, 1
      %p1805 = scmp.lt.s32.totalorder %s1802, 1
      %s1806 = scalar_select %p1805, %s1802, 1
      %s1807 = smul.addr %s1804, 2
      %s1808 = sadd.s32 %s1806, %s1807
      %s1809 = smul.addr %s1808, 8
      %s1810 = scalar_lea.vmem %s14, %s1809
      // Predicated region
      $region85: #{set_transformer_forward.9} parent=75 // pred_check
        %p1811 = pneg %p370
      $region86: #{set_transformer_forward.9} parent=75 // pred_check_branch
        %1813 = sbr.rel (%p1811) target = $region88
      $region87: #{set_transformer_forward.9} parent=75 // pred_region
        %s1814 = smul.u32 2, %s31
      $region88: #{set_transformer_forward.9} parent=75 // pred_fallthru
        _
    $region76: #{set_transformer_forward.9} parent=5 // pred_fallthru
      _
    %p1815 = scmp.le.s32.totalorder 2, %s20
    // Predicated region
    $region89: #{set_transformer_forward.9} parent=5 // pred_check
      %p1816 = pneg %p1815
    $region90: #{set_transformer_forward.9} parent=5 // pred_check_branch
      %1818 = sbr.rel (%p1816) target = $region92
    $region91: #{set_transformer_forward.9} parent=5 // pred_region
      %s1819 = ssub.s32 %s20, 2
      // Predicated region
      $region93: #{set_transformer_forward.9} parent=91 // pred_check
        %p1820 = pneg %p376
      $region94: #{set_transformer_forward.9} parent=91 // pred_check_branch
        %1822 = sbr.rel (%p1820) target = $region96
      $region95: #{set_transformer_forward.9} parent=91 // pred_region
        %s1823 = smul.u32 2, %s34
        %p1824 = scmp.lt.s32.totalorder %s33, 1
        %s1825 = scalar_select %p1824, %s33, 1
        %p1826 = scmp.lt.s32.totalorder %s1823, 1
        %s1827 = scalar_select %p1826, %s1823, 1
        %s1828 = smul.addr %s1825, 2
        %s1829 = sadd.s32 %s1827, %s1828
        %s1830 = smul.addr %s1829, 8
        %s1831 = scalar_lea.vmem %s14, %s1830
      $region96: #{set_transformer_forward.9} parent=91 // pred_fallthru
        _
    $region92: #{set_transformer_forward.9} parent=5 // pred_fallthru
      _
  $region6: #{set_transformer_forward.9} parent=0 // loop_footer
    %s24 = sadd.s32 1, %s20
  $region7: #{set_transformer_forward.9} parent=0 // loop_footer_branch
    %19 = sbr.rel target = $region3
  $region8: #{set_transformer_forward.9} parent=0 // loop_exit
    _

// kernel: set_transformer_forward.13
$region0: #{set_transformer_forward.13}
  #allocation0 [shape = 'u32[]', space=smem, size = 0x4, offset = 0x4, fixed_abs, tag = 'smem constant byte address 0x4 - core index']
  #allocation1 [shape = 'u32[72,128]{1,0:T(1,128)}', space=vmem, size = 0x9000, scoped, tag = 'internal scratch']
  #allocation2 [shape = 'f32[4,128]{1,0:T(4,128)}', space=vmem, size = 0x800, scoped, tag = 'scratch operand']
  #allocation3 [shape = 'f32[4,4,1]{2,1,0:T(4,128)}', space=vmem, size = 0x2000, scoped, tag = 'scratch operand']
  #allocation4 [shape = 'f32[4,4,1]{2,1,0:T(4,128)}', space=vmem, size = 0x2000, scoped, tag = 'scratch operand']
  #allocation5 [shape = 'f32[4,128]{1,0:T(4,128)}', space=vmem, size = 0x800, scoped, tag = 'scratch operand']
  %s0 = inlined_call_operand.vmem [shape: f32[1,4,128], index: 0, kind: input, shape index: {}]
  %s1 = inlined_call_operand.vmem [shape: f32[2,8,128], index: 1, kind: input, shape index: {}]
  %s2 = inlined_call_operand.vmem [shape: bf16[128,128], index: 2, kind: input, shape index: {}]
  %s3 = inlined_call_operand.vmem [shape: f32[1,128], index: 3, kind: input, shape index: {}]
  %s4 = inlined_call_operand.vmem [shape: bf16[128,256], index: 4, kind: input, shape index: {}]
  %s5 = inlined_call_operand.vmem [shape: f32[1,256], index: 5, kind: input, shape index: {}]
  %s6 = inlined_call_operand.vmem [shape: bf16[128,128], index: 6, kind: input, shape index: {}]
  %s7 = inlined_call_operand.vmem [shape: f32[1,128], index: 7, kind: input, shape index: {}]
  %s8 = inlined_call_operand.vmem [shape: f32[1,128], index: 8, kind: input, shape index: {}]
  %s9 = inlined_call_operand.vmem [shape: f32[1,128], index: 9, kind: input, shape index: {}]
  %s10 = inlined_call_operand.vmem [shape: bf16[3,128,128], index: 10, kind: input, shape index: {}]
  %s11 = inlined_call_operand.vmem [shape: f32[3,1,128], index: 11, kind: input, shape index: {}]
  %s12 = inlined_call_operand.vmem [shape: f32[1,128], index: 12, kind: input, shape index: {}]
  %s13 = inlined_call_operand.vmem [shape: f32[1,128], index: 13, kind: input, shape index: {}]
  %s14 = inlined_call_operand.vmem [shape: f32[2,4,128], index: 14, kind: output, shape index: {}]
  %s15 = sld [smem:[#allocation0]]
  $region97: #{set_transformer_forward.13} parent=0
    _
  %s17 = ssub.s32 1, %s15
  %s18 = scalar_select 0, %s17, %s15
  loop: start=0, step=1, limit=4
  $region2: #{set_transformer_forward.13} parent=0 // loop_pre_header
    _
  $region3: #{set_transformer_forward.13} parent=0 // loop_header
    %s20 = sphi 0, %s24
    %p21 = scmp.ge.s32.totalorder %s20, 4
    %s27 = sphi 0, %s46
    %s28 = sphi 0, %s42
    %s29 = sphi 0, %s38
    %s30 = sphi 0, %s27
    %s31 = sphi 0, %s28
    %s32 = sphi 0, %s29
    %s33 = sphi 0, %s30
    %s34 = sphi 0, %s31
    %s35 = sphi 0, %s32
    %s49 = sphi 0, %s51
    %s52 = sphi 0, %s49
    %s53 = sphi 0, %s52
    %s69 = sphi 0, %s53
    %s77 = sphi 0, %s79
    %s80 = sphi 0, %s77
    %s81 = sphi 0, %s80
    %s97 = sphi 0, %s81
    %s101 = sphi 0, %s101
    %s103 = sphi 0, %s101
    %s104 = sphi 0, %s103
    %s118 = sphi 0, %s104
    %s122 = sphi 0, %s122
    %s124 = sphi 0, %s122
    %s125 = sphi 0, %s124
    %s139 = sphi 0, %s125
    %s143 = sphi 0, %s143
    %s145 = sphi 0, %s143
    %s146 = sphi 0, %s145
    %s160 = sphi 0, %s146
    %s164 = sphi 0, %s164
    %s166 = sphi 0, %s164
    %s167 = sphi 0, %s166
    %s181 = sphi 0, %s167
    %s185 = sphi 0, %s185
    %s187 = sphi 0, %s185
    %s188 = sphi 0, %s187
    %s202 = sphi 0, %s188
    %s206 = sphi 0, %s206
    %s208 = sphi 0, %s206
    %s209 = sphi 0, %s208
    %s223 = sphi 0, %s209
    %s227 = sphi 0, %s227
    %s229 = sphi 0, %s227
    %s230 = sphi 0, %s229
    %s244 = sphi 0, %s230
    %s248 = sphi 0, %s248
    %s250 = sphi 0, %s248
    %s251 = sphi 0, %s250
    %s265 = sphi 0, %s251
    %s269 = sphi 0, %s269
    %s271 = sphi 0, %s269
    %s272 = sphi 0, %s271
    %s286 = sphi 0, %s272
    %s290 = sphi 0, %s290
    %s292 = sphi 0, %s290
    %s293 = sphi 0, %s292
    %s307 = sphi 0, %s293
    %s311 = sphi 0, %s311
    %s313 = sphi 0, %s311
    %s314 = sphi 0, %s313
    %s328 = sphi 0, %s314
    %s332 = sphi 0, %s332
    %s334 = sphi 0, %s332
    %s335 = sphi 0, %s334
    %s349 = sphi 0, %s335
    %s357 = sphi 0, %s359
    %s360 = sphi 0, %s357
    %s361 = sphi 0, %s360
    %s377 = sphi 0, %s361
  $region4: #{set_transformer_forward.13} parent=0 // loop_header_branch
    %23 = sbr.rel (%p21) target = $region8
  $region5: #{set_transformer_forward.13} parent=0 // loop_body
    %s25 = ssub.s32 %s20, 1
    %s26 = ssub.s32 %s20, 2
    %s36 = sadd.s32 1, %s29
    %p37 = scmp.ge.s32.totalorder %s36, 1
    %s38 = scalar_select %p37, 0, %s36
    %s39 = sadd.s32 1, %s28
    %s40 = scalar_select %p37, %s39, %s28
    %p41 = scmp.ge.s32.totalorder %s40, 1
    %s42 = scalar_select %p41, 0, %s40
    %s43 = sadd.s32 1, %s27
    %s44 = scalar_select %p41, %s43, %s27
    %p45 = scmp.ge.s32.totalorder %s44, 2
    %s46 = scalar_select %p45, 0, %s44
    %s47 = ssub.s32 %s28, %s42
    %p48 = scmp.eq.s32.totalorder %s47, 0
    %s50 = sadd.s32 %s49, 1
    %s51 = scalar_select %p48, %s49, %s50
    %p54 = pneg %p48
    %p55 = scmp.eq.s32.totalorder %s20, 1
    %p56 = por %p54, %p55
    %p57 = scmp.ne.s32.totalorder %s49, %s52
    %p58 = scmp.eq.s32.totalorder %s20, 0
    %p59 = por %p57, %p58
    %p60 = scmp.ne.s32.totalorder %s49, %s52
    %p61 = scmp.eq.s32.totalorder %s25, 1
    %p62 = por %p60, %p61
    %p63 = scmp.ne.s32.totalorder %s52, %s53
    %p64 = scmp.eq.s32.totalorder %s25, 0
    %p65 = por %p63, %p64
    %p66 = scmp.ne.s32.totalorder %s52, %s53
    %p67 = scmp.eq.s32.totalorder %s26, 1
    %p68 = por %p66, %p67
    %p70 = scmp.ne.s32.totalorder %s53, %s69
    %p71 = scmp.eq.s32.totalorder %s26, 0
    %p72 = por %p70, %p71
    %s73 = ssub.s32 %s27, %s46
    %s74 = ssub.s32 %s29, %s38
    %s75 = sor.u32 %s73, %s74
    %p76 = scmp.eq.s32.totalorder %s75, 0
    %s78 = sadd.s32 %s77, 1
    %s79 = scalar_select %p76, %s77, %s78
    %p82 = pneg %p76
    %p83 = scmp.eq.s32.totalorder %s20, 1
    %p84 = por %p82, %p83
    %p85 = scmp.ne.s32.totalorder %s77, %s80
    %p86 = scmp.eq.s32.totalorder %s20, 0
    %p87 = por %p85, %p86
    %p88 = scmp.ne.s32.totalorder %s77, %s80
    %p89 = scmp.eq.s32.totalorder %s25, 1
    %p90 = por %p88, %p89
    %p91 = scmp.ne.s32.totalorder %s80, %s81
    %p92 = scmp.eq.s32.totalorder %s25, 0
    %p93 = por %p91, %p92
    %p94 = scmp.ne.s32.totalorder %s80, %s81
    %p95 = scmp.eq.s32.totalorder %s26, 1
    %p96 = por %p94, %p95
    %p98 = scmp.ne.s32.totalorder %s81, %s97
    %p99 = scmp.eq.s32.totalorder %s26, 0
    %p100 = por %p98, %p99
    %s102 = sadd.s32 %s101, 1
    %p105 = scmp.eq.s32.totalorder %s20, 1
    %p106 = scmp.ne.s32.totalorder %s101, %s103
    %p107 = scmp.eq.s32.totalorder %s20, 0
    %p108 = por %p106, %p107
    %p109 = scmp.ne.s32.totalorder %s101, %s103
    %p110 = scmp.eq.s32.totalorder %s25, 1
    %p111 = por %p109, %p110
    %p112 = scmp.ne.s32.totalorder %s103, %s104
    %p113 = scmp.eq.s32.totalorder %s25, 0
    %p114 = por %p112, %p113
    %p115 = scmp.ne.s32.totalorder %s103, %s104
    %p116 = scmp.eq.s32.totalorder %s26, 1
    %p117 = por %p115, %p116
    %p119 = scmp.ne.s32.totalorder %s104, %s118
    %p120 = scmp.eq.s32.totalorder %s26, 0
    %p121 = por %p119, %p120
    %s123 = sadd.s32 %s122, 1
    %p126 = scmp.eq.s32.totalorder %s20, 1
    %p127 = scmp.ne.s32.totalorder %s122, %s124
    %p128 = scmp.eq.s32.totalorder %s20, 0
    %p129 = por %p127, %p128
    %p130 = scmp.ne.s32.totalorder %s122, %s124
    %p131 = scmp.eq.s32.totalorder %s25, 1
    %p132 = por %p130, %p131
    %p133 = scmp.ne.s32.totalorder %s124, %s125
    %p134 = scmp.eq.s32.totalorder %s25, 0
    %p135 = por %p133, %p134
    %p136 = scmp.ne.s32.totalorder %s124, %s125
    %p137 = scmp.eq.s32.totalorder %s26, 1
    %p138 = por %p136, %p137
    %p140 = scmp.ne.s32.totalorder %s125, %s139
    %p141 = scmp.eq.s32.totalorder %s26, 0
    %p142 = por %p140, %p141
    %s144 = sadd.s32 %s143, 1
    %p147 = scmp.eq.s32.totalorder %s20, 1
    %p148 = scmp.ne.s32.totalorder %s143, %s145
    %p149 = scmp.eq.s32.totalorder %s20, 0
    %p150 = por %p148, %p149
    %p151 = scmp.ne.s32.totalorder %s143, %s145
    %p152 = scmp.eq.s32.totalorder %s25, 1
    %p153 = por %p151, %p152
    %p154 = scmp.ne.s32.totalorder %s145, %s146
    %p155 = scmp.eq.s32.totalorder %s25, 0
    %p156 = por %p154, %p155
    %p157 = scmp.ne.s32.totalorder %s145, %s146
    %p158 = scmp.eq.s32.totalorder %s26, 1
    %p159 = por %p157, %p158
    %p161 = scmp.ne.s32.totalorder %s146, %s160
    %p162 = scmp.eq.s32.totalorder %s26, 0
    %p163 = por %p161, %p162
    %s165 = sadd.s32 %s164, 1
    %p168 = scmp.eq.s32.totalorder %s20, 1
    %p169 = scmp.ne.s32.totalorder %s164, %s166
    %p170 = scmp.eq.s32.totalorder %s20, 0
    %p171 = por %p169, %p170
    %p172 = scmp.ne.s32.totalorder %s164, %s166
    %p173 = scmp.eq.s32.totalorder %s25, 1
    %p174 = por %p172, %p173
    %p175 = scmp.ne.s32.totalorder %s166, %s167
    %p176 = scmp.eq.s32.totalorder %s25, 0
    %p177 = por %p175, %p176
    %p178 = scmp.ne.s32.totalorder %s166, %s167
    %p179 = scmp.eq.s32.totalorder %s26, 1
    %p180 = por %p178, %p179
    %p182 = scmp.ne.s32.totalorder %s167, %s181
    %p183 = scmp.eq.s32.totalorder %s26, 0
    %p184 = por %p182, %p183
    %s186 = sadd.s32 %s185, 1
    %p189 = scmp.eq.s32.totalorder %s20, 1
    %p190 = scmp.ne.s32.totalorder %s185, %s187
    %p191 = scmp.eq.s32.totalorder %s20, 0
    %p192 = por %p190, %p191
    %p193 = scmp.ne.s32.totalorder %s185, %s187
    %p194 = scmp.eq.s32.totalorder %s25, 1
    %p195 = por %p193, %p194
    %p196 = scmp.ne.s32.totalorder %s187, %s188
    %p197 = scmp.eq.s32.totalorder %s25, 0
    %p198 = por %p196, %p197
    %p199 = scmp.ne.s32.totalorder %s187, %s188
    %p200 = scmp.eq.s32.totalorder %s26, 1
    %p201 = por %p199, %p200
    %p203 = scmp.ne.s32.totalorder %s188, %s202
    %p204 = scmp.eq.s32.totalorder %s26, 0
    %p205 = por %p203, %p204
    %s207 = sadd.s32 %s206, 1
    %p210 = scmp.eq.s32.totalorder %s20, 1
    %p211 = scmp.ne.s32.totalorder %s206, %s208
    %p212 = scmp.eq.s32.totalorder %s20, 0
    %p213 = por %p211, %p212
    %p214 = scmp.ne.s32.totalorder %s206, %s208
    %p215 = scmp.eq.s32.totalorder %s25, 1
    %p216 = por %p214, %p215
    %p217 = scmp.ne.s32.totalorder %s208, %s209
    %p218 = scmp.eq.s32.totalorder %s25, 0
    %p219 = por %p217, %p218
    %p220 = scmp.ne.s32.totalorder %s208, %s209
    %p221 = scmp.eq.s32.totalorder %s26, 1
    %p222 = por %p220, %p221
    %p224 = scmp.ne.s32.totalorder %s209, %s223
    %p225 = scmp.eq.s32.totalorder %s26, 0
    %p226 = por %p224, %p225
    %s228 = sadd.s32 %s227, 1
    %p231 = scmp.eq.s32.totalorder %s20, 1
    %p232 = scmp.ne.s32.totalorder %s227, %s229
    %p233 = scmp.eq.s32.totalorder %s20, 0
    %p234 = por %p232, %p233
    %p235 = scmp.ne.s32.totalorder %s227, %s229
    %p236 = scmp.eq.s32.totalorder %s25, 1
    %p237 = por %p235, %p236
    %p238 = scmp.ne.s32.totalorder %s229, %s230
    %p239 = scmp.eq.s32.totalorder %s25, 0
    %p240 = por %p238, %p239
    %p241 = scmp.ne.s32.totalorder %s229, %s230
    %p242 = scmp.eq.s32.totalorder %s26, 1
    %p243 = por %p241, %p242
    %p245 = scmp.ne.s32.totalorder %s230, %s244
    %p246 = scmp.eq.s32.totalorder %s26, 0
    %p247 = por %p245, %p246
    %s249 = sadd.s32 %s248, 1
    %p252 = scmp.eq.s32.totalorder %s20, 1
    %p253 = scmp.ne.s32.totalorder %s248, %s250
    %p254 = scmp.eq.s32.totalorder %s20, 0
    %p255 = por %p253, %p254
    %p256 = scmp.ne.s32.totalorder %s248, %s250
    %p257 = scmp.eq.s32.totalorder %s25, 1
    %p258 = por %p256, %p257
    %p259 = scmp.ne.s32.totalorder %s250, %s251
    %p260 = scmp.eq.s32.totalorder %s25, 0
    %p261 = por %p259, %p260
    %p262 = scmp.ne.s32.totalorder %s250, %s251
    %p263 = scmp.eq.s32.totalorder %s26, 1
    %p264 = por %p262, %p263
    %p266 = scmp.ne.s32.totalorder %s251, %s265
    %p267 = scmp.eq.s32.totalorder %s26, 0
    %p268 = por %p266, %p267
    %s270 = sadd.s32 %s269, 1
    %p273 = scmp.eq.s32.totalorder %s20, 1
    %p274 = scmp.ne.s32.totalorder %s269, %s271
    %p275 = scmp.eq.s32.totalorder %s20, 0
    %p276 = por %p274, %p275
    %p277 = scmp.ne.s32.totalorder %s269, %s271
    %p278 = scmp.eq.s32.totalorder %s25, 1
    %p279 = por %p277, %p278
    %p280 = scmp.ne.s32.totalorder %s271, %s272
    %p281 = scmp.eq.s32.totalorder %s25, 0
    %p282 = por %p280, %p281
    %p283 = scmp.ne.s32.totalorder %s271, %s272
    %p284 = scmp.eq.s32.totalorder %s26, 1
    %p285 = por %p283, %p284
    %p287 = scmp.ne.s32.totalorder %s272, %s286
    %p288 = scmp.eq.s32.totalorder %s26, 0
    %p289 = por %p287, %p288
    %s291 = sadd.s32 %s290, 1
    %p294 = scmp.eq.s32.totalorder %s20, 1
    %p295 = scmp.ne.s32.totalorder %s290, %s292
    %p296 = scmp.eq.s32.totalorder %s20, 0
    %p297 = por %p295, %p296
    %p298 = scmp.ne.s32.totalorder %s290, %s292
    %p299 = scmp.eq.s32.totalorder %s25, 1
    %p300 = por %p298, %p299
    %p301 = scmp.ne.s32.totalorder %s292, %s293
    %p302 = scmp.eq.s32.totalorder %s25, 0
    %p303 = por %p301, %p302
    %p304 = scmp.ne.s32.totalorder %s292, %s293
    %p305 = scmp.eq.s32.totalorder %s26, 1
    %p306 = por %p304, %p305
    %p308 = scmp.ne.s32.totalorder %s293, %s307
    %p309 = scmp.eq.s32.totalorder %s26, 0
    %p310 = por %p308, %p309
    %s312 = sadd.s32 %s311, 1
    %p315 = scmp.eq.s32.totalorder %s20, 1
    %p316 = scmp.ne.s32.totalorder %s311, %s313
    %p317 = scmp.eq.s32.totalorder %s20, 0
    %p318 = por %p316, %p317
    %p319 = scmp.ne.s32.totalorder %s311, %s313
    %p320 = scmp.eq.s32.totalorder %s25, 1
    %p321 = por %p319, %p320
    %p322 = scmp.ne.s32.totalorder %s313, %s314
    %p323 = scmp.eq.s32.totalorder %s25, 0
    %p324 = por %p322, %p323
    %p325 = scmp.ne.s32.totalorder %s313, %s314
    %p326 = scmp.eq.s32.totalorder %s26, 1
    %p327 = por %p325, %p326
    %p329 = scmp.ne.s32.totalorder %s314, %s328
    %p330 = scmp.eq.s32.totalorder %s26, 0
    %p331 = por %p329, %p330
    %s333 = sadd.s32 %s332, 1
    %p336 = scmp.eq.s32.totalorder %s20, 1
    %p337 = scmp.ne.s32.totalorder %s332, %s334
    %p338 = scmp.eq.s32.totalorder %s20, 0
    %p339 = por %p337, %p338
    %p340 = scmp.ne.s32.totalorder %s332, %s334
    %p341 = scmp.eq.s32.totalorder %s25, 1
    %p342 = por %p340, %p341
    %p343 = scmp.ne.s32.totalorder %s334, %s335
    %p344 = scmp.eq.s32.totalorder %s25, 0
    %p345 = por %p343, %p344
    %p346 = scmp.ne.s32.totalorder %s334, %s335
    %p347 = scmp.eq.s32.totalorder %s26, 1
    %p348 = por %p346, %p347
    %p350 = scmp.ne.s32.totalorder %s335, %s349
    %p351 = scmp.eq.s32.totalorder %s26, 0
    %p352 = por %p350, %p351
    %s353 = ssub.s32 %s27, %s46
    %s354 = ssub.s32 %s28, %s42
    %s355 = sor.u32 %s353, %s354
    %p356 = scmp.eq.s32.totalorder %s355, 0
    %s358 = sadd.s32 %s357, 1
    %s359 = scalar_select %p356, %s357, %s358
    %p362 = pneg %p356
    %p363 = scmp.eq.s32.totalorder %s20, 1
    %p364 = por %p362, %p363
    %p365 = scmp.ne.s32.totalorder %s357, %s360
    %p366 = scmp.eq.s32.totalorder %s20, 0
    %p367 = por %p365, %p366
    %p368 = scmp.ne.s32.totalorder %s357, %s360
    %p369 = scmp.eq.s32.totalorder %s25, 1
    %p370 = por %p368, %p369
    %p371 = scmp.ne.s32.totalorder %s360, %s361
    %p372 = scmp.eq.s32.totalorder %s25, 0
    %p373 = por %p371, %p372
    %p374 = scmp.ne.s32.totalorder %s360, %s361
    %p375 = scmp.eq.s32.totalorder %s26, 1
    %p376 = por %p374, %p375
    %p378 = scmp.ne.s32.totalorder %s361, %s377
    %p379 = scmp.eq.s32.totalorder %s26, 0
    %p380 = por %p378, %p379
    %p381 = scmp.le.s32.totalorder 1, %s20
    %p382 = scmp.lt.s32.totalorder %s20, 3
    %p383 = pnand %p381, %p382
    %p384 = pneg %p383
    // Predicated region
    $region9: #{set_transformer_forward.13} parent=5 // pred_check
      _
    $region10: #{set_transformer_forward.13} parent=5 // pred_check_branch
      %386 = sbr.rel (%p383) target = $region12
    $region11: #{set_transformer_forward.13} parent=5 // pred_region
      %s387 = ssub.s32 %s20, 1
      // Predicated region
      $region13: #{set_transformer_forward.13} parent=11 // pred_check
        %p388 = pneg %p65
      $region14: #{set_transformer_forward.13} parent=11 // pred_check_branch
        %390 = sbr.rel (%p388) target = $region16
      $region15: #{set_transformer_forward.13} parent=11 // pred_region
        %p391 = scmp.lt.s32.totalorder %s31, 0
        %s392 = scalar_select %p391, %s31, 0
        %s393 = smul.addr %s392, 4
        %s394 = scalar_lea.vmem %s0, %s393
      $region16: #{set_transformer_forward.13} parent=11 // pred_fallthru
        _
      // Predicated region
      $region17: #{set_transformer_forward.13} parent=11 // pred_check
        %p395 = pneg %p114
      $region18: #{set_transformer_forward.13} parent=11 // pred_check_branch
        %397 = sbr.rel (%p395) target = $region20
      $region19: #{set_transformer_forward.13} parent=11 // pred_region
        _
      $region20: #{set_transformer_forward.13} parent=11 // pred_fallthru
        _
      // Predicated region
      $region21: #{set_transformer_forward.13} parent=11 // pred_check
        %p398 = pneg %p135
      $region22: #{set_transformer_forward.13} parent=11 // pred_check_branch
        %400 = sbr.rel (%p398) target = $region24
      $region23: #{set_transformer_forward.13} parent=11 // pred_region
        _
      $region24: #{set_transformer_forward.13} parent=11 // pred_fallthru
        _
      // Predicated region
      $region25: #{set_transformer_forward.13} parent=11 // pred_check
        %p401 = pneg %p156
      $region26: #{set_transformer_forward.13} parent=11 // pred_check_branch
        %403 = sbr.rel (%p401) target = $region28
      $region27: #{set_transformer_forward.13} parent=11 // pred_region
        _
      $region28: #{set_transformer_forward.13} parent=11 // pred_fallthru
        _
      // Predicated region
      $region29: #{set_transformer_forward.13} parent=11 // pred_check
        %p404 = pneg %p177
      $region30: #{set_transformer_forward.13} parent=11 // pred_check_branch
        %406 = sbr.rel (%p404) target = $region32
      $region31: #{set_transformer_forward.13} parent=11 // pred_region
        _
      $region32: #{set_transformer_forward.13} parent=11 // pred_fallthru
        _
      // Predicated region
      $region33: #{set_transformer_forward.13} parent=11 // pred_check
        %p407 = pneg %p198
      $region34: #{set_transformer_forward.13} parent=11 // pred_check_branch
        %409 = sbr.rel (%p407) target = $region36
      $region35: #{set_transformer_forward.13} parent=11 // pred_region
        _
      $region36: #{set_transformer_forward.13} parent=11 // pred_fallthru
        _
      // Predicated region
      $region37: #{set_transformer_forward.13} parent=11 // pred_check
        %p410 = pneg %p219
      $region38: #{set_transformer_forward.13} parent=11 // pred_check_branch
        %412 = sbr.rel (%p410) target = $region40
      $region39: #{set_transformer_forward.13} parent=11 // pred_region
        _
      $region40: #{set_transformer_forward.13} parent=11 // pred_fallthru
        _
      // Predicated region
      $region41: #{set_transformer_forward.13} parent=11 // pred_check
        %p413 = pneg %p240
      $region42: #{set_transformer_forward.13} parent=11 // pred_check_branch
        %415 = sbr.rel (%p413) target = $region44
      $region43: #{set_transformer_forward.13} parent=11 // pred_region
        _
      $region44: #{set_transformer_forward.13} parent=11 // pred_fallthru
        _
      // Predicated region
      $region45: #{set_transformer_forward.13} parent=11 // pred_check
        %p416 = pneg %p261
      $region46: #{set_transformer_forward.13} parent=11 // pred_check_branch
        %418 = sbr.rel (%p416) target = $region48
      $region47: #{set_transformer_forward.13} parent=11 // pred_region
        _
      $region48: #{set_transformer_forward.13} parent=11 // pred_fallthru
        _
      // Predicated region
      $region49: #{set_transformer_forward.13} parent=11 // pred_check
        %p419 = pneg %p282
      $region50: #{set_transformer_forward.13} parent=11 // pred_check_branch
        %421 = sbr.rel (%p419) target = $region52
      $region51: #{set_transformer_forward.13} parent=11 // pred_region
        _
      $region52: #{set_transformer_forward.13} parent=11 // pred_fallthru
        _
      // Predicated region
      $region53: #{set_transformer_forward.13} parent=11 // pred_check
        %p422 = pneg %p303
      $region54: #{set_transformer_forward.13} parent=11 // pred_check_branch
        %424 = sbr.rel (%p422) target = $region56
      $region55: #{set_transformer_forward.13} parent=11 // pred_region
        _
      $region56: #{set_transformer_forward.13} parent=11 // pred_fallthru
        _
      // Predicated region
      $region57: #{set_transformer_forward.13} parent=11 // pred_check
        %p425 = pneg %p324
      $region58: #{set_transformer_forward.13} parent=11 // pred_check_branch
        %427 = sbr.rel (%p425) target = $region60
      $region59: #{set_transformer_forward.13} parent=11 // pred_region
        _
      $region60: #{set_transformer_forward.13} parent=11 // pred_fallthru
        _
      // Predicated region
      $region61: #{set_transformer_forward.13} parent=11 // pred_check
        %p428 = pneg %p345
      $region62: #{set_transformer_forward.13} parent=11 // pred_check_branch
        %430 = sbr.rel (%p428) target = $region64
      $region63: #{set_transformer_forward.13} parent=11 // pred_region
        _
      $region64: #{set_transformer_forward.13} parent=11 // pred_fallthru
        _
    $region12: #{set_transformer_forward.13} parent=5 // pred_fallthru
      _
    %p431 = scmp.lt.s32.totalorder %s20, 2
    // Predicated region
    $region65: #{set_transformer_forward.13} parent=5 // pred_check
      %p432 = pneg %p431
    $region66: #{set_transformer_forward.13} parent=5 // pred_check_branch
      %434 = sbr.rel (%p432) target = $region68
    $region67: #{set_transformer_forward.13} parent=5 // pred_region
      // Predicated region
      $region69: #{set_transformer_forward.13} parent=67 // pred_check
        %p435 = pneg %p87
      $region70: #{set_transformer_forward.13} parent=67 // pred_check_branch
        %437 = sbr.rel (%p435) target = $region72
      $region71: #{set_transformer_forward.13} parent=67 // pred_region
        %p438 = scmp.lt.s32.totalorder %s27, 1
        %s439 = scalar_select %p438, %s27, 1
        %p440 = scmp.lt.s32.totalorder %s29, 0
        %s441 = scalar_select %p440, %s29, 0
        %s442 = sadd.s32 %s441, %s439
        %s443 = smul.addr %s442, 8
        %s444 = scalar_lea.vmem %s1, %s443
      $region72: #{set_transformer_forward.13} parent=67 // pred_fallthru
        _
    $region68: #{set_transformer_forward.13} parent=5 // pred_fallthru
      _
    %p445 = scmp.le.s32.totalorder 1, %s20
    %p446 = scmp.lt.s32.totalorder %s20, 3
    %p447 = pnand %p445, %p446
    %p448 = pneg %p447
    // Predicated region
    $region73: #{set_transformer_forward.13} parent=5 // pred_check
      _
    $region74: #{set_transformer_forward.13} parent=5 // pred_check_branch
      %450 = sbr.rel (%p447) target = $region76
    $region75: #{set_transformer_forward.13} parent=5 // pred_region
      %s451 = ssub.s32 %s20, 1
      %p452 = scmp.lt.s32.totalorder %s31, 0
      %s453 = scalar_select %p452, %s31, 0
      %s454 = smul.addr %s453, 4
      %s455 = scalar_lea.vmem %s0, %s454
      %p456 = pneg %p65
      %p457 = pneg %p62
      %p458 = scmp.lt.s32.totalorder %s30, 1
      %s459 = scalar_select %p458, %s30, 1
      %p460 = scmp.lt.s32.totalorder %s32, 0
      %s461 = scalar_select %p460, %s32, 0
      %s462 = sadd.s32 %s461, %s459
      %s463 = smul.addr %s462, 8
      %s464 = scalar_lea.vmem %s1, %s463
      %p465 = pneg %p93
      %p466 = pneg %p90
      %p467 = pneg %p114
      %p468 = pneg %p111
      %p469 = pneg %p135
      %p470 = pneg %p132
      %p471 = pneg %p156
      %p472 = pneg %p153
      %p473 = pneg %p177
      %p474 = pneg %p174
      %p475 = pneg %p198
      %p476 = pneg %p195
      %p477 = pneg %p219
      %p478 = pneg %p216
      %p479 = pneg %p240
      %p480 = pneg %p237
      %p481 = pneg %p261
      %p482 = pneg %p258
      %p483 = pneg %p282
      %p484 = pneg %p279
      %p485 = pneg %p303
      %p486 = pneg %p300
      %p487 = pneg %p324
      %p488 = pneg %p321
      %p489 = pneg %p345
      %p490 = pneg %p342
      %p491 = pneg %p373
      %p492 = pneg %p370
      %p493 = scmp.lt.s32.totalorder %s30, 1
      %s494 = scalar_select %p493, %s30, 1
      %p495 = scmp.lt.s32.totalorder %s31, 0
      %s496 = scalar_select %p495, %s31, 0
      %s497 = sadd.s32 %s496, %s494
      %s498 = smul.addr %s497, 4
      %s499 = scalar_lea.vmem %s14, %s498
      %p500 = scmp.lt.s32.totalorder %s31, 0
      %s501 = scalar_select %p500, %s31, 0
      %s502 = smul.addr %s501, 4
      %s503 = scalar_lea.vmem %s0, %s502
      %p504 = scmp.lt.s32.totalorder %s30, 1
      %s505 = scalar_select %p504, %s30, 1
      %p506 = scmp.lt.s32.totalorder %s32, 0
      %s507 = scalar_select %p506, %s32, 0
      %s508 = sadd.s32 %s507, %s505
      %s509 = smul.addr %s508, 8
      %s510 = scalar_lea.vmem %s1, %s509
      %p511 = scmp.lt.s32.totalorder %s30, 1
      %s512 = scalar_select %p511, %s30, 1
      %p513 = scmp.lt.s32.totalorder %s31, 0
      %s514 = scalar_select %p513, %s31, 0
      %s515 = sadd.s32 %s514, %s512
      %s516 = smul.addr %s515, 4
      %s517 = scalar_lea.vmem %s14, %s516
      %v519 = vld [vmem:[%s503] sm:$0xf]
      %p520 = scmp.eq.s32.totalorder %s32, 0
      // Predicated region
      $region77: #{set_transformer_forward.13} parent=75 // pred_check
        %p521 = pneg %p520
      $region78: #{set_transformer_forward.13} parent=75 // pred_check_branch
        %523 = sbr.rel (%p521) target = $region80
      $region79: #{set_transformer_forward.13} parent=75 // pred_region
        %v524 = vpack.c.bf16 %v519, %v519
        %v525 = vld [vmem:[%s2] sm:$0xf]
        %v526 = vld [vmem:[%s2 + $0x4] sm:$0xf]
        %v527 = vld [vmem:[%s2 + $0x8] sm:$0xf]
        %v528 = vld [vmem:[%s2 + $0xc] sm:$0xf]
        %v529 = vld [vmem:[%s2 + $0x10] sm:$0xf]
        %v530 = vld [vmem:[%s2 + $0x14] sm:$0xf]
        %v531 = vld [vmem:[%s2 + $0x18] sm:$0xf]
        %v532 = vld [vmem:[%s2 + $0x1c] sm:$0xf]
        %v533 = vld [vmem:[%s2 + $0x20] sm:$0xf]
        %v534 = vld [vmem:[%s2 + $0x24] sm:$0xf]
        %v535 = vld [vmem:[%s2 + $0x28] sm:$0xf]
        %v536 = vld [vmem:[%s2 + $0x2c] sm:$0xf]
        %v537 = vld [vmem:[%s2 + $0x30] sm:$0xf]
        %v538 = vld [vmem:[%s2 + $0x34] sm:$0xf]
        %v539 = vld [vmem:[%s2 + $0x38] sm:$0xf]
        %v540 = vld [vmem:[%s2 + $0x3c] sm:$0xf]
        %v541 = vld [vmem:[%s3] sm:$0x1]
        %v543 = vperm.slane %v541, 0
        %v561 = vunpack.c.l.b16 %v525
        %v562 = vunpack.c.l.b16 %v526
        %v563 = vunpack.c.l.b16 %v527
        %v564 = vunpack.c.l.b16 %v528
        %v565 = vunpack.c.l.b16 %v529
        %v566 = vunpack.c.l.b16 %v530
        %v567 = vunpack.c.l.b16 %v531
        %v568 = vunpack.c.l.b16 %v532
        %v569 = vunpack.c.l.b16 %v533
        %v570 = vunpack.c.l.b16 %v534
        %v571 = vunpack.c.l.b16 %v535
        %v572 = vunpack.c.l.b16 %v536
        %v573 = vunpack.c.l.b16 %v537
        %v574 = vunpack.c.l.b16 %v538
        %v575 = vunpack.c.l.b16 %v539
        %v576 = vunpack.c.l.b16 %v540
        %v577 = vpack.c.b16 %v562, %v561
        %v578 = vpack.c.b16 %v564, %v563
        %v579 = vpack.c.b16 %v566, %v565
        %v580 = vpack.c.b16 %v568, %v567
        %v581 = vpack.c.b16 %v570, %v569
        %v582 = vpack.c.b16 %v572, %v571
        %v583 = vpack.c.b16 %v574, %v573
        %v584 = vpack.c.b16 %v576, %v575
        %593 = vmatpush.bf16.msra.mxu0 %v584
        %594 = vmatpush.bf16.msra.mxu0 %v583
        %595 = vmatpush.bf16.msra.mxu0 %v582
        %596 = vmatpush.bf16.msra.mxu0 %v581
        %597 = vmatpush.bf16.msra.mxu0 %v580
        %598 = vmatpush.bf16.msra.mxu0 %v579
        %599 = vmatpush.bf16.msra.mxu0 %v578
        %600 = vmatpush.bf16.msra.mxu0 %v577
        %601 = vmatmul.bf16.gmra.mxu0 %v524
        %v602 = vpop.f32.mrf.mxu0
        %v603 = vadd.f32 %v543, %v602
        %v604 = vpop.f32.mrf.mxu0
        %605 = vdwg.mxu0
        %v606 = vmul.f32 %v603, 0.17677669
        %607 = vst [vmem:[#allocation2] sm:$0xf] %v606
        %vm608 = vcmask 3072
        %609 = vst.msk [vmem:[#allocation3] sm:$0xf] %vm608, -inf
        %610 = vst.msk [vmem:[#allocation3 + $0x4] sm:$0xf] %vm608, -inf
        %611 = vst.msk [vmem:[#allocation3 + $0x8] sm:$0xf] %vm608, -inf
        %612 = vst.msk [vmem:[#allocation3 + $0xc] sm:$0xf] %vm608, -inf
        %613 = vst.msk [vmem:[#allocation4] sm:$0xf] %vm608, 0.0
        %614 = vst.msk [vmem:[#allocation4 + $0x4] sm:$0xf] %vm608, 0.0
        %615 = vst.msk [vmem:[#allocation4 + $0x8] sm:$0xf] %vm608, 0.0
        %616 = vst.msk [vmem:[#allocation4 + $0xc] sm:$0xf] %vm608, 0.0
        %617 = vst [vmem:[#allocation5] sm:$0xf] 0.0
      $region80: #{set_transformer_forward.13} parent=75 // pred_fallthru
        _
      %v618 = vld [vmem:[%s510] sm:$0xff]
      %v619 = vpack.c.bf16 %v618, %v618
      %v620 = vld [vmem:[%s4] sm:$0xff]
      %v621 = vld [vmem:[%s4 + $0x8] sm:$0xff]
      %v622 = vld [vmem:[%s4 + $0x10] sm:$0xff]
      %v623 = vld [vmem:[%s4 + $0x18] sm:$0xff]
      %v624 = vld [vmem:[%s4 + $0x20] sm:$0xff]
      %v625 = vld [vmem:[%s4 + $0x28] sm:$0xff]
      %v626 = vld [vmem:[%s4 + $0x30] sm:$0xff]
      %v627 = vld [vmem:[%s4 + $0x38] sm:$0xff]
      %v628 = vld [vmem:[%s4 + $0x40] sm:$0xff]
      %v629 = vld [vmem:[%s4 + $0x48] sm:$0xff]
      %v630 = vld [vmem:[%s4 + $0x50] sm:$0xff]
      %v631 = vld [vmem:[%s4 + $0x58] sm:$0xff]
      %v632 = vld [vmem:[%s4 + $0x60] sm:$0xff]
      %v633 = vld [vmem:[%s4 + $0x68] sm:$0xff]
      %v634 = vld [vmem:[%s4 + $0x70] sm:$0xff]
      %v635 = vld [vmem:[%s4 + $0x78] sm:$0xff]
      %v636 = vld [vmem:[%s5] sm:$0x3]
      %v638 = vperm.slane %v636, 0
      %v639 = vperm.slane %v636, 1
      %v658 = vunpack.c.l.b16 %v620
      %v659 = vunpack.c.h.b16 %v620
      %v660 = vunpack.c.l.b16 %v621
      %v661 = vunpack.c.h.b16 %v621
      %v662 = vunpack.c.l.b16 %v622
      %v663 = vunpack.c.h.b16 %v622
      %v664 = vunpack.c.l.b16 %v623
      %v665 = vunpack.c.h.b16 %v623
      %v666 = vunpack.c.l.b16 %v624
      %v667 = vunpack.c.h.b16 %v624
      %v668 = vunpack.c.l.b16 %v625
      %v669 = vunpack.c.h.b16 %v625
      %v670 = vunpack.c.l.b16 %v626
      %v671 = vunpack.c.h.b16 %v626
      %v672 = vunpack.c.l.b16 %v627
      %v673 = vunpack.c.h.b16 %v627
      %v674 = vunpack.c.l.b16 %v628
      %v675 = vunpack.c.h.b16 %v628
      %v676 = vunpack.c.l.b16 %v629
      %v677 = vunpack.c.h.b16 %v629
      %v678 = vunpack.c.l.b16 %v630
      %v679 = vunpack.c.h.b16 %v630
      %v680 = vunpack.c.l.b16 %v631
      %v681 = vunpack.c.h.b16 %v631
      %v682 = vunpack.c.l.b16 %v632
      %v683 = vunpack.c.h.b16 %v632
      %v684 = vunpack.c.l.b16 %v633
      %v685 = vunpack.c.h.b16 %v633
      %v686 = vunpack.c.l.b16 %v634
      %v687 = vunpack.c.h.b16 %v634
      %v688 = vunpack.c.l.b16 %v635
      %v689 = vunpack.c.h.b16 %v635
      %v690 = vpack.c.b16 %v660, %v658
      %v691 = vpack.c.b16 %v661, %v659
      %v692 = vpack.c.b16 %v664, %v662
      %v693 = vpack.c.b16 %v665, %v663
      %v694 = vpack.c.b16 %v668, %v666
      %v695 = vpack.c.b16 %v669, %v667
      %v696 = vpack.c.b16 %v672, %v670
      %v697 = vpack.c.b16 %v673, %v671
      %v698 = vpack.c.b16 %v676, %v674
      %v699 = vpack.c.b16 %v677, %v675
      %v700 = vpack.c.b16 %v680, %v678
      %v701 = vpack.c.b16 %v681, %v679
      %v702 = vpack.c.b16 %v684, %v682
      %v703 = vpack.c.b16 %v685, %v683
      %v704 = vpack.c.b16 %v688, %v686
      %v705 = vpack.c.b16 %v689, %v687
      %722 = vmatpush.bf16.msra.mxu0 %v704
      %723 = vmatpush.bf16.msra.mxu0 %v702
      %724 = vmatpush.bf16.msra.mxu0 %v700
      %725 = vmatpush.bf16.msra.mxu0 %v698
      %726 = vmatpush.bf16.msra.mxu0 %v696
      %727 = vmatpush.bf16.msra.mxu0 %v694
      %728 = vmatpush.bf16.msra.mxu0 %v692
      %729 = vmatpush.bf16.msra.mxu0 %v690
      %730 = vmatmul.bf16.gmra.mxu0 %v619
      %v731 = vpop.f32.mrf.mxu0
      %v732 = vadd.f32 %v638, %v731
      %v733 = vpop.f32.mrf.mxu0
      %734 = vdwg.mxu0
      %735 = vmatpush.bf16.msra.mxu0 %v705
      %736 = vmatpush.bf16.msra.mxu0 %v703
      %737 = vmatpush.bf16.msra.mxu0 %v701
      %738 = vmatpush.bf16.msra.mxu0 %v699
      %739 = vmatpush.bf16.msra.mxu0 %v697
      %740 = vmatpush.bf16.msra.mxu0 %v695
      %741 = vmatpush.bf16.msra.mxu0 %v693
      %742 = vmatpush.bf16.msra.mxu0 %v691
      %743 = vmatmul.bf16.gmra.mxu0 %v619
      %v744 = vpop.f32.mrf.mxu0
      %v745 = vadd.f32 %v639, %v744
      %v746 = vpop.f32.mrf.mxu0
      %747 = vdwg.mxu0
      %v748 = vpack.c.bf16 %v732, %v732
      %v749 = vpack.c.bf16 %v745, %v745
      %v750 = vld [vmem:[#allocation2] sm:$0xf]
      %v751 = vpack.c.bf16 %v750, %v750
      %vm752 = vcmask 261120
      %v754 = vsel %vm752, %v751, 0
      %v757 = vsel %vm752, %v748, 0
      %759 = vmatpush.bf16.xpose.msra.mxu0 0
      %760 = vmatpush.bf16.xpose.msra.mxu0 0
      %761 = vmatpush.bf16.xpose.msra.mxu0 0
      %762 = vmatpush.bf16.xpose.msra.mxu0 0
      %763 = vmatpush.bf16.xpose.msra.mxu0 0
      %764 = vmatpush.bf16.xpose.msra.mxu0 0
      %765 = vmatpush.bf16.xpose.msra.mxu0 0
      %766 = vmatpush.bf16.xpose.msra.mxu0 %v757
      %767 = vmatmul.bf16.gmra.mxu0 %v754
      %v768 = vpop.f32.mrf.mxu0
      %v769 = vadd.f32 0.0, %v768
      %v770 = vpop.f32.mrf.mxu0
      %771 = vdwg.mxu0
      %v772 = vld [vmem:[#allocation3] sm:$0xf]
      %vm773 = vcmask 60416
      %v774 = vsel %vm773, %v769, -inf
      %775 = vmax.xlane.f32.xlu0 %v774
      %v776 = vpop.xlane.xlu0 %775
      %v777 = vmax.f32 %v772, %v776
      %v778 = vsub.f32 %v772, %v777
      %v779 = vmul.f32 %v778, 1.442695
      %v780 = vpow.pop %v779
      %782 = vset.pattern.permute.xlu0 0
      %783 = vperm.xlu0 %782, %v777
      %v784 = vpop.permute.xlu0 %783
      %v786 = vsub.f32 %v769, %v784
      %v787 = vmul.f32 %v786, 1.442695
      %v788 = vpow.pop %v787
      %v789 = vld [vmem:[#allocation4] sm:$0xf]
      %v790 = vmul.f32 %v780, %v789
      %v791 = vsel %vm773, %v788, 0.0
      %792 = vadd.xlane.f32.xlu0 %v791
      %v793 = vpop.xlane.xlu0 %792
      %v794 = vadd.f32 %v790, %v793
      %vm795 = vcmask 3072
      %796 = vst.msk [vmem:[#allocation4] sm:$0xf] %vm795, %v794
      %v797 = vpack.c.bf16 %v788, %v788
      %vm798 = vcmask 64512
      %v800 = vsel %vm798, %v797, 0
      %vm802 = vcmask 1043456
      %v804 = vsel %vm802, %v749, 0
      %806 = vmatpush.bf16.msra.mxu0 0
      %807 = vmatpush.bf16.msra.mxu0 0
      %808 = vmatpush.bf16.msra.mxu0 0
      %809 = vmatpush.bf16.msra.mxu0 0
      %810 = vmatpush.bf16.msra.mxu0 0
      %811 = vmatpush.bf16.msra.mxu0 0
      %812 = vmatpush.bf16.msra.mxu0 0
      %813 = vmatpush.bf16.msra.mxu0 %v804
      %814 = vmatmul.bf16.gmra.mxu0 %v800
      %v815 = vpop.f32.mrf.mxu0
      %v816 = vadd.f32 0.0, %v815
      %v817 = vpop.f32.mrf.mxu0
      %818 = vdwg.mxu0
      %v819 = vld [vmem:[#allocation5] sm:$0xf]
      %821 = vset.pattern.permute.xlu0 0
      %822 = vperm.xlu0 %821, %v780
      %v823 = vpop.permute.xlu0 %822
      %v825 = vmul.f32 %v823, %v819
      %v826 = vadd.f32 %v825, %v816
      %vm827 = vcmask 257024
      %828 = vst.msk [vmem:[#allocation5] sm:$0xf] %vm827, %v826
      %829 = vst.msk [vmem:[#allocation3] sm:$0xf] %vm795, %v777
      %831 = vrot.lane.b32.xlu0 %v751, 96
      %v832 = vpop.permute.xlu0 %831
      %v834 = vunpack.c.l.b16 %v748
      %v835 = vpack.c.b16 %v834, %v834
      %836 = vrot.lane.b32.xlu0 %v835, 96
      %v837 = vpop.permute.xlu0 %836
      %v839 = vsel %vm752, %v832, 0
      %v842 = vsel %vm752, %v837, 0
      %844 = vmatpush.bf16.xpose.msra.mxu0 0
      %845 = vmatpush.bf16.xpose.msra.mxu0 0
      %846 = vmatpush.bf16.xpose.msra.mxu0 0
      %847 = vmatpush.bf16.xpose.msra.mxu0 0
      %848 = vmatpush.bf16.xpose.msra.mxu0 0
      %849 = vmatpush.bf16.xpose.msra.mxu0 0
      %850 = vmatpush.bf16.xpose.msra.mxu0 0
      %851 = vmatpush.bf16.xpose.msra.mxu0 %v842
      %852 = vmatmul.bf16.gmra.mxu0 %v839
      %v853 = vpop.f32.mrf.mxu0
      %v854 = vadd.f32 0.0, %v853
      %v855 = vpop.f32.mrf.mxu0
      %856 = vdwg.mxu0
      %s857 = scalar_lea.vmem [#allocation3], 4
      %v858 = vld [vmem:[%s857] sm:$0xf]
      %v859 = vsel %vm773, %v854, -inf
      %860 = vmax.xlane.f32.xlu0 %v859
      %v861 = vpop.xlane.xlu0 %860
      %v862 = vmax.f32 %v858, %v861
      %v863 = vsub.f32 %v858, %v862
      %v864 = vmul.f32 %v863, 1.442695
      %v865 = vpow.pop %v864
      %867 = vset.pattern.permute.xlu0 0
      %868 = vperm.xlu0 %867, %v862
      %v869 = vpop.permute.xlu0 %868
      %v871 = vsub.f32 %v854, %v869
      %v872 = vmul.f32 %v871, 1.442695
      %v873 = vpow.pop %v872
      %s874 = scalar_lea.vmem [#allocation4], 4
      %v875 = vld [vmem:[%s874] sm:$0xf]
      %v876 = vmul.f32 %v865, %v875
      %v877 = vsel %vm773, %v873, 0.0
      %878 = vadd.xlane.f32.xlu0 %v877
      %v879 = vpop.xlane.xlu0 %878
      %v880 = vadd.f32 %v876, %v879
      %881 = vst.msk [vmem:[%s874] sm:$0xf] %vm795, %v880
      %v882 = vpack.c.bf16 %v873, %v873
      %v884 = vunpack.c.l.b16 %v749
      %v885 = vpack.c.b16 %v884, %v884
      %886 = vrot.lane.b32.xlu0 %v885, 96
      %v887 = vpop.permute.xlu0 %886
      %v889 = vsel %vm798, %v882, 0
      %v892 = vsel %vm802, %v887, 0
      %894 = vmatpush.bf16.msra.mxu0 0
      %895 = vmatpush.bf16.msra.mxu0 0
      %896 = vmatpush.bf16.msra.mxu0 0
      %897 = vmatpush.bf16.msra.mxu0 0
      %898 = vmatpush.bf16.msra.mxu0 0
      %899 = vmatpush.bf16.msra.mxu0 0
      %900 = vmatpush.bf16.msra.mxu0 0
      %901 = vmatpush.bf16.msra.mxu0 %v892
      %902 = vmatmul.bf16.gmra.mxu0 %v889
      %v903 = vpop.f32.mrf.mxu0
      %v904 = vadd.f32 0.0, %v903
      %v905 = vpop.f32.mrf.mxu0
      %906 = vdwg.mxu0
      %v907 = vld [vmem:[#allocation5] sm:$0xf]
      %909 = vset.pattern.permute.xlu0 0
      %910 = vperm.xlu0 %909, %v865
      %v911 = vpop.permute.xlu0 %910
      %v913 = vmul.f32 %v911, %v907
      %915 = vrot.lane.b32.xlu0 %v904, 32
      %v916 = vpop.permute.xlu0 %915
      %v918 = vadd.f32 %v913, %v916
      %vm919 = vcmask 519424
      %920 = vst.msk [vmem:[#allocation5] sm:$0xf] %vm919, %v918
      %921 = vst.msk [vmem:[%s857] sm:$0xf] %vm795, %v862
      %922 = vrot.lane.b32.xlu0 %v751, 64
      %v923 = vpop.permute.xlu0 %922
      %924 = vrot.lane.b32.xlu0 %v835, 64
      %v925 = vpop.permute.xlu0 %924
      %v927 = vsel %vm752, %v923, 0
      %v930 = vsel %vm752, %v925, 0
      %932 = vmatpush.bf16.xpose.msra.mxu0 0
      %933 = vmatpush.bf16.xpose.msra.mxu0 0
      %934 = vmatpush.bf16.xpose.msra.mxu0 0
      %935 = vmatpush.bf16.xpose.msra.mxu0 0
      %936 = vmatpush.bf16.xpose.msra.mxu0 0
      %937 = vmatpush.bf16.xpose.msra.mxu0 0
      %938 = vmatpush.bf16.xpose.msra.mxu0 0
      %939 = vmatpush.bf16.xpose.msra.mxu0 %v930
      %940 = vmatmul.bf16.gmra.mxu0 %v927
      %v941 = vpop.f32.mrf.mxu0
      %v942 = vadd.f32 0.0, %v941
      %v943 = vpop.f32.mrf.mxu0
      %944 = vdwg.mxu0
      %s945 = scalar_lea.vmem [#allocation3], 8
      %v946 = vld [vmem:[%s945] sm:$0xf]
      %v947 = vsel %vm773, %v942, -inf
      %948 = vmax.xlane.f32.xlu0 %v947
      %v949 = vpop.xlane.xlu0 %948
      %v950 = vmax.f32 %v946, %v949
      %v951 = vsub.f32 %v946, %v950
      %v952 = vmul.f32 %v951, 1.442695
      %v953 = vpow.pop %v952
      %955 = vset.pattern.permute.xlu0 0
      %956 = vperm.xlu0 %955, %v950
      %v957 = vpop.permute.xlu0 %956
      %v959 = vsub.f32 %v942, %v957
      %v960 = vmul.f32 %v959, 1.442695
      %v961 = vpow.pop %v960
      %s962 = scalar_lea.vmem [#allocation4], 8
      %v963 = vld [vmem:[%s962] sm:$0xf]
      %v964 = vmul.f32 %v953, %v963
      %v965 = vsel %vm773, %v961, 0.0
      %966 = vadd.xlane.f32.xlu0 %v965
      %v967 = vpop.xlane.xlu0 %966
      %v968 = vadd.f32 %v964, %v967
      %969 = vst.msk [vmem:[%s962] sm:$0xf] %vm795, %v968
      %v970 = vpack.c.bf16 %v961, %v961
      %971 = vrot.lane.b32.xlu0 %v885, 64
      %v972 = vpop.permute.xlu0 %971
      %v974 = vsel %vm798, %v970, 0
      %v977 = vsel %vm802, %v972, 0
      %979 = vmatpush.bf16.msra.mxu0 0
      %980 = vmatpush.bf16.msra.mxu0 0
      %981 = vmatpush.bf16.msra.mxu0 0
      %982 = vmatpush.bf16.msra.mxu0 0
      %983 = vmatpush.bf16.msra.mxu0 0
      %984 = vmatpush.bf16.msra.mxu0 0
      %985 = vmatpush.bf16.msra.mxu0 0
      %986 = vmatpush.bf16.msra.mxu0 %v977
      %987 = vmatmul.bf16.gmra.mxu0 %v974
      %v988 = vpop.f32.mrf.mxu0
      %v989 = vadd.f32 0.0, %v988
      %v990 = vpop.f32.mrf.mxu0
      %991 = vdwg.mxu0
      %v992 = vld [vmem:[#allocation5] sm:$0xf]
      %994 = vset.pattern.permute.xlu0 0
      %995 = vperm.xlu0 %994, %v953
      %v996 = vpop.permute.xlu0 %995
      %v998 = vmul.f32 %v996, %v992
      %1000 = vrot.lane.b32.xlu0 %v989, 64
      %v1001 = vpop.permute.xlu0 %1000
      %v1003 = vadd.f32 %v998, %v1001
      %vm1004 = vcmask 781824
      %1005 = vst.msk [vmem:[#allocation5] sm:$0xf] %vm1004, %v1003
      %1006 = vst.msk [vmem:[%s945] sm:$0xf] %vm795, %v950
      %1007 = vrot.lane.b32.xlu0 %v751, 32
      %v1008 = vpop.permute.xlu0 %1007
      %1009 = vrot.lane.b32.xlu0 %v835, 32
      %v1010 = vpop.permute.xlu0 %1009
      %v1012 = vsel %vm752, %v1008, 0
      %v1015 = vsel %vm752, %v1010, 0
      %1017 = vmatpush.bf16.xpose.msra.mxu0 0
      %1018 = vmatpush.bf16.xpose.msra.mxu0 0
      %1019 = vmatpush.bf16.xpose.msra.mxu0 0
      %1020 = vmatpush.bf16.xpose.msra.mxu0 0
      %1021 = vmatpush.bf16.xpose.msra.mxu0 0
      %1022 = vmatpush.bf16.xpose.msra.mxu0 0
      %1023 = vmatpush.bf16.xpose.msra.mxu0 0
      %1024 = vmatpush.bf16.xpose.msra.mxu0 %v1015
      %1025 = vmatmul.bf16.gmra.mxu0 %v1012
      %v1026 = vpop.f32.mrf.mxu0
      %v1027 = vadd.f32 0.0, %v1026
      %v1028 = vpop.f32.mrf.mxu0
      %1029 = vdwg.mxu0
      %s1030 = scalar_lea.vmem [#allocation3], 12
      %v1031 = vld [vmem:[%s1030] sm:$0xf]
      %v1032 = vsel %vm773, %v1027, -inf
      %1033 = vmax.xlane.f32.xlu0 %v1032
      %v1034 = vpop.xlane.xlu0 %1033
      %v1035 = vmax.f32 %v1031, %v1034
      %v1036 = vsub.f32 %v1031, %v1035
      %v1037 = vmul.f32 %v1036, 1.442695
      %v1038 = vpow.pop %v1037
      %1040 = vset.pattern.permute.xlu0 0
      %1041 = vperm.xlu0 %1040, %v1035
      %v1042 = vpop.permute.xlu0 %1041
      %v1044 = vsub.f32 %v1027, %v1042
      %v1045 = vmul.f32 %v1044, 1.442695
      %v1046 = vpow.pop %v1045
      %s1047 = scalar_lea.vmem [#allocation4], 12
      %v1048 = vld [vmem:[%s1047] sm:$0xf]
      %v1049 = vmul.f32 %v1038, %v1048
      %v1050 = vsel %vm773, %v1046, 0.0
      %1051 = vadd.xlane.f32.xlu0 %v1050
      %v1052 = vpop.xlane.xlu0 %1051
      %v1053 = vadd.f32 %v1049, %v1052
      %1054 = vst.msk [vmem:[%s1047] sm:$0xf] %vm795, %v1053
      %v1055 = vpack.c.bf16 %v1046, %v1046
      %1056 = vrot.lane.b32.xlu0 %v885, 32
      %v1057 = vpop.permute.xlu0 %1056
      %v1059 = vsel %vm798, %v1055, 0
      %v1062 = vsel %vm802, %v1057, 0
      %1064 = vmatpush.bf16.msra.mxu0 0
      %1065 = vmatpush.bf16.msra.mxu0 0
      %1066 = vmatpush.bf16.msra.mxu0 0
      %1067 = vmatpush.bf16.msra.mxu0 0
      %1068 = vmatpush.bf16.msra.mxu0 0
      %1069 = vmatpush.bf16.msra.mxu0 0
      %1070 = vmatpush.bf16.msra.mxu0 0
      %1071 = vmatpush.bf16.msra.mxu0 %v1062
      %1072 = vmatmul.bf16.gmra.mxu0 %v1059
      %v1073 = vpop.f32.mrf.mxu0
      %v1074 = vadd.f32 0.0, %v1073
      %v1075 = vpop.f32.mrf.mxu0
      %1076 = vdwg.mxu0
      %v1077 = vld [vmem:[#allocation5] sm:$0xf]
      %1079 = vset.pattern.permute.xlu0 0
      %1080 = vperm.xlu0 %1079, %v1038
      %v1081 = vpop.permute.xlu0 %1080
      %v1083 = vmul.f32 %v1081, %v1077
      %1085 = vrot.lane.b32.xlu0 %v1074, 96
      %v1086 = vpop.permute.xlu0 %1085
      %v1088 = vadd.f32 %v1083, %v1086
      %vm1089 = vcmask 1044224
      %1090 = vst.msk [vmem:[#allocation5] sm:$0xf] %vm1089, %v1088
      %1091 = vst.msk [vmem:[%s1030] sm:$0xf] %vm795, %v1035
      // Predicated region
      $region81: #{set_transformer_forward.13} parent=75 // pred_check
        %p1092 = pneg %p520
      $region82: #{set_transformer_forward.13} parent=75 // pred_check_branch
        %1094 = sbr.rel (%p1092) target = $region84
      $region83: #{set_transformer_forward.13} parent=75 // pred_region
        %v1095 = vld [vmem:[#allocation5] sm:$0xf]
        %v1096 = vld [vmem:[#allocation4] sm:$0xf]
        %v1097 = vrcp.pop %v1096
        %1099 = vset.pattern.permute.xlu0 0
        %1100 = vperm.xlu0 %1099, %v1097
        %v1101 = vpop.permute.xlu0 %1100
        %v1103 = vmul.f32 %v1095, %v1101
        %v1104 = vld [vmem:[%s874] sm:$0xf]
        %v1105 = vrcp.pop %v1104
        %1107 = vset.pattern.permute.xlu0 0
        %1108 = vperm.xlu0 %1107, %v1105
        %v1109 = vpop.permute.xlu0 %1108
        %v1111 = vmul.f32 %v1095, %v1109
        %v1112 = vld [vmem:[%s962] sm:$0xf]
        %v1113 = vrcp.pop %v1112
        %1115 = vset.pattern.permute.xlu0 0
        %1116 = vperm.xlu0 %1115, %v1113
        %v1117 = vpop.permute.xlu0 %1116
        %v1119 = vmul.f32 %v1095, %v1117
        %v1120 = vld [vmem:[%s1047] sm:$0xf]
        %v1121 = vrcp.pop %v1120
        %1123 = vset.pattern.permute.xlu0 0
        %1124 = vperm.xlu0 %1123, %v1121
        %v1125 = vpop.permute.xlu0 %1124
        %v1127 = vmul.f32 %v1095, %v1125
        %v1128 = vsel %vm752, %v1103, %v1111
        %vm1129 = vcmask 523264
        %v1130 = vsel %vm1129, %v1128, %v1119
        %vm1131 = vcmask 785408
        %v1132 = vsel %vm1131, %v1130, %v1127
        %v1133 = vpack.c.bf16 %v1132, %v1132
        %v1134 = vld [vmem:[%s6] sm:$0xf]
        %v1135 = vld [vmem:[%s6 + $0x4] sm:$0xf]
        %v1136 = vld [vmem:[%s6 + $0x8] sm:$0xf]
        %v1137 = vld [vmem:[%s6 + $0xc] sm:$0xf]
        %v1138 = vld [vmem:[%s6 + $0x10] sm:$0xf]
        %v1139 = vld [vmem:[%s6 + $0x14] sm:$0xf]
        %v1140 = vld [vmem:[%s6 + $0x18] sm:$0xf]
        %v1141 = vld [vmem:[%s6 + $0x1c] sm:$0xf]
        %v1142 = vld [vmem:[%s6 + $0x20] sm:$0xf]
        %v1143 = vld [vmem:[%s6 + $0x24] sm:$0xf]
        %v1144 = vld [vmem:[%s6 + $0x28] sm:$0xf]
        %v1145 = vld [vmem:[%s6 + $0x2c] sm:$0xf]
        %v1146 = vld [vmem:[%s6 + $0x30] sm:$0xf]
        %v1147 = vld [vmem:[%s6 + $0x34] sm:$0xf]
        %v1148 = vld [vmem:[%s6 + $0x38] sm:$0xf]
        %v1149 = vld [vmem:[%s6 + $0x3c] sm:$0xf]
        %v1150 = vld [vmem:[%s7] sm:$0x1]
        %v1152 = vperm.slane %v1150, 0
        %v1170 = vunpack.c.l.b16 %v1134
        %v1171 = vunpack.c.l.b16 %v1135
        %v1172 = vunpack.c.l.b16 %v1136
        %v1173 = vunpack.c.l.b16 %v1137
        %v1174 = vunpack.c.l.b16 %v1138
        %v1175 = vunpack.c.l.b16 %v1139
        %v1176 = vunpack.c.l.b16 %v1140
        %v1177 = vunpack.c.l.b16 %v1141
        %v1178 = vunpack.c.l.b16 %v1142
        %v1179 = vunpack.c.l.b16 %v1143
        %v1180 = vunpack.c.l.b16 %v1144
        %v1181 = vunpack.c.l.b16 %v1145
        %v1182 = vunpack.c.l.b16 %v1146
        %v1183 = vunpack.c.l.b16 %v1147
        %v1184 = vunpack.c.l.b16 %v1148
        %v1185 = vunpack.c.l.b16 %v1149
        %v1186 = vpack.c.b16 %v1171, %v1170
        %v1187 = vpack.c.b16 %v1173, %v1172
        %v1188 = vpack.c.b16 %v1175, %v1174
        %v1189 = vpack.c.b16 %v1177, %v1176
        %v1190 = vpack.c.b16 %v1179, %v1178
        %v1191 = vpack.c.b16 %v1181, %v1180
        %v1192 = vpack.c.b16 %v1183, %v1182
        %v1193 = vpack.c.b16 %v1185, %v1184
        %1202 = vmatpush.bf16.msra.mxu0 %v1193
        %1203 = vmatpush.bf16.msra.mxu0 %v1192
        %1204 = vmatpush.bf16.msra.mxu0 %v1191
        %1205 = vmatpush.bf16.msra.mxu0 %v1190
        %1206 = vmatpush.bf16.msra.mxu0 %v1189
        %1207 = vmatpush.bf16.msra.mxu0 %v1188
        %1208 = vmatpush.bf16.msra.mxu0 %v1187
        %1209 = vmatpush.bf16.msra.mxu0 %v1186
        %1210 = vmatmul.bf16.gmra.mxu0 %v1133
        %v1211 = vpop.f32.mrf.mxu0
        %v1212 = vadd.f32 %v1152, %v1211
        %v1213 = vpop.f32.mrf.mxu0
        %1214 = vdwg.mxu0
        %v1215 = vadd.f32 %v519, %v1212
        %v1216 = vld [vmem:[%s8] sm:$0x1]
        %v1217 = vld [vmem:[%s9] sm:$0x1]
        %v1218 = vsel %vm802, %v1215, 0.0
        %1219 = vadd.xlane.f32.xlu0 %v1218
        %v1220 = vpop.xlane.xlu0 %1219
        %v1221 = vrcp.pop 128.0
        %v1222 = vmul.f32 128.0, %v1221
        %v1223 = vsub.f32 1.0, %v1222
        %v1224 = vmul.f32 %v1221, %v1223
        %v1225 = vadd.f32 %v1221, %v1224
        %vm1226 = vweird.f32 %v1221
        %v1227 = vsel %vm1226, %v1221, %v1225
        %v1228 = vmul.f32 %v1220, %v1227
        %v1229 = vsub.f32 %v1215, %v1228
        %v1230 = vmul.f32 %v1229, %v1229
        %v1231 = vsel %vm802, %v1230, 0.0
        %1232 = vadd.xlane.f32.xlu0 %v1231
        %v1233 = vpop.xlane.xlu0 %1232
        %v1234 = vmul.f32 %v1233, %v1227
        %v1235 = vadd.f32 %v1234, 1e-05
        %v1236 = vrsqrt.pop %v1235
        %v1237 = vmul.f32 %v1236, %v1235
        %v1238 = vmul.f32 %v1237, %v1236
        %v1239 = vmul.f32 0.5, %v1238
        %v1240 = vsub.f32 1.5, %v1239
        %v1241 = vmul.f32 %v1236, %v1240
        %vm1242 = vweird.f32 %v1235
        %vm1243 = vweird.f32 %v1236
        %vm1244 = vmor %vm1242, %vm1243
        %v1245 = vsel %vm1244, %v1236, %v1241
        %v1246 = vmul.f32 %v1229, %v1245
        %v1248 = vperm.slane %v1216, 0
        %v1250 = vmul.f32 %v1246, %v1248
        %v1252 = vperm.slane %v1217, 0
        %v1254 = vadd.f32 %v1250, %v1252
        %v1255 = vpack.c.bf16 %v1254, %v1254
        %v1256 = vld [vmem:[%s10] sm:$0xf]
        %v1257 = vld [vmem:[%s10 + $0x4] sm:$0xf]
        %v1258 = vld [vmem:[%s10 + $0x8] sm:$0xf]
        %v1259 = vld [vmem:[%s10 + $0xc] sm:$0xf]
        %v1260 = vld [vmem:[%s10 + $0x10] sm:$0xf]
        %v1261 = vld [vmem:[%s10 + $0x14] sm:$0xf]
        %v1262 = vld [vmem:[%s10 + $0x18] sm:$0xf]
        %v1263 = vld [vmem:[%s10 + $0x1c] sm:$0xf]
        %v1264 = vld [vmem:[%s10 + $0x20] sm:$0xf]
        %v1265 = vld [vmem:[%s10 + $0x24] sm:$0xf]
        %v1266 = vld [vmem:[%s10 + $0x28] sm:$0xf]
        %v1267 = vld [vmem:[%s10 + $0x2c] sm:$0xf]
        %v1268 = vld [vmem:[%s10 + $0x30] sm:$0xf]
        %v1269 = vld [vmem:[%s10 + $0x34] sm:$0xf]
        %v1270 = vld [vmem:[%s10 + $0x38] sm:$0xf]
        %v1271 = vld [vmem:[%s10 + $0x3c] sm:$0xf]
        %v1272 = vld [vmem:[%s11] sm:$0x1]
        %v1274 = vperm.slane %v1272, 0
        %v1292 = vunpack.c.l.b16 %v1256
        %v1293 = vunpack.c.l.b16 %v1257
        %v1294 = vunpack.c.l.b16 %v1258
        %v1295 = vunpack.c.l.b16 %v1259
        %v1296 = vunpack.c.l.b16 %v1260
        %v1297 = vunpack.c.l.b16 %v1261
        %v1298 = vunpack.c.l.b16 %v1262
        %v1299 = vunpack.c.l.b16 %v1263
        %v1300 = vunpack.c.l.b16 %v1264
        %v1301 = vunpack.c.l.b16 %v1265
        %v1302 = vunpack.c.l.b16 %v1266
        %v1303 = vunpack.c.l.b16 %v1267
        %v1304 = vunpack.c.l.b16 %v1268
        %v1305 = vunpack.c.l.b16 %v1269
        %v1306 = vunpack.c.l.b16 %v1270
        %v1307 = vunpack.c.l.b16 %v1271
        %v1308 = vpack.c.b16 %v1293, %v1292
        %v1309 = vpack.c.b16 %v1295, %v1294
        %v1310 = vpack.c.b16 %v1297, %v1296
        %v1311 = vpack.c.b16 %v1299, %v1298
        %v1312 = vpack.c.b16 %v1301, %v1300
        %v1313 = vpack.c.b16 %v1303, %v1302
        %v1314 = vpack.c.b16 %v1305, %v1304
        %v1315 = vpack.c.b16 %v1307, %v1306
        %1324 = vmatpush.bf16.msra.mxu0 %v1315
        %1325 = vmatpush.bf16.msra.mxu0 %v1314
        %1326 = vmatpush.bf16.msra.mxu0 %v1313
        %1327 = vmatpush.bf16.msra.mxu0 %v1312
        %1328 = vmatpush.bf16.msra.mxu0 %v1311
        %1329 = vmatpush.bf16.msra.mxu0 %v1310
        %1330 = vmatpush.bf16.msra.mxu0 %v1309
        %1331 = vmatpush.bf16.msra.mxu0 %v1308
        %1332 = vmatmul.bf16.gmra.mxu0 %v1255
        %v1333 = vpop.f32.mrf.mxu0
        %v1334 = vadd.f32 %v1274, %v1333
        %v1335 = vpop.f32.mrf.mxu0
        %1336 = vdwg.mxu0
        %v1337 = vmax.f32 %v1334, 0.0
        %v1338 = vpack.c.bf16 %v1337, %v1337
        %s1339 = scalar_lea.vmem %s10, 64
        %v1340 = vld [vmem:[%s1339] sm:$0xf]
        %v1341 = vld [vmem:[%s1339 + $0x4] sm:$0xf]
        %v1342 = vld [vmem:[%s1339 + $0x8] sm:$0xf]
        %v1343 = vld [vmem:[%s1339 + $0xc] sm:$0xf]
        %v1344 = vld [vmem:[%s1339 + $0x10] sm:$0xf]
        %v1345 = vld [vmem:[%s1339 + $0x14] sm:$0xf]
        %v1346 = vld [vmem:[%s1339 + $0x18] sm:$0xf]
        %v1347 = vld [vmem:[%s1339 + $0x1c] sm:$0xf]
        %v1348 = vld [vmem:[%s1339 + $0x20] sm:$0xf]
        %v1349 = vld [vmem:[%s1339 + $0x24] sm:$0xf]
        %v1350 = vld [vmem:[%s1339 + $0x28] sm:$0xf]
        %v1351 = vld [vmem:[%s1339 + $0x2c] sm:$0xf]
        %v1352 = vld [vmem:[%s1339 + $0x30] sm:$0xf]
        %v1353 = vld [vmem:[%s1339 + $0x34] sm:$0xf]
        %v1354 = vld [vmem:[%s1339 + $0x38] sm:$0xf]
        %v1355 = vld [vmem:[%s1339 + $0x3c] sm:$0xf]
        %s1356 = scalar_lea.vmem %s11, 1
        %v1357 = vld [vmem:[%s1356] sm:$0x1]
        %v1359 = vperm.slane %v1357, 0
        %v1377 = vunpack.c.l.b16 %v1340
        %v1378 = vunpack.c.l.b16 %v1341
        %v1379 = vunpack.c.l.b16 %v1342
        %v1380 = vunpack.c.l.b16 %v1343
        %v1381 = vunpack.c.l.b16 %v1344
        %v1382 = vunpack.c.l.b16 %v1345
        %v1383 = vunpack.c.l.b16 %v1346
        %v1384 = vunpack.c.l.b16 %v1347
        %v1385 = vunpack.c.l.b16 %v1348
        %v1386 = vunpack.c.l.b16 %v1349
        %v1387 = vunpack.c.l.b16 %v1350
        %v1388 = vunpack.c.l.b16 %v1351
        %v1389 = vunpack.c.l.b16 %v1352
        %v1390 = vunpack.c.l.b16 %v1353
        %v1391 = vunpack.c.l.b16 %v1354
        %v1392 = vunpack.c.l.b16 %v1355
        %v1393 = vpack.c.b16 %v1378, %v1377
        %v1394 = vpack.c.b16 %v1380, %v1379
        %v1395 = vpack.c.b16 %v1382, %v1381
        %v1396 = vpack.c.b16 %v1384, %v1383
        %v1397 = vpack.c.b16 %v1386, %v1385
        %v1398 = vpack.c.b16 %v1388, %v1387
        %v1399 = vpack.c.b16 %v1390, %v1389
        %v1400 = vpack.c.b16 %v1392, %v1391
        %1409 = vmatpush.bf16.msra.mxu0 %v1400
        %1410 = vmatpush.bf16.msra.mxu0 %v1399
        %1411 = vmatpush.bf16.msra.mxu0 %v1398
        %1412 = vmatpush.bf16.msra.mxu0 %v1397
        %1413 = vmatpush.bf16.msra.mxu0 %v1396
        %1414 = vmatpush.bf16.msra.mxu0 %v1395
        %1415 = vmatpush.bf16.msra.mxu0 %v1394
        %1416 = vmatpush.bf16.msra.mxu0 %v1393
        %1417 = vmatmul.bf16.gmra.mxu0 %v1338
        %v1418 = vpop.f32.mrf.mxu0
        %v1419 = vadd.f32 %v1359, %v1418
        %v1420 = vpop.f32.mrf.mxu0
        %1421 = vdwg.mxu0
        %v1422 = vmax.f32 %v1419, 0.0
        %v1423 = vpack.c.bf16 %v1422, %v1422
        %s1424 = scalar_lea.vmem %s10, 128
        %v1425 = vld [vmem:[%s1424] sm:$0xf]
        %v1426 = vld [vmem:[%s1424 + $0x4] sm:$0xf]
        %v1427 = vld [vmem:[%s1424 + $0x8] sm:$0xf]
        %v1428 = vld [vmem:[%s1424 + $0xc] sm:$0xf]
        %v1429 = vld [vmem:[%s1424 + $0x10] sm:$0xf]
        %v1430 = vld [vmem:[%s1424 + $0x14] sm:$0xf]
        %v1431 = vld [vmem:[%s1424 + $0x18] sm:$0xf]
        %v1432 = vld [vmem:[%s1424 + $0x1c] sm:$0xf]
        %v1433 = vld [vmem:[%s1424 + $0x20] sm:$0xf]
        %v1434 = vld [vmem:[%s1424 + $0x24] sm:$0xf]
        %v1435 = vld [vmem:[%s1424 + $0x28] sm:$0xf]
        %v1436 = vld [vmem:[%s1424 + $0x2c] sm:$0xf]
        %v1437 = vld [vmem:[%s1424 + $0x30] sm:$0xf]
        %v1438 = vld [vmem:[%s1424 + $0x34] sm:$0xf]
        %v1439 = vld [vmem:[%s1424 + $0x38] sm:$0xf]
        %v1440 = vld [vmem:[%s1424 + $0x3c] sm:$0xf]
        %s1441 = scalar_lea.vmem %s11, 2
        %v1442 = vld [vmem:[%s1441] sm:$0x1]
        %v1444 = vperm.slane %v1442, 0
        %v1462 = vunpack.c.l.b16 %v1425
        %v1463 = vunpack.c.l.b16 %v1426
        %v1464 = vunpack.c.l.b16 %v1427
        %v1465 = vunpack.c.l.b16 %v1428
        %v1466 = vunpack.c.l.b16 %v1429
        %v1467 = vunpack.c.l.b16 %v1430
        %v1468 = vunpack.c.l.b16 %v1431
        %v1469 = vunpack.c.l.b16 %v1432
        %v1470 = vunpack.c.l.b16 %v1433
        %v1471 = vunpack.c.l.b16 %v1434
        %v1472 = vunpack.c.l.b16 %v1435
        %v1473 = vunpack.c.l.b16 %v1436
        %v1474 = vunpack.c.l.b16 %v1437
        %v1475 = vunpack.c.l.b16 %v1438
        %v1476 = vunpack.c.l.b16 %v1439
        %v1477 = vunpack.c.l.b16 %v1440
        %v1478 = vpack.c.b16 %v1463, %v1462
        %v1479 = vpack.c.b16 %v1465, %v1464
        %v1480 = vpack.c.b16 %v1467, %v1466
        %v1481 = vpack.c.b16 %v1469, %v1468
        %v1482 = vpack.c.b16 %v1471, %v1470
        %v1483 = vpack.c.b16 %v1473, %v1472
        %v1484 = vpack.c.b16 %v1475, %v1474
        %v1485 = vpack.c.b16 %v1477, %v1476
        %1494 = vmatpush.bf16.msra.mxu0 %v1485
        %1495 = vmatpush.bf16.msra.mxu0 %v1484
        %1496 = vmatpush.bf16.msra.mxu0 %v1483
        %1497 = vmatpush.bf16.msra.mxu0 %v1482
        %1498 = vmatpush.bf16.msra.mxu0 %v1481
        %1499 = vmatpush.bf16.msra.mxu0 %v1480
        %1500 = vmatpush.bf16.msra.mxu0 %v1479
        %1501 = vmatpush.bf16.msra.mxu0 %v1478
        %1502 = vmatmul.bf16.gmra.mxu0 %v1423
        %v1503 = vpop.f32.mrf.mxu0
        %v1504 = vadd.f32 %v1444, %v1503
        %v1505 = vpop.f32.mrf.mxu0
        %1506 = vdwg.mxu0
        %v1507 = vmax.f32 %v1504, 0.0
        %v1508 = vadd.f32 %v1254, %v1507
        %v1509 = vld [vmem:[%s12] sm:$0x1]
        %v1510 = vld [vmem:[%s13] sm:$0x1]
        %v1511 = vsel %vm802, %v1508, 0.0
        %1512 = vadd.xlane.f32.xlu0 %v1511
        %v1513 = vpop.xlane.xlu0 %1512
        %v1514 = vmul.f32 %v1513, %v1227
        %v1515 = vsub.f32 %v1508, %v1514
        %v1516 = vmul.f32 %v1515, %v1515
        %v1517 = vsel %vm802, %v1516, 0.0
        %1518 = vadd.xlane.f32.xlu0 %v1517
        %v1519 = vpop.xlane.xlu0 %1518
        %v1520 = vmul.f32 %v1519, %v1227
        %v1521 = vadd.f32 %v1520, 1e-05
        %v1522 = vrsqrt.pop %v1521
        %v1523 = vmul.f32 %v1522, %v1521
        %v1524 = vmul.f32 %v1523, %v1522
        %v1525 = vmul.f32 0.5, %v1524
        %v1526 = vsub.f32 1.5, %v1525
        %v1527 = vmul.f32 %v1522, %v1526
        %vm1528 = vweird.f32 %v1521
        %vm1529 = vweird.f32 %v1522
        %vm1530 = vmor %vm1528, %vm1529
        %v1531 = vsel %vm1530, %v1522, %v1527
        %v1532 = vmul.f32 %v1515, %v1531
        %v1534 = vperm.slane %v1509, 0
        %v1536 = vmul.f32 %v1532, %v1534
        %v1538 = vperm.slane %v1510, 0
        %v1540 = vadd.f32 %v1536, %v1538
        %1541 = vst [vmem:[%s517] sm:$0xf] %v1540
      $region84: #{set_transformer_forward.13} parent=75 // pred_fallthru
        _
      %p1542 = scmp.lt.s32.totalorder %s30, 1
      %s1543 = scalar_select %p1542, %s30, 1
      %p1544 = scmp.lt.s32.totalorder %s31, 0
      %s1545 = scalar_select %p1544, %s31, 0
      %s1546 = sadd.s32 %s1545, %s1543
      %s1547 = smul.addr %s1546, 4
      %s1548 = scalar_lea.vmem %s14, %s1547
      // Predicated region
      $region85: #{set_transformer_forward.13} parent=75 // pred_check
        %p1549 = pneg %p370
      $region86: #{set_transformer_forward.13} parent=75 // pred_check_branch
        %1551 = sbr.rel (%p1549) target = $region88
      $region87: #{set_transformer_forward.13} parent=75 // pred_region
        _
      $region88: #{set_transformer_forward.13} parent=75 // pred_fallthru
        _
    $region76: #{set_transformer_forward.13} parent=5 // pred_fallthru
      _
    %p1552 = scmp.le.s32.totalorder 2, %s20
    // Predicated region
    $region89: #{set_transformer_forward.13} parent=5 // pred_check
      %p1553 = pneg %p1552
    $region90: #{set_transformer_forward.13} parent=5 // pred_check_branch
      %1555 = sbr.rel (%p1553) target = $region92
    $region91: #{set_transformer_forward.13} parent=5 // pred_region
      %s1556 = ssub.s32 %s20, 2
      // Predicated region
      $region93: #{set_transformer_forward.13} parent=91 // pred_check
        %p1557 = pneg %p376
      $region94: #{set_transformer_forward.13} parent=91 // pred_check_branch
        %1559 = sbr.rel (%p1557) target = $region96
      $region95: #{set_transformer_forward.13} parent=91 // pred_region
        %p1560 = scmp.lt.s32.totalorder %s33, 1
        %s1561 = scalar_select %p1560, %s33, 1
        %p1562 = scmp.lt.s32.totalorder %s34, 0
        %s1563 = scalar_select %p1562, %s34, 0
        %s1564 = sadd.s32 %s1563, %s1561
        %s1565 = smul.addr %s1564, 4
        %s1566 = scalar_lea.vmem %s14, %s1565
      $region96: #{set_transformer_forward.13} parent=91 // pred_fallthru
        _
    $region92: #{set_transformer_forward.13} parent=5 // pred_fallthru
      _
  $region6: #{set_transformer_forward.13} parent=0 // loop_footer
    %s24 = sadd.s32 1, %s20
  $region7: #{set_transformer_forward.13} parent=0 // loop_footer_branch
    %19 = sbr.rel target = $region3
  $region8: #{set_transformer_forward.13} parent=0 // loop_exit
    _

// kernel: set_transformer_forward.14
$region0: #{set_transformer_forward.14}
  #allocation0 [shape = 'u32[]', space=smem, size = 0x4, offset = 0x4, fixed_abs, tag = 'smem constant byte address 0x4 - core index']
  #allocation1 [shape = 'u32[72,128]{1,0:T(1,128)}', space=vmem, size = 0x9000, scoped, tag = 'internal scratch']
  #allocation2 [shape = 'f32[4,128]{1,0:T(4,128)}', space=vmem, size = 0x800, scoped, tag = 'scratch operand']
  #allocation3 [shape = 'f32[4,4,1]{2,1,0:T(4,128)}', space=vmem, size = 0x2000, scoped, tag = 'scratch operand']
  #allocation4 [shape = 'f32[4,4,1]{2,1,0:T(4,128)}', space=vmem, size = 0x2000, scoped, tag = 'scratch operand']
  #allocation5 [shape = 'f32[4,128]{1,0:T(4,128)}', space=vmem, size = 0x800, scoped, tag = 'scratch operand']
  %s0 = inlined_call_operand.vmem [shape: f32[2,4,128], index: 0, kind: input, shape index: {}, may-alias: {0,1}]
  %s1 = inlined_call_operand.vmem [shape: f32[2,4,128], index: 1, kind: input, shape index: {}, may-alias: {0,1}]
  %s2 = inlined_call_operand.vmem [shape: bf16[128,128], index: 2, kind: input, shape index: {}]
  %s3 = inlined_call_operand.vmem [shape: f32[1,128], index: 3, kind: input, shape index: {}]
  %s4 = inlined_call_operand.vmem [shape: bf16[128,256], index: 4, kind: input, shape index: {}]
  %s5 = inlined_call_operand.vmem [shape: f32[1,256], index: 5, kind: input, shape index: {}]
  %s6 = inlined_call_operand.vmem [shape: bf16[128,128], index: 6, kind: input, shape index: {}]
  %s7 = inlined_call_operand.vmem [shape: f32[1,128], index: 7, kind: input, shape index: {}]
  %s8 = inlined_call_operand.vmem [shape: f32[1,128], index: 8, kind: input, shape index: {}]
  %s9 = inlined_call_operand.vmem [shape: f32[1,128], index: 9, kind: input, shape index: {}]
  %s10 = inlined_call_operand.vmem [shape: bf16[3,128,128], index: 10, kind: input, shape index: {}]
  %s11 = inlined_call_operand.vmem [shape: f32[3,1,128], index: 11, kind: input, shape index: {}]
  %s12 = inlined_call_operand.vmem [shape: f32[1,128], index: 12, kind: input, shape index: {}]
  %s13 = inlined_call_operand.vmem [shape: f32[1,128], index: 13, kind: input, shape index: {}]
  %s14 = inlined_call_operand.vmem [shape: f32[2,4,128], index: 14, kind: output, shape index: {}]
  %s15 = sld [smem:[#allocation0]]
  $region97: #{set_transformer_forward.14} parent=0
    _
  %s17 = ssub.s32 1, %s15
  %s18 = scalar_select 0, %s17, %s15
  loop: start=0, step=1, limit=4
  $region2: #{set_transformer_forward.14} parent=0 // loop_pre_header
    _
  $region3: #{set_transformer_forward.14} parent=0 // loop_header
    %s20 = sphi 0, %s24
    %p21 = scmp.ge.s32.totalorder %s20, 4
    %s27 = sphi 0, %s46
    %s28 = sphi 0, %s42
    %s29 = sphi 0, %s38
    %s30 = sphi 0, %s27
    %s31 = sphi 0, %s28
    %s32 = sphi 0, %s29
    %s33 = sphi 0, %s30
    %s34 = sphi 0, %s31
    %s35 = sphi 0, %s32
    %s51 = sphi 0, %s53
    %s54 = sphi 0, %s51
    %s55 = sphi 0, %s54
    %s71 = sphi 0, %s55
    %s79 = sphi 0, %s81
    %s82 = sphi 0, %s79
    %s83 = sphi 0, %s82
    %s99 = sphi 0, %s83
    %s103 = sphi 0, %s103
    %s105 = sphi 0, %s103
    %s106 = sphi 0, %s105
    %s120 = sphi 0, %s106
    %s124 = sphi 0, %s124
    %s126 = sphi 0, %s124
    %s127 = sphi 0, %s126
    %s141 = sphi 0, %s127
    %s145 = sphi 0, %s145
    %s147 = sphi 0, %s145
    %s148 = sphi 0, %s147
    %s162 = sphi 0, %s148
    %s166 = sphi 0, %s166
    %s168 = sphi 0, %s166
    %s169 = sphi 0, %s168
    %s183 = sphi 0, %s169
    %s187 = sphi 0, %s187
    %s189 = sphi 0, %s187
    %s190 = sphi 0, %s189
    %s204 = sphi 0, %s190
    %s208 = sphi 0, %s208
    %s210 = sphi 0, %s208
    %s211 = sphi 0, %s210
    %s225 = sphi 0, %s211
    %s229 = sphi 0, %s229
    %s231 = sphi 0, %s229
    %s232 = sphi 0, %s231
    %s246 = sphi 0, %s232
    %s250 = sphi 0, %s250
    %s252 = sphi 0, %s250
    %s253 = sphi 0, %s252
    %s267 = sphi 0, %s253
    %s271 = sphi 0, %s271
    %s273 = sphi 0, %s271
    %s274 = sphi 0, %s273
    %s288 = sphi 0, %s274
    %s292 = sphi 0, %s292
    %s294 = sphi 0, %s292
    %s295 = sphi 0, %s294
    %s309 = sphi 0, %s295
    %s313 = sphi 0, %s313
    %s315 = sphi 0, %s313
    %s316 = sphi 0, %s315
    %s330 = sphi 0, %s316
    %s334 = sphi 0, %s334
    %s336 = sphi 0, %s334
    %s337 = sphi 0, %s336
    %s351 = sphi 0, %s337
    %s359 = sphi 0, %s361
    %s362 = sphi 0, %s359
    %s363 = sphi 0, %s362
    %s379 = sphi 0, %s363
  $region4: #{set_transformer_forward.14} parent=0 // loop_header_branch
    %23 = sbr.rel (%p21) target = $region8
  $region5: #{set_transformer_forward.14} parent=0 // loop_body
    %s25 = ssub.s32 %s20, 1
    %s26 = ssub.s32 %s20, 2
    %s36 = sadd.s32 1, %s29
    %p37 = scmp.ge.s32.totalorder %s36, 1
    %s38 = scalar_select %p37, 0, %s36
    %s39 = sadd.s32 1, %s28
    %s40 = scalar_select %p37, %s39, %s28
    %p41 = scmp.ge.s32.totalorder %s40, 1
    %s42 = scalar_select %p41, 0, %s40
    %s43 = sadd.s32 1, %s27
    %s44 = scalar_select %p41, %s43, %s27
    %p45 = scmp.ge.s32.totalorder %s44, 2
    %s46 = scalar_select %p45, 0, %s44
    %s47 = ssub.s32 %s27, %s46
    %s48 = ssub.s32 %s28, %s42
    %s49 = sor.u32 %s47, %s48
    %p50 = scmp.eq.s32.totalorder %s49, 0
    %s52 = sadd.s32 %s51, 1
    %s53 = scalar_select %p50, %s51, %s52
    %p56 = pneg %p50
    %p57 = scmp.eq.s32.totalorder %s20, 1
    %p58 = por %p56, %p57
    %p59 = scmp.ne.s32.totalorder %s51, %s54
    %p60 = scmp.eq.s32.totalorder %s20, 0
    %p61 = por %p59, %p60
    %p62 = scmp.ne.s32.totalorder %s51, %s54
    %p63 = scmp.eq.s32.totalorder %s25, 1
    %p64 = por %p62, %p63
    %p65 = scmp.ne.s32.totalorder %s54, %s55
    %p66 = scmp.eq.s32.totalorder %s25, 0
    %p67 = por %p65, %p66
    %p68 = scmp.ne.s32.totalorder %s54, %s55
    %p69 = scmp.eq.s32.totalorder %s26, 1
    %p70 = por %p68, %p69
    %p72 = scmp.ne.s32.totalorder %s55, %s71
    %p73 = scmp.eq.s32.totalorder %s26, 0
    %p74 = por %p72, %p73
    %s75 = ssub.s32 %s27, %s46
    %s76 = ssub.s32 %s29, %s38
    %s77 = sor.u32 %s75, %s76
    %p78 = scmp.eq.s32.totalorder %s77, 0
    %s80 = sadd.s32 %s79, 1
    %s81 = scalar_select %p78, %s79, %s80
    %p84 = pneg %p78
    %p85 = scmp.eq.s32.totalorder %s20, 1
    %p86 = por %p84, %p85
    %p87 = scmp.ne.s32.totalorder %s79, %s82
    %p88 = scmp.eq.s32.totalorder %s20, 0
    %p89 = por %p87, %p88
    %p90 = scmp.ne.s32.totalorder %s79, %s82
    %p91 = scmp.eq.s32.totalorder %s25, 1
    %p92 = por %p90, %p91
    %p93 = scmp.ne.s32.totalorder %s82, %s83
    %p94 = scmp.eq.s32.totalorder %s25, 0
    %p95 = por %p93, %p94
    %p96 = scmp.ne.s32.totalorder %s82, %s83
    %p97 = scmp.eq.s32.totalorder %s26, 1
    %p98 = por %p96, %p97
    %p100 = scmp.ne.s32.totalorder %s83, %s99
    %p101 = scmp.eq.s32.totalorder %s26, 0
    %p102 = por %p100, %p101
    %s104 = sadd.s32 %s103, 1
    %p107 = scmp.eq.s32.totalorder %s20, 1
    %p108 = scmp.ne.s32.totalorder %s103, %s105
    %p109 = scmp.eq.s32.totalorder %s20, 0
    %p110 = por %p108, %p109
    %p111 = scmp.ne.s32.totalorder %s103, %s105
    %p112 = scmp.eq.s32.totalorder %s25, 1
    %p113 = por %p111, %p112
    %p114 = scmp.ne.s32.totalorder %s105, %s106
    %p115 = scmp.eq.s32.totalorder %s25, 0
    %p116 = por %p114, %p115
    %p117 = scmp.ne.s32.totalorder %s105, %s106
    %p118 = scmp.eq.s32.totalorder %s26, 1
    %p119 = por %p117, %p118
    %p121 = scmp.ne.s32.totalorder %s106, %s120
    %p122 = scmp.eq.s32.totalorder %s26, 0
    %p123 = por %p121, %p122
    %s125 = sadd.s32 %s124, 1
    %p128 = scmp.eq.s32.totalorder %s20, 1
    %p129 = scmp.ne.s32.totalorder %s124, %s126
    %p130 = scmp.eq.s32.totalorder %s20, 0
    %p131 = por %p129, %p130
    %p132 = scmp.ne.s32.totalorder %s124, %s126
    %p133 = scmp.eq.s32.totalorder %s25, 1
    %p134 = por %p132, %p133
    %p135 = scmp.ne.s32.totalorder %s126, %s127
    %p136 = scmp.eq.s32.totalorder %s25, 0
    %p137 = por %p135, %p136
    %p138 = scmp.ne.s32.totalorder %s126, %s127
    %p139 = scmp.eq.s32.totalorder %s26, 1
    %p140 = por %p138, %p139
    %p142 = scmp.ne.s32.totalorder %s127, %s141
    %p143 = scmp.eq.s32.totalorder %s26, 0
    %p144 = por %p142, %p143
    %s146 = sadd.s32 %s145, 1
    %p149 = scmp.eq.s32.totalorder %s20, 1
    %p150 = scmp.ne.s32.totalorder %s145, %s147
    %p151 = scmp.eq.s32.totalorder %s20, 0
    %p152 = por %p150, %p151
    %p153 = scmp.ne.s32.totalorder %s145, %s147
    %p154 = scmp.eq.s32.totalorder %s25, 1
    %p155 = por %p153, %p154
    %p156 = scmp.ne.s32.totalorder %s147, %s148
    %p157 = scmp.eq.s32.totalorder %s25, 0
    %p158 = por %p156, %p157
    %p159 = scmp.ne.s32.totalorder %s147, %s148
    %p160 = scmp.eq.s32.totalorder %s26, 1
    %p161 = por %p159, %p160
    %p163 = scmp.ne.s32.totalorder %s148, %s162
    %p164 = scmp.eq.s32.totalorder %s26, 0
    %p165 = por %p163, %p164
    %s167 = sadd.s32 %s166, 1
    %p170 = scmp.eq.s32.totalorder %s20, 1
    %p171 = scmp.ne.s32.totalorder %s166, %s168
    %p172 = scmp.eq.s32.totalorder %s20, 0
    %p173 = por %p171, %p172
    %p174 = scmp.ne.s32.totalorder %s166, %s168
    %p175 = scmp.eq.s32.totalorder %s25, 1
    %p176 = por %p174, %p175
    %p177 = scmp.ne.s32.totalorder %s168, %s169
    %p178 = scmp.eq.s32.totalorder %s25, 0
    %p179 = por %p177, %p178
    %p180 = scmp.ne.s32.totalorder %s168, %s169
    %p181 = scmp.eq.s32.totalorder %s26, 1
    %p182 = por %p180, %p181
    %p184 = scmp.ne.s32.totalorder %s169, %s183
    %p185 = scmp.eq.s32.totalorder %s26, 0
    %p186 = por %p184, %p185
    %s188 = sadd.s32 %s187, 1
    %p191 = scmp.eq.s32.totalorder %s20, 1
    %p192 = scmp.ne.s32.totalorder %s187, %s189
    %p193 = scmp.eq.s32.totalorder %s20, 0
    %p194 = por %p192, %p193
    %p195 = scmp.ne.s32.totalorder %s187, %s189
    %p196 = scmp.eq.s32.totalorder %s25, 1
    %p197 = por %p195, %p196
    %p198 = scmp.ne.s32.totalorder %s189, %s190
    %p199 = scmp.eq.s32.totalorder %s25, 0
    %p200 = por %p198, %p199
    %p201 = scmp.ne.s32.totalorder %s189, %s190
    %p202 = scmp.eq.s32.totalorder %s26, 1
    %p203 = por %p201, %p202
    %p205 = scmp.ne.s32.totalorder %s190, %s204
    %p206 = scmp.eq.s32.totalorder %s26, 0
    %p207 = por %p205, %p206
    %s209 = sadd.s32 %s208, 1
    %p212 = scmp.eq.s32.totalorder %s20, 1
    %p213 = scmp.ne.s32.totalorder %s208, %s210
    %p214 = scmp.eq.s32.totalorder %s20, 0
    %p215 = por %p213, %p214
    %p216 = scmp.ne.s32.totalorder %s208, %s210
    %p217 = scmp.eq.s32.totalorder %s25, 1
    %p218 = por %p216, %p217
    %p219 = scmp.ne.s32.totalorder %s210, %s211
    %p220 = scmp.eq.s32.totalorder %s25, 0
    %p221 = por %p219, %p220
    %p222 = scmp.ne.s32.totalorder %s210, %s211
    %p223 = scmp.eq.s32.totalorder %s26, 1
    %p224 = por %p222, %p223
    %p226 = scmp.ne.s32.totalorder %s211, %s225
    %p227 = scmp.eq.s32.totalorder %s26, 0
    %p228 = por %p226, %p227
    %s230 = sadd.s32 %s229, 1
    %p233 = scmp.eq.s32.totalorder %s20, 1
    %p234 = scmp.ne.s32.totalorder %s229, %s231
    %p235 = scmp.eq.s32.totalorder %s20, 0
    %p236 = por %p234, %p235
    %p237 = scmp.ne.s32.totalorder %s229, %s231
    %p238 = scmp.eq.s32.totalorder %s25, 1
    %p239 = por %p237, %p238
    %p240 = scmp.ne.s32.totalorder %s231, %s232
    %p241 = scmp.eq.s32.totalorder %s25, 0
    %p242 = por %p240, %p241
    %p243 = scmp.ne.s32.totalorder %s231, %s232
    %p244 = scmp.eq.s32.totalorder %s26, 1
    %p245 = por %p243, %p244
    %p247 = scmp.ne.s32.totalorder %s232, %s246
    %p248 = scmp.eq.s32.totalorder %s26, 0
    %p249 = por %p247, %p248
    %s251 = sadd.s32 %s250, 1
    %p254 = scmp.eq.s32.totalorder %s20, 1
    %p255 = scmp.ne.s32.totalorder %s250, %s252
    %p256 = scmp.eq.s32.totalorder %s20, 0
    %p257 = por %p255, %p256
    %p258 = scmp.ne.s32.totalorder %s250, %s252
    %p259 = scmp.eq.s32.totalorder %s25, 1
    %p260 = por %p258, %p259
    %p261 = scmp.ne.s32.totalorder %s252, %s253
    %p262 = scmp.eq.s32.totalorder %s25, 0
    %p263 = por %p261, %p262
    %p264 = scmp.ne.s32.totalorder %s252, %s253
    %p265 = scmp.eq.s32.totalorder %s26, 1
    %p266 = por %p264, %p265
    %p268 = scmp.ne.s32.totalorder %s253, %s267
    %p269 = scmp.eq.s32.totalorder %s26, 0
    %p270 = por %p268, %p269
    %s272 = sadd.s32 %s271, 1
    %p275 = scmp.eq.s32.totalorder %s20, 1
    %p276 = scmp.ne.s32.totalorder %s271, %s273
    %p277 = scmp.eq.s32.totalorder %s20, 0
    %p278 = por %p276, %p277
    %p279 = scmp.ne.s32.totalorder %s271, %s273
    %p280 = scmp.eq.s32.totalorder %s25, 1
    %p281 = por %p279, %p280
    %p282 = scmp.ne.s32.totalorder %s273, %s274
    %p283 = scmp.eq.s32.totalorder %s25, 0
    %p284 = por %p282, %p283
    %p285 = scmp.ne.s32.totalorder %s273, %s274
    %p286 = scmp.eq.s32.totalorder %s26, 1
    %p287 = por %p285, %p286
    %p289 = scmp.ne.s32.totalorder %s274, %s288
    %p290 = scmp.eq.s32.totalorder %s26, 0
    %p291 = por %p289, %p290
    %s293 = sadd.s32 %s292, 1
    %p296 = scmp.eq.s32.totalorder %s20, 1
    %p297 = scmp.ne.s32.totalorder %s292, %s294
    %p298 = scmp.eq.s32.totalorder %s20, 0
    %p299 = por %p297, %p298
    %p300 = scmp.ne.s32.totalorder %s292, %s294
    %p301 = scmp.eq.s32.totalorder %s25, 1
    %p302 = por %p300, %p301
    %p303 = scmp.ne.s32.totalorder %s294, %s295
    %p304 = scmp.eq.s32.totalorder %s25, 0
    %p305 = por %p303, %p304
    %p306 = scmp.ne.s32.totalorder %s294, %s295
    %p307 = scmp.eq.s32.totalorder %s26, 1
    %p308 = por %p306, %p307
    %p310 = scmp.ne.s32.totalorder %s295, %s309
    %p311 = scmp.eq.s32.totalorder %s26, 0
    %p312 = por %p310, %p311
    %s314 = sadd.s32 %s313, 1
    %p317 = scmp.eq.s32.totalorder %s20, 1
    %p318 = scmp.ne.s32.totalorder %s313, %s315
    %p319 = scmp.eq.s32.totalorder %s20, 0
    %p320 = por %p318, %p319
    %p321 = scmp.ne.s32.totalorder %s313, %s315
    %p322 = scmp.eq.s32.totalorder %s25, 1
    %p323 = por %p321, %p322
    %p324 = scmp.ne.s32.totalorder %s315, %s316
    %p325 = scmp.eq.s32.totalorder %s25, 0
    %p326 = por %p324, %p325
    %p327 = scmp.ne.s32.totalorder %s315, %s316
    %p328 = scmp.eq.s32.totalorder %s26, 1
    %p329 = por %p327, %p328
    %p331 = scmp.ne.s32.totalorder %s316, %s330
    %p332 = scmp.eq.s32.totalorder %s26, 0
    %p333 = por %p331, %p332
    %s335 = sadd.s32 %s334, 1
    %p338 = scmp.eq.s32.totalorder %s20, 1
    %p339 = scmp.ne.s32.totalorder %s334, %s336
    %p340 = scmp.eq.s32.totalorder %s20, 0
    %p341 = por %p339, %p340
    %p342 = scmp.ne.s32.totalorder %s334, %s336
    %p343 = scmp.eq.s32.totalorder %s25, 1
    %p344 = por %p342, %p343
    %p345 = scmp.ne.s32.totalorder %s336, %s337
    %p346 = scmp.eq.s32.totalorder %s25, 0
    %p347 = por %p345, %p346
    %p348 = scmp.ne.s32.totalorder %s336, %s337
    %p349 = scmp.eq.s32.totalorder %s26, 1
    %p350 = por %p348, %p349
    %p352 = scmp.ne.s32.totalorder %s337, %s351
    %p353 = scmp.eq.s32.totalorder %s26, 0
    %p354 = por %p352, %p353
    %s355 = ssub.s32 %s27, %s46
    %s356 = ssub.s32 %s28, %s42
    %s357 = sor.u32 %s355, %s356
    %p358 = scmp.eq.s32.totalorder %s357, 0
    %s360 = sadd.s32 %s359, 1
    %s361 = scalar_select %p358, %s359, %s360
    %p364 = pneg %p358
    %p365 = scmp.eq.s32.totalorder %s20, 1
    %p366 = por %p364, %p365
    %p367 = scmp.ne.s32.totalorder %s359, %s362
    %p368 = scmp.eq.s32.totalorder %s20, 0
    %p369 = por %p367, %p368
    %p370 = scmp.ne.s32.totalorder %s359, %s362
    %p371 = scmp.eq.s32.totalorder %s25, 1
    %p372 = por %p370, %p371
    %p373 = scmp.ne.s32.totalorder %s362, %s363
    %p374 = scmp.eq.s32.totalorder %s25, 0
    %p375 = por %p373, %p374
    %p376 = scmp.ne.s32.totalorder %s362, %s363
    %p377 = scmp.eq.s32.totalorder %s26, 1
    %p378 = por %p376, %p377
    %p380 = scmp.ne.s32.totalorder %s363, %s379
    %p381 = scmp.eq.s32.totalorder %s26, 0
    %p382 = por %p380, %p381
    %p383 = scmp.le.s32.totalorder 1, %s20
    %p384 = scmp.lt.s32.totalorder %s20, 3
    %p385 = pnand %p383, %p384
    %p386 = pneg %p385
    // Predicated region
    $region9: #{set_transformer_forward.14} parent=5 // pred_check
      _
    $region10: #{set_transformer_forward.14} parent=5 // pred_check_branch
      %388 = sbr.rel (%p385) target = $region12
    $region11: #{set_transformer_forward.14} parent=5 // pred_region
      %s389 = ssub.s32 %s20, 1
      // Predicated region
      $region13: #{set_transformer_forward.14} parent=11 // pred_check
        %p390 = pneg %p116
      $region14: #{set_transformer_forward.14} parent=11 // pred_check_branch
        %392 = sbr.rel (%p390) target = $region16
      $region15: #{set_transformer_forward.14} parent=11 // pred_region
        _
      $region16: #{set_transformer_forward.14} parent=11 // pred_fallthru
        _
      // Predicated region
      $region17: #{set_transformer_forward.14} parent=11 // pred_check
        %p393 = pneg %p137
      $region18: #{set_transformer_forward.14} parent=11 // pred_check_branch
        %395 = sbr.rel (%p393) target = $region20
      $region19: #{set_transformer_forward.14} parent=11 // pred_region
        _
      $region20: #{set_transformer_forward.14} parent=11 // pred_fallthru
        _
      // Predicated region
      $region21: #{set_transformer_forward.14} parent=11 // pred_check
        %p396 = pneg %p158
      $region22: #{set_transformer_forward.14} parent=11 // pred_check_branch
        %398 = sbr.rel (%p396) target = $region24
      $region23: #{set_transformer_forward.14} parent=11 // pred_region
        _
      $region24: #{set_transformer_forward.14} parent=11 // pred_fallthru
        _
      // Predicated region
      $region25: #{set_transformer_forward.14} parent=11 // pred_check
        %p399 = pneg %p179
      $region26: #{set_transformer_forward.14} parent=11 // pred_check_branch
        %401 = sbr.rel (%p399) target = $region28
      $region27: #{set_transformer_forward.14} parent=11 // pred_region
        _
      $region28: #{set_transformer_forward.14} parent=11 // pred_fallthru
        _
      // Predicated region
      $region29: #{set_transformer_forward.14} parent=11 // pred_check
        %p402 = pneg %p200
      $region30: #{set_transformer_forward.14} parent=11 // pred_check_branch
        %404 = sbr.rel (%p402) target = $region32
      $region31: #{set_transformer_forward.14} parent=11 // pred_region
        _
      $region32: #{set_transformer_forward.14} parent=11 // pred_fallthru
        _
      // Predicated region
      $region33: #{set_transformer_forward.14} parent=11 // pred_check
        %p405 = pneg %p221
      $region34: #{set_transformer_forward.14} parent=11 // pred_check_branch
        %407 = sbr.rel (%p405) target = $region36
      $region35: #{set_transformer_forward.14} parent=11 // pred_region
        _
      $region36: #{set_transformer_forward.14} parent=11 // pred_fallthru
        _
      // Predicated region
      $region37: #{set_transformer_forward.14} parent=11 // pred_check
        %p408 = pneg %p242
      $region38: #{set_transformer_forward.14} parent=11 // pred_check_branch
        %410 = sbr.rel (%p408) target = $region40
      $region39: #{set_transformer_forward.14} parent=11 // pred_region
        _
      $region40: #{set_transformer_forward.14} parent=11 // pred_fallthru
        _
      // Predicated region
      $region41: #{set_transformer_forward.14} parent=11 // pred_check
        %p411 = pneg %p263
      $region42: #{set_transformer_forward.14} parent=11 // pred_check_branch
        %413 = sbr.rel (%p411) target = $region44
      $region43: #{set_transformer_forward.14} parent=11 // pred_region
        _
      $region44: #{set_transformer_forward.14} parent=11 // pred_fallthru
        _
      // Predicated region
      $region45: #{set_transformer_forward.14} parent=11 // pred_check
        %p414 = pneg %p284
      $region46: #{set_transformer_forward.14} parent=11 // pred_check_branch
        %416 = sbr.rel (%p414) target = $region48
      $region47: #{set_transformer_forward.14} parent=11 // pred_region
        _
      $region48: #{set_transformer_forward.14} parent=11 // pred_fallthru
        _
      // Predicated region
      $region49: #{set_transformer_forward.14} parent=11 // pred_check
        %p417 = pneg %p305
      $region50: #{set_transformer_forward.14} parent=11 // pred_check_branch
        %419 = sbr.rel (%p417) target = $region52
      $region51: #{set_transformer_forward.14} parent=11 // pred_region
        _
      $region52: #{set_transformer_forward.14} parent=11 // pred_fallthru
        _
      // Predicated region
      $region53: #{set_transformer_forward.14} parent=11 // pred_check
        %p420 = pneg %p326
      $region54: #{set_transformer_forward.14} parent=11 // pred_check_branch
        %422 = sbr.rel (%p420) target = $region56
      $region55: #{set_transformer_forward.14} parent=11 // pred_region
        _
      $region56: #{set_transformer_forward.14} parent=11 // pred_fallthru
        _
      // Predicated region
      $region57: #{set_transformer_forward.14} parent=11 // pred_check
        %p423 = pneg %p347
      $region58: #{set_transformer_forward.14} parent=11 // pred_check_branch
        %425 = sbr.rel (%p423) target = $region60
      $region59: #{set_transformer_forward.14} parent=11 // pred_region
        _
      $region60: #{set_transformer_forward.14} parent=11 // pred_fallthru
        _
    $region12: #{set_transformer_forward.14} parent=5 // pred_fallthru
      _
    %p426 = scmp.lt.s32.totalorder %s20, 2
    // Predicated region
    $region61: #{set_transformer_forward.14} parent=5 // pred_check
      %p427 = pneg %p426
    $region62: #{set_transformer_forward.14} parent=5 // pred_check_branch
      %429 = sbr.rel (%p427) target = $region64
    $region63: #{set_transformer_forward.14} parent=5 // pred_region
      // Predicated region
      $region65: #{set_transformer_forward.14} parent=63 // pred_check
        %p430 = pneg %p61
      $region66: #{set_transformer_forward.14} parent=63 // pred_check_branch
        %432 = sbr.rel (%p430) target = $region68
      $region67: #{set_transformer_forward.14} parent=63 // pred_region
        %p433 = scmp.lt.s32.totalorder %s27, 1
        %s434 = scalar_select %p433, %s27, 1
        %p435 = scmp.lt.s32.totalorder %s28, 0
        %s436 = scalar_select %p435, %s28, 0
        %s437 = sadd.s32 %s436, %s434
        %s438 = smul.addr %s437, 4
        %s439 = scalar_lea.vmem %s0, %s438
      $region68: #{set_transformer_forward.14} parent=63 // pred_fallthru
        _
      // Predicated region
      $region69: #{set_transformer_forward.14} parent=63 // pred_check
        %p440 = pneg %p89
      $region70: #{set_transformer_forward.14} parent=63 // pred_check_branch
        %442 = sbr.rel (%p440) target = $region72
      $region71: #{set_transformer_forward.14} parent=63 // pred_region
        %p443 = scmp.lt.s32.totalorder %s27, 1
        %s444 = scalar_select %p443, %s27, 1
        %p445 = scmp.lt.s32.totalorder %s29, 0
        %s446 = scalar_select %p445, %s29, 0
        %s447 = sadd.s32 %s446, %s444
        %s448 = smul.addr %s447, 4
        %s449 = scalar_lea.vmem %s1, %s448
      $region72: #{set_transformer_forward.14} parent=63 // pred_fallthru
        _
    $region64: #{set_transformer_forward.14} parent=5 // pred_fallthru
      _
    %p450 = scmp.le.s32.totalorder 1, %s20
    %p451 = scmp.lt.s32.totalorder %s20, 3
    %p452 = pnand %p450, %p451
    %p453 = pneg %p452
    // Predicated region
    $region73: #{set_transformer_forward.14} parent=5 // pred_check
      _
    $region74: #{set_transformer_forward.14} parent=5 // pred_check_branch
      %455 = sbr.rel (%p452) target = $region76
    $region75: #{set_transformer_forward.14} parent=5 // pred_region
      %s456 = ssub.s32 %s20, 1
      %p457 = scmp.lt.s32.totalorder %s30, 1
      %s458 = scalar_select %p457, %s30, 1
      %p459 = scmp.lt.s32.totalorder %s31, 0
      %s460 = scalar_select %p459, %s31, 0
      %s461 = sadd.s32 %s460, %s458
      %s462 = smul.addr %s461, 4
      %s463 = scalar_lea.vmem %s0, %s462
      %p464 = pneg %p67
      %p465 = pneg %p64
      %p466 = scmp.lt.s32.totalorder %s30, 1
      %s467 = scalar_select %p466, %s30, 1
      %p468 = scmp.lt.s32.totalorder %s32, 0
      %s469 = scalar_select %p468, %s32, 0
      %s470 = sadd.s32 %s469, %s467
      %s471 = smul.addr %s470, 4
      %s472 = scalar_lea.vmem %s1, %s471
      %p473 = pneg %p95
      %p474 = pneg %p92
      %p475 = pneg %p116
      %p476 = pneg %p113
      %p477 = pneg %p137
      %p478 = pneg %p134
      %p479 = pneg %p158
      %p480 = pneg %p155
      %p481 = pneg %p179
      %p482 = pneg %p176
      %p483 = pneg %p200
      %p484 = pneg %p197
      %p485 = pneg %p221
      %p486 = pneg %p218
      %p487 = pneg %p242
      %p488 = pneg %p239
      %p489 = pneg %p263
      %p490 = pneg %p260
      %p491 = pneg %p284
      %p492 = pneg %p281
      %p493 = pneg %p305
      %p494 = pneg %p302
      %p495 = pneg %p326
      %p496 = pneg %p323
      %p497 = pneg %p347
      %p498 = pneg %p344
      %p499 = pneg %p375
      %p500 = pneg %p372
      %p501 = scmp.lt.s32.totalorder %s30, 1
      %s502 = scalar_select %p501, %s30, 1
      %p503 = scmp.lt.s32.totalorder %s31, 0
      %s504 = scalar_select %p503, %s31, 0
      %s505 = sadd.s32 %s504, %s502
      %s506 = smul.addr %s505, 4
      %s507 = scalar_lea.vmem %s14, %s506
      %p508 = scmp.lt.s32.totalorder %s30, 1
      %s509 = scalar_select %p508, %s30, 1
      %p510 = scmp.lt.s32.totalorder %s31, 0
      %s511 = scalar_select %p510, %s31, 0
      %s512 = sadd.s32 %s511, %s509
      %s513 = smul.addr %s512, 4
      %s514 = scalar_lea.vmem %s0, %s513
      %p515 = scmp.lt.s32.totalorder %s30, 1
      %s516 = scalar_select %p515, %s30, 1
      %p517 = scmp.lt.s32.totalorder %s32, 0
      %s518 = scalar_select %p517, %s32, 0
      %s519 = sadd.s32 %s518, %s516
      %s520 = smul.addr %s519, 4
      %s521 = scalar_lea.vmem %s1, %s520
      %p522 = scmp.lt.s32.totalorder %s30, 1
      %s523 = scalar_select %p522, %s30, 1
      %p524 = scmp.lt.s32.totalorder %s31, 0
      %s525 = scalar_select %p524, %s31, 0
      %s526 = sadd.s32 %s525, %s523
      %s527 = smul.addr %s526, 4
      %s528 = scalar_lea.vmem %s14, %s527
      %v530 = vld [vmem:[%s514] sm:$0xf]
      %p531 = scmp.eq.s32.totalorder %s32, 0
      // Predicated region
      $region77: #{set_transformer_forward.14} parent=75 // pred_check
        %p532 = pneg %p531
      $region78: #{set_transformer_forward.14} parent=75 // pred_check_branch
        %534 = sbr.rel (%p532) target = $region80
      $region79: #{set_transformer_forward.14} parent=75 // pred_region
        %v535 = vpack.c.bf16 %v530, %v530
        %v536 = vld [vmem:[%s2] sm:$0xf]
        %v537 = vld [vmem:[%s2 + $0x4] sm:$0xf]
        %v538 = vld [vmem:[%s2 + $0x8] sm:$0xf]
        %v539 = vld [vmem:[%s2 + $0xc] sm:$0xf]
        %v540 = vld [vmem:[%s2 + $0x10] sm:$0xf]
        %v541 = vld [vmem:[%s2 + $0x14] sm:$0xf]
        %v542 = vld [vmem:[%s2 + $0x18] sm:$0xf]
        %v543 = vld [vmem:[%s2 + $0x1c] sm:$0xf]
        %v544 = vld [vmem:[%s2 + $0x20] sm:$0xf]
        %v545 = vld [vmem:[%s2 + $0x24] sm:$0xf]
        %v546 = vld [vmem:[%s2 + $0x28] sm:$0xf]
        %v547 = vld [vmem:[%s2 + $0x2c] sm:$0xf]
        %v548 = vld [vmem:[%s2 + $0x30] sm:$0xf]
        %v549 = vld [vmem:[%s2 + $0x34] sm:$0xf]
        %v550 = vld [vmem:[%s2 + $0x38] sm:$0xf]
        %v551 = vld [vmem:[%s2 + $0x3c] sm:$0xf]
        %v552 = vld [vmem:[%s3] sm:$0x1]
        %v554 = vperm.slane %v552, 0
        %v572 = vunpack.c.l.b16 %v536
        %v573 = vunpack.c.l.b16 %v537
        %v574 = vunpack.c.l.b16 %v538
        %v575 = vunpack.c.l.b16 %v539
        %v576 = vunpack.c.l.b16 %v540
        %v577 = vunpack.c.l.b16 %v541
        %v578 = vunpack.c.l.b16 %v542
        %v579 = vunpack.c.l.b16 %v543
        %v580 = vunpack.c.l.b16 %v544
        %v581 = vunpack.c.l.b16 %v545
        %v582 = vunpack.c.l.b16 %v546
        %v583 = vunpack.c.l.b16 %v547
        %v584 = vunpack.c.l.b16 %v548
        %v585 = vunpack.c.l.b16 %v549
        %v586 = vunpack.c.l.b16 %v550
        %v587 = vunpack.c.l.b16 %v551
        %v588 = vpack.c.b16 %v573, %v572
        %v589 = vpack.c.b16 %v575, %v574
        %v590 = vpack.c.b16 %v577, %v576
        %v591 = vpack.c.b16 %v579, %v578
        %v592 = vpack.c.b16 %v581, %v580
        %v593 = vpack.c.b16 %v583, %v582
        %v594 = vpack.c.b16 %v585, %v584
        %v595 = vpack.c.b16 %v587, %v586
        %604 = vmatpush.bf16.msra.mxu0 %v595
        %605 = vmatpush.bf16.msra.mxu0 %v594
        %606 = vmatpush.bf16.msra.mxu0 %v593
        %607 = vmatpush.bf16.msra.mxu0 %v592
        %608 = vmatpush.bf16.msra.mxu0 %v591
        %609 = vmatpush.bf16.msra.mxu0 %v590
        %610 = vmatpush.bf16.msra.mxu0 %v589
        %611 = vmatpush.bf16.msra.mxu0 %v588
        %612 = vmatmul.bf16.gmra.mxu0 %v535
        %v613 = vpop.f32.mrf.mxu0
        %v614 = vadd.f32 %v554, %v613
        %v615 = vpop.f32.mrf.mxu0
        %616 = vdwg.mxu0
        %v617 = vmul.f32 %v614, 0.17677669
        %618 = vst [vmem:[#allocation2] sm:$0xf] %v617
        %vm619 = vcmask 3072
        %620 = vst.msk [vmem:[#allocation3] sm:$0xf] %vm619, -inf
        %621 = vst.msk [vmem:[#allocation3 + $0x4] sm:$0xf] %vm619, -inf
        %622 = vst.msk [vmem:[#allocation3 + $0x8] sm:$0xf] %vm619, -inf
        %623 = vst.msk [vmem:[#allocation3 + $0xc] sm:$0xf] %vm619, -inf
        %624 = vst.msk [vmem:[#allocation4] sm:$0xf] %vm619, 0.0
        %625 = vst.msk [vmem:[#allocation4 + $0x4] sm:$0xf] %vm619, 0.0
        %626 = vst.msk [vmem:[#allocation4 + $0x8] sm:$0xf] %vm619, 0.0
        %627 = vst.msk [vmem:[#allocation4 + $0xc] sm:$0xf] %vm619, 0.0
        %628 = vst [vmem:[#allocation5] sm:$0xf] 0.0
      $region80: #{set_transformer_forward.14} parent=75 // pred_fallthru
        _
      %v629 = vld [vmem:[%s521] sm:$0xf]
      %v630 = vpack.c.bf16 %v629, %v629
      %v631 = vld [vmem:[%s4] sm:$0xff]
      %v632 = vld [vmem:[%s4 + $0x8] sm:$0xff]
      %v633 = vld [vmem:[%s4 + $0x10] sm:$0xff]
      %v634 = vld [vmem:[%s4 + $0x18] sm:$0xff]
      %v635 = vld [vmem:[%s4 + $0x20] sm:$0xff]
      %v636 = vld [vmem:[%s4 + $0x28] sm:$0xff]
      %v637 = vld [vmem:[%s4 + $0x30] sm:$0xff]
      %v638 = vld [vmem:[%s4 + $0x38] sm:$0xff]
      %v639 = vld [vmem:[%s4 + $0x40] sm:$0xff]
      %v640 = vld [vmem:[%s4 + $0x48] sm:$0xff]
      %v641 = vld [vmem:[%s4 + $0x50] sm:$0xff]
      %v642 = vld [vmem:[%s4 + $0x58] sm:$0xff]
      %v643 = vld [vmem:[%s4 + $0x60] sm:$0xff]
      %v644 = vld [vmem:[%s4 + $0x68] sm:$0xff]
      %v645 = vld [vmem:[%s4 + $0x70] sm:$0xff]
      %v646 = vld [vmem:[%s4 + $0x78] sm:$0xff]
      %v647 = vld [vmem:[%s5] sm:$0x3]
      %v649 = vperm.slane %v647, 0
      %v650 = vperm.slane %v647, 1
      %v669 = vunpack.c.l.b16 %v631
      %v670 = vunpack.c.h.b16 %v631
      %v671 = vunpack.c.l.b16 %v632
      %v672 = vunpack.c.h.b16 %v632
      %v673 = vunpack.c.l.b16 %v633
      %v674 = vunpack.c.h.b16 %v633
      %v675 = vunpack.c.l.b16 %v634
      %v676 = vunpack.c.h.b16 %v634
      %v677 = vunpack.c.l.b16 %v635
      %v678 = vunpack.c.h.b16 %v635
      %v679 = vunpack.c.l.b16 %v636
      %v680 = vunpack.c.h.b16 %v636
      %v681 = vunpack.c.l.b16 %v637
      %v682 = vunpack.c.h.b16 %v637
      %v683 = vunpack.c.l.b16 %v638
      %v684 = vunpack.c.h.b16 %v638
      %v685 = vunpack.c.l.b16 %v639
      %v686 = vunpack.c.h.b16 %v639
      %v687 = vunpack.c.l.b16 %v640
      %v688 = vunpack.c.h.b16 %v640
      %v689 = vunpack.c.l.b16 %v641
      %v690 = vunpack.c.h.b16 %v641
      %v691 = vunpack.c.l.b16 %v642
      %v692 = vunpack.c.h.b16 %v642
      %v693 = vunpack.c.l.b16 %v643
      %v694 = vunpack.c.h.b16 %v643
      %v695 = vunpack.c.l.b16 %v644
      %v696 = vunpack.c.h.b16 %v644
      %v697 = vunpack.c.l.b16 %v645
      %v698 = vunpack.c.h.b16 %v645
      %v699 = vunpack.c.l.b16 %v646
      %v700 = vunpack.c.h.b16 %v646
      %v701 = vpack.c.b16 %v671, %v669
      %v702 = vpack.c.b16 %v672, %v670
      %v703 = vpack.c.b16 %v675, %v673
      %v704 = vpack.c.b16 %v676, %v674
      %v705 = vpack.c.b16 %v679, %v677
      %v706 = vpack.c.b16 %v680, %v678
      %v707 = vpack.c.b16 %v683, %v681
      %v708 = vpack.c.b16 %v684, %v682
      %v709 = vpack.c.b16 %v687, %v685
      %v710 = vpack.c.b16 %v688, %v686
      %v711 = vpack.c.b16 %v691, %v689
      %v712 = vpack.c.b16 %v692, %v690
      %v713 = vpack.c.b16 %v695, %v693
      %v714 = vpack.c.b16 %v696, %v694
      %v715 = vpack.c.b16 %v699, %v697
      %v716 = vpack.c.b16 %v700, %v698
      %733 = vmatpush.bf16.msra.mxu0 %v715
      %734 = vmatpush.bf16.msra.mxu0 %v713
      %735 = vmatpush.bf16.msra.mxu0 %v711
      %736 = vmatpush.bf16.msra.mxu0 %v709
      %737 = vmatpush.bf16.msra.mxu0 %v707
      %738 = vmatpush.bf16.msra.mxu0 %v705
      %739 = vmatpush.bf16.msra.mxu0 %v703
      %740 = vmatpush.bf16.msra.mxu0 %v701
      %741 = vmatmul.bf16.gmra.mxu0 %v630
      %v742 = vpop.f32.mrf.mxu0
      %v743 = vadd.f32 %v649, %v742
      %v744 = vpop.f32.mrf.mxu0
      %745 = vdwg.mxu0
      %746 = vmatpush.bf16.msra.mxu0 %v716
      %747 = vmatpush.bf16.msra.mxu0 %v714
      %748 = vmatpush.bf16.msra.mxu0 %v712
      %749 = vmatpush.bf16.msra.mxu0 %v710
      %750 = vmatpush.bf16.msra.mxu0 %v708
      %751 = vmatpush.bf16.msra.mxu0 %v706
      %752 = vmatpush.bf16.msra.mxu0 %v704
      %753 = vmatpush.bf16.msra.mxu0 %v702
      %754 = vmatmul.bf16.gmra.mxu0 %v630
      %v755 = vpop.f32.mrf.mxu0
      %v756 = vadd.f32 %v650, %v755
      %v757 = vpop.f32.mrf.mxu0
      %758 = vdwg.mxu0
      %v759 = vpack.c.bf16 %v743, %v743
      %v760 = vpack.c.bf16 %v756, %v756
      %v761 = vld [vmem:[#allocation2] sm:$0xf]
      %v762 = vpack.c.bf16 %v761, %v761
      %vm763 = vcmask 261120
      %v765 = vsel %vm763, %v762, 0
      %v768 = vsel %vm763, %v759, 0
      %770 = vmatpush.bf16.xpose.msra.mxu0 0
      %771 = vmatpush.bf16.xpose.msra.mxu0 0
      %772 = vmatpush.bf16.xpose.msra.mxu0 0
      %773 = vmatpush.bf16.xpose.msra.mxu0 0
      %774 = vmatpush.bf16.xpose.msra.mxu0 0
      %775 = vmatpush.bf16.xpose.msra.mxu0 0
      %776 = vmatpush.bf16.xpose.msra.mxu0 0
      %777 = vmatpush.bf16.xpose.msra.mxu0 %v768
      %778 = vmatmul.bf16.gmra.mxu0 %v765
      %v779 = vpop.f32.mrf.mxu0
      %v780 = vadd.f32 0.0, %v779
      %v781 = vpop.f32.mrf.mxu0
      %782 = vdwg.mxu0
      %v783 = vld [vmem:[#allocation3] sm:$0xf]
      %vm784 = vcmask 27648
      %v785 = vsel %vm784, %v780, -inf
      %786 = vmax.xlane.f32.xlu0 %v785
      %v787 = vpop.xlane.xlu0 %786
      %v788 = vmax.f32 %v783, %v787
      %v789 = vsub.f32 %v783, %v788
      %v790 = vmul.f32 %v789, 1.442695
      %v791 = vpow.pop %v790
      %793 = vset.pattern.permute.xlu0 0
      %794 = vperm.xlu0 %793, %v788
      %v795 = vpop.permute.xlu0 %794
      %v797 = vsub.f32 %v780, %v795
      %v798 = vmul.f32 %v797, 1.442695
      %v799 = vpow.pop %v798
      %v800 = vld [vmem:[#allocation4] sm:$0xf]
      %v801 = vmul.f32 %v791, %v800
      %v802 = vsel %vm784, %v799, 0.0
      %803 = vadd.xlane.f32.xlu0 %v802
      %v804 = vpop.xlane.xlu0 %803
      %v805 = vadd.f32 %v801, %v804
      %vm806 = vcmask 3072
      %807 = vst.msk [vmem:[#allocation4] sm:$0xf] %vm806, %v805
      %v808 = vpack.c.bf16 %v799, %v799
      %vm809 = vcmask 31744
      %v811 = vsel %vm809, %v808, 0
      %vm813 = vcmask 1041408
      %v815 = vsel %vm813, %v760, 0
      %817 = vmatpush.bf16.msra.mxu0 0
      %818 = vmatpush.bf16.msra.mxu0 0
      %819 = vmatpush.bf16.msra.mxu0 0
      %820 = vmatpush.bf16.msra.mxu0 0
      %821 = vmatpush.bf16.msra.mxu0 0
      %822 = vmatpush.bf16.msra.mxu0 0
      %823 = vmatpush.bf16.msra.mxu0 0
      %824 = vmatpush.bf16.msra.mxu0 %v815
      %825 = vmatmul.bf16.gmra.mxu0 %v811
      %v826 = vpop.f32.mrf.mxu0
      %v827 = vadd.f32 0.0, %v826
      %v828 = vpop.f32.mrf.mxu0
      %829 = vdwg.mxu0
      %v830 = vld [vmem:[#allocation5] sm:$0xf]
      %832 = vset.pattern.permute.xlu0 0
      %833 = vperm.xlu0 %832, %v791
      %v834 = vpop.permute.xlu0 %833
      %v836 = vmul.f32 %v834, %v830
      %v837 = vadd.f32 %v836, %v827
      %vm838 = vcmask 257024
      %839 = vst.msk [vmem:[#allocation5] sm:$0xf] %vm838, %v837
      %840 = vst.msk [vmem:[#allocation3] sm:$0xf] %vm806, %v788
      %842 = vrot.lane.b32.xlu0 %v762, 96
      %v843 = vpop.permute.xlu0 %842
      %v845 = vunpack.c.l.b16 %v759
      %v846 = vpack.c.b16 %v845, %v845
      %847 = vrot.lane.b32.xlu0 %v846, 96
      %v848 = vpop.permute.xlu0 %847
      %v850 = vsel %vm763, %v843, 0
      %v853 = vsel %vm763, %v848, 0
      %855 = vmatpush.bf16.xpose.msra.mxu0 0
      %856 = vmatpush.bf16.xpose.msra.mxu0 0
      %857 = vmatpush.bf16.xpose.msra.mxu0 0
      %858 = vmatpush.bf16.xpose.msra.mxu0 0
      %859 = vmatpush.bf16.xpose.msra.mxu0 0
      %860 = vmatpush.bf16.xpose.msra.mxu0 0
      %861 = vmatpush.bf16.xpose.msra.mxu0 0
      %862 = vmatpush.bf16.xpose.msra.mxu0 %v853
      %863 = vmatmul.bf16.gmra.mxu0 %v850
      %v864 = vpop.f32.mrf.mxu0
      %v865 = vadd.f32 0.0, %v864
      %v866 = vpop.f32.mrf.mxu0
      %867 = vdwg.mxu0
      %s868 = scalar_lea.vmem [#allocation3], 4
      %v869 = vld [vmem:[%s868] sm:$0xf]
      %v870 = vsel %vm784, %v865, -inf
      %871 = vmax.xlane.f32.xlu0 %v870
      %v872 = vpop.xlane.xlu0 %871
      %v873 = vmax.f32 %v869, %v872
      %v874 = vsub.f32 %v869, %v873
      %v875 = vmul.f32 %v874, 1.442695
      %v876 = vpow.pop %v875
      %878 = vset.pattern.permute.xlu0 0
      %879 = vperm.xlu0 %878, %v873
      %v880 = vpop.permute.xlu0 %879
      %v882 = vsub.f32 %v865, %v880
      %v883 = vmul.f32 %v882, 1.442695
      %v884 = vpow.pop %v883
      %s885 = scalar_lea.vmem [#allocation4], 4
      %v886 = vld [vmem:[%s885] sm:$0xf]
      %v887 = vmul.f32 %v876, %v886
      %v888 = vsel %vm784, %v884, 0.0
      %889 = vadd.xlane.f32.xlu0 %v888
      %v890 = vpop.xlane.xlu0 %889
      %v891 = vadd.f32 %v887, %v890
      %892 = vst.msk [vmem:[%s885] sm:$0xf] %vm806, %v891
      %v893 = vpack.c.bf16 %v884, %v884
      %v895 = vunpack.c.l.b16 %v760
      %v896 = vpack.c.b16 %v895, %v895
      %897 = vrot.lane.b32.xlu0 %v896, 96
      %v898 = vpop.permute.xlu0 %897
      %v900 = vsel %vm809, %v893, 0
      %v903 = vsel %vm813, %v898, 0
      %905 = vmatpush.bf16.msra.mxu0 0
      %906 = vmatpush.bf16.msra.mxu0 0
      %907 = vmatpush.bf16.msra.mxu0 0
      %908 = vmatpush.bf16.msra.mxu0 0
      %909 = vmatpush.bf16.msra.mxu0 0
      %910 = vmatpush.bf16.msra.mxu0 0
      %911 = vmatpush.bf16.msra.mxu0 0
      %912 = vmatpush.bf16.msra.mxu0 %v903
      %913 = vmatmul.bf16.gmra.mxu0 %v900
      %v914 = vpop.f32.mrf.mxu0
      %v915 = vadd.f32 0.0, %v914
      %v916 = vpop.f32.mrf.mxu0
      %917 = vdwg.mxu0
      %v918 = vld [vmem:[#allocation5] sm:$0xf]
      %920 = vset.pattern.permute.xlu0 0
      %921 = vperm.xlu0 %920, %v876
      %v922 = vpop.permute.xlu0 %921
      %v924 = vmul.f32 %v922, %v918
      %926 = vrot.lane.b32.xlu0 %v915, 32
      %v927 = vpop.permute.xlu0 %926
      %v929 = vadd.f32 %v924, %v927
      %vm930 = vcmask 519424
      %931 = vst.msk [vmem:[#allocation5] sm:$0xf] %vm930, %v929
      %932 = vst.msk [vmem:[%s868] sm:$0xf] %vm806, %v873
      %933 = vrot.lane.b32.xlu0 %v762, 64
      %v934 = vpop.permute.xlu0 %933
      %935 = vrot.lane.b32.xlu0 %v846, 64
      %v936 = vpop.permute.xlu0 %935
      %v938 = vsel %vm763, %v934, 0
      %v941 = vsel %vm763, %v936, 0
      %943 = vmatpush.bf16.xpose.msra.mxu0 0
      %944 = vmatpush.bf16.xpose.msra.mxu0 0
      %945 = vmatpush.bf16.xpose.msra.mxu0 0
      %946 = vmatpush.bf16.xpose.msra.mxu0 0
      %947 = vmatpush.bf16.xpose.msra.mxu0 0
      %948 = vmatpush.bf16.xpose.msra.mxu0 0
      %949 = vmatpush.bf16.xpose.msra.mxu0 0
      %950 = vmatpush.bf16.xpose.msra.mxu0 %v941
      %951 = vmatmul.bf16.gmra.mxu0 %v938
      %v952 = vpop.f32.mrf.mxu0
      %v953 = vadd.f32 0.0, %v952
      %v954 = vpop.f32.mrf.mxu0
      %955 = vdwg.mxu0
      %s956 = scalar_lea.vmem [#allocation3], 8
      %v957 = vld [vmem:[%s956] sm:$0xf]
      %v958 = vsel %vm784, %v953, -inf
      %959 = vmax.xlane.f32.xlu0 %v958
      %v960 = vpop.xlane.xlu0 %959
      %v961 = vmax.f32 %v957, %v960
      %v962 = vsub.f32 %v957, %v961
      %v963 = vmul.f32 %v962, 1.442695
      %v964 = vpow.pop %v963
      %966 = vset.pattern.permute.xlu0 0
      %967 = vperm.xlu0 %966, %v961
      %v968 = vpop.permute.xlu0 %967
      %v970 = vsub.f32 %v953, %v968
      %v971 = vmul.f32 %v970, 1.442695
      %v972 = vpow.pop %v971
      %s973 = scalar_lea.vmem [#allocation4], 8
      %v974 = vld [vmem:[%s973] sm:$0xf]
      %v975 = vmul.f32 %v964, %v974
      %v976 = vsel %vm784, %v972, 0.0
      %977 = vadd.xlane.f32.xlu0 %v976
      %v978 = vpop.xlane.xlu0 %977
      %v979 = vadd.f32 %v975, %v978
      %980 = vst.msk [vmem:[%s973] sm:$0xf] %vm806, %v979
      %v981 = vpack.c.bf16 %v972, %v972
      %982 = vrot.lane.b32.xlu0 %v896, 64
      %v983 = vpop.permute.xlu0 %982
      %v985 = vsel %vm809, %v981, 0
      %v988 = vsel %vm813, %v983, 0
      %990 = vmatpush.bf16.msra.mxu0 0
      %991 = vmatpush.bf16.msra.mxu0 0
      %992 = vmatpush.bf16.msra.mxu0 0
      %993 = vmatpush.bf16.msra.mxu0 0
      %994 = vmatpush.bf16.msra.mxu0 0
      %995 = vmatpush.bf16.msra.mxu0 0
      %996 = vmatpush.bf16.msra.mxu0 0
      %997 = vmatpush.bf16.msra.mxu0 %v988
      %998 = vmatmul.bf16.gmra.mxu0 %v985
      %v999 = vpop.f32.mrf.mxu0
      %v1000 = vadd.f32 0.0, %v999
      %v1001 = vpop.f32.mrf.mxu0
      %1002 = vdwg.mxu0
      %v1003 = vld [vmem:[#allocation5] sm:$0xf]
      %1005 = vset.pattern.permute.xlu0 0
      %1006 = vperm.xlu0 %1005, %v964
      %v1007 = vpop.permute.xlu0 %1006
      %v1009 = vmul.f32 %v1007, %v1003
      %1011 = vrot.lane.b32.xlu0 %v1000, 64
      %v1012 = vpop.permute.xlu0 %1011
      %v1014 = vadd.f32 %v1009, %v1012
      %vm1015 = vcmask 781824
      %1016 = vst.msk [vmem:[#allocation5] sm:$0xf] %vm1015, %v1014
      %1017 = vst.msk [vmem:[%s956] sm:$0xf] %vm806, %v961
      %1018 = vrot.lane.b32.xlu0 %v762, 32
      %v1019 = vpop.permute.xlu0 %1018
      %1020 = vrot.lane.b32.xlu0 %v846, 32
      %v1021 = vpop.permute.xlu0 %1020
      %v1023 = vsel %vm763, %v1019, 0
      %v1026 = vsel %vm763, %v1021, 0
      %1028 = vmatpush.bf16.xpose.msra.mxu0 0
      %1029 = vmatpush.bf16.xpose.msra.mxu0 0
      %1030 = vmatpush.bf16.xpose.msra.mxu0 0
      %1031 = vmatpush.bf16.xpose.msra.mxu0 0
      %1032 = vmatpush.bf16.xpose.msra.mxu0 0
      %1033 = vmatpush.bf16.xpose.msra.mxu0 0
      %1034 = vmatpush.bf16.xpose.msra.mxu0 0
      %1035 = vmatpush.bf16.xpose.msra.mxu0 %v1026
      %1036 = vmatmul.bf16.gmra.mxu0 %v1023
      %v1037 = vpop.f32.mrf.mxu0
      %v1038 = vadd.f32 0.0, %v1037
      %v1039 = vpop.f32.mrf.mxu0
      %1040 = vdwg.mxu0
      %s1041 = scalar_lea.vmem [#allocation3], 12
      %v1042 = vld [vmem:[%s1041] sm:$0xf]
      %v1043 = vsel %vm784, %v1038, -inf
      %1044 = vmax.xlane.f32.xlu0 %v1043
      %v1045 = vpop.xlane.xlu0 %1044
      %v1046 = vmax.f32 %v1042, %v1045
      %v1047 = vsub.f32 %v1042, %v1046
      %v1048 = vmul.f32 %v1047, 1.442695
      %v1049 = vpow.pop %v1048
      %1051 = vset.pattern.permute.xlu0 0
      %1052 = vperm.xlu0 %1051, %v1046
      %v1053 = vpop.permute.xlu0 %1052
      %v1055 = vsub.f32 %v1038, %v1053
      %v1056 = vmul.f32 %v1055, 1.442695
      %v1057 = vpow.pop %v1056
      %s1058 = scalar_lea.vmem [#allocation4], 12
      %v1059 = vld [vmem:[%s1058] sm:$0xf]
      %v1060 = vmul.f32 %v1049, %v1059
      %v1061 = vsel %vm784, %v1057, 0.0
      %1062 = vadd.xlane.f32.xlu0 %v1061
      %v1063 = vpop.xlane.xlu0 %1062
      %v1064 = vadd.f32 %v1060, %v1063
      %1065 = vst.msk [vmem:[%s1058] sm:$0xf] %vm806, %v1064
      %v1066 = vpack.c.bf16 %v1057, %v1057
      %1067 = vrot.lane.b32.xlu0 %v896, 32
      %v1068 = vpop.permute.xlu0 %1067
      %v1070 = vsel %vm809, %v1066, 0
      %v1073 = vsel %vm813, %v1068, 0
      %1075 = vmatpush.bf16.msra.mxu0 0
      %1076 = vmatpush.bf16.msra.mxu0 0
      %1077 = vmatpush.bf16.msra.mxu0 0
      %1078 = vmatpush.bf16.msra.mxu0 0
      %1079 = vmatpush.bf16.msra.mxu0 0
      %1080 = vmatpush.bf16.msra.mxu0 0
      %1081 = vmatpush.bf16.msra.mxu0 0
      %1082 = vmatpush.bf16.msra.mxu0 %v1073
      %1083 = vmatmul.bf16.gmra.mxu0 %v1070
      %v1084 = vpop.f32.mrf.mxu0
      %v1085 = vadd.f32 0.0, %v1084
      %v1086 = vpop.f32.mrf.mxu0
      %1087 = vdwg.mxu0
      %v1088 = vld [vmem:[#allocation5] sm:$0xf]
      %1090 = vset.pattern.permute.xlu0 0
      %1091 = vperm.xlu0 %1090, %v1049
      %v1092 = vpop.permute.xlu0 %1091
      %v1094 = vmul.f32 %v1092, %v1088
      %1096 = vrot.lane.b32.xlu0 %v1085, 96
      %v1097 = vpop.permute.xlu0 %1096
      %v1099 = vadd.f32 %v1094, %v1097
      %vm1100 = vcmask 1044224
      %1101 = vst.msk [vmem:[#allocation5] sm:$0xf] %vm1100, %v1099
      %1102 = vst.msk [vmem:[%s1041] sm:$0xf] %vm806, %v1046
      // Predicated region
      $region81: #{set_transformer_forward.14} parent=75 // pred_check
        %p1103 = pneg %p531
      $region82: #{set_transformer_forward.14} parent=75 // pred_check_branch
        %1105 = sbr.rel (%p1103) target = $region84
      $region83: #{set_transformer_forward.14} parent=75 // pred_region
        %v1106 = vld [vmem:[#allocation5] sm:$0xf]
        %v1107 = vld [vmem:[#allocation4] sm:$0xf]
        %v1108 = vrcp.pop %v1107
        %1110 = vset.pattern.permute.xlu0 0
        %1111 = vperm.xlu0 %1110, %v1108
        %v1112 = vpop.permute.xlu0 %1111
        %v1114 = vmul.f32 %v1106, %v1112
        %v1115 = vld [vmem:[%s885] sm:$0xf]
        %v1116 = vrcp.pop %v1115
        %1118 = vset.pattern.permute.xlu0 0
        %1119 = vperm.xlu0 %1118, %v1116
        %v1120 = vpop.permute.xlu0 %1119
        %v1122 = vmul.f32 %v1106, %v1120
        %v1123 = vld [vmem:[%s973] sm:$0xf]
        %v1124 = vrcp.pop %v1123
        %1126 = vset.pattern.permute.xlu0 0
        %1127 = vperm.xlu0 %1126, %v1124
        %v1128 = vpop.permute.xlu0 %1127
        %v1130 = vmul.f32 %v1106, %v1128
        %v1131 = vld [vmem:[%s1058] sm:$0xf]
        %v1132 = vrcp.pop %v1131
        %1134 = vset.pattern.permute.xlu0 0
        %1135 = vperm.xlu0 %1134, %v1132
        %v1136 = vpop.permute.xlu0 %1135
        %v1138 = vmul.f32 %v1106, %v1136
        %v1139 = vsel %vm763, %v1114, %v1122
        %vm1140 = vcmask 523264
        %v1141 = vsel %vm1140, %v1139, %v1130
        %vm1142 = vcmask 785408
        %v1143 = vsel %vm1142, %v1141, %v1138
        %v1144 = vpack.c.bf16 %v1143, %v1143
        %v1145 = vld [vmem:[%s6] sm:$0xf]
        %v1146 = vld [vmem:[%s6 + $0x4] sm:$0xf]
        %v1147 = vld [vmem:[%s6 + $0x8] sm:$0xf]
        %v1148 = vld [vmem:[%s6 + $0xc] sm:$0xf]
        %v1149 = vld [vmem:[%s6 + $0x10] sm:$0xf]
        %v1150 = vld [vmem:[%s6 + $0x14] sm:$0xf]
        %v1151 = vld [vmem:[%s6 + $0x18] sm:$0xf]
        %v1152 = vld [vmem:[%s6 + $0x1c] sm:$0xf]
        %v1153 = vld [vmem:[%s6 + $0x20] sm:$0xf]
        %v1154 = vld [vmem:[%s6 + $0x24] sm:$0xf]
        %v1155 = vld [vmem:[%s6 + $0x28] sm:$0xf]
        %v1156 = vld [vmem:[%s6 + $0x2c] sm:$0xf]
        %v1157 = vld [vmem:[%s6 + $0x30] sm:$0xf]
        %v1158 = vld [vmem:[%s6 + $0x34] sm:$0xf]
        %v1159 = vld [vmem:[%s6 + $0x38] sm:$0xf]
        %v1160 = vld [vmem:[%s6 + $0x3c] sm:$0xf]
        %v1161 = vld [vmem:[%s7] sm:$0x1]
        %v1163 = vperm.slane %v1161, 0
        %v1181 = vunpack.c.l.b16 %v1145
        %v1182 = vunpack.c.l.b16 %v1146
        %v1183 = vunpack.c.l.b16 %v1147
        %v1184 = vunpack.c.l.b16 %v1148
        %v1185 = vunpack.c.l.b16 %v1149
        %v1186 = vunpack.c.l.b16 %v1150
        %v1187 = vunpack.c.l.b16 %v1151
        %v1188 = vunpack.c.l.b16 %v1152
        %v1189 = vunpack.c.l.b16 %v1153
        %v1190 = vunpack.c.l.b16 %v1154
        %v1191 = vunpack.c.l.b16 %v1155
        %v1192 = vunpack.c.l.b16 %v1156
        %v1193 = vunpack.c.l.b16 %v1157
        %v1194 = vunpack.c.l.b16 %v1158
        %v1195 = vunpack.c.l.b16 %v1159
        %v1196 = vunpack.c.l.b16 %v1160
        %v1197 = vpack.c.b16 %v1182, %v1181
        %v1198 = vpack.c.b16 %v1184, %v1183
        %v1199 = vpack.c.b16 %v1186, %v1185
        %v1200 = vpack.c.b16 %v1188, %v1187
        %v1201 = vpack.c.b16 %v1190, %v1189
        %v1202 = vpack.c.b16 %v1192, %v1191
        %v1203 = vpack.c.b16 %v1194, %v1193
        %v1204 = vpack.c.b16 %v1196, %v1195
        %1213 = vmatpush.bf16.msra.mxu0 %v1204
        %1214 = vmatpush.bf16.msra.mxu0 %v1203
        %1215 = vmatpush.bf16.msra.mxu0 %v1202
        %1216 = vmatpush.bf16.msra.mxu0 %v1201
        %1217 = vmatpush.bf16.msra.mxu0 %v1200
        %1218 = vmatpush.bf16.msra.mxu0 %v1199
        %1219 = vmatpush.bf16.msra.mxu0 %v1198
        %1220 = vmatpush.bf16.msra.mxu0 %v1197
        %1221 = vmatmul.bf16.gmra.mxu0 %v1144
        %v1222 = vpop.f32.mrf.mxu0
        %v1223 = vadd.f32 %v1163, %v1222
        %v1224 = vpop.f32.mrf.mxu0
        %1225 = vdwg.mxu0
        %v1226 = vadd.f32 %v530, %v1223
        %v1227 = vld [vmem:[%s8] sm:$0x1]
        %v1228 = vld [vmem:[%s9] sm:$0x1]
        %vm1229 = vcmask 1043456
        %v1230 = vsel %vm1229, %v1226, 0.0
        %1231 = vadd.xlane.f32.xlu0 %v1230
        %v1232 = vpop.xlane.xlu0 %1231
        %v1233 = vrcp.pop 128.0
        %v1234 = vmul.f32 128.0, %v1233
        %v1235 = vsub.f32 1.0, %v1234
        %v1236 = vmul.f32 %v1233, %v1235
        %v1237 = vadd.f32 %v1233, %v1236
        %vm1238 = vweird.f32 %v1233
        %v1239 = vsel %vm1238, %v1233, %v1237
        %v1240 = vmul.f32 %v1232, %v1239
        %v1241 = vsub.f32 %v1226, %v1240
        %v1242 = vmul.f32 %v1241, %v1241
        %v1243 = vsel %vm1229, %v1242, 0.0
        %1244 = vadd.xlane.f32.xlu0 %v1243
        %v1245 = vpop.xlane.xlu0 %1244
        %v1246 = vmul.f32 %v1245, %v1239
        %v1247 = vadd.f32 %v1246, 1e-05
        %v1248 = vrsqrt.pop %v1247
        %v1249 = vmul.f32 %v1248, %v1247
        %v1250 = vmul.f32 %v1249, %v1248
        %v1251 = vmul.f32 0.5, %v1250
        %v1252 = vsub.f32 1.5, %v1251
        %v1253 = vmul.f32 %v1248, %v1252
        %vm1254 = vweird.f32 %v1247
        %vm1255 = vweird.f32 %v1248
        %vm1256 = vmor %vm1254, %vm1255
        %v1257 = vsel %vm1256, %v1248, %v1253
        %v1258 = vmul.f32 %v1241, %v1257
        %v1260 = vperm.slane %v1227, 0
        %v1262 = vmul.f32 %v1258, %v1260
        %v1264 = vperm.slane %v1228, 0
        %v1266 = vadd.f32 %v1262, %v1264
        %v1267 = vpack.c.bf16 %v1266, %v1266
        %v1268 = vld [vmem:[%s10] sm:$0xf]
        %v1269 = vld [vmem:[%s10 + $0x4] sm:$0xf]
        %v1270 = vld [vmem:[%s10 + $0x8] sm:$0xf]
        %v1271 = vld [vmem:[%s10 + $0xc] sm:$0xf]
        %v1272 = vld [vmem:[%s10 + $0x10] sm:$0xf]
        %v1273 = vld [vmem:[%s10 + $0x14] sm:$0xf]
        %v1274 = vld [vmem:[%s10 + $0x18] sm:$0xf]
        %v1275 = vld [vmem:[%s10 + $0x1c] sm:$0xf]
        %v1276 = vld [vmem:[%s10 + $0x20] sm:$0xf]
        %v1277 = vld [vmem:[%s10 + $0x24] sm:$0xf]
        %v1278 = vld [vmem:[%s10 + $0x28] sm:$0xf]
        %v1279 = vld [vmem:[%s10 + $0x2c] sm:$0xf]
        %v1280 = vld [vmem:[%s10 + $0x30] sm:$0xf]
        %v1281 = vld [vmem:[%s10 + $0x34] sm:$0xf]
        %v1282 = vld [vmem:[%s10 + $0x38] sm:$0xf]
        %v1283 = vld [vmem:[%s10 + $0x3c] sm:$0xf]
        %v1284 = vld [vmem:[%s11] sm:$0x1]
        %v1286 = vperm.slane %v1284, 0
        %v1304 = vunpack.c.l.b16 %v1268
        %v1305 = vunpack.c.l.b16 %v1269
        %v1306 = vunpack.c.l.b16 %v1270
        %v1307 = vunpack.c.l.b16 %v1271
        %v1308 = vunpack.c.l.b16 %v1272
        %v1309 = vunpack.c.l.b16 %v1273
        %v1310 = vunpack.c.l.b16 %v1274
        %v1311 = vunpack.c.l.b16 %v1275
        %v1312 = vunpack.c.l.b16 %v1276
        %v1313 = vunpack.c.l.b16 %v1277
        %v1314 = vunpack.c.l.b16 %v1278
        %v1315 = vunpack.c.l.b16 %v1279
        %v1316 = vunpack.c.l.b16 %v1280
        %v1317 = vunpack.c.l.b16 %v1281
        %v1318 = vunpack.c.l.b16 %v1282
        %v1319 = vunpack.c.l.b16 %v1283
        %v1320 = vpack.c.b16 %v1305, %v1304
        %v1321 = vpack.c.b16 %v1307, %v1306
        %v1322 = vpack.c.b16 %v1309, %v1308
        %v1323 = vpack.c.b16 %v1311, %v1310
        %v1324 = vpack.c.b16 %v1313, %v1312
        %v1325 = vpack.c.b16 %v1315, %v1314
        %v1326 = vpack.c.b16 %v1317, %v1316
        %v1327 = vpack.c.b16 %v1319, %v1318
        %1336 = vmatpush.bf16.msra.mxu0 %v1327
        %1337 = vmatpush.bf16.msra.mxu0 %v1326
        %1338 = vmatpush.bf16.msra.mxu0 %v1325
        %1339 = vmatpush.bf16.msra.mxu0 %v1324
        %1340 = vmatpush.bf16.msra.mxu0 %v1323
        %1341 = vmatpush.bf16.msra.mxu0 %v1322
        %1342 = vmatpush.bf16.msra.mxu0 %v1321
        %1343 = vmatpush.bf16.msra.mxu0 %v1320
        %1344 = vmatmul.bf16.gmra.mxu0 %v1267
        %v1345 = vpop.f32.mrf.mxu0
        %v1346 = vadd.f32 %v1286, %v1345
        %v1347 = vpop.f32.mrf.mxu0
        %1348 = vdwg.mxu0
        %v1349 = vmax.f32 %v1346, 0.0
        %v1350 = vpack.c.bf16 %v1349, %v1349
        %s1351 = scalar_lea.vmem %s10, 64
        %v1352 = vld [vmem:[%s1351] sm:$0xf]
        %v1353 = vld [vmem:[%s1351 + $0x4] sm:$0xf]
        %v1354 = vld [vmem:[%s1351 + $0x8] sm:$0xf]
        %v1355 = vld [vmem:[%s1351 + $0xc] sm:$0xf]
        %v1356 = vld [vmem:[%s1351 + $0x10] sm:$0xf]
        %v1357 = vld [vmem:[%s1351 + $0x14] sm:$0xf]
        %v1358 = vld [vmem:[%s1351 + $0x18] sm:$0xf]
        %v1359 = vld [vmem:[%s1351 + $0x1c] sm:$0xf]
        %v1360 = vld [vmem:[%s1351 + $0x20] sm:$0xf]
        %v1361 = vld [vmem:[%s1351 + $0x24] sm:$0xf]
        %v1362 = vld [vmem:[%s1351 + $0x28] sm:$0xf]
        %v1363 = vld [vmem:[%s1351 + $0x2c] sm:$0xf]
        %v1364 = vld [vmem:[%s1351 + $0x30] sm:$0xf]
        %v1365 = vld [vmem:[%s1351 + $0x34] sm:$0xf]
        %v1366 = vld [vmem:[%s1351 + $0x38] sm:$0xf]
        %v1367 = vld [vmem:[%s1351 + $0x3c] sm:$0xf]
        %s1368 = scalar_lea.vmem %s11, 1
        %v1369 = vld [vmem:[%s1368] sm:$0x1]
        %v1371 = vperm.slane %v1369, 0
        %v1389 = vunpack.c.l.b16 %v1352
        %v1390 = vunpack.c.l.b16 %v1353
        %v1391 = vunpack.c.l.b16 %v1354
        %v1392 = vunpack.c.l.b16 %v1355
        %v1393 = vunpack.c.l.b16 %v1356
        %v1394 = vunpack.c.l.b16 %v1357
        %v1395 = vunpack.c.l.b16 %v1358
        %v1396 = vunpack.c.l.b16 %v1359
        %v1397 = vunpack.c.l.b16 %v1360
        %v1398 = vunpack.c.l.b16 %v1361
        %v1399 = vunpack.c.l.b16 %v1362
        %v1400 = vunpack.c.l.b16 %v1363
        %v1401 = vunpack.c.l.b16 %v1364
        %v1402 = vunpack.c.l.b16 %v1365
        %v1403 = vunpack.c.l.b16 %v1366
        %v1404 = vunpack.c.l.b16 %v1367
        %v1405 = vpack.c.b16 %v1390, %v1389
        %v1406 = vpack.c.b16 %v1392, %v1391
        %v1407 = vpack.c.b16 %v1394, %v1393
        %v1408 = vpack.c.b16 %v1396, %v1395
        %v1409 = vpack.c.b16 %v1398, %v1397
        %v1410 = vpack.c.b16 %v1400, %v1399
        %v1411 = vpack.c.b16 %v1402, %v1401
        %v1412 = vpack.c.b16 %v1404, %v1403
        %1421 = vmatpush.bf16.msra.mxu0 %v1412
        %1422 = vmatpush.bf16.msra.mxu0 %v1411
        %1423 = vmatpush.bf16.msra.mxu0 %v1410
        %1424 = vmatpush.bf16.msra.mxu0 %v1409
        %1425 = vmatpush.bf16.msra.mxu0 %v1408
        %1426 = vmatpush.bf16.msra.mxu0 %v1407
        %1427 = vmatpush.bf16.msra.mxu0 %v1406
        %1428 = vmatpush.bf16.msra.mxu0 %v1405
        %1429 = vmatmul.bf16.gmra.mxu0 %v1350
        %v1430 = vpop.f32.mrf.mxu0
        %v1431 = vadd.f32 %v1371, %v1430
        %v1432 = vpop.f32.mrf.mxu0
        %1433 = vdwg.mxu0
        %v1434 = vmax.f32 %v1431, 0.0
        %v1435 = vpack.c.bf16 %v1434, %v1434
        %s1436 = scalar_lea.vmem %s10, 128
        %v1437 = vld [vmem:[%s1436] sm:$0xf]
        %v1438 = vld [vmem:[%s1436 + $0x4] sm:$0xf]
        %v1439 = vld [vmem:[%s1436 + $0x8] sm:$0xf]
        %v1440 = vld [vmem:[%s1436 + $0xc] sm:$0xf]
        %v1441 = vld [vmem:[%s1436 + $0x10] sm:$0xf]
        %v1442 = vld [vmem:[%s1436 + $0x14] sm:$0xf]
        %v1443 = vld [vmem:[%s1436 + $0x18] sm:$0xf]
        %v1444 = vld [vmem:[%s1436 + $0x1c] sm:$0xf]
        %v1445 = vld [vmem:[%s1436 + $0x20] sm:$0xf]
        %v1446 = vld [vmem:[%s1436 + $0x24] sm:$0xf]
        %v1447 = vld [vmem:[%s1436 + $0x28] sm:$0xf]
        %v1448 = vld [vmem:[%s1436 + $0x2c] sm:$0xf]
        %v1449 = vld [vmem:[%s1436 + $0x30] sm:$0xf]
        %v1450 = vld [vmem:[%s1436 + $0x34] sm:$0xf]
        %v1451 = vld [vmem:[%s1436 + $0x38] sm:$0xf]
        %v1452 = vld [vmem:[%s1436 + $0x3c] sm:$0xf]
        %s1453 = scalar_lea.vmem %s11, 2
        %v1454 = vld [vmem:[%s1453] sm:$0x1]
        %v1456 = vperm.slane %v1454, 0
        %v1474 = vunpack.c.l.b16 %v1437
        %v1475 = vunpack.c.l.b16 %v1438
        %v1476 = vunpack.c.l.b16 %v1439
        %v1477 = vunpack.c.l.b16 %v1440
        %v1478 = vunpack.c.l.b16 %v1441
        %v1479 = vunpack.c.l.b16 %v1442
        %v1480 = vunpack.c.l.b16 %v1443
        %v1481 = vunpack.c.l.b16 %v1444
        %v1482 = vunpack.c.l.b16 %v1445
        %v1483 = vunpack.c.l.b16 %v1446
        %v1484 = vunpack.c.l.b16 %v1447
        %v1485 = vunpack.c.l.b16 %v1448
        %v1486 = vunpack.c.l.b16 %v1449
        %v1487 = vunpack.c.l.b16 %v1450
        %v1488 = vunpack.c.l.b16 %v1451
        %v1489 = vunpack.c.l.b16 %v1452
        %v1490 = vpack.c.b16 %v1475, %v1474
        %v1491 = vpack.c.b16 %v1477, %v1476
        %v1492 = vpack.c.b16 %v1479, %v1478
        %v1493 = vpack.c.b16 %v1481, %v1480
        %v1494 = vpack.c.b16 %v1483, %v1482
        %v1495 = vpack.c.b16 %v1485, %v1484
        %v1496 = vpack.c.b16 %v1487, %v1486
        %v1497 = vpack.c.b16 %v1489, %v1488
        %1506 = vmatpush.bf16.msra.mxu0 %v1497
        %1507 = vmatpush.bf16.msra.mxu0 %v1496
        %1508 = vmatpush.bf16.msra.mxu0 %v1495
        %1509 = vmatpush.bf16.msra.mxu0 %v1494
        %1510 = vmatpush.bf16.msra.mxu0 %v1493
        %1511 = vmatpush.bf16.msra.mxu0 %v1492
        %1512 = vmatpush.bf16.msra.mxu0 %v1491
        %1513 = vmatpush.bf16.msra.mxu0 %v1490
        %1514 = vmatmul.bf16.gmra.mxu0 %v1435
        %v1515 = vpop.f32.mrf.mxu0
        %v1516 = vadd.f32 %v1456, %v1515
        %v1517 = vpop.f32.mrf.mxu0
        %1518 = vdwg.mxu0
        %v1519 = vmax.f32 %v1516, 0.0
        %v1520 = vadd.f32 %v1266, %v1519
        %v1521 = vld [vmem:[%s12] sm:$0x1]
        %v1522 = vld [vmem:[%s13] sm:$0x1]
        %v1523 = vsel %vm1229, %v1520, 0.0
        %1524 = vadd.xlane.f32.xlu0 %v1523
        %v1525 = vpop.xlane.xlu0 %1524
        %v1526 = vmul.f32 %v1525, %v1239
        %v1527 = vsub.f32 %v1520, %v1526
        %v1528 = vmul.f32 %v1527, %v1527
        %v1529 = vsel %vm1229, %v1528, 0.0
        %1530 = vadd.xlane.f32.xlu0 %v1529
        %v1531 = vpop.xlane.xlu0 %1530
        %v1532 = vmul.f32 %v1531, %v1239
        %v1533 = vadd.f32 %v1532, 1e-05
        %v1534 = vrsqrt.pop %v1533
        %v1535 = vmul.f32 %v1534, %v1533
        %v1536 = vmul.f32 %v1535, %v1534
        %v1537 = vmul.f32 0.5, %v1536
        %v1538 = vsub.f32 1.5, %v1537
        %v1539 = vmul.f32 %v1534, %v1538
        %vm1540 = vweird.f32 %v1533
        %vm1541 = vweird.f32 %v1534
        %vm1542 = vmor %vm1540, %vm1541
        %v1543 = vsel %vm1542, %v1534, %v1539
        %v1544 = vmul.f32 %v1527, %v1543
        %v1546 = vperm.slane %v1521, 0
        %v1548 = vmul.f32 %v1544, %v1546
        %v1550 = vperm.slane %v1522, 0
        %v1552 = vadd.f32 %v1548, %v1550
        %1553 = vst [vmem:[%s528] sm:$0xf] %v1552
      $region84: #{set_transformer_forward.14} parent=75 // pred_fallthru
        _
      %p1554 = scmp.lt.s32.totalorder %s30, 1
      %s1555 = scalar_select %p1554, %s30, 1
      %p1556 = scmp.lt.s32.totalorder %s31, 0
      %s1557 = scalar_select %p1556, %s31, 0
      %s1558 = sadd.s32 %s1557, %s1555
      %s1559 = smul.addr %s1558, 4
      %s1560 = scalar_lea.vmem %s14, %s1559
      // Predicated region
      $region85: #{set_transformer_forward.14} parent=75 // pred_check
        %p1561 = pneg %p372
      $region86: #{set_transformer_forward.14} parent=75 // pred_check_branch
        %1563 = sbr.rel (%p1561) target = $region88
      $region87: #{set_transformer_forward.14} parent=75 // pred_region
        _
      $region88: #{set_transformer_forward.14} parent=75 // pred_fallthru
        _
    $region76: #{set_transformer_forward.14} parent=5 // pred_fallthru
      _
    %p1564 = scmp.le.s32.totalorder 2, %s20
    // Predicated region
    $region89: #{set_transformer_forward.14} parent=5 // pred_check
      %p1565 = pneg %p1564
    $region90: #{set_transformer_forward.14} parent=5 // pred_check_branch
      %1567 = sbr.rel (%p1565) target = $region92
    $region91: #{set_transformer_forward.14} parent=5 // pred_region
      %s1568 = ssub.s32 %s20, 2
      // Predicated region
      $region93: #{set_transformer_forward.14} parent=91 // pred_check
        %p1569 = pneg %p378
      $region94: #{set_transformer_forward.14} parent=91 // pred_check_branch
        %1571 = sbr.rel (%p1569) target = $region96
      $region95: #{set_transformer_forward.14} parent=91 // pred_region
        %p1572 = scmp.lt.s32.totalorder %s33, 1
        %s1573 = scalar_select %p1572, %s33, 1
        %p1574 = scmp.lt.s32.totalorder %s34, 0
        %s1575 = scalar_select %p1574, %s34, 0
        %s1576 = sadd.s32 %s1575, %s1573
        %s1577 = smul.addr %s1576, 4
        %s1578 = scalar_lea.vmem %s14, %s1577
      $region96: #{set_transformer_forward.14} parent=91 // pred_fallthru
        _
    $region92: #{set_transformer_forward.14} parent=5 // pred_fallthru
      _
  $region6: #{set_transformer_forward.14} parent=0 // loop_footer
    %s24 = sadd.s32 1, %s20
  $region7: #{set_transformer_forward.14} parent=0 // loop_footer_branch
    %19 = sbr.rel target = $region3
  $region8: #{set_transformer_forward.14} parent=0 // loop_exit
    _

// kernel: set_transformer_forward.15
$region0: #{set_transformer_forward.15}
  #allocation0 [shape = 'u32[]', space=smem, size = 0x4, offset = 0x4, fixed_abs, tag = 'smem constant byte address 0x4 - core index']
  #allocation1 [shape = 'u32[72,128]{1,0:T(1,128)}', space=vmem, size = 0x9000, scoped, tag = 'internal scratch']
  %s0 = inlined_call_operand.vmem [shape: f32[2,512], index: 0, kind: input, shape index: {}]
  %s1 = inlined_call_operand.vmem [shape: f32[512,128], index: 1, kind: input, shape index: {}]
  %s2 = inlined_call_operand.vmem [shape: f32[1,128], index: 2, kind: input, shape index: {}]
  %s3 = inlined_call_operand.hbm [shape: f32[2,128], index: 3, kind: output, shape index: {}]
  %s4 = sld [smem:[#allocation0]]
  $region22: #{set_transformer_forward.15} parent=0
    _
  %s6 = ssub.s32 1, %s4
  %s7 = scalar_select 0, %s6, %s4
  $region1: #{set_transformer_forward.15} parent=0
    #allocation2 [shape = 'u8[1024]{0}', space=vmem, size = 0x400, scoped, tag = 'output window, operand 0, single buffered']
    #allocation3 [shape = 's32[1]{0}', space=sflag, size = 0x4, scoped, tag = 'scoped memory for set_transformer_forward.15']
    %8 = vsyncpa [#allocation3], 0
    // Predicated region
    $region2: #{set_transformer_forward.15} parent=1 // pred_check
      _
    $region3: #{set_transformer_forward.15} parent=1 // pred_check_branch
      %10 = sbr.rel (0) target = $region5
    $region4: #{set_transformer_forward.15} parent=1 // pred_region
      _
    $region5: #{set_transformer_forward.15} parent=1 // pred_fallthru
      _
    // Predicated region
    $region6: #{set_transformer_forward.15} parent=1 // pred_check
      _
    $region7: #{set_transformer_forward.15} parent=1 // pred_check_branch
      %12 = sbr.rel (0) target = $region9
    $region8: #{set_transformer_forward.15} parent=1 // pred_region
      _
    $region9: #{set_transformer_forward.15} parent=1 // pred_fallthru
      _
    // Predicated region
    $region10: #{set_transformer_forward.15} parent=1 // pred_check
      _
    $region11: #{set_transformer_forward.15} parent=1 // pred_check_branch
      %14 = sbr.rel (0) target = $region13
    $region12: #{set_transformer_forward.15} parent=1 // pred_region
      _
    $region13: #{set_transformer_forward.15} parent=1 // pred_fallthru
      _
    %v15 = vld [vmem:[%s0] sm:$0xff]
    %v16 = vld [vmem:[%s1] sm:$0xff]
    %v17 = vld [vmem:[%s1 + $0x8] sm:$0xff]
    %v18 = vld [vmem:[%s1 + $0x10] sm:$0xff]
    %v19 = vld [vmem:[%s1 + $0x18] sm:$0xff]
    %v20 = vld [vmem:[%s1 + $0x20] sm:$0xff]
    %v21 = vld [vmem:[%s1 + $0x28] sm:$0xff]
    %v22 = vld [vmem:[%s1 + $0x30] sm:$0xff]
    %v23 = vld [vmem:[%s1 + $0x38] sm:$0xff]
    %v24 = vld [vmem:[%s1 + $0x40] sm:$0xff]
    %v25 = vld [vmem:[%s1 + $0x48] sm:$0xff]
    %v26 = vld [vmem:[%s1 + $0x50] sm:$0xff]
    %v27 = vld [vmem:[%s1 + $0x58] sm:$0xff]
    %v28 = vld [vmem:[%s1 + $0x60] sm:$0xff]
    %v29 = vld [vmem:[%s1 + $0x68] sm:$0xff]
    %v30 = vld [vmem:[%s1 + $0x70] sm:$0xff]
    %v31 = vld [vmem:[%s1 + $0x78] sm:$0xff]
    %v32 = vld [vmem:[%s1 + $0x80] sm:$0xff]
    %v33 = vld [vmem:[%s1 + $0x88] sm:$0xff]
    %v34 = vld [vmem:[%s1 + $0x90] sm:$0xff]
    %v35 = vld [vmem:[%s1 + $0x98] sm:$0xff]
    %v36 = vld [vmem:[%s1 + $0xa0] sm:$0xff]
    %v37 = vld [vmem:[%s1 + $0xa8] sm:$0xff]
    %v38 = vld [vmem:[%s1 + $0xb0] sm:$0xff]
    %v39 = vld [vmem:[%s1 + $0xb8] sm:$0xff]
    %v40 = vld [vmem:[%s1 + $0xc0] sm:$0xff]
    %v41 = vld [vmem:[%s1 + $0xc8] sm:$0xff]
    %v42 = vld [vmem:[%s1 + $0xd0] sm:$0xff]
    %v43 = vld [vmem:[%s1 + $0xd8] sm:$0xff]
    %v44 = vld [vmem:[%s1 + $0xe0] sm:$0xff]
    %v45 = vld [vmem:[%s1 + $0xe8] sm:$0xff]
    %v46 = vld [vmem:[%s1 + $0xf0] sm:$0xff]
    %v47 = vld [vmem:[%s1 + $0xf8] sm:$0xff]
    %v48 = vld [vmem:[%s1 + $0x100] sm:$0xff]
    %v49 = vld [vmem:[%s1 + $0x108] sm:$0xff]
    %v50 = vld [vmem:[%s1 + $0x110] sm:$0xff]
    %v51 = vld [vmem:[%s1 + $0x118] sm:$0xff]
    %v52 = vld [vmem:[%s1 + $0x120] sm:$0xff]
    %v53 = vld [vmem:[%s1 + $0x128] sm:$0xff]
    %v54 = vld [vmem:[%s1 + $0x130] sm:$0xff]
    %v55 = vld [vmem:[%s1 + $0x138] sm:$0xff]
    %v56 = vld [vmem:[%s1 + $0x140] sm:$0xff]
    %v57 = vld [vmem:[%s1 + $0x148] sm:$0xff]
    %v58 = vld [vmem:[%s1 + $0x150] sm:$0xff]
    %v59 = vld [vmem:[%s1 + $0x158] sm:$0xff]
    %v60 = vld [vmem:[%s1 + $0x160] sm:$0xff]
    %v61 = vld [vmem:[%s1 + $0x168] sm:$0xff]
    %v62 = vld [vmem:[%s1 + $0x170] sm:$0xff]
    %v63 = vld [vmem:[%s1 + $0x178] sm:$0xff]
    %v64 = vld [vmem:[%s1 + $0x180] sm:$0xff]
    %v65 = vld [vmem:[%s1 + $0x188] sm:$0xff]
    %v66 = vld [vmem:[%s1 + $0x190] sm:$0xff]
    %v67 = vld [vmem:[%s1 + $0x198] sm:$0xff]
    %v68 = vld [vmem:[%s1 + $0x1a0] sm:$0xff]
    %v69 = vld [vmem:[%s1 + $0x1a8] sm:$0xff]
    %v70 = vld [vmem:[%s1 + $0x1b0] sm:$0xff]
    %v71 = vld [vmem:[%s1 + $0x1b8] sm:$0xff]
    %v72 = vld [vmem:[%s1 + $0x1c0] sm:$0xff]
    %v73 = vld [vmem:[%s1 + $0x1c8] sm:$0xff]
    %v74 = vld [vmem:[%s1 + $0x1d0] sm:$0xff]
    %v75 = vld [vmem:[%s1 + $0x1d8] sm:$0xff]
    %v76 = vld [vmem:[%s1 + $0x1e0] sm:$0xff]
    %v77 = vld [vmem:[%s1 + $0x1e8] sm:$0xff]
    %v78 = vld [vmem:[%s1 + $0x1f0] sm:$0xff]
    %v79 = vld [vmem:[%s1 + $0x1f8] sm:$0xff]
    %81 = vst [vmem:[#allocation1] ss:$4 sm:$0xff] %v15
    %v82 = vld.sshfl [vmem:[#allocation1] sm:$0xff pattern:$0x73625140]
    %v83 = vld.sshfl [vmem:[#allocation1 + $0x8] sm:$0xff pattern:$0x73625140]
    %v84 = vld.sshfl [vmem:[#allocation1 + $0x10] sm:$0xff pattern:$0x73625140]
    %v85 = vld.sshfl [vmem:[#allocation1 + $0x18] sm:$0xff pattern:$0x73625140]
    %v90 = vpack.c.bf16 %v82, %v82
    %v91 = vpack.c.bf16 %v83, %v83
    %v92 = vpack.c.bf16 %v84, %v84
    %v93 = vpack.c.bf16 %v85, %v85
    %v94 = vpack.c.bf16 %v17, %v16
    %v95 = vpack.c.bf16 %v19, %v18
    %v96 = vpack.c.bf16 %v21, %v20
    %v97 = vpack.c.bf16 %v23, %v22
    %v98 = vpack.c.bf16 %v25, %v24
    %v99 = vpack.c.bf16 %v27, %v26
    %v100 = vpack.c.bf16 %v29, %v28
    %v101 = vpack.c.bf16 %v31, %v30
    %v102 = vpack.c.bf16 %v33, %v32
    %v103 = vpack.c.bf16 %v35, %v34
    %v104 = vpack.c.bf16 %v37, %v36
    %v105 = vpack.c.bf16 %v39, %v38
    %v106 = vpack.c.bf16 %v41, %v40
    %v107 = vpack.c.bf16 %v43, %v42
    %v108 = vpack.c.bf16 %v45, %v44
    %v109 = vpack.c.bf16 %v47, %v46
    %v110 = vpack.c.bf16 %v49, %v48
    %v111 = vpack.c.bf16 %v51, %v50
    %v112 = vpack.c.bf16 %v53, %v52
    %v113 = vpack.c.bf16 %v55, %v54
    %v114 = vpack.c.bf16 %v57, %v56
    %v115 = vpack.c.bf16 %v59, %v58
    %v116 = vpack.c.bf16 %v61, %v60
    %v117 = vpack.c.bf16 %v63, %v62
    %v118 = vpack.c.bf16 %v65, %v64
    %v119 = vpack.c.bf16 %v67, %v66
    %v120 = vpack.c.bf16 %v69, %v68
    %v121 = vpack.c.bf16 %v71, %v70
    %v122 = vpack.c.bf16 %v73, %v72
    %v123 = vpack.c.bf16 %v75, %v74
    %v124 = vpack.c.bf16 %v77, %v76
    %v125 = vpack.c.bf16 %v79, %v78
    %v126 = vld [vmem:[%s2] sm:$0x1]
    %v128 = vperm.slane %v126, 0
    %130 = vmatpush.bf16.msra.mxu0 %v101
    %131 = vmatpush.bf16.msra.mxu0 %v100
    %132 = vmatpush.bf16.msra.mxu0 %v99
    %133 = vmatpush.bf16.msra.mxu0 %v98
    %134 = vmatpush.bf16.msra.mxu0 %v97
    %135 = vmatpush.bf16.msra.mxu0 %v96
    %136 = vmatpush.bf16.msra.mxu0 %v95
    %137 = vmatpush.bf16.msra.mxu0 %v94
    %138 = vmatmul.bf16.gmra.mxu0 %v90
    %v139 = vpop.f32.mrf.mxu0
    %v140 = vadd.f32 %v128, %v139
    %v141 = vpop.f32.mrf.mxu0
    %142 = vdwg.mxu0
    %143 = vmatpush.bf16.msra.mxu0 %v109
    %144 = vmatpush.bf16.msra.mxu0 %v108
    %145 = vmatpush.bf16.msra.mxu0 %v107
    %146 = vmatpush.bf16.msra.mxu0 %v106
    %147 = vmatpush.bf16.msra.mxu0 %v105
    %148 = vmatpush.bf16.msra.mxu0 %v104
    %149 = vmatpush.bf16.msra.mxu0 %v103
    %150 = vmatpush.bf16.msra.mxu0 %v102
    %151 = vmatmul.bf16.gmra.mxu0 %v91
    %v152 = vpop.f32.mrf.mxu0
    %v153 = vadd.f32 %v140, %v152
    %v154 = vpop.f32.mrf.mxu0
    %155 = vdwg.mxu0
    %156 = vmatpush.bf16.msra.mxu0 %v117
    %157 = vmatpush.bf16.msra.mxu0 %v116
    %158 = vmatpush.bf16.msra.mxu0 %v115
    %159 = vmatpush.bf16.msra.mxu0 %v114
    %160 = vmatpush.bf16.msra.mxu0 %v113
    %161 = vmatpush.bf16.msra.mxu0 %v112
    %162 = vmatpush.bf16.msra.mxu0 %v111
    %163 = vmatpush.bf16.msra.mxu0 %v110
    %164 = vmatmul.bf16.gmra.mxu0 %v92
    %v165 = vpop.f32.mrf.mxu0
    %v166 = vadd.f32 %v153, %v165
    %v167 = vpop.f32.mrf.mxu0
    %168 = vdwg.mxu0
    %169 = vmatpush.bf16.msra.mxu0 %v125
    %170 = vmatpush.bf16.msra.mxu0 %v124
    %171 = vmatpush.bf16.msra.mxu0 %v123
    %172 = vmatpush.bf16.msra.mxu0 %v122
    %173 = vmatpush.bf16.msra.mxu0 %v121
    %174 = vmatpush.bf16.msra.mxu0 %v120
    %175 = vmatpush.bf16.msra.mxu0 %v119
    %176 = vmatpush.bf16.msra.mxu0 %v118
    %177 = vmatmul.bf16.gmra.mxu0 %v93
    %v178 = vpop.f32.mrf.mxu0
    %v179 = vadd.f32 %v166, %v178
    %v180 = vpop.f32.mrf.mxu0
    %181 = vdwg.mxu0
    %182 = vst [vmem:[#allocation2] sm:$0x3] %v179
    // Predicated region
    $region14: #{set_transformer_forward.15} parent=1 // pred_check
      _
    $region15: #{set_transformer_forward.15} parent=1 // pred_check_branch
      %184 = sbr.rel (0) target = $region17
    $region16: #{set_transformer_forward.15} parent=1 // pred_region
      %186 = vsyncadd [#allocation3], 0
      %s188 = sshll.u32 [#allocation2], 4
      %s189 = int_to_ptr.vmem [resolvable:$true] %s188
      %s190 = sshll.u32 %s3, 4
      %s191 = int_to_ptr.hbm [resolvable:$true] %s190
      %193 = dma.vmem_to_hbm [thread:$0]  %s189, 32, %s191, [#allocation3]
    $region17: #{set_transformer_forward.15} parent=1 // pred_fallthru
      _
    // Predicated region
    $region18: #{set_transformer_forward.15} parent=1 // pred_check
      _
    $region19: #{set_transformer_forward.15} parent=1 // pred_check_branch
      %195 = sbr.rel (0) target = $region21
    $region20: #{set_transformer_forward.15} parent=1 // pred_region
      %197 = dma.done [#allocation3], 32
    $region21: #{set_transformer_forward.15} parent=1 // pred_fallthru
      _
    %198 = vsyncpa [#allocation3], 1

</llo_original>
